<compile_context>
chip_gen: v7x
topology: tpu7x:2x2x1
jax: 0.10.0
libtpu: 0.0.40
codegen_flags: <defaults>
</compile_context>

<pallas_src>
import jax
import jax.numpy as jnp
from jax import lax
from jax.experimental import pallas as pl
from jax.experimental.pallas import tpu as pltpu

BN_EPS = 1e-5

# Architecture constants (84x84 input is forced by fc1 = Linear(64*7*7, 512)).
H1, W1 = 20, 20                      # conv1 output grid (84, k=8, s=4)
H2, W2 = 9, 9                        # conv2 output grid (k=4, s=2)
H3, W3 = 7, 7                        # conv3 output grid (k=3, s=1)
C1, C2, C3 = 32, 64, 64              # conv output channels
K1 = 4 * 8 * 8                       # 256  im2col K for conv1
K2 = C1 * 4 * 4                      # 512  conv2 weight rows (16 offsets x 32)
K3 = C2 * 3 * 3                      # 576  conv3 weight rows (9 offsets x 64)
GW = H1 // 2                         # 10   within-phase grid width
ES = GW * GW                         # 100  rows per element per phase
ROWS3 = H3 * W3                      # 49   valid conv3 rows per element
ROWS3_PAD = 56                       # padded rows per element (multiple of 8)
FC1_K = ROWS3_PAD * C3               # 3584 = 28 * 128
FC_H = 512


# ----------------------------------------------------------------------------
# Kernel 1: fused conv tower (bb batch elements per grid step)
# ----------------------------------------------------------------------------
def _conv_tower_kernel(p1_ref, w1_ref, b1_ref, w2_ref, b2_ref, w3_ref, b3_ref,
                       out_ref, a1_ref, acc2_ref, a2_ref, acc3_ref):
    bb = p1_ref.shape[0] // (H1 * W1)       # batch elements in this block
    r2 = bb * ES - 11                       # conv2 accumulator rows
    r3 = bb * ES - 33                       # conv3 accumulator rows

    # ---- conv1 + bn1 + relu: one MXU dot for all bb elements -----------------
    # a1 row layout: ph*(bb*100) + elem*100 + (h1//2)*10 + (w1//2),
    # with ph = (h1%2)*2 + (w1%2)  (established by the host-side patch order).
    y1 = jnp.dot(p1_ref[...], w1_ref[...], preferred_element_type=jnp.float32)
    a1_ref[...] = jnp.maximum(y1 + b1_ref[...], 0.0).astype(a1_ref.dtype)

    # ---- conv2 + bn2 + relu: 16 shifted-slab accumulate matmuls --------------
    # For kernel offset (i, j): phase = (i%2)*2 + (j%2), shift = (i//2)*10 + j//2.
    # acc2 row r = elem*100 + oh*10 + ow reads a1[phase_base + shift + r], which
    # stays inside element `elem`'s 100-row block for every valid (oh, ow) <= 8;
    # rows with ow == 9 (and the per-element tail) are garbage and never used.
    for i in range(4):
        for j in range(4):
            ph = (i % 2) * 2 + (j % 2)
            start = ph * (bb * ES) + (i // 2) * GW + (j // 2)
            o = i * 4 + j
            contrib = jnp.dot(a1_ref[start:start + r2, :],
                              w2_ref[o * C1:(o + 1) * C1, :],
                              preferred_element_type=jnp.float32)
            if o == 0:
                acc2_ref[...] = contrib
            else:
                acc2_ref[...] += contrib
    a2_ref[...] = jnp.maximum(acc2_ref[...] + b2_ref[...], 0.0).astype(a2_ref.dtype)

    # ---- conv3 + bn3: 9 shifted-slab accumulate matmuls ----------------------
    # acc3 row r = elem*100 + oh*10 + ow reads a2[r + i*10 + j]; valid rows
    # (oh, ow) <= 6 only ever read valid conv2 rows of the same element.
    for i in range(3):
        for j in range(3):
            o = i * 3 + j
            start = i * GW + j
            contrib = jnp.dot(a2_ref[start:start + r3, :],
                              w3_ref[o * C2:(o + 1) * C2, :],
                              preferred_element_type=jnp.float32)
            if o == 0:
                acc3_ref[...] = contrib
            else:
                acc3_ref[...] += contrib

    # ---- bias + relu + compaction into the lane-dense padded output ----------
    # 7 small copies per element (down from ~207 masked copies per element).
    zeros_pad = jnp.zeros((ROWS3_PAD - ROWS3, C3), out_ref.dtype)
    for b in range(bb):
        for oh in range(H3):
            src = b * ES + oh * GW
            dst = b * ROWS3_PAD + oh * W3
            out_ref[dst:dst + W3, :] = jnp.maximum(
                acc3_ref[src:src + W3, :] + b3_ref[...], 0.0).astype(out_ref.dtype)
        # pad rows must be zero (fc1's padded weight rows are zero as well).
        out_ref[b * ROWS3_PAD + ROWS3:(b + 1) * ROWS3_PAD, :] = zeros_pad


def conv_tower(p1, w1, b1, w2, b2, w3, b3, batch, bb):
    """p1: (batch*400, 256) bf16 phase-ordered patches -> (batch*56, 64) bf16."""
    assert batch % bb == 0
    r2 = bb * ES - 11
    r3 = bb * ES - 33
    return pl.pallas_call(
        _conv_tower_kernel,
        out_shape=jax.ShapeDtypeStruct((batch * ROWS3_PAD, C3), jnp.bfloat16),
        grid=(batch // bb,),
        in_specs=[
            pl.BlockSpec((bb * H1 * W1, K1), lambda g: (g, 0)),  # conv1 patches
            pl.BlockSpec((K1, C1), lambda g: (0, 0)),            # conv1 weight
            pl.BlockSpec((1, C1), lambda g: (0, 0)),
            pl.BlockSpec((K2, C2), lambda g: (0, 0)),            # conv2 weight
            pl.BlockSpec((1, C2), lambda g: (0, 0)),
            pl.BlockSpec((K3, C3), lambda g: (0, 0)),            # conv3 weight
            pl.BlockSpec((1, C3), lambda g: (0, 0)),
        ],
        out_specs=pl.BlockSpec((bb * ROWS3_PAD, C3), lambda g: (g, 0)),
        scratch_shapes=[
            pltpu.VMEM((bb * H1 * W1, C1), jnp.bfloat16),        # a1 (phase-ordered)
            pltpu.VMEM((r2, C2), jnp.float32),                   # conv2 accumulator
            pltpu.VMEM((r2, C2), jnp.bfloat16),                  # a2
            pltpu.VMEM((r3, C3), jnp.float32),                   # conv3 accumulator
        ],
        compiler_params=pltpu.CompilerParams(
            dimension_semantics=("parallel",)),
    )(p1, w1, b1, w2, b2, w3, b3)


# ----------------------------------------------------------------------------
# Kernel 2: fused fc1 + ReLU + fc2, tiled over batch and over K=3584
# ----------------------------------------------------------------------------
def _fc_kernel(x_ref, w4_ref, b4_ref, w5_ref, b5_ref, o_ref, acc_ref):
    k = pl.program_id(1)

    @pl.when(k == 0)
    def _():
        acc_ref[...] = jnp.zeros_like(acc_ref)

    acc_ref[...] += jnp.dot(x_ref[...], w4_ref[...],
                            preferred_element_type=jnp.float32)

    @pl.when(k == pl.num_programs(1) - 1)
    def _():
        h = jnp.maximum(acc_ref[...] + b4_ref[...], 0.0)
        o = jnp.dot(h.astype(jnp.bfloat16), w5_ref[...],
                    preferred_element_type=jnp.float32)
        o_ref[...] = o + b5_ref[...]


def fc_head(x, w4, b4, w5, b5, bb, tk=896):
    """x: (B, 3584) bf16 -> (B, 128) f32 (valid logits in the first columns)."""
    B, K = x.shape
    assert B % bb == 0 and K % tk == 0
    return pl.pallas_call(
        _fc_kernel,
        out_shape=jax.ShapeDtypeStruct((B, w5.shape[1]), jnp.float32),
        grid=(B // bb, K // tk),
        in_specs=[
            pl.BlockSpec((bb, tk), lambda b, k: (b, k)),
            pl.BlockSpec((tk, FC_H), lambda b, k: (k, 0)),       # fc1 weight (K-tiled)
            pl.BlockSpec((1, FC_H), lambda b, k: (0, 0)),
            pl.BlockSpec((FC_H, 128), lambda b, k: (0, 0)),      # fc2 weight (padded)
            pl.BlockSpec((1, 128), lambda b, k: (0, 0)),
        ],
        out_specs=pl.BlockSpec((bb, 128), lambda b, k: (b, 0)),
        scratch_shapes=[pltpu.VMEM((bb, FC_H), jnp.float32)],
        compiler_params=pltpu.CompilerParams(
            dimension_semantics=("parallel", "arbitrary")),
    )(x, w4, b4, w5, b5)


# ----------------------------------------------------------------------------
# Host-side parameter preparation (one time, outside the hot path)
# ----------------------------------------------------------------------------
def prepare_params(p):
    bf16 = jnp.bfloat16
    s1 = p["g1"] / jnp.sqrt(p["v1"] + BN_EPS)
    s2 = p["g2"] / jnp.sqrt(p["v2"] + BN_EPS)
    s3 = p["g3"] / jnp.sqrt(p["v3"] + BN_EPS)

    # conv1: patch columns ordered (ci, kh, kw)
    w1f = (p["c1_w"].reshape(C1, K1) * s1[:, None]).T.astype(bf16)
    b1f = ((p["c1_b"] - p["m1"]) * s1 + p["be1"]).reshape(1, C1).astype(jnp.float32)

    # conv2: weight rows ordered (kh, kw, ci)
    w2f = (jnp.transpose(p["c2_w"], (2, 3, 1, 0)).reshape(K2, C2)
           * s2[None, :]).astype(bf16)
    b2f = ((p["c2_b"] - p["m2"]) * s2 + p["be2"]).reshape(1, C2).astype(jnp.float32)

    # conv3: weight rows ordered (kh, kw, ci)
    w3f = (jnp.transpose(p["c3_w"], (2, 3, 1, 0)).reshape(K3, C3)
           * s3[None, :]).astype(bf16)
    b3f = ((p["c3_b"] - p["m3"]) * s3 + p["be3"]).reshape(1, C3).astype(jnp.float32)

    # fc1: kernel-1 emits per-element features ordered (h3, w3, c) with 7 zero
    # pad rows; PyTorch flattens (c, h3, w3).  Reorder + zero-pad to K=3584.
    w4 = (jnp.transpose(p["fc1_w"].reshape(FC_H, C3, H3, W3), (0, 2, 3, 1))
          .reshape(FC_H, ROWS3 * C3).T)
    w4 = jnp.concatenate(
        [w4, jnp.zeros((FC1_K - ROWS3 * C3, FC_H), w4.dtype)], axis=0).astype(bf16)
    b4 = p["fc1_b"].reshape(1, FC_H).astype(jnp.float32)

    # fc2: pad the tiny output dim (num_actions) up to 128 lanes.
    na = p["fc2_w"].shape[0]
    w5 = jnp.zeros((FC_H, 128), jnp.float32).at[:, :na].set(p["fc2_w"].T).astype(bf16)
    b5 = jnp.zeros((1, 128), jnp.float32).at[0, :na].set(p["fc2_b"])

    return {"w1": w1f, "b1": b1f, "w2": w2f, "b2": b2f, "w3": w3f, "b3": b3f,
            "w4": w4, "b4": b4, "w5": w5, "b5": b5}


# ----------------------------------------------------------------------------
# conv1 im2col (plain XLA): columns ordered (ci, kh, kw); rows ordered
# (batch_block, phase_i, phase_j, elem, h1//2, w1//2) so the kernel's
# shifted-slab conv2/conv3 matmuls only need contiguous static slices.
# ----------------------------------------------------------------------------
def _conv1_patches(x, bb):
    B, C, _, _ = x.shape
    G = B // bb
    cols = []
    for i in range(8):
        for j in range(8):
            cols.append(x[:, :, i:i + 4 * H1:4, j:j + 4 * W1:4])   # (B, C, 20, 20)
    pt = jnp.stack(cols, axis=2)                    # (B, C, 64, 20, 20)
    pt = jnp.transpose(pt, (0, 3, 4, 1, 2))         # (B, 20, 20, C, 64)
    pt = pt.reshape(B, H1, W1, K1)                  # columns = (ci, kh, kw)
    pt = pt.reshape(G, bb, GW, 2, GW, 2, K1)        # (G, elem, hh, pi, ww, pj, K1)
    pt = jnp.transpose(pt, (0, 3, 5, 1, 2, 4, 6))   # (G, pi, pj, elem, hh, ww, K1)
    return pt.reshape(B * H1 * W1, K1).astype(jnp.bfloat16)


def _pick_bb(B):
    for bb in (8, 4, 2, 1):
        if B % bb == 0 and B // bb >= 2:
            return bb
    return B


def flappy_bird_forward(x, prep, num_actions=2):
    B = x.shape[0]
    bb = _pick_bb(B)
    p1 = _conv1_patches(x, bb)                                       # (B*400, 256) bf16
    act3 = conv_tower(p1, prep["w1"], prep["b1"], prep["w2"], prep["b2"],
                      prep["w3"], prep["b3"], B, bb)                 # (B*56, 64) bf16
    xfc = act3.reshape(B, FC1_K)                                     # (B, 3584) bf16
    bb2 = B if (B <= 8 or B % 8 != 0) else 8
    out = fc_head(xfc, prep["w4"], prep["b4"], prep["w5"], prep["b5"], bb2)
    return out[:, :num_actions]


# ----------------------------------------------------------------------------
# Pure-JAX reference (for sanity checking the Pallas path)
# ----------------------------------------------------------------------------
def reference_forward(x, p):
    def cbr(x, w, b, g, be, m, v, stride):
        y = lax.conv_general_dilated(
            x, w, window_strides=(stride, stride), padding="VALID",
            dimension_numbers=("NCHW", "OIHW", "NCHW"))
        y = y + b[None, :, None, None]
        y = (y - m[None, :, None, None]) / jnp.sqrt(v[None, :, None, None] + BN_EPS)
        y = y * g[None, :, None, None] + be[None, :, None, None]
        return jnp.maximum(y, 0.0)

    x = cbr(x, p["c1_w"], p["c1_b"], p["g1"], p["be1"], p["m1"], p["v1"], 4)
    x = cbr(x, p["c2_w"], p["c2_b"], p["g2"], p["be2"], p["m2"], p["v2"], 2)
    x = cbr(x, p["c3_w"], p["c3_b"], p["g3"], p["be3"], p["m3"], p["v3"], 1)
    x = x.reshape(x.shape[0], -1)
    x = jnp.maximum(x @ p["fc1_w"].T + p["fc1_b"], 0.0)
    return x @ p["fc2_w"].T + p["fc2_b"]


# ----------------------------------------------------------------------------
# Deterministic parameter init
# ----------------------------------------------------------------------------
def make_params(key, stack_frame_len=4, num_actions=2):
    ks = jax.random.split(key, 16)
    f32 = jnp.float32

    def nrm(k, shape, scale=0.05):
        return (scale * jax.random.normal(k, shape)).astype(f32)

    return {
        "c1_w": nrm(ks[0], (32, stack_frame_len, 8, 8)),
        "c1_b": nrm(ks[1], (32,)),
        "g1": 1.0 + nrm(ks[2], (32,), 0.1), "be1": nrm(ks[2], (32,), 0.1),
        "m1": nrm(ks[3], (32,), 0.1), "v1": 1.0 + jnp.abs(nrm(ks[3], (32,), 0.1)),
        "c2_w": nrm(ks[4], (64, 32, 4, 4)),
        "c2_b": nrm(ks[5], (64,)),
        "g2": 1.0 + nrm(ks[6], (64,), 0.1), "be2": nrm(ks[6], (64,), 0.1),
        "m2": nrm(ks[7], (64,), 0.1), "v2": 1.0 + jnp.abs(nrm(ks[7], (64,), 0.1)),
        "c3_w": nrm(ks[8], (64, 64, 3, 3)),
        "c3_b": nrm(ks[9], (64,)),
        "g3": 1.0 + nrm(ks[10], (64,), 0.1), "be3": nrm(ks[10], (64,), 0.1),
        "m3": nrm(ks[11], (64,), 0.1), "v3": 1.0 + jnp.abs(nrm(ks[11], (64,), 0.1)),
        "fc1_w": nrm(ks[12], (512, 64 * 7 * 7)),
        "fc1_b": nrm(ks[13], (512,)),
        "fc2_w": nrm(ks[14], (num_actions, 512)),
        "fc2_b": nrm(ks[15], (num_actions,)),
    }


if __name__ == "__main__":
    key = jax.random.PRNGKey(0)
    kx, kp = jax.random.split(key)
    params = make_params(kp)
    prep = prepare_params(params)          # one-time host-side folding / reordering

    fwd = jax.jit(flappy_bird_forward)
    ref_fn = jax.jit(reference_forward)

    # Spatial size 84 is forced by the architecture (fc1 expects 64*7*7 features).
    # B=2 exercises the grid>=2 path (bb=1); B=8 exercises the batch-blocked
    # (bb=4) shifted-slab path.
    for B in (2, 8):
        x = jax.random.normal(jax.random.fold_in(kx, B), (B, 4, 84, 84),
                              dtype=jnp.float32)
        out = jax.block_until_ready(fwd(x, prep))
        assert out.shape == (B, 2), out.shape
        ref = jax.block_until_ready(ref_fn(x, params))
        # bf16 MXU operands (f32 accumulation) -> looser tolerance than pure f32.
        assert jnp.allclose(out, ref, rtol=1e-1, atol=7e-2), (B, out, ref)

    print("KERNEL_OK")
</pallas_src>

<mosaic_0001>
module attributes {stable_mosaic.version = 11 : i64} {
  func.func @_fc_kernel(%arg0: i32, %arg1: i32, %arg2: memref<2x896xbf16, #tpu.memory_space<vmem>>, %arg3: memref<896x512xbf16, #tpu.memory_space<vmem>>, %arg4: memref<1x512xf32, #tpu.memory_space<vmem>>, %arg5: memref<512x128xbf16, #tpu.memory_space<vmem>>, %arg6: memref<1x128xf32, #tpu.memory_space<vmem>>, %arg7: memref<2x128xf32, #tpu.memory_space<vmem>>, %arg8: memref<2x512xf32, #tpu.memory_space<vmem>>) attributes {dimension_semantics = [#tpu.dimension_semantics<parallel>, #tpu.dimension_semantics<arbitrary>], iteration_bounds = array<i64: 1, 4>, scalar_prefetch = 0 : i64, scratch_operands = 1 : i64, tpu.core_type = #tpu.core_type<tc>, window_params = [{transform_indices = @transform_0, window_bounds = array<i64: 2, 896>}, {transform_indices = @transform_1, window_bounds = array<i64: 896, 512>}, {pipeline_mode = #tpu.pipeline_mode<synchronous>, transform_indices = @transform_2, window_bounds = array<i64: 1, 512>}, {pipeline_mode = #tpu.pipeline_mode<synchronous>, transform_indices = @transform_3, window_bounds = array<i64: 512, 128>}, {pipeline_mode = #tpu.pipeline_mode<synchronous>, transform_indices = @transform_4, window_bounds = array<i64: 1, 128>}, {transform_indices = @transform_5, window_bounds = array<i64: 2, 128>}]} {
    %c0_i32 = arith.constant 0 : i32
    %0 = arith.cmpi eq, %arg1, %c0_i32 : i32
    %1 = arith.extui %0 : i1 to i32
    %c0_i32_0 = arith.constant 0 : i32
    %2 = arith.cmpi ne, %1, %c0_i32_0 : i32
    scf.if %2 {
      %cst_9 = arith.constant 0.000000e+00 : f32
      %12 = vector.broadcast %cst_9 : f32 to vector<2x512xf32>
      %c0_10 = arith.constant 0 : index
      %c0_11 = arith.constant 0 : index
      %13 = vector.load %arg8[%c0_10, %c0_11] : memref<2x512xf32, #tpu.memory_space<vmem>>, vector<2x512xf32>
      tpu.vector_store %arg8[%c0_10, %c0_11], %12 {strides = array<i32>} : memref<2x512xf32, #tpu.memory_space<vmem>>, vector<2x512xf32>,
    } else {
    }
    %c0 = arith.constant 0 : index
    %c0_1 = arith.constant 0 : index
    %3 = vector.load %arg8[%c0, %c0_1] : memref<2x512xf32, #tpu.memory_space<vmem>>, vector<2x512xf32>
    %c0_2 = arith.constant 0 : index
    %c0_3 = arith.constant 0 : index
    %4 = vector.load %arg2[%c0_2, %c0_3] : memref<2x896xbf16, #tpu.memory_space<vmem>>, vector<2x896xbf16>
    %c0_4 = arith.constant 0 : index
    %c0_5 = arith.constant 0 : index
    %5 = vector.load %arg3[%c0_4, %c0_5] : memref<896x512xbf16, #tpu.memory_space<vmem>>, vector<896x512xbf16>
    %cst = arith.constant dense<0.000000e+00> : vector<2x512xf32>
    %6 = tpu.matmul %4, %5, %cst {dimension_numbers = #tpu.dot_dimension_numbers<[1], [0], [0], [1], [0, 0, 1, 1], [], []>} : vector<2x896xbf16>, vector<896x512xbf16>, vector<2x512xf32> -> vector<2x512xf32>
    %7 = arith.addf %3, %6 : vector<2x512xf32>
    %c0_6 = arith.constant 0 : index
    %c0_7 = arith.constant 0 : index
    %8 = vector.load %arg8[%c0_6, %c0_7] : memref<2x512xf32, #tpu.memory_space<vmem>>, vector<2x512xf32>
    tpu.vector_store %arg8[%c0_6, %c0_7], %7 {strides = array<i32>} : memref<2x512xf32, #tpu.memory_space<vmem>>, vector<2x512xf32>,
    %c3_i32 = arith.constant 3 : i32
    %9 = arith.cmpi eq, %arg1, %c3_i32 : i32
    %10 = arith.extui %9 : i1 to i32
    %c0_i32_8 = arith.constant 0 : i32
    %11 = arith.cmpi ne, %10, %c0_i32_8 : i32
    scf.if %11 {
      %c0_9 = arith.constant 0 : index
      %c0_10 = arith.constant 0 : index
      %12 = vector.load %arg8[%c0_9, %c0_10] : memref<2x512xf32, #tpu.memory_space<vmem>>, vector<2x512xf32>
      %c0_11 = arith.constant 0 : index
      %c0_12 = arith.constant 0 : index
      %13 = vector.load %arg4[%c0_11, %c0_12] : memref<1x512xf32, #tpu.memory_space<vmem>>, vector<1x512xf32>
      %14 = vector.broadcast %13 : vector<1x512xf32> to vector<2x512xf32>
      %15 = arith.addf %12, %14 : vector<2x512xf32>
      %cst_13 = arith.constant 0.000000e+00 : f32
      %16 = vector.broadcast %cst_13 : f32 to vector<2x512xf32>
      %17 = arith.maximumf %15, %16 : vector<2x512xf32>
      %18 = arith.truncf %17 : vector<2x512xf32> to vector<2x512xbf16>
      %c0_14 = arith.constant 0 : index
      %c0_15 = arith.constant 0 : index
      %19 = vector.load %arg5[%c0_14, %c0_15] : memref<512x128xbf16, #tpu.memory_space<vmem>>, vector<512x128xbf16>
      %cst_16 = arith.constant dense<0.000000e+00> : vector<2x128xf32>
      %20 = tpu.matmul %18, %19, %cst_16 {dimension_numbers = #tpu.dot_dimension_numbers<[1], [0], [0], [1], [0, 0, 1, 1], [], []>} : vector<2x512xbf16>, vector<512x128xbf16>, vector<2x128xf32> -> vector<2x128xf32>
      %c0_17 = arith.constant 0 : index
      %c0_18 = arith.constant 0 : index
      %21 = vector.load %arg6[%c0_17, %c0_18] : memref<1x128xf32, #tpu.memory_space<vmem>>, vector<1x128xf32>
      %22 = vector.broadcast %21 : vector<1x128xf32> to vector<2x128xf32>
      %23 = arith.addf %20, %22 : vector<2x128xf32>
      %c0_19 = arith.constant 0 : index
      %c0_20 = arith.constant 0 : index
      %24 = vector.load %arg7[%c0_19, %c0_20] : memref<2x128xf32, #tpu.memory_space<vmem>>, vector<2x128xf32>
      tpu.vector_store %arg7[%c0_19, %c0_20], %23 {strides = array<i32>} : memref<2x128xf32, #tpu.memory_space<vmem>>, vector<2x128xf32>,
    } else {
    }
    return
  }
  func.func @transform_0(%arg0: i32, %arg1: i32) -> (i32, i32) {
    %c0_i32 = arith.constant 0 : i32
    return %arg0, %arg1 : i32, i32
  }
  func.func @transform_1(%arg0: i32, %arg1: i32) -> (i32, i32) {
    %c0_i32 = arith.constant 0 : i32
    %c0_i32_0 = arith.constant 0 : i32
    return %arg1, %c0_i32 : i32, i32
  }
  func.func @transform_2(%arg0: i32, %arg1: i32) -> (i32, i32) {
    %c0_i32 = arith.constant 0 : i32
    %c0_i32_0 = arith.constant 0 : i32
    %c0_i32_1 = arith.constant 0 : i32
    return %c0_i32, %c0_i32_0 : i32, i32
  }
  func.func @transform_3(%arg0: i32, %arg1: i32) -> (i32, i32) {
    %c0_i32 = arith.constant 0 : i32
    %c0_i32_0 = arith.constant 0 : i32
    %c0_i32_1 = arith.constant 0 : i32
    return %c0_i32, %c0_i32_0 : i32, i32
  }
  func.func @transform_4(%arg0: i32, %arg1: i32) -> (i32, i32) {
    %c0_i32 = arith.constant 0 : i32
    %c0_i32_0 = arith.constant 0 : i32
    %c0_i32_1 = arith.constant 0 : i32
    return %c0_i32, %c0_i32_0 : i32, i32
  }
  func.func @transform_5(%arg0: i32, %arg1: i32) -> (i32, i32) {
    %c0_i32 = arith.constant 0 : i32
    %c0_i32_0 = arith.constant 0 : i32
    return %arg0, %c0_i32 : i32, i32
  }
}

module attributes {stable_mosaic.version = 11 : i64} {
  func.func @_conv_tower_kernel(%arg0: i32, %arg1: memref<400x256xbf16, #tpu.memory_space<vmem>>, %arg2: memref<256x32xbf16, #tpu.memory_space<vmem>>, %arg3: memref<1x32xf32, #tpu.memory_space<vmem>>, %arg4: memref<512x64xbf16, #tpu.memory_space<vmem>>, %arg5: memref<1x64xf32, #tpu.memory_space<vmem>>, %arg6: memref<576x64xbf16, #tpu.memory_space<vmem>>, %arg7: memref<1x64xf32, #tpu.memory_space<vmem>>, %arg8: memref<56x64xbf16, #tpu.memory_space<vmem>>, %arg9: memref<400x32xbf16, #tpu.memory_space<vmem>>, %arg10: memref<89x64xf32, #tpu.memory_space<vmem>>, %arg11: memref<89x64xbf16, #tpu.memory_space<vmem>>, %arg12: memref<67x64xf32, #tpu.memory_space<vmem>>) attributes {dimension_semantics = [#tpu.dimension_semantics<parallel>], iteration_bounds = array<i64: 2>, scalar_prefetch = 0 : i64, scratch_operands = 4 : i64, tpu.core_type = #tpu.core_type<tc>, window_params = [{transform_indices = @transform_0, window_bounds = array<i64: 400, 256>}, {pipeline_mode = #tpu.pipeline_mode<synchronous>, transform_indices = @transform_1, window_bounds = array<i64: 256, 32>}, {pipeline_mode = #tpu.pipeline_mode<synchronous>, transform_indices = @transform_2, window_bounds = array<i64: 1, 32>}, {pipeline_mode = #tpu.pipeline_mode<synchronous>, transform_indices = @transform_3, window_bounds = array<i64: 512, 64>}, {pipeline_mode = #tpu.pipeline_mode<synchronous>, transform_indices = @transform_4, window_bounds = array<i64: 1, 64>}, {pipeline_mode = #tpu.pipeline_mode<synchronous>, transform_indices = @transform_5, window_bounds = array<i64: 576, 64>}, {pipeline_mode = #tpu.pipeline_mode<synchronous>, transform_indices = @transform_6, window_bounds = array<i64: 1, 64>}, {transform_indices = @transform_7, window_bounds = array<i64: 56, 64>}]} {
    %c0 = arith.constant 0 : index
    %c0_0 = arith.constant 0 : index
    %0 = vector.load %arg1[%c0, %c0_0] : memref<400x256xbf16, #tpu.memory_space<vmem>>, vector<400x256xbf16>
    %c0_1 = arith.constant 0 : index
    %c0_2 = arith.constant 0 : index
    %1 = vector.load %arg2[%c0_1, %c0_2] : memref<256x32xbf16, #tpu.memory_space<vmem>>, vector<256x32xbf16>
    %cst = arith.constant dense<0.000000e+00> : vector<400x32xf32>
    %2 = tpu.matmul %0, %1, %cst {dimension_numbers = #tpu.dot_dimension_numbers<[1], [0], [0], [1], [0, 0, 1, 1], [], []>} : vector<400x256xbf16>, vector<256x32xbf16>, vector<400x32xf32> -> vector<400x32xf32>
    %c0_3 = arith.constant 0 : index
    %c0_4 = arith.constant 0 : index
    %3 = vector.load %arg3[%c0_3, %c0_4] : memref<1x32xf32, #tpu.memory_space<vmem>>, vector<1x32xf32>
    %4 = vector.broadcast %3 : vector<1x32xf32> to vector<400x32xf32>
    %5 = arith.addf %2, %4 : vector<400x32xf32>
    %cst_5 = arith.constant 0.000000e+00 : f32
    %6 = vector.broadcast %cst_5 : f32 to vector<400x32xf32>
    %7 = arith.maximumf %5, %6 : vector<400x32xf32>
    %8 = arith.truncf %7 : vector<400x32xf32> to vector<400x32xbf16>
    %c0_6 = arith.constant 0 : index
    %c0_7 = arith.constant 0 : index
    %9 = vector.load %arg9[%c0_6, %c0_7] : memref<400x32xbf16, #tpu.memory_space<vmem>>, vector<400x32xbf16>
    tpu.vector_store %arg9[%c0_6, %c0_7], %8 {strides = array<i32>} : memref<400x32xbf16, #tpu.memory_space<vmem>>, vector<400x32xbf16>,
    %c0_8 = arith.constant 0 : index
    %c0_9 = arith.constant 0 : index
    %10 = vector.load %arg9[%c0_8, %c0_9] : memref<400x32xbf16, #tpu.memory_space<vmem>>, vector<89x32xbf16>
    %c0_10 = arith.constant 0 : index
    %c0_11 = arith.constant 0 : index
    %11 = vector.load %arg4[%c0_10, %c0_11] : memref<512x64xbf16, #tpu.memory_space<vmem>>, vector<32x64xbf16>
    %cst_12 = arith.constant dense<0.000000e+00> : vector<89x64xf32>
    %12 = tpu.matmul %10, %11, %cst_12 {dimension_numbers = #tpu.dot_dimension_numbers<[1], [0], [0], [1], [0, 0, 1, 1], [], []>} : vector<89x32xbf16>, vector<32x64xbf16>, vector<89x64xf32> -> vector<89x64xf32>
    %c0_13 = arith.constant 0 : index
    %c0_14 = arith.constant 0 : index
    %13 = vector.load %arg10[%c0_13, %c0_14] : memref<89x64xf32, #tpu.memory_space<vmem>>, vector<89x64xf32>
    tpu.vector_store %arg10[%c0_13, %c0_14], %12 {strides = array<i32>} : memref<89x64xf32, #tpu.memory_space<vmem>>, vector<89x64xf32>,
    %c100 = arith.constant 100 : index
    %c0_15 = arith.constant 0 : index
    %14 = vector.load %arg9[%c100, %c0_15] : memref<400x32xbf16, #tpu.memory_space<vmem>>, vector<89x32xbf16>
    %c32 = arith.constant 32 : index
    %c0_16 = arith.constant 0 : index
    %15 = vector.load %arg4[%c32, %c0_16] : memref<512x64xbf16, #tpu.memory_space<vmem>>, vector<32x64xbf16>
    %cst_17 = arith.constant dense<0.000000e+00> : vector<89x64xf32>
    %16 = tpu.matmul %14, %15, %cst_17 {dimension_numbers = #tpu.dot_dimension_numbers<[1], [0], [0], [1], [0, 0, 1, 1], [], []>} : vector<89x32xbf16>, vector<32x64xbf16>, vector<89x64xf32> -> vector<89x64xf32>
    %c0_18 = arith.constant 0 : index
    %c0_19 = arith.constant 0 : index
    %17 = vector.load %arg10[%c0_18, %c0_19] : memref<89x64xf32, #tpu.memory_space<vmem>>, vector<89x64xf32>
    %18 = arith.addf %17, %16 : vector<89x64xf32>
    %c0_20 = arith.constant 0 : index
    %c0_21 = arith.constant 0 : index
    %19 = vector.load %arg10[%c0_20, %c0_21] : memref<89x64xf32, #tpu.memory_space<vmem>>, vector<89x64xf32>
    tpu.vector_store %arg10[%c0_20, %c0_21], %18 {strides = array<i32>} : memref<89x64xf32, #tpu.memory_space<vmem>>, vector<89x64xf32>,
    %c1 = arith.constant 1 : index
    %c0_22 = arith.constant 0 : index
    %20 = vector.load %arg9[%c1, %c0_22] : memref<400x32xbf16, #tpu.memory_space<vmem>>, vector<89x32xbf16>
    %c64 = arith.constant 64 : index
    %c0_23 = arith.constant 0 : index
    %21 = vector.load %arg4[%c64, %c0_23] : memref<512x64xbf16, #tpu.memory_space<vmem>>, vector<32x64xbf16>
    %cst_24 = arith.constant dense<0.000000e+00> : vector<89x64xf32>
    %22 = tpu.matmul %20, %21, %cst_24 {dimension_numbers = #tpu.dot_dimension_numbers<[1], [0], [0], [1], [0, 0, 1, 1], [], []>} : vector<89x32xbf16>, vector<32x64xbf16>, vector<89x64xf32> -> vector<89x64xf32>
    %c0_25 = arith.constant 0 : index
    %c0_26 = arith.constant 0 : index
    %23 = vector.load %arg10[%c0_25, %c0_26] : memref<89x64xf32, #tpu.memory_space<vmem>>, vector<89x64xf32>
    %24 = arith.addf %23, %22 : vector<89x64xf32>
    %c0_27 = arith.constant 0 : index
    %c0_28 = arith.constant 0 : index
    %25 = vector.load %arg10[%c0_27, %c0_28] : memref<89x64xf32, #tpu.memory_space<vmem>>, vector<89x64xf32>
    tpu.vector_store %arg10[%c0_27, %c0_28], %24 {strides = array<i32>} : memref<89x64xf32, #tpu.memory_space<vmem>>, vector<89x64xf32>,
    %c101 = arith.constant 101 : index
    %c0_29 = arith.constant 0 : index
    %26 = vector.load %arg9[%c101, %c0_29] : memref<400x32xbf16, #tpu.memory_space<vmem>>, vector<89x32xbf16>
    %c96 = arith.constant 96 : index
    %c0_30 = arith.constant 0 : index
    %27 = vector.load %arg4[%c96, %c0_30] : memref<512x64xbf16, #tpu.memory_space<vmem>>, vector<32x64xbf16>
    %cst_31 = arith.constant dense<0.000000e+00> : vector<89x64xf32>
    %28 = tpu.matmul %26, %27, %cst_31 {dimension_numbers = #tpu.dot_dimension_numbers<[1], [0], [0], [1], [0, 0, 1, 1], [], []>} : vector<89x32xbf16>, vector<32x64xbf16>, vector<89x64xf32> -> vector<89x64xf32>
    %c0_32 = arith.constant 0 : index
    %c0_33 = arith.constant 0 : index
    %29 = vector.load %arg10[%c0_32, %c0_33] : memref<89x64xf32, #tpu.memory_space<vmem>>, vector<89x64xf32>
    %30 = arith.addf %29, %28 : vector<89x64xf32>
    %c0_34 = arith.constant 0 : index
    %c0_35 = arith.constant 0 : index
    %31 = vector.load %arg10[%c0_34, %c0_35] : memref<89x64xf32, #tpu.memory_space<vmem>>, vector<89x64xf32>
    tpu.vector_store %arg10[%c0_34, %c0_35], %30 {strides = array<i32>} : memref<89x64xf32, #tpu.memory_space<vmem>>, vector<89x64xf32>,
    %c200 = arith.constant 200 : index
    %c0_36 = arith.constant 0 : index
    %32 = vector.load %arg9[%c200, %c0_36] : memref<400x32xbf16, #tpu.memory_space<vmem>>, vector<89x32xbf16>
    %c128 = arith.constant 128 : index
    %c0_37 = arith.constant 0 : index
    %33 = vector.load %arg4[%c128, %c0_37] : memref<512x64xbf16, #tpu.memory_space<vmem>>, vector<32x64xbf16>
    %cst_38 = arith.constant dense<0.000000e+00> : vector<89x64xf32>
    %34 = tpu.matmul %32, %33, %cst_38 {dimension_numbers = #tpu.dot_dimension_numbers<[1], [0], [0], [1], [0, 0, 1, 1], [], []>} : vector<89x32xbf16>, vector<32x64xbf16>, vector<89x64xf32> -> vector<89x64xf32>
    %c0_39 = arith.constant 0 : index
    %c0_40 = arith.constant 0 : index
    %35 = vector.load %arg10[%c0_39, %c0_40] : memref<89x64xf32, #tpu.memory_space<vmem>>, vector<89x64xf32>
    %36 = arith.addf %35, %34 : vector<89x64xf32>
    %c0_41 = arith.constant 0 : index
    %c0_42 = arith.constant 0 : index
    %37 = vector.load %arg10[%c0_41, %c0_42] : memref<89x64xf32, #tpu.memory_space<vmem>>, vector<89x64xf32>
    tpu.vector_store %arg10[%c0_41, %c0_42], %36 {strides = array<i32>} : memref<89x64xf32, #tpu.memory_space<vmem>>, vector<89x64xf32>,
    %c300 = arith.constant 300 : index
    %c0_43 = arith.constant 0 : index
    %38 = vector.load %arg9[%c300, %c0_43] : memref<400x32xbf16, #tpu.memory_space<vmem>>, vector<89x32xbf16>
    %c160 = arith.constant 160 : index
    %c0_44 = arith.constant 0 : index
    %39 = vector.load %arg4[%c160, %c0_44] : memref<512x64xbf16, #tpu.memory_space<vmem>>, vector<32x64xbf16>
    %cst_45 = arith.constant dense<0.000000e+00> : vector<89x64xf32>
    %40 = tpu.matmul %38, %39, %cst_45 {dimension_numbers = #tpu.dot_dimension_numbers<[1], [0], [0], [1], [0, 0, 1, 1], [], []>} : vector<89x32xbf16>, vector<32x64xbf16>, vector<89x64xf32> -> vector<89x64xf32>
    %c0_46 = arith.constant 0 : index
    %c0_47 = arith.constant 0 : index
    %41 = vector.load %arg10[%c0_46, %c0_47] : memref<89x64xf32, #tpu.memory_space<vmem>>, vector<89x64xf32>
    %42 = arith.addf %41, %40 : vector<89x64xf32>
    %c0_48 = arith.constant 0 : index
    %c0_49 = arith.constant 0 : index
    %43 = vector.load %arg10[%c0_48, %c0_49] : memref<89x64xf32, #tpu.memory_space<vmem>>, vector<89x64xf32>
    tpu.vector_store %arg10[%c0_48, %c0_49], %42 {strides = array<i32>} : memref<89x64xf32, #tpu.memory_space<vmem>>, vector<89x64xf32>,
    %c201 = arith.constant 201 : index
    %c0_50 = arith.constant 0 : index
    %44 = vector.load %arg9[%c201, %c0_50] : memref<400x32xbf16, #tpu.memory_space<vmem>>, vector<89x32xbf16>
    %c192 = arith.constant 192 : index
    %c0_51 = arith.constant 0 : index
    %45 = vector.load %arg4[%c192, %c0_51] : memref<512x64xbf16, #tpu.memory_space<vmem>>, vector<32x64xbf16>
    %cst_52 = arith.constant dense<0.000000e+00> : vector<89x64xf32>
    %46 = tpu.matmul %44, %45, %cst_52 {dimension_numbers = #tpu.dot_dimension_numbers<[1], [0], [0], [1], [0, 0, 1, 1], [], []>} : vector<89x32xbf16>, vector<32x64xbf16>, vector<89x64xf32> -> vector<89x64xf32>
    %c0_53 = arith.constant 0 : index
    %c0_54 = arith.constant 0 : index
    %47 = vector.load %arg10[%c0_53, %c0_54] : memref<89x64xf32, #tpu.memory_space<vmem>>, vector<89x64xf32>
    %48 = arith.addf %47, %46 : vector<89x64xf32>
    %c0_55 = arith.constant 0 : index
    %c0_56 = arith.constant 0 : index
    %49 = vector.load %arg10[%c0_55, %c0_56] : memref<89x64xf32, #tpu.memory_space<vmem>>, vector<89x64xf32>
    tpu.vector_store %arg10[%c0_55, %c0_56], %48 {strides = array<i32>} : memref<89x64xf32, #tpu.memory_space<vmem>>, vector<89x64xf32>,
    %c301 = arith.constant 301 : index
    %c0_57 = arith.constant 0 : index
    %50 = vector.load %arg9[%c301, %c0_57] : memref<400x32xbf16, #tpu.memory_space<vmem>>, vector<89x32xbf16>
    %c224 = arith.constant 224 : index
    %c0_58 = arith.constant 0 : index
    %51 = vector.load %arg4[%c224, %c0_58] : memref<512x64xbf16, #tpu.memory_space<vmem>>, vector<32x64xbf16>
    %cst_59 = arith.constant dense<0.000000e+00> : vector<89x64xf32>
    %52 = tpu.matmul %50, %51, %cst_59 {dimension_numbers = #tpu.dot_dimension_numbers<[1], [0], [0], [1], [0, 0, 1, 1], [], []>} : vector<89x32xbf16>, vector<32x64xbf16>, vector<89x64xf32> -> vector<89x64xf32>
    %c0_60 = arith.constant 0 : index
    %c0_61 = arith.constant 0 : index
    %53 = vector.load %arg10[%c0_60, %c0_61] : memref<89x64xf32, #tpu.memory_space<vmem>>, vector<89x64xf32>
    %54 = arith.addf %53, %52 : vector<89x64xf32>
    %c0_62 = arith.constant 0 : index
    %c0_63 = arith.constant 0 : index
    %55 = vector.load %arg10[%c0_62, %c0_63] : memref<89x64xf32, #tpu.memory_space<vmem>>, vector<89x64xf32>
    tpu.vector_store %arg10[%c0_62, %c0_63], %54 {strides = array<i32>} : memref<89x64xf32, #tpu.memory_space<vmem>>, vector<89x64xf32>,
    %c10 = arith.constant 10 : index
    %c0_64 = arith.constant 0 : index
    %56 = vector.load %arg9[%c10, %c0_64] : memref<400x32xbf16, #tpu.memory_space<vmem>>, vector<89x32xbf16>
    %c256 = arith.constant 256 : index
    %c0_65 = arith.constant 0 : index
    %57 = vector.load %arg4[%c256, %c0_65] : memref<512x64xbf16, #tpu.memory_space<vmem>>, vector<32x64xbf16>
    %cst_66 = arith.constant dense<0.000000e+00> : vector<89x64xf32>
    %58 = tpu.matmul %56, %57, %cst_66 {dimension_numbers = #tpu.dot_dimension_numbers<[1], [0], [0], [1], [0, 0, 1, 1], [], []>} : vector<89x32xbf16>, vector<32x64xbf16>, vector<89x64xf32> -> vector<89x64xf32>
    %c0_67 = arith.constant 0 : index
    %c0_68 = arith.constant 0 : index
    %59 = vector.load %arg10[%c0_67, %c0_68] : memref<89x64xf32, #tpu.memory_space<vmem>>, vector<89x64xf32>
    %60 = arith.addf %59, %58 : vector<89x64xf32>
    %c0_69 = arith.constant 0 : index
    %c0_70 = arith.constant 0 : index
    %61 = vector.load %arg10[%c0_69, %c0_70] : memref<89x64xf32, #tpu.memory_space<vmem>>, vector<89x64xf32>
    tpu.vector_store %arg10[%c0_69, %c0_70], %60 {strides = array<i32>} : memref<89x64xf32, #tpu.memory_space<vmem>>, vector<89x64xf32>,
    %c110 = arith.constant 110 : index
    %c0_71 = arith.constant 0 : index
    %62 = vector.load %arg9[%c110, %c0_71] : memref<400x32xbf16, #tpu.memory_space<vmem>>, vector<89x32xbf16>
    %c288 = arith.constant 288 : index
    %c0_72 = arith.constant 0 : index
    %63 = vector.load %arg4[%c288, %c0_72] : memref<512x64xbf16, #tpu.memory_space<vmem>>, vector<32x64xbf16>
    %cst_73 = arith.constant dense<0.000000e+00> : vector<89x64xf32>
    %64 = tpu.matmul %62, %63, %cst_73 {dimension_numbers = #tpu.dot_dimension_numbers<[1], [0], [0], [1], [0, 0, 1, 1], [], []>} : vector<89x32xbf16>, vector<32x64xbf16>, vector<89x64xf32> -> vector<89x64xf32>
    %c0_74 = arith.constant 0 : index
    %c0_75 = arith.constant 0 : index
    %65 = vector.load %arg10[%c0_74, %c0_75] : memref<89x64xf32, #tpu.memory_space<vmem>>, vector<89x64xf32>
    %66 = arith.addf %65, %64 : vector<89x64xf32>
    %c0_76 = arith.constant 0 : index
    %c0_77 = arith.constant 0 : index
    %67 = vector.load %arg10[%c0_76, %c0_77] : memref<89x64xf32, #tpu.memory_space<vmem>>, vector<89x64xf32>
    tpu.vector_store %arg10[%c0_76, %c0_77], %66 {strides = array<i32>} : memref<89x64xf32, #tpu.memory_space<vmem>>, vector<89x64xf32>,
    %c11 = arith.constant 11 : index
    %c0_78 = arith.constant 0 : index
    %68 = vector.load %arg9[%c11, %c0_78] : memref<400x32xbf16, #tpu.memory_space<vmem>>, vector<89x32xbf16>
    %c320 = arith.constant 320 : index
    %c0_79 = arith.constant 0 : index
    %69 = vector.load %arg4[%c320, %c0_79] : memref<512x64xbf16, #tpu.memory_space<vmem>>, vector<32x64xbf16>
    %cst_80 = arith.constant dense<0.000000e+00> : vector<89x64xf32>
    %70 = tpu.matmul %68, %69, %cst_80 {dimension_numbers = #tpu.dot_dimension_numbers<[1], [0], [0], [1], [0, 0, 1, 1], [], []>} : vector<89x32xbf16>, vector<32x64xbf16>, vector<89x64xf32> -> vector<89x64xf32>
    %c0_81 = arith.constant 0 : index
    %c0_82 = arith.constant 0 : index
    %71 = vector.load %arg10[%c0_81, %c0_82] : memref<89x64xf32, #tpu.memory_space<vmem>>, vector<89x64xf32>
    %72 = arith.addf %71, %70 : vector<89x64xf32>
    %c0_83 = arith.constant 0 : index
    %c0_84 = arith.constant 0 : index
    %73 = vector.load %arg10[%c0_83, %c0_84] : memref<89x64xf32, #tpu.memory_space<vmem>>, vector<89x64xf32>
    tpu.vector_store %arg10[%c0_83, %c0_84], %72 {strides = array<i32>} : memref<89x64xf32, #tpu.memory_space<vmem>>, vector<89x64xf32>,
    %c111 = arith.constant 111 : index
    %c0_85 = arith.constant 0 : index
    %74 = vector.load %arg9[%c111, %c0_85] : memref<400x32xbf16, #tpu.memory_space<vmem>>, vector<89x32xbf16>
    %c352 = arith.constant 352 : index
    %c0_86 = arith.constant 0 : index
    %75 = vector.load %arg4[%c352, %c0_86] : memref<512x64xbf16, #tpu.memory_space<vmem>>, vector<32x64xbf16>
    %cst_87 = arith.constant dense<0.000000e+00> : vector<89x64xf32>
    %76 = tpu.matmul %74, %75, %cst_87 {dimension_numbers = #tpu.dot_dimension_numbers<[1], [0], [0], [1], [0, 0, 1, 1], [], []>} : vector<89x32xbf16>, vector<32x64xbf16>, vector<89x64xf32> -> vector<89x64xf32>
    %c0_88 = arith.constant 0 : index
    %c0_89 = arith.constant 0 : index
    %77 = vector.load %arg10[%c0_88, %c0_89] : memref<89x64xf32, #tpu.memory_space<vmem>>, vector<89x64xf32>
    %78 = arith.addf %77, %76 : vector<89x64xf32>
    %c0_90 = arith.constant 0 : index
    %c0_91 = arith.constant 0 : index
    %79 = vector.load %arg10[%c0_90, %c0_91] : memref<89x64xf32, #tpu.memory_space<vmem>>, vector<89x64xf32>
    tpu.vector_store %arg10[%c0_90, %c0_91], %78 {strides = array<i32>} : memref<89x64xf32, #tpu.memory_space<vmem>>, vector<89x64xf32>,
    %c210 = arith.constant 210 : index
    %c0_92 = arith.constant 0 : index
    %80 = vector.load %arg9[%c210, %c0_92] : memref<400x32xbf16, #tpu.memory_space<vmem>>, vector<89x32xbf16>
    %c384 = arith.constant 384 : index
    %c0_93 = arith.constant 0 : index
    %81 = vector.load %arg4[%c384, %c0_93] : memref<512x64xbf16, #tpu.memory_space<vmem>>, vector<32x64xbf16>
    %cst_94 = arith.constant dense<0.000000e+00> : vector<89x64xf32>
    %82 = tpu.matmul %80, %81, %cst_94 {dimension_numbers = #tpu.dot_dimension_numbers<[1], [0], [0], [1], [0, 0, 1, 1], [], []>} : vector<89x32xbf16>, vector<32x64xbf16>, vector<89x64xf32> -> vector<89x64xf32>
    %c0_95 = arith.constant 0 : index
    %c0_96 = arith.constant 0 : index
    %83 = vector.load %arg10[%c0_95, %c0_96] : memref<89x64xf32, #tpu.memory_space<vmem>>, vector<89x64xf32>
    %84 = arith.addf %83, %82 : vector<89x64xf32>
    %c0_97 = arith.constant 0 : index
    %c0_98 = arith.constant 0 : index
    %85 = vector.load %arg10[%c0_97, %c0_98] : memref<89x64xf32, #tpu.memory_space<vmem>>, vector<89x64xf32>
    tpu.vector_store %arg10[%c0_97, %c0_98], %84 {strides = array<i32>} : memref<89x64xf32, #tpu.memory_space<vmem>>, vector<89x64xf32>,
    %c310 = arith.constant 310 : index
    %c0_99 = arith.constant 0 : index
    %86 = vector.load %arg9[%c310, %c0_99] : memref<400x32xbf16, #tpu.memory_space<vmem>>, vector<89x32xbf16>
    %c416 = arith.constant 416 : index
    %c0_100 = arith.constant 0 : index
    %87 = vector.load %arg4[%c416, %c0_100] : memref<512x64xbf16, #tpu.memory_space<vmem>>, vector<32x64xbf16>
    %cst_101 = arith.constant dense<0.000000e+00> : vector<89x64xf32>
    %88 = tpu.matmul %86, %87, %cst_101 {dimension_numbers = #tpu.dot_dimension_numbers<[1], [0], [0], [1], [0, 0, 1, 1], [], []>} : vector<89x32xbf16>, vector<32x64xbf16>, vector<89x64xf32> -> vector<89x64xf32>
    %c0_102 = arith.constant 0 : index
    %c0_103 = arith.constant 0 : index
    %89 = vector.load %arg10[%c0_102, %c0_103] : memref<89x64xf32, #tpu.memory_space<vmem>>, vector<89x64xf32>
    %90 = arith.addf %89, %88 : vector<89x64xf32>
    %c0_104 = arith.constant 0 : index
    %c0_105 = arith.constant 0 : index
    %91 = vector.load %arg10[%c0_104, %c0_105] : memref<89x64xf32, #tpu.memory_space<vmem>>, vector<89x64xf32>
    tpu.vector_store %arg10[%c0_104, %c0_105], %90 {strides = array<i32>} : memref<89x64xf32, #tpu.memory_space<vmem>>, vector<89x64xf32>,
    %c211 = arith.constant 211 : index
    %c0_106 = arith.constant 0 : index
    %92 = vector.load %arg9[%c211, %c0_106] : memref<400x32xbf16, #tpu.memory_space<vmem>>, vector<89x32xbf16>
    %c448 = arith.constant 448 : index
    %c0_107 = arith.constant 0 : index
    %93 = vector.load %arg4[%c448, %c0_107] : memref<512x64xbf16, #tpu.memory_space<vmem>>, vector<32x64xbf16>
    %cst_108 = arith.constant dense<0.000000e+00> : vector<89x64xf32>
    %94 = tpu.matmul %92, %93, %cst_108 {dimension_numbers = #tpu.dot_dimension_numbers<[1], [0], [0], [1], [0, 0, 1, 1], [], []>} : vector<89x32xbf16>, vector<32x64xbf16>, vector<89x64xf32> -> vector<89x64xf32>
    %c0_109 = arith.constant 0 : index
    %c0_110 = arith.constant 0 : index
    %95 = vector.load %arg10[%c0_109, %c0_110] : memref<89x64xf32, #tpu.memory_space<vmem>>, vector<89x64xf32>
    %96 = arith.addf %95, %94 : vector<89x64xf32>
    %c0_111 = arith.constant 0 : index
    %c0_112 = arith.constant 0 : index
    %97 = vector.load %arg10[%c0_111, %c0_112] : memref<89x64xf32, #tpu.memory_space<vmem>>, vector<89x64xf32>
    tpu.vector_store %arg10[%c0_111, %c0_112], %96 {strides = array<i32>} : memref<89x64xf32, #tpu.memory_space<vmem>>, vector<89x64xf32>,
    %c311 = arith.constant 311 : index
    %c0_113 = arith.constant 0 : index
    %98 = vector.load %arg9[%c311, %c0_113] : memref<400x32xbf16, #tpu.memory_space<vmem>>, vector<89x32xbf16>
    %c480 = arith.constant 480 : index
    %c0_114 = arith.constant 0 : index
    %99 = vector.load %arg4[%c480, %c0_114] : memref<512x64xbf16, #tpu.memory_space<vmem>>, vector<32x64xbf16>
    %cst_115 = arith.constant dense<0.000000e+00> : vector<89x64xf32>
    %100 = tpu.matmul %98, %99, %cst_115 {dimension_numbers = #tpu.dot_dimension_numbers<[1], [0], [0], [1], [0, 0, 1, 1], [], []>} : vector<89x32xbf16>, vector<32x64xbf16>, vector<89x64xf32> -> vector<89x64xf32>
    %c0_116 = arith.constant 0 : index
    %c0_117 = arith.constant 0 : index
    %101 = vector.load %arg10[%c0_116, %c0_117] : memref<89x64xf32, #tpu.memory_space<vmem>>, vector<89x64xf32>
    %102 = arith.addf %101, %100 : vector<89x64xf32>
    %c0_118 = arith.constant 0 : index
    %c0_119 = arith.constant 0 : index
    %103 = vector.load %arg10[%c0_118, %c0_119] : memref<89x64xf32, #tpu.memory_space<vmem>>, vector<89x64xf32>
    tpu.vector_store %arg10[%c0_118, %c0_119], %102 {strides = array<i32>} : memref<89x64xf32, #tpu.memory_space<vmem>>, vector<89x64xf32>,
    %c0_120 = arith.constant 0 : index
    %c0_121 = arith.constant 0 : index
    %104 = vector.load %arg10[%c0_120, %c0_121] : memref<89x64xf32, #tpu.memory_space<vmem>>, vector<89x64xf32>
    %c0_122 = arith.constant 0 : index
    %c0_123 = arith.constant 0 : index
    %105 = vector.load %arg5[%c0_122, %c0_123] : memref<1x64xf32, #tpu.memory_space<vmem>>, vector<1x64xf32>
    %106 = vector.broadcast %105 : vector<1x64xf32> to vector<89x64xf32>
    %107 = arith.addf %104, %106 : vector<89x64xf32>
    %cst_124 = arith.constant 0.000000e+00 : f32
    %108 = vector.broadcast %cst_124 : f32 to vector<89x64xf32>
    %109 = arith.maximumf %107, %108 : vector<89x64xf32>
    %110 = arith.truncf %109 : vector<89x64xf32> to vector<89x64xbf16>
    %c0_125 = arith.constant 0 : index
    %c0_126 = arith.constant 0 : index
    %111 = vector.load %arg11[%c0_125, %c0_126] : memref<89x64xbf16, #tpu.memory_space<vmem>>, vector<89x64xbf16>
    tpu.vector_store %arg11[%c0_125, %c0_126], %110 {strides = array<i32>} : memref<89x64xbf16, #tpu.memory_space<vmem>>, vector<89x64xbf16>,
    %c0_127 = arith.constant 0 : index
    %c0_128 = arith.constant 0 : index
    %112 = vector.load %arg11[%c0_127, %c0_128] : memref<89x64xbf16, #tpu.memory_space<vmem>>, vector<67x64xbf16>
    %c0_129 = arith.constant 0 : index
    %c0_130 = arith.constant 0 : index
    %113 = vector.load %arg6[%c0_129, %c0_130] : memref<576x64xbf16, #tpu.memory_space<vmem>>, vector<64x64xbf16>
    %cst_131 = arith.constant dense<0.000000e+00> : vector<67x64xf32>
    %114 = tpu.matmul %112, %113, %cst_131 {dimension_numbers = #tpu.dot_dimension_numbers<[1], [0], [0], [1], [0, 0, 1, 1], [], []>} : vector<67x64xbf16>, vector<64x64xbf16>, vector<67x64xf32> -> vector<67x64xf32>
    %c0_132 = arith.constant 0 : index
    %c0_133 = arith.constant 0 : index
    %115 = vector.load %arg12[%c0_132, %c0_133] : memref<67x64xf32, #tpu.memory_space<vmem>>, vector<67x64xf32>
    tpu.vector_store %arg12[%c0_132, %c0_133], %114 {strides = array<i32>} : memref<67x64xf32, #tpu.memory_space<vmem>>, vector<67x64xf32>,
    %c1_134 = arith.constant 1 : index
    %c0_135 = arith.constant 0 : index
    %116 = vector.load %arg11[%c1_134, %c0_135] : memref<89x64xbf16, #tpu.memory_space<vmem>>, vector<67x64xbf16>
    %c64_136 = arith.constant 64 : index
    %c0_137 = arith.constant 0 : index
    %117 = vector.load %arg6[%c64_136, %c0_137] : memref<576x64xbf16, #tpu.memory_space<vmem>>, vector<64x64xbf16>
    %cst_138 = arith.constant dense<0.000000e+00> : vector<67x64xf32>
    %118 = tpu.matmul %116, %117, %cst_138 {dimension_numbers = #tpu.dot_dimension_numbers<[1], [0], [0], [1], [0, 0, 1, 1], [], []>} : vector<67x64xbf16>, vector<64x64xbf16>, vector<67x64xf32> -> vector<67x64xf32>
    %c0_139 = arith.constant 0 : index
    %c0_140 = arith.constant 0 : index
    %119 = vector.load %arg12[%c0_139, %c0_140] : memref<67x64xf32, #tpu.memory_space<vmem>>, vector<67x64xf32>
    %120 = arith.addf %119, %118 : vector<67x64xf32>
    %c0_141 = arith.constant 0 : index
    %c0_142 = arith.constant 0 : index
    %121 = vector.load %arg12[%c0_141, %c0_142] : memref<67x64xf32, #tpu.memory_space<vmem>>, vector<67x64xf32>
    tpu.vector_store %arg12[%c0_141, %c0_142], %120 {strides = array<i32>} : memref<67x64xf32, #tpu.memory_space<vmem>>, vector<67x64xf32>,
    %c2 = arith.constant 2 : index
    %c0_143 = arith.constant 0 : index
    %122 = vector.load %arg11[%c2, %c0_143] : memref<89x64xbf16, #tpu.memory_space<vmem>>, vector<67x64xbf16>
    %c128_144 = arith.constant 128 : index
    %c0_145 = arith.constant 0 : index
    %123 = vector.load %arg6[%c128_144, %c0_145] : memref<576x64xbf16, #tpu.memory_space<vmem>>, vector<64x64xbf16>
    %cst_146 = arith.constant dense<0.000000e+00> : vector<67x64xf32>
    %124 = tpu.matmul %122, %123, %cst_146 {dimension_numbers = #tpu.dot_dimension_numbers<[1], [0], [0], [1], [0, 0, 1, 1], [], []>} : vector<67x64xbf16>, vector<64x64xbf16>, vector<67x64xf32> -> vector<67x64xf32>
    %c0_147 = arith.constant 0 : index
    %c0_148 = arith.constant 0 : index
    %125 = vector.load %arg12[%c0_147, %c0_148] : memref<67x64xf32, #tpu.memory_space<vmem>>, vector<67x64xf32>
    %126 = arith.addf %125, %124 : vector<67x64xf32>
    %c0_149 = arith.constant 0 : index
    %c0_150 = arith.constant 0 : index
    %127 = vector.load %arg12[%c0_149, %c0_150] : memref<67x64xf32, #tpu.memory_space<vmem>>, vector<67x64xf32>
    tpu.vector_store %arg12[%c0_149, %c0_150], %126 {strides = array<i32>} : memref<67x64xf32, #tpu.memory_space<vmem>>, vector<67x64xf32>,
    %c10_151 = arith.constant 10 : index
    %c0_152 = arith.constant 0 : index
    %128 = vector.load %arg11[%c10_151, %c0_152] : memref<89x64xbf16, #tpu.memory_space<vmem>>, vector<67x64xbf16>
    %c192_153 = arith.constant 192 : index
    %c0_154 = arith.constant 0 : index
    %129 = vector.load %arg6[%c192_153, %c0_154] : memref<576x64xbf16, #tpu.memory_space<vmem>>, vector<64x64xbf16>
    %cst_155 = arith.constant dense<0.000000e+00> : vector<67x64xf32>
    %130 = tpu.matmul %128, %129, %cst_155 {dimension_numbers = #tpu.dot_dimension_numbers<[1], [0], [0], [1], [0, 0, 1, 1], [], []>} : vector<67x64xbf16>, vector<64x64xbf16>, vector<67x64xf32> -> vector<67x64xf32>
    %c0_156 = arith.constant 0 : index
    %c0_157 = arith.constant 0 : index
    %131 = vector.load %arg12[%c0_156, %c0_157] : memref<67x64xf32, #tpu.memory_space<vmem>>, vector<67x64xf32>
    %132 = arith.addf %131, %130 : vector<67x64xf32>
    %c0_158 = arith.constant 0 : index
    %c0_159 = arith.constant 0 : index
    %133 = vector.load %arg12[%c0_158, %c0_159] : memref<67x64xf32, #tpu.memory_space<vmem>>, vector<67x64xf32>
    tpu.vector_store %arg12[%c0_158, %c0_159], %132 {strides = array<i32>} : memref<67x64xf32, #tpu.memory_space<vmem>>, vector<67x64xf32>,
    %c11_160 = arith.constant 11 : index
    %c0_161 = arith.constant 0 : index
    %134 = vector.load %arg11[%c11_160, %c0_161] : memref<89x64xbf16, #tpu.memory_space<vmem>>, vector<67x64xbf16>
    %c256_162 = arith.constant 256 : index
    %c0_163 = arith.constant 0 : index
    %135 = vector.load %arg6[%c256_162, %c0_163] : memref<576x64xbf16, #tpu.memory_space<vmem>>, vector<64x64xbf16>
    %cst_164 = arith.constant dense<0.000000e+00> : vector<67x64xf32>
    %136 = tpu.matmul %134, %135, %cst_164 {dimension_numbers = #tpu.dot_dimension_numbers<[1], [0], [0], [1], [0, 0, 1, 1], [], []>} : vector<67x64xbf16>, vector<64x64xbf16>, vector<67x64xf32> -> vector<67x64xf32>
    %c0_165 = arith.constant 0 : index
    %c0_166 = arith.constant 0 : index
    %137 = vector.load %arg12[%c0_165, %c0_166] : memref<67x64xf32, #tpu.memory_space<vmem>>, vector<67x64xf32>
    %138 = arith.addf %137, %136 : vector<67x64xf32>
    %c0_167 = arith.constant 0 : index
    %c0_168 = arith.constant 0 : index
    %139 = vector.load %arg12[%c0_167, %c0_168] : memref<67x64xf32, #tpu.memory_space<vmem>>, vector<67x64xf32>
    tpu.vector_store %arg12[%c0_167, %c0_168], %138 {strides = array<i32>} : memref<67x64xf32, #tpu.memory_space<vmem>>, vector<67x64xf32>,
    %c12 = arith.constant 12 : index
    %c0_169 = arith.constant 0 : index
    %140 = vector.load %arg11[%c12, %c0_169] : memref<89x64xbf16, #tpu.memory_space<vmem>>, vector<67x64xbf16>
    %c320_170 = arith.constant 320 : index
    %c0_171 = arith.constant 0 : index
    %141 = vector.load %arg6[%c320_170, %c0_171] : memref<576x64xbf16, #tpu.memory_space<vmem>>, vector<64x64xbf16>
    %cst_172 = arith.constant dense<0.000000e+00> : vector<67x64xf32>
    %142 = tpu.matmul %140, %141, %cst_172 {dimension_numbers = #tpu.dot_dimension_numbers<[1], [0], [0], [1], [0, 0, 1, 1], [], []>} : vector<67x64xbf16>, vector<64x64xbf16>, vector<67x64xf32> -> vector<67x64xf32>
    %c0_173 = arith.constant 0 : index
    %c0_174 = arith.constant 0 : index
    %143 = vector.load %arg12[%c0_173, %c0_174] : memref<67x64xf32, #tpu.memory_space<vmem>>, vector<67x64xf32>
    %144 = arith.addf %143, %142 : vector<67x64xf32>
    %c0_175 = arith.constant 0 : index
    %c0_176 = arith.constant 0 : index
    %145 = vector.load %arg12[%c0_175, %c0_176] : memref<67x64xf32, #tpu.memory_space<vmem>>, vector<67x64xf32>
    tpu.vector_store %arg12[%c0_175, %c0_176], %144 {strides = array<i32>} : memref<67x64xf32, #tpu.memory_space<vmem>>, vector<67x64xf32>,
    %c20 = arith.constant 20 : index
    %c0_177 = arith.constant 0 : index
    %146 = vector.load %arg11[%c20, %c0_177] : memref<89x64xbf16, #tpu.memory_space<vmem>>, vector<67x64xbf16>
    %c384_178 = arith.constant 384 : index
    %c0_179 = arith.constant 0 : index
    %147 = vector.load %arg6[%c384_178, %c0_179] : memref<576x64xbf16, #tpu.memory_space<vmem>>, vector<64x64xbf16>
    %cst_180 = arith.constant dense<0.000000e+00> : vector<67x64xf32>
    %148 = tpu.matmul %146, %147, %cst_180 {dimension_numbers = #tpu.dot_dimension_numbers<[1], [0], [0], [1], [0, 0, 1, 1], [], []>} : vector<67x64xbf16>, vector<64x64xbf16>, vector<67x64xf32> -> vector<67x64xf32>
    %c0_181 = arith.constant 0 : index
    %c0_182 = arith.constant 0 : index
    %149 = vector.load %arg12[%c0_181, %c0_182] : memref<67x64xf32, #tpu.memory_space<vmem>>, vector<67x64xf32>
    %150 = arith.addf %149, %148 : vector<67x64xf32>
    %c0_183 = arith.constant 0 : index
    %c0_184 = arith.constant 0 : index
    %151 = vector.load %arg12[%c0_183, %c0_184] : memref<67x64xf32, #tpu.memory_space<vmem>>, vector<67x64xf32>
    tpu.vector_store %arg12[%c0_183, %c0_184], %150 {strides = array<i32>} : memref<67x64xf32, #tpu.memory_space<vmem>>, vector<67x64xf32>,
    %c21 = arith.constant 21 : index
    %c0_185 = arith.constant 0 : index
    %152 = vector.load %arg11[%c21, %c0_185] : memref<89x64xbf16, #tpu.memory_space<vmem>>, vector<67x64xbf16>
    %c448_186 = arith.constant 448 : index
    %c0_187 = arith.constant 0 : index
    %153 = vector.load %arg6[%c448_186, %c0_187] : memref<576x64xbf16, #tpu.memory_space<vmem>>, vector<64x64xbf16>
    %cst_188 = arith.constant dense<0.000000e+00> : vector<67x64xf32>
    %154 = tpu.matmul %152, %153, %cst_188 {dimension_numbers = #tpu.dot_dimension_numbers<[1], [0], [0], [1], [0, 0, 1, 1], [], []>} : vector<67x64xbf16>, vector<64x64xbf16>, vector<67x64xf32> -> vector<67x64xf32>
    %c0_189 = arith.constant 0 : index
    %c0_190 = arith.constant 0 : index
    %155 = vector.load %arg12[%c0_189, %c0_190] : memref<67x64xf32, #tpu.memory_space<vmem>>, vector<67x64xf32>
    %156 = arith.addf %155, %154 : vector<67x64xf32>
    %c0_191 = arith.constant 0 : index
    %c0_192 = arith.constant 0 : index
    %157 = vector.load %arg12[%c0_191, %c0_192] : memref<67x64xf32, #tpu.memory_space<vmem>>, vector<67x64xf32>
    tpu.vector_store %arg12[%c0_191, %c0_192], %156 {strides = array<i32>} : memref<67x64xf32, #tpu.memory_space<vmem>>, vector<67x64xf32>,
    %c22 = arith.constant 22 : index
    %c0_193 = arith.constant 0 : index
    %158 = vector.load %arg11[%c22, %c0_193] : memref<89x64xbf16, #tpu.memory_space<vmem>>, vector<67x64xbf16>
    %c512 = arith.constant 512 : index
    %c0_194 = arith.constant 0 : index
    %159 = vector.load %arg6[%c512, %c0_194] : memref<576x64xbf16, #tpu.memory_space<vmem>>, vector<64x64xbf16>
    %cst_195 = arith.constant dense<0.000000e+00> : vector<67x64xf32>
    %160 = tpu.matmul %158, %159, %cst_195 {dimension_numbers = #tpu.dot_dimension_numbers<[1], [0], [0], [1], [0, 0, 1, 1], [], []>} : vector<67x64xbf16>, vector<64x64xbf16>, vector<67x64xf32> -> vector<67x64xf32>
    %c0_196 = arith.constant 0 : index
    %c0_197 = arith.constant 0 : index
    %161 = vector.load %arg12[%c0_196, %c0_197] : memref<67x64xf32, #tpu.memory_space<vmem>>, vector<67x64xf32>
    %162 = arith.addf %161, %160 : vector<67x64xf32>
    %c0_198 = arith.constant 0 : index
    %c0_199 = arith.constant 0 : index
    %163 = vector.load %arg12[%c0_198, %c0_199] : memref<67x64xf32, #tpu.memory_space<vmem>>, vector<67x64xf32>
    tpu.vector_store %arg12[%c0_198, %c0_199], %162 {strides = array<i32>} : memref<67x64xf32, #tpu.memory_space<vmem>>, vector<67x64xf32>,
    %cst_200 = arith.constant 0.000000e+00 : bf16
    %164 = vector.broadcast %cst_200 : bf16 to vector<7x64xbf16>
    %c0_201 = arith.constant 0 : index
    %c0_202 = arith.constant 0 : index
    %165 = vector.load %arg12[%c0_201, %c0_202] : memref<67x64xf32, #tpu.memory_space<vmem>>, vector<7x64xf32>
    %c0_203 = arith.constant 0 : index
    %c0_204 = arith.constant 0 : index
    %166 = vector.load %arg7[%c0_203, %c0_204] : memref<1x64xf32, #tpu.memory_space<vmem>>, vector<1x64xf32>
    %167 = vector.broadcast %166 : vector<1x64xf32> to vector<7x64xf32>
    %168 = arith.addf %165, %167 : vector<7x64xf32>
    %cst_205 = arith.constant 0.000000e+00 : f32
    %169 = vector.broadcast %cst_205 : f32 to vector<7x64xf32>
    %170 = arith.maximumf %168, %169 : vector<7x64xf32>
    %171 = arith.truncf %170 : vector<7x64xf32> to vector<7x64xbf16>
    %c0_206 = arith.constant 0 : index
    %c0_207 = arith.constant 0 : index
    %172 = vector.load %arg8[%c0_206, %c0_207] : memref<56x64xbf16, #tpu.memory_space<vmem>>, vector<7x64xbf16>
    tpu.vector_store %arg8[%c0_206, %c0_207], %171 {strides = array<i32>} : memref<56x64xbf16, #tpu.memory_space<vmem>>, vector<7x64xbf16>,
    %c10_208 = arith.constant 10 : index
    %c0_209 = arith.constant 0 : index
    %173 = vector.load %arg12[%c10_208, %c0_209] : memref<67x64xf32, #tpu.memory_space<vmem>>, vector<7x64xf32>
    %c0_210 = arith.constant 0 : index
    %c0_211 = arith.constant 0 : index
    %174 = vector.load %arg7[%c0_210, %c0_211] : memref<1x64xf32, #tpu.memory_space<vmem>>, vector<1x64xf32>
    %175 = vector.broadcast %174 : vector<1x64xf32> to vector<7x64xf32>
    %176 = arith.addf %173, %175 : vector<7x64xf32>
    %cst_212 = arith.constant 0.000000e+00 : f32
    %177 = vector.broadcast %cst_212 : f32 to vector<7x64xf32>
    %178 = arith.maximumf %176, %177 : vector<7x64xf32>
    %179 = arith.truncf %178 : vector<7x64xf32> to vector<7x64xbf16>
    %c7 = arith.constant 7 : index
    %c0_213 = arith.constant 0 : index
    %180 = vector.load %arg8[%c7, %c0_213] : memref<56x64xbf16, #tpu.memory_space<vmem>>, vector<7x64xbf16>
    tpu.vector_store %arg8[%c7, %c0_213], %179 {strides = array<i32>} : memref<56x64xbf16, #tpu.memory_space<vmem>>, vector<7x64xbf16>,
    %c20_214 = arith.constant 20 : index
    %c0_215 = arith.constant 0 : index
    %181 = vector.load %arg12[%c20_214, %c0_215] : memref<67x64xf32, #tpu.memory_space<vmem>>, vector<7x64xf32>
    %c0_216 = arith.constant 0 : index
    %c0_217 = arith.constant 0 : index
    %182 = vector.load %arg7[%c0_216, %c0_217] : memref<1x64xf32, #tpu.memory_space<vmem>>, vector<1x64xf32>
    %183 = vector.broadcast %182 : vector<1x64xf32> to vector<7x64xf32>
    %184 = arith.addf %181, %183 : vector<7x64xf32>
    %cst_218 = arith.constant 0.000000e+00 : f32
    %185 = vector.broadcast %cst_218 : f32 to vector<7x64xf32>
    %186 = arith.maximumf %184, %185 : vector<7x64xf32>
    %187 = arith.truncf %186 : vector<7x64xf32> to vector<7x64xbf16>
    %c14 = arith.constant 14 : index
    %c0_219 = arith.constant 0 : index
    %188 = vector.load %arg8[%c14, %c0_219] : memref<56x64xbf16, #tpu.memory_space<vmem>>, vector<7x64xbf16>
    tpu.vector_store %arg8[%c14, %c0_219], %187 {strides = array<i32>} : memref<56x64xbf16, #tpu.memory_space<vmem>>, vector<7x64xbf16>,
    %c30 = arith.constant 30 : index
    %c0_220 = arith.constant 0 : index
    %189 = vector.load %arg12[%c30, %c0_220] : memref<67x64xf32, #tpu.memory_space<vmem>>, vector<7x64xf32>
    %c0_221 = arith.constant 0 : index
    %c0_222 = arith.constant 0 : index
    %190 = vector.load %arg7[%c0_221, %c0_222] : memref<1x64xf32, #tpu.memory_space<vmem>>, vector<1x64xf32>
    %191 = vector.broadcast %190 : vector<1x64xf32> to vector<7x64xf32>
    %192 = arith.addf %189, %191 : vector<7x64xf32>
    %cst_223 = arith.constant 0.000000e+00 : f32
    %193 = vector.broadcast %cst_223 : f32 to vector<7x64xf32>
    %194 = arith.maximumf %192, %193 : vector<7x64xf32>
    %195 = arith.truncf %194 : vector<7x64xf32> to vector<7x64xbf16>
    %c21_224 = arith.constant 21 : index
    %c0_225 = arith.constant 0 : index
    %196 = vector.load %arg8[%c21_224, %c0_225] : memref<56x64xbf16, #tpu.memory_space<vmem>>, vector<7x64xbf16>
    tpu.vector_store %arg8[%c21_224, %c0_225], %195 {strides = array<i32>} : memref<56x64xbf16, #tpu.memory_space<vmem>>, vector<7x64xbf16>,
    %c40 = arith.constant 40 : index
    %c0_226 = arith.constant 0 : index
    %197 = vector.load %arg12[%c40, %c0_226] : memref<67x64xf32, #tpu.memory_space<vmem>>, vector<7x64xf32>
    %c0_227 = arith.constant 0 : index
    %c0_228 = arith.constant 0 : index
    %198 = vector.load %arg7[%c0_227, %c0_228] : memref<1x64xf32, #tpu.memory_space<vmem>>, vector<1x64xf32>
    %199 = vector.broadcast %198 : vector<1x64xf32> to vector<7x64xf32>
    %200 = arith.addf %197, %199 : vector<7x64xf32>
    %cst_229 = arith.constant 0.000000e+00 : f32
    %201 = vector.broadcast %cst_229 : f32 to vector<7x64xf32>
    %202 = arith.maximumf %200, %201 : vector<7x64xf32>
    %203 = arith.truncf %202 : vector<7x64xf32> to vector<7x64xbf16>
    %c28 = arith.constant 28 : index
    %c0_230 = arith.constant 0 : index
    %204 = vector.load %arg8[%c28, %c0_230] : memref<56x64xbf16, #tpu.memory_space<vmem>>, vector<7x64xbf16>
    tpu.vector_store %arg8[%c28, %c0_230], %203 {strides = array<i32>} : memref<56x64xbf16, #tpu.memory_space<vmem>>, vector<7x64xbf16>,
    %c50 = arith.constant 50 : index
    %c0_231 = arith.constant 0 : index
    %205 = vector.load %arg12[%c50, %c0_231] : memref<67x64xf32, #tpu.memory_space<vmem>>, vector<7x64xf32>
    %c0_232 = arith.constant 0 : index
    %c0_233 = arith.constant 0 : index
    %206 = vector.load %arg7[%c0_232, %c0_233] : memref<1x64xf32, #tpu.memory_space<vmem>>, vector<1x64xf32>
    %207 = vector.broadcast %206 : vector<1x64xf32> to vector<7x64xf32>
    %208 = arith.addf %205, %207 : vector<7x64xf32>
    %cst_234 = arith.constant 0.000000e+00 : f32
    %209 = vector.broadcast %cst_234 : f32 to vector<7x64xf32>
    %210 = arith.maximumf %208, %209 : vector<7x64xf32>
    %211 = arith.truncf %210 : vector<7x64xf32> to vector<7x64xbf16>
    %c35 = arith.constant 35 : index
    %c0_235 = arith.constant 0 : index
    %212 = vector.load %arg8[%c35, %c0_235] : memref<56x64xbf16, #tpu.memory_space<vmem>>, vector<7x64xbf16>
    tpu.vector_store %arg8[%c35, %c0_235], %211 {strides = array<i32>} : memref<56x64xbf16, #tpu.memory_space<vmem>>, vector<7x64xbf16>,
    %c60 = arith.constant 60 : index
    %c0_236 = arith.constant 0 : index
    %213 = vector.load %arg12[%c60, %c0_236] : memref<67x64xf32, #tpu.memory_space<vmem>>, vector<7x64xf32>
    %c0_237 = arith.constant 0 : index
    %c0_238 = arith.constant 0 : index
    %214 = vector.load %arg7[%c0_237, %c0_238] : memref<1x64xf32, #tpu.memory_space<vmem>>, vector<1x64xf32>
    %215 = vector.broadcast %214 : vector<1x64xf32> to vector<7x64xf32>
    %216 = arith.addf %213, %215 : vector<7x64xf32>
    %cst_239 = arith.constant 0.000000e+00 : f32
    %217 = vector.broadcast %cst_239 : f32 to vector<7x64xf32>
    %218 = arith.maximumf %216, %217 : vector<7x64xf32>
    %219 = arith.truncf %218 : vector<7x64xf32> to vector<7x64xbf16>
    %c42 = arith.constant 42 : index
    %c0_240 = arith.constant 0 : index
    %220 = vector.load %arg8[%c42, %c0_240] : memref<56x64xbf16, #tpu.memory_space<vmem>>, vector<7x64xbf16>
    tpu.vector_store %arg8[%c42, %c0_240], %219 {strides = array<i32>} : memref<56x64xbf16, #tpu.memory_space<vmem>>, vector<7x64xbf16>,
    %c49 = arith.constant 49 : index
    %c0_241 = arith.constant 0 : index
    %221 = vector.load %arg8[%c49, %c0_241] : memref<56x64xbf16, #tpu.memory_space<vmem>>, vector<7x64xbf16>
    tpu.vector_store %arg8[%c49, %c0_241], %164 {strides = array<i32>} : memref<56x64xbf16, #tpu.memory_space<vmem>>, vector<7x64xbf16>,
    return
  }
  func.func @transform_0(%arg0: i32) -> (i32, i32) {
    %c0_i32 = arith.constant 0 : i32
    %c0_i32_0 = arith.constant 0 : i32
    return %arg0, %c0_i32 : i32, i32
  }
  func.func @transform_1(%arg0: i32) -> (i32, i32) {
    %c0_i32 = arith.constant 0 : i32
    %c0_i32_0 = arith.constant 0 : i32
    %c0_i32_1 = arith.constant 0 : i32
    return %c0_i32, %c0_i32_0 : i32, i32
  }
  func.func @transform_2(%arg0: i32) -> (i32, i32) {
    %c0_i32 = arith.constant 0 : i32
    %c0_i32_0 = arith.constant 0 : i32
    %c0_i32_1 = arith.constant 0 : i32
    return %c0_i32, %c0_i32_0 : i32, i32
  }
  func.func @transform_3(%arg0: i32) -> (i32, i32) {
    %c0_i32 = arith.constant 0 : i32
    %c0_i32_0 = arith.constant 0 : i32
    %c0_i32_1 = arith.constant 0 : i32
    return %c0_i32, %c0_i32_0 : i32, i32
  }
  func.func @transform_4(%arg0: i32) -> (i32, i32) {
    %c0_i32 = arith.constant 0 : i32
    %c0_i32_0 = arith.constant 0 : i32
    %c0_i32_1 = arith.constant 0 : i32
    return %c0_i32, %c0_i32_0 : i32, i32
  }
  func.func @transform_5(%arg0: i32) -> (i32, i32) {
    %c0_i32 = arith.constant 0 : i32
    %c0_i32_0 = arith.constant 0 : i32
    %c0_i32_1 = arith.constant 0 : i32
    return %c0_i32, %c0_i32_0 : i32, i32
  }
  func.func @transform_6(%arg0: i32) -> (i32, i32) {
    %c0_i32 = arith.constant 0 : i32
    %c0_i32_0 = arith.constant 0 : i32
    %c0_i32_1 = arith.constant 0 : i32
    return %c0_i32, %c0_i32_0 : i32, i32
  }
  func.func @transform_7(%arg0: i32) -> (i32, i32) {
    %c0_i32 = arith.constant 0 : i32
    %c0_i32_0 = arith.constant 0 : i32
    return %arg0, %c0_i32 : i32, i32
  }
}

</mosaic_0001>

<llo_original>
// kernel: flappy_bird_forward.3
$region0: #{flappy_bird_forward.3}
  #allocation0 [shape = 'u32[]', space=smem, size = 0x4, offset = 0x4, fixed_abs, tag = 'smem constant byte address 0x4 - core index']
  #allocation1 [shape = 'u32[144,128]{1,0:T(1,128)}', space=vmem, size = 0x12000, scoped, tag = 'internal scratch']
  #allocation2 [shape = 'f32[2,512]{1,0:T(2,128)}', space=vmem, size = 0x1000, scoped, tag = 'scratch operand']
  %s0 = inlined_call_operand.vmem [shape: bf16[2,3584], index: 0, kind: input, shape index: {}]
  %s1 = inlined_call_operand.vmem [shape: bf16[3584,512], index: 1, kind: input, shape index: {}]
  %s2 = inlined_call_operand.vmem [shape: f32[1,512], index: 2, kind: input, shape index: {}]
  %s3 = inlined_call_operand.vmem [shape: bf16[512,128], index: 3, kind: input, shape index: {}]
  %s4 = inlined_call_operand.vmem [shape: f32[1,128], index: 4, kind: input, shape index: {}]
  %s5 = inlined_call_operand.hbm [shape: f32[2,128], index: 5, kind: output, shape index: {}]
  %s6 = sld [smem:[#allocation0]]
  $region61: #{flappy_bird_forward.3} parent=0
    _
  %s8 = ssub.s32 1, %s6
  %s9 = scalar_select 0, %s8, %s6
  $region1: #{flappy_bird_forward.3} parent=0
    #allocation3 [shape = 'u8[1024]{0}', space=vmem, size = 0x400, scoped, tag = 'output window, operand 0, single buffered']
    #allocation4 [shape = 's32[2]{0}', space=sflag, size = 0x8, scoped, tag = 'scoped memory for flappy_bird_forward.3']
    %10 = vsyncpa [#allocation4], 0
    loop: start=0, step=1, limit=6
    $region2: #{flappy_bird_forward.3} parent=1 // loop_pre_header
      _
    $region3: #{flappy_bird_forward.3} parent=1 // loop_header
      %s12 = sphi 0, %s16
      %p13 = scmp.ge.s32.totalorder %s12, 6
      %s19 = sphi 0, %s31
      %s20 = sphi 0, %s27
      %s21 = sphi 0, %s19
      %s22 = sphi 0, %s20
      %s23 = sphi 0, %s21
      %s24 = sphi 0, %s22
      %s36 = sphi 0, %s38
      %s39 = sphi 0, %s36
      %s40 = sphi 0, %s39
      %s56 = sphi 0, %s40
      %s62 = sphi 0, %s64
      %s65 = sphi 0, %s62
      %s66 = sphi 0, %s65
      %s82 = sphi 0, %s66
      %s86 = sphi 0, %s86
      %s88 = sphi 0, %s86
      %s89 = sphi 0, %s88
      %s103 = sphi 0, %s89
      %s107 = sphi 0, %s107
      %s109 = sphi 0, %s107
      %s110 = sphi 0, %s109
      %s124 = sphi 0, %s110
      %s128 = sphi 0, %s128
      %s130 = sphi 0, %s128
      %s131 = sphi 0, %s130
      %s145 = sphi 0, %s131
      %s151 = sphi 0, %s153
      %s154 = sphi 0, %s151
      %s155 = sphi 0, %s154
      %s171 = sphi 0, %s155
    $region4: #{flappy_bird_forward.3} parent=1 // loop_header_branch
      %15 = sbr.rel (%p13) target = $region8
    $region5: #{flappy_bird_forward.3} parent=1 // loop_body
      %s17 = ssub.s32 %s12, 1
      %s18 = ssub.s32 %s12, 2
      %s25 = sadd.s32 1, %s20
      %p26 = scmp.ge.s32.totalorder %s25, 4
      %s27 = scalar_select %p26, 0, %s25
      %s28 = sadd.s32 1, %s19
      %s29 = scalar_select %p26, %s28, %s19
      %p30 = scmp.ge.s32.totalorder %s29, 1
      %s31 = scalar_select %p30, 0, %s29
      %s32 = ssub.s32 %s19, %s31
      %s33 = ssub.s32 %s20, %s27
      %s34 = sor.u32 %s32, %s33
      %p35 = scmp.eq.s32.totalorder %s34, 0
      %s37 = sadd.s32 %s36, 1
      %s38 = scalar_select %p35, %s36, %s37
      %p41 = pneg %p35
      %p42 = scmp.eq.s32.totalorder %s12, 3
      %p43 = por %p41, %p42
      %p44 = scmp.ne.s32.totalorder %s36, %s39
      %p45 = scmp.eq.s32.totalorder %s12, 0
      %p46 = por %p44, %p45
      %p47 = scmp.ne.s32.totalorder %s36, %s39
      %p48 = scmp.eq.s32.totalorder %s17, 3
      %p49 = por %p47, %p48
      %p50 = scmp.ne.s32.totalorder %s39, %s40
      %p51 = scmp.eq.s32.totalorder %s17, 0
      %p52 = por %p50, %p51
      %p53 = scmp.ne.s32.totalorder %s39, %s40
      %p54 = scmp.eq.s32.totalorder %s18, 3
      %p55 = por %p53, %p54
      %p57 = scmp.ne.s32.totalorder %s40, %s56
      %p58 = scmp.eq.s32.totalorder %s18, 0
      %p59 = por %p57, %p58
      %s60 = ssub.s32 %s20, %s27
      %p61 = scmp.eq.s32.totalorder %s60, 0
      %s63 = sadd.s32 %s62, 1
      %s64 = scalar_select %p61, %s62, %s63
      %p67 = pneg %p61
      %p68 = scmp.eq.s32.totalorder %s12, 3
      %p69 = por %p67, %p68
      %p70 = scmp.ne.s32.totalorder %s62, %s65
      %p71 = scmp.eq.s32.totalorder %s12, 0
      %p72 = por %p70, %p71
      %p73 = scmp.ne.s32.totalorder %s62, %s65
      %p74 = scmp.eq.s32.totalorder %s17, 3
      %p75 = por %p73, %p74
      %p76 = scmp.ne.s32.totalorder %s65, %s66
      %p77 = scmp.eq.s32.totalorder %s17, 0
      %p78 = por %p76, %p77
      %p79 = scmp.ne.s32.totalorder %s65, %s66
      %p80 = scmp.eq.s32.totalorder %s18, 3
      %p81 = por %p79, %p80
      %p83 = scmp.ne.s32.totalorder %s66, %s82
      %p84 = scmp.eq.s32.totalorder %s18, 0
      %p85 = por %p83, %p84
      %s87 = sadd.s32 %s86, 1
      %p90 = scmp.eq.s32.totalorder %s12, 3
      %p91 = scmp.ne.s32.totalorder %s86, %s88
      %p92 = scmp.eq.s32.totalorder %s12, 0
      %p93 = por %p91, %p92
      %p94 = scmp.ne.s32.totalorder %s86, %s88
      %p95 = scmp.eq.s32.totalorder %s17, 3
      %p96 = por %p94, %p95
      %p97 = scmp.ne.s32.totalorder %s88, %s89
      %p98 = scmp.eq.s32.totalorder %s17, 0
      %p99 = por %p97, %p98
      %p100 = scmp.ne.s32.totalorder %s88, %s89
      %p101 = scmp.eq.s32.totalorder %s18, 3
      %p102 = por %p100, %p101
      %p104 = scmp.ne.s32.totalorder %s89, %s103
      %p105 = scmp.eq.s32.totalorder %s18, 0
      %p106 = por %p104, %p105
      %s108 = sadd.s32 %s107, 1
      %p111 = scmp.eq.s32.totalorder %s12, 3
      %p112 = scmp.ne.s32.totalorder %s107, %s109
      %p113 = scmp.eq.s32.totalorder %s12, 0
      %p114 = por %p112, %p113
      %p115 = scmp.ne.s32.totalorder %s107, %s109
      %p116 = scmp.eq.s32.totalorder %s17, 3
      %p117 = por %p115, %p116
      %p118 = scmp.ne.s32.totalorder %s109, %s110
      %p119 = scmp.eq.s32.totalorder %s17, 0
      %p120 = por %p118, %p119
      %p121 = scmp.ne.s32.totalorder %s109, %s110
      %p122 = scmp.eq.s32.totalorder %s18, 3
      %p123 = por %p121, %p122
      %p125 = scmp.ne.s32.totalorder %s110, %s124
      %p126 = scmp.eq.s32.totalorder %s18, 0
      %p127 = por %p125, %p126
      %s129 = sadd.s32 %s128, 1
      %p132 = scmp.eq.s32.totalorder %s12, 3
      %p133 = scmp.ne.s32.totalorder %s128, %s130
      %p134 = scmp.eq.s32.totalorder %s12, 0
      %p135 = por %p133, %p134
      %p136 = scmp.ne.s32.totalorder %s128, %s130
      %p137 = scmp.eq.s32.totalorder %s17, 3
      %p138 = por %p136, %p137
      %p139 = scmp.ne.s32.totalorder %s130, %s131
      %p140 = scmp.eq.s32.totalorder %s17, 0
      %p141 = por %p139, %p140
      %p142 = scmp.ne.s32.totalorder %s130, %s131
      %p143 = scmp.eq.s32.totalorder %s18, 3
      %p144 = por %p142, %p143
      %p146 = scmp.ne.s32.totalorder %s131, %s145
      %p147 = scmp.eq.s32.totalorder %s18, 0
      %p148 = por %p146, %p147
      %s149 = ssub.s32 %s19, %s31
      %p150 = scmp.eq.s32.totalorder %s149, 0
      %s152 = sadd.s32 %s151, 1
      %s153 = scalar_select %p150, %s151, %s152
      %p156 = pneg %p150
      %p157 = scmp.eq.s32.totalorder %s12, 3
      %p158 = por %p156, %p157
      %p159 = scmp.ne.s32.totalorder %s151, %s154
      %p160 = scmp.eq.s32.totalorder %s12, 0
      %p161 = por %p159, %p160
      %p162 = scmp.ne.s32.totalorder %s151, %s154
      %p163 = scmp.eq.s32.totalorder %s17, 3
      %p164 = por %p162, %p163
      %p165 = scmp.ne.s32.totalorder %s154, %s155
      %p166 = scmp.eq.s32.totalorder %s17, 0
      %p167 = por %p165, %p166
      %p168 = scmp.ne.s32.totalorder %s154, %s155
      %p169 = scmp.eq.s32.totalorder %s18, 3
      %p170 = por %p168, %p169
      %p172 = scmp.ne.s32.totalorder %s155, %s171
      %p173 = scmp.eq.s32.totalorder %s18, 0
      %p174 = por %p172, %p173
      %p175 = scmp.le.s32.totalorder 1, %s12
      %p176 = scmp.lt.s32.totalorder %s12, 5
      %p177 = pnand %p175, %p176
      %p178 = pneg %p177
      // Predicated region
      $region9: #{flappy_bird_forward.3} parent=5 // pred_check
        _
      $region10: #{flappy_bird_forward.3} parent=5 // pred_check_branch
        %180 = sbr.rel (%p177) target = $region12
      $region11: #{flappy_bird_forward.3} parent=5 // pred_region
        %s181 = ssub.s32 %s12, 1
        // Predicated region
        $region13: #{flappy_bird_forward.3} parent=11 // pred_check
          %p182 = pneg %p99
        $region14: #{flappy_bird_forward.3} parent=11 // pred_check_branch
          %184 = sbr.rel (%p182) target = $region16
        $region15: #{flappy_bird_forward.3} parent=11 // pred_region
          _
        $region16: #{flappy_bird_forward.3} parent=11 // pred_fallthru
          _
        // Predicated region
        $region17: #{flappy_bird_forward.3} parent=11 // pred_check
          %p185 = pneg %p120
        $region18: #{flappy_bird_forward.3} parent=11 // pred_check_branch
          %187 = sbr.rel (%p185) target = $region20
        $region19: #{flappy_bird_forward.3} parent=11 // pred_region
          _
        $region20: #{flappy_bird_forward.3} parent=11 // pred_fallthru
          _
        // Predicated region
        $region21: #{flappy_bird_forward.3} parent=11 // pred_check
          %p188 = pneg %p141
        $region22: #{flappy_bird_forward.3} parent=11 // pred_check_branch
          %190 = sbr.rel (%p188) target = $region24
        $region23: #{flappy_bird_forward.3} parent=11 // pred_region
          _
        $region24: #{flappy_bird_forward.3} parent=11 // pred_fallthru
          _
      $region12: #{flappy_bird_forward.3} parent=5 // pred_fallthru
        _
      %p191 = scmp.lt.s32.totalorder %s12, 4
      // Predicated region
      $region25: #{flappy_bird_forward.3} parent=5 // pred_check
        %p192 = pneg %p191
      $region26: #{flappy_bird_forward.3} parent=5 // pred_check_branch
        %194 = sbr.rel (%p192) target = $region28
      $region27: #{flappy_bird_forward.3} parent=5 // pred_region
        // Predicated region
        $region29: #{flappy_bird_forward.3} parent=27 // pred_check
          %p195 = pneg %p46
        $region30: #{flappy_bird_forward.3} parent=27 // pred_check_branch
          %197 = sbr.rel (%p195) target = $region32
        $region31: #{flappy_bird_forward.3} parent=27 // pred_region
          %s198 = smul.u32 7, %s20
          %p199 = scmp.lt.s32.totalorder %s19, 0
          %s200 = scalar_select %p199, %s19, 0
          %p201 = scmp.lt.s32.totalorder %s198, 27
          %s202 = scalar_select %p201, %s198, 27
          %s203 = smul.addr %s200, 28
          %s204 = sadd.s32 %s202, %s203
          %s205 = scalar_lea.vmem %s0, %s204
          %s206 = smul.u32 7, %s20
        $region32: #{flappy_bird_forward.3} parent=27 // pred_fallthru
          _
        // Predicated region
        $region33: #{flappy_bird_forward.3} parent=27 // pred_check
          %p207 = pneg %p72
        $region34: #{flappy_bird_forward.3} parent=27 // pred_check_branch
          %209 = sbr.rel (%p207) target = $region36
        $region35: #{flappy_bird_forward.3} parent=27 // pred_region
          %s210 = smul.u32 112, %s20
          %p211 = scmp.lt.s32.totalorder %s210, 447
          %s212 = scalar_select %p211, %s210, 447
          %s213 = smul.addr %s212, 4
          %s214 = smul.addr %s213, 4
          %s215 = scalar_lea.vmem %s1, %s214
          %s216 = smul.u32 112, %s20
        $region36: #{flappy_bird_forward.3} parent=27 // pred_fallthru
          _
      $region28: #{flappy_bird_forward.3} parent=5 // pred_fallthru
        _
      %p217 = scmp.le.s32.totalorder 1, %s12
      %p218 = scmp.lt.s32.totalorder %s12, 5
      %p219 = pnand %p217, %p218
      %p220 = pneg %p219
      // Predicated region
      $region37: #{flappy_bird_forward.3} parent=5 // pred_check
        _
      $region38: #{flappy_bird_forward.3} parent=5 // pred_check_branch
        %222 = sbr.rel (%p219) target = $region40
      $region39: #{flappy_bird_forward.3} parent=5 // pred_region
        %s223 = ssub.s32 %s12, 1
        %s224 = smul.u32 7, %s22
        %p225 = scmp.lt.s32.totalorder %s21, 0
        %s226 = scalar_select %p225, %s21, 0
        %p227 = scmp.lt.s32.totalorder %s224, 27
        %s228 = scalar_select %p227, %s224, 27
        %s229 = smul.addr %s226, 28
        %s230 = sadd.s32 %s228, %s229
        %s231 = scalar_lea.vmem %s0, %s230
        %p232 = pneg %p52
        %p233 = pneg %p49
        %s234 = smul.u32 112, %s22
        %p235 = scmp.lt.s32.totalorder %s234, 447
        %s236 = scalar_select %p235, %s234, 447
        %s237 = smul.addr %s236, 4
        %s238 = smul.addr %s237, 4
        %s239 = scalar_lea.vmem %s1, %s238
        %p240 = pneg %p78
        %p241 = pneg %p75
        %p242 = pneg %p99
        %p243 = pneg %p96
        %p244 = pneg %p120
        %p245 = pneg %p117
        %p246 = pneg %p141
        %p247 = pneg %p138
        %p248 = pneg %p167
        %p249 = pneg %p164
        %s250 = smul.u32 7, %s22
        %p251 = scmp.lt.s32.totalorder %s21, 0
        %s252 = scalar_select %p251, %s21, 0
        %p253 = scmp.lt.s32.totalorder %s250, 27
        %s254 = scalar_select %p253, %s250, 27
        %s255 = smul.addr %s252, 28
        %s256 = sadd.s32 %s254, %s255
        %s257 = scalar_lea.vmem %s0, %s256
        %s258 = smul.u32 7, %s22
        %s259 = smul.u32 112, %s22
        %p260 = scmp.lt.s32.totalorder %s259, 447
        %s261 = scalar_select %p260, %s259, 447
        %s262 = smul.addr %s261, 4
        %s263 = smul.addr %s262, 4
        %s264 = scalar_lea.vmem %s1, %s263
        %s265 = smul.u32 112, %s22
        %p267 = scmp.eq.s32.totalorder %s22, 0
        // Predicated region
        $region41: #{flappy_bird_forward.3} parent=39 // pred_check
          %p268 = pneg %p267
        $region42: #{flappy_bird_forward.3} parent=39 // pred_check_branch
          %270 = sbr.rel (%p268) target = $region44
        $region43: #{flappy_bird_forward.3} parent=39 // pred_region
          %271 = vst [vmem:[#allocation2] sm:$0xff] 0.0
        $region44: #{flappy_bird_forward.3} parent=39 // pred_fallthru
          _
        %v272 = vld [vmem:[#allocation2] sm:$0xff]
        %v273 = vld [vmem:[%s257] sm:$0x7f]
        %v274 = vld [vmem:[%s264] sm:$0xff]
        %v275 = vld [vmem:[%s264 + $0x8] sm:$0xff]
        %v276 = vld [vmem:[%s264 + $0x10] sm:$0xff]
        %v277 = vld [vmem:[%s264 + $0x18] sm:$0xff]
        %v278 = vld [vmem:[%s264 + $0x20] sm:$0xff]
        %v279 = vld [vmem:[%s264 + $0x28] sm:$0xff]
        %v280 = vld [vmem:[%s264 + $0x30] sm:$0xff]
        %v281 = vld [vmem:[%s264 + $0x38] sm:$0xff]
        %v282 = vld [vmem:[%s264 + $0x40] sm:$0xff]
        %v283 = vld [vmem:[%s264 + $0x48] sm:$0xff]
        %v284 = vld [vmem:[%s264 + $0x50] sm:$0xff]
        %v285 = vld [vmem:[%s264 + $0x58] sm:$0xff]
        %v286 = vld [vmem:[%s264 + $0x60] sm:$0xff]
        %v287 = vld [vmem:[%s264 + $0x68] sm:$0xff]
        %v288 = vld [vmem:[%s264 + $0x70] sm:$0xff]
        %v289 = vld [vmem:[%s264 + $0x78] sm:$0xff]
        %v290 = vld [vmem:[%s264 + $0x80] sm:$0xff]
        %v291 = vld [vmem:[%s264 + $0x88] sm:$0xff]
        %v292 = vld [vmem:[%s264 + $0x90] sm:$0xff]
        %v293 = vld [vmem:[%s264 + $0x98] sm:$0xff]
        %v294 = vld [vmem:[%s264 + $0xa0] sm:$0xff]
        %v295 = vld [vmem:[%s264 + $0xa8] sm:$0xff]
        %v296 = vld [vmem:[%s264 + $0xb0] sm:$0xff]
        %v297 = vld [vmem:[%s264 + $0xb8] sm:$0xff]
        %v298 = vld [vmem:[%s264 + $0xc0] sm:$0xff]
        %v299 = vld [vmem:[%s264 + $0xc8] sm:$0xff]
        %v300 = vld [vmem:[%s264 + $0xd0] sm:$0xff]
        %v301 = vld [vmem:[%s264 + $0xd8] sm:$0xff]
        %v302 = vld [vmem:[%s264 + $0xe0] sm:$0xff]
        %v303 = vld [vmem:[%s264 + $0xe8] sm:$0xff]
        %v304 = vld [vmem:[%s264 + $0xf0] sm:$0xff]
        %v305 = vld [vmem:[%s264 + $0xf8] sm:$0xff]
        %v306 = vld [vmem:[%s264 + $0x100] sm:$0xff]
        %v307 = vld [vmem:[%s264 + $0x108] sm:$0xff]
        %v308 = vld [vmem:[%s264 + $0x110] sm:$0xff]
        %v309 = vld [vmem:[%s264 + $0x118] sm:$0xff]
        %v310 = vld [vmem:[%s264 + $0x120] sm:$0xff]
        %v311 = vld [vmem:[%s264 + $0x128] sm:$0xff]
        %v312 = vld [vmem:[%s264 + $0x130] sm:$0xff]
        %v313 = vld [vmem:[%s264 + $0x138] sm:$0xff]
        %v314 = vld [vmem:[%s264 + $0x140] sm:$0xff]
        %v315 = vld [vmem:[%s264 + $0x148] sm:$0xff]
        %v316 = vld [vmem:[%s264 + $0x150] sm:$0xff]
        %v317 = vld [vmem:[%s264 + $0x158] sm:$0xff]
        %v318 = vld [vmem:[%s264 + $0x160] sm:$0xff]
        %v319 = vld [vmem:[%s264 + $0x168] sm:$0xff]
        %v320 = vld [vmem:[%s264 + $0x170] sm:$0xff]
        %v321 = vld [vmem:[%s264 + $0x178] sm:$0xff]
        %v322 = vld [vmem:[%s264 + $0x180] sm:$0xff]
        %v323 = vld [vmem:[%s264 + $0x188] sm:$0xff]
        %v324 = vld [vmem:[%s264 + $0x190] sm:$0xff]
        %v325 = vld [vmem:[%s264 + $0x198] sm:$0xff]
        %v326 = vld [vmem:[%s264 + $0x1a0] sm:$0xff]
        %v327 = vld [vmem:[%s264 + $0x1a8] sm:$0xff]
        %v328 = vld [vmem:[%s264 + $0x1b0] sm:$0xff]
        %v329 = vld [vmem:[%s264 + $0x1b8] sm:$0xff]
        %v330 = vld [vmem:[%s264 + $0x1c0] sm:$0xff]
        %v331 = vld [vmem:[%s264 + $0x1c8] sm:$0xff]
        %v332 = vld [vmem:[%s264 + $0x1d0] sm:$0xff]
        %v333 = vld [vmem:[%s264 + $0x1d8] sm:$0xff]
        %v334 = vld [vmem:[%s264 + $0x1e0] sm:$0xff]
        %v335 = vld [vmem:[%s264 + $0x1e8] sm:$0xff]
        %v336 = vld [vmem:[%s264 + $0x1f0] sm:$0xff]
        %v337 = vld [vmem:[%s264 + $0x1f8] sm:$0xff]
        %v338 = vld [vmem:[%s264 + $0x200] sm:$0xff]
        %v339 = vld [vmem:[%s264 + $0x208] sm:$0xff]
        %v340 = vld [vmem:[%s264 + $0x210] sm:$0xff]
        %v341 = vld [vmem:[%s264 + $0x218] sm:$0xff]
        %v342 = vld [vmem:[%s264 + $0x220] sm:$0xff]
        %v343 = vld [vmem:[%s264 + $0x228] sm:$0xff]
        %v344 = vld [vmem:[%s264 + $0x230] sm:$0xff]
        %v345 = vld [vmem:[%s264 + $0x238] sm:$0xff]
        %v346 = vld [vmem:[%s264 + $0x240] sm:$0xff]
        %v347 = vld [vmem:[%s264 + $0x248] sm:$0xff]
        %v348 = vld [vmem:[%s264 + $0x250] sm:$0xff]
        %v349 = vld [vmem:[%s264 + $0x258] sm:$0xff]
        %v350 = vld [vmem:[%s264 + $0x260] sm:$0xff]
        %v351 = vld [vmem:[%s264 + $0x268] sm:$0xff]
        %v352 = vld [vmem:[%s264 + $0x270] sm:$0xff]
        %v353 = vld [vmem:[%s264 + $0x278] sm:$0xff]
        %v354 = vld [vmem:[%s264 + $0x280] sm:$0xff]
        %v355 = vld [vmem:[%s264 + $0x288] sm:$0xff]
        %v356 = vld [vmem:[%s264 + $0x290] sm:$0xff]
        %v357 = vld [vmem:[%s264 + $0x298] sm:$0xff]
        %v358 = vld [vmem:[%s264 + $0x2a0] sm:$0xff]
        %v359 = vld [vmem:[%s264 + $0x2a8] sm:$0xff]
        %v360 = vld [vmem:[%s264 + $0x2b0] sm:$0xff]
        %v361 = vld [vmem:[%s264 + $0x2b8] sm:$0xff]
        %v362 = vld [vmem:[%s264 + $0x2c0] sm:$0xff]
        %v363 = vld [vmem:[%s264 + $0x2c8] sm:$0xff]
        %v364 = vld [vmem:[%s264 + $0x2d0] sm:$0xff]
        %v365 = vld [vmem:[%s264 + $0x2d8] sm:$0xff]
        %v366 = vld [vmem:[%s264 + $0x2e0] sm:$0xff]
        %v367 = vld [vmem:[%s264 + $0x2e8] sm:$0xff]
        %v368 = vld [vmem:[%s264 + $0x2f0] sm:$0xff]
        %v369 = vld [vmem:[%s264 + $0x2f8] sm:$0xff]
        %v370 = vld [vmem:[%s264 + $0x300] sm:$0xff]
        %v371 = vld [vmem:[%s264 + $0x308] sm:$0xff]
        %v372 = vld [vmem:[%s264 + $0x310] sm:$0xff]
        %v373 = vld [vmem:[%s264 + $0x318] sm:$0xff]
        %v374 = vld [vmem:[%s264 + $0x320] sm:$0xff]
        %v375 = vld [vmem:[%s264 + $0x328] sm:$0xff]
        %v376 = vld [vmem:[%s264 + $0x330] sm:$0xff]
        %v377 = vld [vmem:[%s264 + $0x338] sm:$0xff]
        %v378 = vld [vmem:[%s264 + $0x340] sm:$0xff]
        %v379 = vld [vmem:[%s264 + $0x348] sm:$0xff]
        %v380 = vld [vmem:[%s264 + $0x350] sm:$0xff]
        %v381 = vld [vmem:[%s264 + $0x358] sm:$0xff]
        %v382 = vld [vmem:[%s264 + $0x360] sm:$0xff]
        %v383 = vld [vmem:[%s264 + $0x368] sm:$0xff]
        %v384 = vld [vmem:[%s264 + $0x370] sm:$0xff]
        %v385 = vld [vmem:[%s264 + $0x378] sm:$0xff]
        %v386 = vld [vmem:[%s264 + $0x380] sm:$0xff]
        %v387 = vld [vmem:[%s264 + $0x388] sm:$0xff]
        %v388 = vld [vmem:[%s264 + $0x390] sm:$0xff]
        %v389 = vld [vmem:[%s264 + $0x398] sm:$0xff]
        %v390 = vld [vmem:[%s264 + $0x3a0] sm:$0xff]
        %v391 = vld [vmem:[%s264 + $0x3a8] sm:$0xff]
        %v392 = vld [vmem:[%s264 + $0x3b0] sm:$0xff]
        %v393 = vld [vmem:[%s264 + $0x3b8] sm:$0xff]
        %v394 = vld [vmem:[%s264 + $0x3c0] sm:$0xff]
        %v395 = vld [vmem:[%s264 + $0x3c8] sm:$0xff]
        %v396 = vld [vmem:[%s264 + $0x3d0] sm:$0xff]
        %v397 = vld [vmem:[%s264 + $0x3d8] sm:$0xff]
        %v398 = vld [vmem:[%s264 + $0x3e0] sm:$0xff]
        %v399 = vld [vmem:[%s264 + $0x3e8] sm:$0xff]
        %v400 = vld [vmem:[%s264 + $0x3f0] sm:$0xff]
        %v401 = vld [vmem:[%s264 + $0x3f8] sm:$0xff]
        %v402 = vld [vmem:[%s264 + $0x400] sm:$0xff]
        %v403 = vld [vmem:[%s264 + $0x408] sm:$0xff]
        %v404 = vld [vmem:[%s264 + $0x410] sm:$0xff]
        %v405 = vld [vmem:[%s264 + $0x418] sm:$0xff]
        %v406 = vld [vmem:[%s264 + $0x420] sm:$0xff]
        %v407 = vld [vmem:[%s264 + $0x428] sm:$0xff]
        %v408 = vld [vmem:[%s264 + $0x430] sm:$0xff]
        %v409 = vld [vmem:[%s264 + $0x438] sm:$0xff]
        %v410 = vld [vmem:[%s264 + $0x440] sm:$0xff]
        %v411 = vld [vmem:[%s264 + $0x448] sm:$0xff]
        %v412 = vld [vmem:[%s264 + $0x450] sm:$0xff]
        %v413 = vld [vmem:[%s264 + $0x458] sm:$0xff]
        %v414 = vld [vmem:[%s264 + $0x460] sm:$0xff]
        %v415 = vld [vmem:[%s264 + $0x468] sm:$0xff]
        %v416 = vld [vmem:[%s264 + $0x470] sm:$0xff]
        %v417 = vld [vmem:[%s264 + $0x478] sm:$0xff]
        %v418 = vld [vmem:[%s264 + $0x480] sm:$0xff]
        %v419 = vld [vmem:[%s264 + $0x488] sm:$0xff]
        %v420 = vld [vmem:[%s264 + $0x490] sm:$0xff]
        %v421 = vld [vmem:[%s264 + $0x498] sm:$0xff]
        %v422 = vld [vmem:[%s264 + $0x4a0] sm:$0xff]
        %v423 = vld [vmem:[%s264 + $0x4a8] sm:$0xff]
        %v424 = vld [vmem:[%s264 + $0x4b0] sm:$0xff]
        %v425 = vld [vmem:[%s264 + $0x4b8] sm:$0xff]
        %v426 = vld [vmem:[%s264 + $0x4c0] sm:$0xff]
        %v427 = vld [vmem:[%s264 + $0x4c8] sm:$0xff]
        %v428 = vld [vmem:[%s264 + $0x4d0] sm:$0xff]
        %v429 = vld [vmem:[%s264 + $0x4d8] sm:$0xff]
        %v430 = vld [vmem:[%s264 + $0x4e0] sm:$0xff]
        %v431 = vld [vmem:[%s264 + $0x4e8] sm:$0xff]
        %v432 = vld [vmem:[%s264 + $0x4f0] sm:$0xff]
        %v433 = vld [vmem:[%s264 + $0x4f8] sm:$0xff]
        %v434 = vld [vmem:[%s264 + $0x500] sm:$0xff]
        %v435 = vld [vmem:[%s264 + $0x508] sm:$0xff]
        %v436 = vld [vmem:[%s264 + $0x510] sm:$0xff]
        %v437 = vld [vmem:[%s264 + $0x518] sm:$0xff]
        %v438 = vld [vmem:[%s264 + $0x520] sm:$0xff]
        %v439 = vld [vmem:[%s264 + $0x528] sm:$0xff]
        %v440 = vld [vmem:[%s264 + $0x530] sm:$0xff]
        %v441 = vld [vmem:[%s264 + $0x538] sm:$0xff]
        %v442 = vld [vmem:[%s264 + $0x540] sm:$0xff]
        %v443 = vld [vmem:[%s264 + $0x548] sm:$0xff]
        %v444 = vld [vmem:[%s264 + $0x550] sm:$0xff]
        %v445 = vld [vmem:[%s264 + $0x558] sm:$0xff]
        %v446 = vld [vmem:[%s264 + $0x560] sm:$0xff]
        %v447 = vld [vmem:[%s264 + $0x568] sm:$0xff]
        %v448 = vld [vmem:[%s264 + $0x570] sm:$0xff]
        %v449 = vld [vmem:[%s264 + $0x578] sm:$0xff]
        %v450 = vld [vmem:[%s264 + $0x580] sm:$0xff]
        %v451 = vld [vmem:[%s264 + $0x588] sm:$0xff]
        %v452 = vld [vmem:[%s264 + $0x590] sm:$0xff]
        %v453 = vld [vmem:[%s264 + $0x598] sm:$0xff]
        %v454 = vld [vmem:[%s264 + $0x5a0] sm:$0xff]
        %v455 = vld [vmem:[%s264 + $0x5a8] sm:$0xff]
        %v456 = vld [vmem:[%s264 + $0x5b0] sm:$0xff]
        %v457 = vld [vmem:[%s264 + $0x5b8] sm:$0xff]
        %v458 = vld [vmem:[%s264 + $0x5c0] sm:$0xff]
        %v459 = vld [vmem:[%s264 + $0x5c8] sm:$0xff]
        %v460 = vld [vmem:[%s264 + $0x5d0] sm:$0xff]
        %v461 = vld [vmem:[%s264 + $0x5d8] sm:$0xff]
        %v462 = vld [vmem:[%s264 + $0x5e0] sm:$0xff]
        %v463 = vld [vmem:[%s264 + $0x5e8] sm:$0xff]
        %v464 = vld [vmem:[%s264 + $0x5f0] sm:$0xff]
        %v465 = vld [vmem:[%s264 + $0x5f8] sm:$0xff]
        %v466 = vld [vmem:[%s264 + $0x600] sm:$0xff]
        %v467 = vld [vmem:[%s264 + $0x608] sm:$0xff]
        %v468 = vld [vmem:[%s264 + $0x610] sm:$0xff]
        %v469 = vld [vmem:[%s264 + $0x618] sm:$0xff]
        %v470 = vld [vmem:[%s264 + $0x620] sm:$0xff]
        %v471 = vld [vmem:[%s264 + $0x628] sm:$0xff]
        %v472 = vld [vmem:[%s264 + $0x630] sm:$0xff]
        %v473 = vld [vmem:[%s264 + $0x638] sm:$0xff]
        %v474 = vld [vmem:[%s264 + $0x640] sm:$0xff]
        %v475 = vld [vmem:[%s264 + $0x648] sm:$0xff]
        %v476 = vld [vmem:[%s264 + $0x650] sm:$0xff]
        %v477 = vld [vmem:[%s264 + $0x658] sm:$0xff]
        %v478 = vld [vmem:[%s264 + $0x660] sm:$0xff]
        %v479 = vld [vmem:[%s264 + $0x668] sm:$0xff]
        %v480 = vld [vmem:[%s264 + $0x670] sm:$0xff]
        %v481 = vld [vmem:[%s264 + $0x678] sm:$0xff]
        %v482 = vld [vmem:[%s264 + $0x680] sm:$0xff]
        %v483 = vld [vmem:[%s264 + $0x688] sm:$0xff]
        %v484 = vld [vmem:[%s264 + $0x690] sm:$0xff]
        %v485 = vld [vmem:[%s264 + $0x698] sm:$0xff]
        %v486 = vld [vmem:[%s264 + $0x6a0] sm:$0xff]
        %v487 = vld [vmem:[%s264 + $0x6a8] sm:$0xff]
        %v488 = vld [vmem:[%s264 + $0x6b0] sm:$0xff]
        %v489 = vld [vmem:[%s264 + $0x6b8] sm:$0xff]
        %v490 = vld [vmem:[%s264 + $0x6c0] sm:$0xff]
        %v491 = vld [vmem:[%s264 + $0x6c8] sm:$0xff]
        %v492 = vld [vmem:[%s264 + $0x6d0] sm:$0xff]
        %v493 = vld [vmem:[%s264 + $0x6d8] sm:$0xff]
        %v494 = vld [vmem:[%s264 + $0x6e0] sm:$0xff]
        %v495 = vld [vmem:[%s264 + $0x6e8] sm:$0xff]
        %v496 = vld [vmem:[%s264 + $0x6f0] sm:$0xff]
        %v497 = vld [vmem:[%s264 + $0x6f8] sm:$0xff]
        %v499 = vcombine.high %v273, %v273
        %v501 = vunpack.c.l.s4 1966171168
        %v502 = vunpack.c.0.s8 %v501
        %v503 = vlaneseq
        %v504 = vshrl.u32 %v503, 7
        %v505 = vsub.s32 %v502, %v504
        %v506 = vrot.slane %v273, %v505
        %v508 = vunpack.c.l.s4 1966171168
        %v509 = vunpack.c.0.s8 %v508
        %v510 = vlaneseq
        %v511 = vshrl.u32 %v510, 7
        %v512 = vsub.s32 %v509, %v511
        %v513 = vrot.slane %v499, %v512
        %v514 = vcombine.high %v506, %v506
        %v515 = vcombine.high %v513, %v513
        %v517 = vunpack.c.l.s4 1966171168
        %v518 = vunpack.c.0.s8 %v517
        %v519 = vlaneseq
        %v520 = vshrl.u32 %v519, 7
        %v521 = vsub.s32 %v518, %v520
        %v522 = vrot.slane %v506, %v521
        %v524 = vunpack.c.l.s4 1966171168
        %v525 = vunpack.c.0.s8 %v524
        %v526 = vlaneseq
        %v527 = vshrl.u32 %v526, 7
        %v528 = vsub.s32 %v525, %v527
        %v529 = vrot.slane %v513, %v528
        %v531 = vunpack.c.l.s4 1966171168
        %v532 = vunpack.c.0.s8 %v531
        %v533 = vlaneseq
        %v534 = vshrl.u32 %v533, 7
        %v535 = vsub.s32 %v532, %v534
        %v536 = vrot.slane %v514, %v535
        %v538 = vunpack.c.l.s4 1966171168
        %v539 = vunpack.c.0.s8 %v538
        %v540 = vlaneseq
        %v541 = vshrl.u32 %v540, 7
        %v542 = vsub.s32 %v539, %v541
        %v543 = vrot.slane %v515, %v542
        %v544 = vcombine.high %v522, %v522
        %v545 = vcombine.high %v529, %v529
        %v546 = vcombine.high %v536, %v536
        %v778 = vunpack.c.l.b16 %v274
        %v779 = vunpack.c.h.b16 %v274
        %v780 = vunpack.c.l.b16 %v275
        %v781 = vunpack.c.h.b16 %v275
        %v782 = vunpack.c.l.b16 %v276
        %v783 = vunpack.c.h.b16 %v276
        %v784 = vunpack.c.l.b16 %v277
        %v785 = vunpack.c.h.b16 %v277
        %v786 = vunpack.c.l.b16 %v278
        %v787 = vunpack.c.h.b16 %v278
        %v788 = vunpack.c.l.b16 %v279
        %v789 = vunpack.c.h.b16 %v279
        %v790 = vunpack.c.l.b16 %v280
        %v791 = vunpack.c.h.b16 %v280
        %v792 = vunpack.c.l.b16 %v281
        %v793 = vunpack.c.h.b16 %v281
        %v794 = vunpack.c.l.b16 %v282
        %v795 = vunpack.c.h.b16 %v282
        %v796 = vunpack.c.l.b16 %v283
        %v797 = vunpack.c.h.b16 %v283
        %v798 = vunpack.c.l.b16 %v284
        %v799 = vunpack.c.h.b16 %v284
        %v800 = vunpack.c.l.b16 %v285
        %v801 = vunpack.c.h.b16 %v285
        %v802 = vunpack.c.l.b16 %v286
        %v803 = vunpack.c.h.b16 %v286
        %v804 = vunpack.c.l.b16 %v287
        %v805 = vunpack.c.h.b16 %v287
        %v806 = vunpack.c.l.b16 %v288
        %v807 = vunpack.c.h.b16 %v288
        %v808 = vunpack.c.l.b16 %v289
        %v809 = vunpack.c.h.b16 %v289
        %v810 = vunpack.c.l.b16 %v290
        %v811 = vunpack.c.h.b16 %v290
        %v812 = vunpack.c.l.b16 %v291
        %v813 = vunpack.c.h.b16 %v291
        %v814 = vunpack.c.l.b16 %v292
        %v815 = vunpack.c.h.b16 %v292
        %v816 = vunpack.c.l.b16 %v293
        %v817 = vunpack.c.h.b16 %v293
        %v818 = vunpack.c.l.b16 %v294
        %v819 = vunpack.c.h.b16 %v294
        %v820 = vunpack.c.l.b16 %v295
        %v821 = vunpack.c.h.b16 %v295
        %v822 = vunpack.c.l.b16 %v296
        %v823 = vunpack.c.h.b16 %v296
        %v824 = vunpack.c.l.b16 %v297
        %v825 = vunpack.c.h.b16 %v297
        %v826 = vunpack.c.l.b16 %v298
        %v827 = vunpack.c.h.b16 %v298
        %v828 = vunpack.c.l.b16 %v299
        %v829 = vunpack.c.h.b16 %v299
        %v830 = vunpack.c.l.b16 %v300
        %v831 = vunpack.c.h.b16 %v300
        %v832 = vunpack.c.l.b16 %v301
        %v833 = vunpack.c.h.b16 %v301
        %v834 = vunpack.c.l.b16 %v302
        %v835 = vunpack.c.h.b16 %v302
        %v836 = vunpack.c.l.b16 %v303
        %v837 = vunpack.c.h.b16 %v303
        %v838 = vunpack.c.l.b16 %v304
        %v839 = vunpack.c.h.b16 %v304
        %v840 = vunpack.c.l.b16 %v305
        %v841 = vunpack.c.h.b16 %v305
        %v842 = vunpack.c.l.b16 %v306
        %v843 = vunpack.c.h.b16 %v306
        %v844 = vunpack.c.l.b16 %v307
        %v845 = vunpack.c.h.b16 %v307
        %v846 = vunpack.c.l.b16 %v308
        %v847 = vunpack.c.h.b16 %v308
        %v848 = vunpack.c.l.b16 %v309
        %v849 = vunpack.c.h.b16 %v309
        %v850 = vunpack.c.l.b16 %v310
        %v851 = vunpack.c.h.b16 %v310
        %v852 = vunpack.c.l.b16 %v311
        %v853 = vunpack.c.h.b16 %v311
        %v854 = vunpack.c.l.b16 %v312
        %v855 = vunpack.c.h.b16 %v312
        %v856 = vunpack.c.l.b16 %v313
        %v857 = vunpack.c.h.b16 %v313
        %v858 = vunpack.c.l.b16 %v314
        %v859 = vunpack.c.h.b16 %v314
        %v860 = vunpack.c.l.b16 %v315
        %v861 = vunpack.c.h.b16 %v315
        %v862 = vunpack.c.l.b16 %v316
        %v863 = vunpack.c.h.b16 %v316
        %v864 = vunpack.c.l.b16 %v317
        %v865 = vunpack.c.h.b16 %v317
        %v866 = vunpack.c.l.b16 %v318
        %v867 = vunpack.c.h.b16 %v318
        %v868 = vunpack.c.l.b16 %v319
        %v869 = vunpack.c.h.b16 %v319
        %v870 = vunpack.c.l.b16 %v320
        %v871 = vunpack.c.h.b16 %v320
        %v872 = vunpack.c.l.b16 %v321
        %v873 = vunpack.c.h.b16 %v321
        %v874 = vunpack.c.l.b16 %v322
        %v875 = vunpack.c.h.b16 %v322
        %v876 = vunpack.c.l.b16 %v323
        %v877 = vunpack.c.h.b16 %v323
        %v878 = vunpack.c.l.b16 %v324
        %v879 = vunpack.c.h.b16 %v324
        %v880 = vunpack.c.l.b16 %v325
        %v881 = vunpack.c.h.b16 %v325
        %v882 = vunpack.c.l.b16 %v326
        %v883 = vunpack.c.h.b16 %v326
        %v884 = vunpack.c.l.b16 %v327
        %v885 = vunpack.c.h.b16 %v327
        %v886 = vunpack.c.l.b16 %v328
        %v887 = vunpack.c.h.b16 %v328
        %v888 = vunpack.c.l.b16 %v329
        %v889 = vunpack.c.h.b16 %v329
        %v890 = vunpack.c.l.b16 %v330
        %v891 = vunpack.c.h.b16 %v330
        %v892 = vunpack.c.l.b16 %v331
        %v893 = vunpack.c.h.b16 %v331
        %v894 = vunpack.c.l.b16 %v332
        %v895 = vunpack.c.h.b16 %v332
        %v896 = vunpack.c.l.b16 %v333
        %v897 = vunpack.c.h.b16 %v333
        %v898 = vunpack.c.l.b16 %v334
        %v899 = vunpack.c.h.b16 %v334
        %v900 = vunpack.c.l.b16 %v335
        %v901 = vunpack.c.h.b16 %v335
        %v902 = vunpack.c.l.b16 %v336
        %v903 = vunpack.c.h.b16 %v336
        %v904 = vunpack.c.l.b16 %v337
        %v905 = vunpack.c.h.b16 %v337
        %v906 = vunpack.c.l.b16 %v338
        %v907 = vunpack.c.h.b16 %v338
        %v908 = vunpack.c.l.b16 %v339
        %v909 = vunpack.c.h.b16 %v339
        %v910 = vunpack.c.l.b16 %v340
        %v911 = vunpack.c.h.b16 %v340
        %v912 = vunpack.c.l.b16 %v341
        %v913 = vunpack.c.h.b16 %v341
        %v914 = vunpack.c.l.b16 %v342
        %v915 = vunpack.c.h.b16 %v342
        %v916 = vunpack.c.l.b16 %v343
        %v917 = vunpack.c.h.b16 %v343
        %v918 = vunpack.c.l.b16 %v344
        %v919 = vunpack.c.h.b16 %v344
        %v920 = vunpack.c.l.b16 %v345
        %v921 = vunpack.c.h.b16 %v345
        %v922 = vunpack.c.l.b16 %v346
        %v923 = vunpack.c.h.b16 %v346
        %v924 = vunpack.c.l.b16 %v347
        %v925 = vunpack.c.h.b16 %v347
        %v926 = vunpack.c.l.b16 %v348
        %v927 = vunpack.c.h.b16 %v348
        %v928 = vunpack.c.l.b16 %v349
        %v929 = vunpack.c.h.b16 %v349
        %v930 = vunpack.c.l.b16 %v350
        %v931 = vunpack.c.h.b16 %v350
        %v932 = vunpack.c.l.b16 %v351
        %v933 = vunpack.c.h.b16 %v351
        %v934 = vunpack.c.l.b16 %v352
        %v935 = vunpack.c.h.b16 %v352
        %v936 = vunpack.c.l.b16 %v353
        %v937 = vunpack.c.h.b16 %v353
        %v938 = vunpack.c.l.b16 %v354
        %v939 = vunpack.c.h.b16 %v354
        %v940 = vunpack.c.l.b16 %v355
        %v941 = vunpack.c.h.b16 %v355
        %v942 = vunpack.c.l.b16 %v356
        %v943 = vunpack.c.h.b16 %v356
        %v944 = vunpack.c.l.b16 %v357
        %v945 = vunpack.c.h.b16 %v357
        %v946 = vunpack.c.l.b16 %v358
        %v947 = vunpack.c.h.b16 %v358
        %v948 = vunpack.c.l.b16 %v359
        %v949 = vunpack.c.h.b16 %v359
        %v950 = vunpack.c.l.b16 %v360
        %v951 = vunpack.c.h.b16 %v360
        %v952 = vunpack.c.l.b16 %v361
        %v953 = vunpack.c.h.b16 %v361
        %v954 = vunpack.c.l.b16 %v362
        %v955 = vunpack.c.h.b16 %v362
        %v956 = vunpack.c.l.b16 %v363
        %v957 = vunpack.c.h.b16 %v363
        %v958 = vunpack.c.l.b16 %v364
        %v959 = vunpack.c.h.b16 %v364
        %v960 = vunpack.c.l.b16 %v365
        %v961 = vunpack.c.h.b16 %v365
        %v962 = vunpack.c.l.b16 %v366
        %v963 = vunpack.c.h.b16 %v366
        %v964 = vunpack.c.l.b16 %v367
        %v965 = vunpack.c.h.b16 %v367
        %v966 = vunpack.c.l.b16 %v368
        %v967 = vunpack.c.h.b16 %v368
        %v968 = vunpack.c.l.b16 %v369
        %v969 = vunpack.c.h.b16 %v369
        %v970 = vunpack.c.l.b16 %v370
        %v971 = vunpack.c.h.b16 %v370
        %v972 = vunpack.c.l.b16 %v371
        %v973 = vunpack.c.h.b16 %v371
        %v974 = vunpack.c.l.b16 %v372
        %v975 = vunpack.c.h.b16 %v372
        %v976 = vunpack.c.l.b16 %v373
        %v977 = vunpack.c.h.b16 %v373
        %v978 = vunpack.c.l.b16 %v374
        %v979 = vunpack.c.h.b16 %v374
        %v980 = vunpack.c.l.b16 %v375
        %v981 = vunpack.c.h.b16 %v375
        %v982 = vunpack.c.l.b16 %v376
        %v983 = vunpack.c.h.b16 %v376
        %v984 = vunpack.c.l.b16 %v377
        %v985 = vunpack.c.h.b16 %v377
        %v986 = vunpack.c.l.b16 %v378
        %v987 = vunpack.c.h.b16 %v378
        %v988 = vunpack.c.l.b16 %v379
        %v989 = vunpack.c.h.b16 %v379
        %v990 = vunpack.c.l.b16 %v380
        %v991 = vunpack.c.h.b16 %v380
        %v992 = vunpack.c.l.b16 %v381
        %v993 = vunpack.c.h.b16 %v381
        %v994 = vunpack.c.l.b16 %v382
        %v995 = vunpack.c.h.b16 %v382
        %v996 = vunpack.c.l.b16 %v383
        %v997 = vunpack.c.h.b16 %v383
        %v998 = vunpack.c.l.b16 %v384
        %v999 = vunpack.c.h.b16 %v384
        %v1000 = vunpack.c.l.b16 %v385
        %v1001 = vunpack.c.h.b16 %v385
        %v1002 = vunpack.c.l.b16 %v386
        %v1003 = vunpack.c.h.b16 %v386
        %v1004 = vunpack.c.l.b16 %v387
        %v1005 = vunpack.c.h.b16 %v387
        %v1006 = vunpack.c.l.b16 %v388
        %v1007 = vunpack.c.h.b16 %v388
        %v1008 = vunpack.c.l.b16 %v389
        %v1009 = vunpack.c.h.b16 %v389
        %v1010 = vunpack.c.l.b16 %v390
        %v1011 = vunpack.c.h.b16 %v390
        %v1012 = vunpack.c.l.b16 %v391
        %v1013 = vunpack.c.h.b16 %v391
        %v1014 = vunpack.c.l.b16 %v392
        %v1015 = vunpack.c.h.b16 %v392
        %v1016 = vunpack.c.l.b16 %v393
        %v1017 = vunpack.c.h.b16 %v393
        %v1018 = vunpack.c.l.b16 %v394
        %v1019 = vunpack.c.h.b16 %v394
        %v1020 = vunpack.c.l.b16 %v395
        %v1021 = vunpack.c.h.b16 %v395
        %v1022 = vunpack.c.l.b16 %v396
        %v1023 = vunpack.c.h.b16 %v396
        %v1024 = vunpack.c.l.b16 %v397
        %v1025 = vunpack.c.h.b16 %v397
        %v1026 = vunpack.c.l.b16 %v398
        %v1027 = vunpack.c.h.b16 %v398
        %v1028 = vunpack.c.l.b16 %v399
        %v1029 = vunpack.c.h.b16 %v399
        %v1030 = vunpack.c.l.b16 %v400
        %v1031 = vunpack.c.h.b16 %v400
        %v1032 = vunpack.c.l.b16 %v401
        %v1033 = vunpack.c.h.b16 %v401
        %v1034 = vunpack.c.l.b16 %v402
        %v1035 = vunpack.c.h.b16 %v402
        %v1036 = vunpack.c.l.b16 %v403
        %v1037 = vunpack.c.h.b16 %v403
        %v1038 = vunpack.c.l.b16 %v404
        %v1039 = vunpack.c.h.b16 %v404
        %v1040 = vunpack.c.l.b16 %v405
        %v1041 = vunpack.c.h.b16 %v405
        %v1042 = vunpack.c.l.b16 %v406
        %v1043 = vunpack.c.h.b16 %v406
        %v1044 = vunpack.c.l.b16 %v407
        %v1045 = vunpack.c.h.b16 %v407
        %v1046 = vunpack.c.l.b16 %v408
        %v1047 = vunpack.c.h.b16 %v408
        %v1048 = vunpack.c.l.b16 %v409
        %v1049 = vunpack.c.h.b16 %v409
        %v1050 = vunpack.c.l.b16 %v410
        %v1051 = vunpack.c.h.b16 %v410
        %v1052 = vunpack.c.l.b16 %v411
        %v1053 = vunpack.c.h.b16 %v411
        %v1054 = vunpack.c.l.b16 %v412
        %v1055 = vunpack.c.h.b16 %v412
        %v1056 = vunpack.c.l.b16 %v413
        %v1057 = vunpack.c.h.b16 %v413
        %v1058 = vunpack.c.l.b16 %v414
        %v1059 = vunpack.c.h.b16 %v414
        %v1060 = vunpack.c.l.b16 %v415
        %v1061 = vunpack.c.h.b16 %v415
        %v1062 = vunpack.c.l.b16 %v416
        %v1063 = vunpack.c.h.b16 %v416
        %v1064 = vunpack.c.l.b16 %v417
        %v1065 = vunpack.c.h.b16 %v417
        %v1066 = vunpack.c.l.b16 %v418
        %v1067 = vunpack.c.h.b16 %v418
        %v1068 = vunpack.c.l.b16 %v419
        %v1069 = vunpack.c.h.b16 %v419
        %v1070 = vunpack.c.l.b16 %v420
        %v1071 = vunpack.c.h.b16 %v420
        %v1072 = vunpack.c.l.b16 %v421
        %v1073 = vunpack.c.h.b16 %v421
        %v1074 = vunpack.c.l.b16 %v422
        %v1075 = vunpack.c.h.b16 %v422
        %v1076 = vunpack.c.l.b16 %v423
        %v1077 = vunpack.c.h.b16 %v423
        %v1078 = vunpack.c.l.b16 %v424
        %v1079 = vunpack.c.h.b16 %v424
        %v1080 = vunpack.c.l.b16 %v425
        %v1081 = vunpack.c.h.b16 %v425
        %v1082 = vunpack.c.l.b16 %v426
        %v1083 = vunpack.c.h.b16 %v426
        %v1084 = vunpack.c.l.b16 %v427
        %v1085 = vunpack.c.h.b16 %v427
        %v1086 = vunpack.c.l.b16 %v428
        %v1087 = vunpack.c.h.b16 %v428
        %v1088 = vunpack.c.l.b16 %v429
        %v1089 = vunpack.c.h.b16 %v429
        %v1090 = vunpack.c.l.b16 %v430
        %v1091 = vunpack.c.h.b16 %v430
        %v1092 = vunpack.c.l.b16 %v431
        %v1093 = vunpack.c.h.b16 %v431
        %v1094 = vunpack.c.l.b16 %v432
        %v1095 = vunpack.c.h.b16 %v432
        %v1096 = vunpack.c.l.b16 %v433
        %v1097 = vunpack.c.h.b16 %v433
        %v1098 = vunpack.c.l.b16 %v434
        %v1099 = vunpack.c.h.b16 %v434
        %v1100 = vunpack.c.l.b16 %v435
        %v1101 = vunpack.c.h.b16 %v435
        %v1102 = vunpack.c.l.b16 %v436
        %v1103 = vunpack.c.h.b16 %v436
        %v1104 = vunpack.c.l.b16 %v437
        %v1105 = vunpack.c.h.b16 %v437
        %v1106 = vunpack.c.l.b16 %v438
        %v1107 = vunpack.c.h.b16 %v438
        %v1108 = vunpack.c.l.b16 %v439
        %v1109 = vunpack.c.h.b16 %v439
        %v1110 = vunpack.c.l.b16 %v440
        %v1111 = vunpack.c.h.b16 %v440
        %v1112 = vunpack.c.l.b16 %v441
        %v1113 = vunpack.c.h.b16 %v441
        %v1114 = vunpack.c.l.b16 %v442
        %v1115 = vunpack.c.h.b16 %v442
        %v1116 = vunpack.c.l.b16 %v443
        %v1117 = vunpack.c.h.b16 %v443
        %v1118 = vunpack.c.l.b16 %v444
        %v1119 = vunpack.c.h.b16 %v444
        %v1120 = vunpack.c.l.b16 %v445
        %v1121 = vunpack.c.h.b16 %v445
        %v1122 = vunpack.c.l.b16 %v446
        %v1123 = vunpack.c.h.b16 %v446
        %v1124 = vunpack.c.l.b16 %v447
        %v1125 = vunpack.c.h.b16 %v447
        %v1126 = vunpack.c.l.b16 %v448
        %v1127 = vunpack.c.h.b16 %v448
        %v1128 = vunpack.c.l.b16 %v449
        %v1129 = vunpack.c.h.b16 %v449
        %v1130 = vunpack.c.l.b16 %v450
        %v1131 = vunpack.c.h.b16 %v450
        %v1132 = vunpack.c.l.b16 %v451
        %v1133 = vunpack.c.h.b16 %v451
        %v1134 = vunpack.c.l.b16 %v452
        %v1135 = vunpack.c.h.b16 %v452
        %v1136 = vunpack.c.l.b16 %v453
        %v1137 = vunpack.c.h.b16 %v453
        %v1138 = vunpack.c.l.b16 %v454
        %v1139 = vunpack.c.h.b16 %v454
        %v1140 = vunpack.c.l.b16 %v455
        %v1141 = vunpack.c.h.b16 %v455
        %v1142 = vunpack.c.l.b16 %v456
        %v1143 = vunpack.c.h.b16 %v456
        %v1144 = vunpack.c.l.b16 %v457
        %v1145 = vunpack.c.h.b16 %v457
        %v1146 = vunpack.c.l.b16 %v458
        %v1147 = vunpack.c.h.b16 %v458
        %v1148 = vunpack.c.l.b16 %v459
        %v1149 = vunpack.c.h.b16 %v459
        %v1150 = vunpack.c.l.b16 %v460
        %v1151 = vunpack.c.h.b16 %v460
        %v1152 = vunpack.c.l.b16 %v461
        %v1153 = vunpack.c.h.b16 %v461
        %v1154 = vunpack.c.l.b16 %v462
        %v1155 = vunpack.c.h.b16 %v462
        %v1156 = vunpack.c.l.b16 %v463
        %v1157 = vunpack.c.h.b16 %v463
        %v1158 = vunpack.c.l.b16 %v464
        %v1159 = vunpack.c.h.b16 %v464
        %v1160 = vunpack.c.l.b16 %v465
        %v1161 = vunpack.c.h.b16 %v465
        %v1162 = vunpack.c.l.b16 %v466
        %v1163 = vunpack.c.h.b16 %v466
        %v1164 = vunpack.c.l.b16 %v467
        %v1165 = vunpack.c.h.b16 %v467
        %v1166 = vunpack.c.l.b16 %v468
        %v1167 = vunpack.c.h.b16 %v468
        %v1168 = vunpack.c.l.b16 %v469
        %v1169 = vunpack.c.h.b16 %v469
        %v1170 = vunpack.c.l.b16 %v470
        %v1171 = vunpack.c.h.b16 %v470
        %v1172 = vunpack.c.l.b16 %v471
        %v1173 = vunpack.c.h.b16 %v471
        %v1174 = vunpack.c.l.b16 %v472
        %v1175 = vunpack.c.h.b16 %v472
        %v1176 = vunpack.c.l.b16 %v473
        %v1177 = vunpack.c.h.b16 %v473
        %v1178 = vunpack.c.l.b16 %v474
        %v1179 = vunpack.c.h.b16 %v474
        %v1180 = vunpack.c.l.b16 %v475
        %v1181 = vunpack.c.h.b16 %v475
        %v1182 = vunpack.c.l.b16 %v476
        %v1183 = vunpack.c.h.b16 %v476
        %v1184 = vunpack.c.l.b16 %v477
        %v1185 = vunpack.c.h.b16 %v477
        %v1186 = vunpack.c.l.b16 %v478
        %v1187 = vunpack.c.h.b16 %v478
        %v1188 = vunpack.c.l.b16 %v479
        %v1189 = vunpack.c.h.b16 %v479
        %v1190 = vunpack.c.l.b16 %v480
        %v1191 = vunpack.c.h.b16 %v480
        %v1192 = vunpack.c.l.b16 %v481
        %v1193 = vunpack.c.h.b16 %v481
        %v1194 = vunpack.c.l.b16 %v482
        %v1195 = vunpack.c.h.b16 %v482
        %v1196 = vunpack.c.l.b16 %v483
        %v1197 = vunpack.c.h.b16 %v483
        %v1198 = vunpack.c.l.b16 %v484
        %v1199 = vunpack.c.h.b16 %v484
        %v1200 = vunpack.c.l.b16 %v485
        %v1201 = vunpack.c.h.b16 %v485
        %v1202 = vunpack.c.l.b16 %v486
        %v1203 = vunpack.c.h.b16 %v486
        %v1204 = vunpack.c.l.b16 %v487
        %v1205 = vunpack.c.h.b16 %v487
        %v1206 = vunpack.c.l.b16 %v488
        %v1207 = vunpack.c.h.b16 %v488
        %v1208 = vunpack.c.l.b16 %v489
        %v1209 = vunpack.c.h.b16 %v489
        %v1210 = vunpack.c.l.b16 %v490
        %v1211 = vunpack.c.h.b16 %v490
        %v1212 = vunpack.c.l.b16 %v491
        %v1213 = vunpack.c.h.b16 %v491
        %v1214 = vunpack.c.l.b16 %v492
        %v1215 = vunpack.c.h.b16 %v492
        %v1216 = vunpack.c.l.b16 %v493
        %v1217 = vunpack.c.h.b16 %v493
        %v1218 = vunpack.c.l.b16 %v494
        %v1219 = vunpack.c.h.b16 %v494
        %v1220 = vunpack.c.l.b16 %v495
        %v1221 = vunpack.c.h.b16 %v495
        %v1222 = vunpack.c.l.b16 %v496
        %v1223 = vunpack.c.h.b16 %v496
        %v1224 = vunpack.c.l.b16 %v497
        %v1225 = vunpack.c.h.b16 %v497
        %v1226 = vpack.c.b16 %v782, %v778
        %v1227 = vpack.c.b16 %v783, %v779
        %v1228 = vpack.c.b16 %v784, %v780
        %v1229 = vpack.c.b16 %v785, %v781
        %v1230 = vpack.c.b16 %v790, %v786
        %v1231 = vpack.c.b16 %v791, %v787
        %v1232 = vpack.c.b16 %v792, %v788
        %v1233 = vpack.c.b16 %v793, %v789
        %v1234 = vpack.c.b16 %v798, %v794
        %v1235 = vpack.c.b16 %v799, %v795
        %v1236 = vpack.c.b16 %v800, %v796
        %v1237 = vpack.c.b16 %v801, %v797
        %v1238 = vpack.c.b16 %v806, %v802
        %v1239 = vpack.c.b16 %v807, %v803
        %v1240 = vpack.c.b16 %v808, %v804
        %v1241 = vpack.c.b16 %v809, %v805
        %v1242 = vpack.c.b16 %v814, %v810
        %v1243 = vpack.c.b16 %v815, %v811
        %v1244 = vpack.c.b16 %v816, %v812
        %v1245 = vpack.c.b16 %v817, %v813
        %v1246 = vpack.c.b16 %v822, %v818
        %v1247 = vpack.c.b16 %v823, %v819
        %v1248 = vpack.c.b16 %v824, %v820
        %v1249 = vpack.c.b16 %v825, %v821
        %v1250 = vpack.c.b16 %v830, %v826
        %v1251 = vpack.c.b16 %v831, %v827
        %v1252 = vpack.c.b16 %v832, %v828
        %v1253 = vpack.c.b16 %v833, %v829
        %v1254 = vpack.c.b16 %v838, %v834
        %v1255 = vpack.c.b16 %v839, %v835
        %v1256 = vpack.c.b16 %v840, %v836
        %v1257 = vpack.c.b16 %v841, %v837
        %v1258 = vpack.c.b16 %v846, %v842
        %v1259 = vpack.c.b16 %v847, %v843
        %v1260 = vpack.c.b16 %v848, %v844
        %v1261 = vpack.c.b16 %v849, %v845
        %v1262 = vpack.c.b16 %v854, %v850
        %v1263 = vpack.c.b16 %v855, %v851
        %v1264 = vpack.c.b16 %v856, %v852
        %v1265 = vpack.c.b16 %v857, %v853
        %v1266 = vpack.c.b16 %v862, %v858
        %v1267 = vpack.c.b16 %v863, %v859
        %v1268 = vpack.c.b16 %v864, %v860
        %v1269 = vpack.c.b16 %v865, %v861
        %v1270 = vpack.c.b16 %v870, %v866
        %v1271 = vpack.c.b16 %v871, %v867
        %v1272 = vpack.c.b16 %v872, %v868
        %v1273 = vpack.c.b16 %v873, %v869
        %v1274 = vpack.c.b16 %v878, %v874
        %v1275 = vpack.c.b16 %v879, %v875
        %v1276 = vpack.c.b16 %v880, %v876
        %v1277 = vpack.c.b16 %v881, %v877
        %v1278 = vpack.c.b16 %v886, %v882
        %v1279 = vpack.c.b16 %v887, %v883
        %v1280 = vpack.c.b16 %v888, %v884
        %v1281 = vpack.c.b16 %v889, %v885
        %v1282 = vpack.c.b16 %v894, %v890
        %v1283 = vpack.c.b16 %v895, %v891
        %v1284 = vpack.c.b16 %v896, %v892
        %v1285 = vpack.c.b16 %v897, %v893
        %v1286 = vpack.c.b16 %v902, %v898
        %v1287 = vpack.c.b16 %v903, %v899
        %v1288 = vpack.c.b16 %v904, %v900
        %v1289 = vpack.c.b16 %v905, %v901
        %v1290 = vpack.c.b16 %v910, %v906
        %v1291 = vpack.c.b16 %v911, %v907
        %v1292 = vpack.c.b16 %v912, %v908
        %v1293 = vpack.c.b16 %v913, %v909
        %v1294 = vpack.c.b16 %v918, %v914
        %v1295 = vpack.c.b16 %v919, %v915
        %v1296 = vpack.c.b16 %v920, %v916
        %v1297 = vpack.c.b16 %v921, %v917
        %v1298 = vpack.c.b16 %v926, %v922
        %v1299 = vpack.c.b16 %v927, %v923
        %v1300 = vpack.c.b16 %v928, %v924
        %v1301 = vpack.c.b16 %v929, %v925
        %v1302 = vpack.c.b16 %v934, %v930
        %v1303 = vpack.c.b16 %v935, %v931
        %v1304 = vpack.c.b16 %v936, %v932
        %v1305 = vpack.c.b16 %v937, %v933
        %v1306 = vpack.c.b16 %v942, %v938
        %v1307 = vpack.c.b16 %v943, %v939
        %v1308 = vpack.c.b16 %v944, %v940
        %v1309 = vpack.c.b16 %v945, %v941
        %v1310 = vpack.c.b16 %v950, %v946
        %v1311 = vpack.c.b16 %v951, %v947
        %v1312 = vpack.c.b16 %v952, %v948
        %v1313 = vpack.c.b16 %v953, %v949
        %v1314 = vpack.c.b16 %v958, %v954
        %v1315 = vpack.c.b16 %v959, %v955
        %v1316 = vpack.c.b16 %v960, %v956
        %v1317 = vpack.c.b16 %v961, %v957
        %v1318 = vpack.c.b16 %v966, %v962
        %v1319 = vpack.c.b16 %v967, %v963
        %v1320 = vpack.c.b16 %v968, %v964
        %v1321 = vpack.c.b16 %v969, %v965
        %v1322 = vpack.c.b16 %v974, %v970
        %v1323 = vpack.c.b16 %v975, %v971
        %v1324 = vpack.c.b16 %v976, %v972
        %v1325 = vpack.c.b16 %v977, %v973
        %v1326 = vpack.c.b16 %v982, %v978
        %v1327 = vpack.c.b16 %v983, %v979
        %v1328 = vpack.c.b16 %v984, %v980
        %v1329 = vpack.c.b16 %v985, %v981
        %v1330 = vpack.c.b16 %v990, %v986
        %v1331 = vpack.c.b16 %v991, %v987
        %v1332 = vpack.c.b16 %v992, %v988
        %v1333 = vpack.c.b16 %v993, %v989
        %v1334 = vpack.c.b16 %v998, %v994
        %v1335 = vpack.c.b16 %v999, %v995
        %v1336 = vpack.c.b16 %v1000, %v996
        %v1337 = vpack.c.b16 %v1001, %v997
        %v1338 = vpack.c.b16 %v1006, %v1002
        %v1339 = vpack.c.b16 %v1007, %v1003
        %v1340 = vpack.c.b16 %v1008, %v1004
        %v1341 = vpack.c.b16 %v1009, %v1005
        %v1342 = vpack.c.b16 %v1014, %v1010
        %v1343 = vpack.c.b16 %v1015, %v1011
        %v1344 = vpack.c.b16 %v1016, %v1012
        %v1345 = vpack.c.b16 %v1017, %v1013
        %v1346 = vpack.c.b16 %v1022, %v1018
        %v1347 = vpack.c.b16 %v1023, %v1019
        %v1348 = vpack.c.b16 %v1024, %v1020
        %v1349 = vpack.c.b16 %v1025, %v1021
        %v1350 = vpack.c.b16 %v1030, %v1026
        %v1351 = vpack.c.b16 %v1031, %v1027
        %v1352 = vpack.c.b16 %v1032, %v1028
        %v1353 = vpack.c.b16 %v1033, %v1029
        %v1354 = vpack.c.b16 %v1038, %v1034
        %v1355 = vpack.c.b16 %v1039, %v1035
        %v1356 = vpack.c.b16 %v1040, %v1036
        %v1357 = vpack.c.b16 %v1041, %v1037
        %v1358 = vpack.c.b16 %v1046, %v1042
        %v1359 = vpack.c.b16 %v1047, %v1043
        %v1360 = vpack.c.b16 %v1048, %v1044
        %v1361 = vpack.c.b16 %v1049, %v1045
        %v1362 = vpack.c.b16 %v1054, %v1050
        %v1363 = vpack.c.b16 %v1055, %v1051
        %v1364 = vpack.c.b16 %v1056, %v1052
        %v1365 = vpack.c.b16 %v1057, %v1053
        %v1366 = vpack.c.b16 %v1062, %v1058
        %v1367 = vpack.c.b16 %v1063, %v1059
        %v1368 = vpack.c.b16 %v1064, %v1060
        %v1369 = vpack.c.b16 %v1065, %v1061
        %v1370 = vpack.c.b16 %v1070, %v1066
        %v1371 = vpack.c.b16 %v1071, %v1067
        %v1372 = vpack.c.b16 %v1072, %v1068
        %v1373 = vpack.c.b16 %v1073, %v1069
        %v1374 = vpack.c.b16 %v1078, %v1074
        %v1375 = vpack.c.b16 %v1079, %v1075
        %v1376 = vpack.c.b16 %v1080, %v1076
        %v1377 = vpack.c.b16 %v1081, %v1077
        %v1378 = vpack.c.b16 %v1086, %v1082
        %v1379 = vpack.c.b16 %v1087, %v1083
        %v1380 = vpack.c.b16 %v1088, %v1084
        %v1381 = vpack.c.b16 %v1089, %v1085
        %v1382 = vpack.c.b16 %v1094, %v1090
        %v1383 = vpack.c.b16 %v1095, %v1091
        %v1384 = vpack.c.b16 %v1096, %v1092
        %v1385 = vpack.c.b16 %v1097, %v1093
        %v1386 = vpack.c.b16 %v1102, %v1098
        %v1387 = vpack.c.b16 %v1103, %v1099
        %v1388 = vpack.c.b16 %v1104, %v1100
        %v1389 = vpack.c.b16 %v1105, %v1101
        %v1390 = vpack.c.b16 %v1110, %v1106
        %v1391 = vpack.c.b16 %v1111, %v1107
        %v1392 = vpack.c.b16 %v1112, %v1108
        %v1393 = vpack.c.b16 %v1113, %v1109
        %v1394 = vpack.c.b16 %v1118, %v1114
        %v1395 = vpack.c.b16 %v1119, %v1115
        %v1396 = vpack.c.b16 %v1120, %v1116
        %v1397 = vpack.c.b16 %v1121, %v1117
        %v1398 = vpack.c.b16 %v1126, %v1122
        %v1399 = vpack.c.b16 %v1127, %v1123
        %v1400 = vpack.c.b16 %v1128, %v1124
        %v1401 = vpack.c.b16 %v1129, %v1125
        %v1402 = vpack.c.b16 %v1134, %v1130
        %v1403 = vpack.c.b16 %v1135, %v1131
        %v1404 = vpack.c.b16 %v1136, %v1132
        %v1405 = vpack.c.b16 %v1137, %v1133
        %v1406 = vpack.c.b16 %v1142, %v1138
        %v1407 = vpack.c.b16 %v1143, %v1139
        %v1408 = vpack.c.b16 %v1144, %v1140
        %v1409 = vpack.c.b16 %v1145, %v1141
        %v1410 = vpack.c.b16 %v1150, %v1146
        %v1411 = vpack.c.b16 %v1151, %v1147
        %v1412 = vpack.c.b16 %v1152, %v1148
        %v1413 = vpack.c.b16 %v1153, %v1149
        %v1414 = vpack.c.b16 %v1158, %v1154
        %v1415 = vpack.c.b16 %v1159, %v1155
        %v1416 = vpack.c.b16 %v1160, %v1156
        %v1417 = vpack.c.b16 %v1161, %v1157
        %v1418 = vpack.c.b16 %v1166, %v1162
        %v1419 = vpack.c.b16 %v1167, %v1163
        %v1420 = vpack.c.b16 %v1168, %v1164
        %v1421 = vpack.c.b16 %v1169, %v1165
        %v1422 = vpack.c.b16 %v1174, %v1170
        %v1423 = vpack.c.b16 %v1175, %v1171
        %v1424 = vpack.c.b16 %v1176, %v1172
        %v1425 = vpack.c.b16 %v1177, %v1173
        %v1426 = vpack.c.b16 %v1182, %v1178
        %v1427 = vpack.c.b16 %v1183, %v1179
        %v1428 = vpack.c.b16 %v1184, %v1180
        %v1429 = vpack.c.b16 %v1185, %v1181
        %v1430 = vpack.c.b16 %v1190, %v1186
        %v1431 = vpack.c.b16 %v1191, %v1187
        %v1432 = vpack.c.b16 %v1192, %v1188
        %v1433 = vpack.c.b16 %v1193, %v1189
        %v1434 = vpack.c.b16 %v1198, %v1194
        %v1435 = vpack.c.b16 %v1199, %v1195
        %v1436 = vpack.c.b16 %v1200, %v1196
        %v1437 = vpack.c.b16 %v1201, %v1197
        %v1438 = vpack.c.b16 %v1206, %v1202
        %v1439 = vpack.c.b16 %v1207, %v1203
        %v1440 = vpack.c.b16 %v1208, %v1204
        %v1441 = vpack.c.b16 %v1209, %v1205
        %v1442 = vpack.c.b16 %v1214, %v1210
        %v1443 = vpack.c.b16 %v1215, %v1211
        %v1444 = vpack.c.b16 %v1216, %v1212
        %v1445 = vpack.c.b16 %v1217, %v1213
        %v1446 = vpack.c.b16 %v1222, %v1218
        %v1447 = vpack.c.b16 %v1223, %v1219
        %v1448 = vpack.c.b16 %v1224, %v1220
        %v1449 = vpack.c.b16 %v1225, %v1221
        %1674 = vmatprep.subr.bf16.mxu0 %v1227
        %1675 = vmatpush1.bf16.msra.mxu0 %v1226
        %1676 = vmatprep.subr.bf16.mxu0 %v1231
        %1677 = vmatpush1.bf16.msra.mxu0 %v1230
        %1678 = vmatprep.subr.bf16.mxu0 %v1235
        %1679 = vmatpush1.bf16.msra.mxu0 %v1234
        %1680 = vmatprep.subr.bf16.mxu0 %v1239
        %1681 = vmatpush1.bf16.msra.mxu0 %v1238
        %1682 = vmatprep.subr.bf16.mxu0 %v1243
        %1683 = vmatpush1.bf16.msra.mxu0 %v1242
        %1684 = vmatprep.subr.bf16.mxu0 %v1247
        %1685 = vmatpush1.bf16.msra.mxu0 %v1246
        %1686 = vmatprep.subr.bf16.mxu0 %v1251
        %1687 = vmatpush1.bf16.msra.mxu0 %v1250
        %1688 = vmatprep.subr.bf16.mxu0 %v1255
        %1689 = vmatpush1.bf16.msra.mxu0 %v1254
        %1690 = vmatprep.subr.bf16.mxu0 %v1259
        %1691 = vmatpush1.bf16.msra.mxu0 %v1258
        %1692 = vmatprep.subr.bf16.mxu0 %v1263
        %1693 = vmatpush1.bf16.msra.mxu0 %v1262
        %1694 = vmatprep.subr.bf16.mxu0 %v1267
        %1695 = vmatpush1.bf16.msra.mxu0 %v1266
        %1696 = vmatprep.subr.bf16.mxu0 %v1271
        %1697 = vmatpush1.bf16.msra.mxu0 %v1270
        %1698 = vmatprep.subr.bf16.mxu0 %v1275
        %1699 = vmatpush1.bf16.msra.mxu0 %v1274
        %1700 = vmatprep.subr.bf16.mxu0 %v1279
        %1701 = vmatpush1.bf16.msra.mxu0 %v1278
        %1702 = vmatprep.subr.bf16.mxu0 %v1283
        %1703 = vmatpush1.bf16.msra.mxu0 %v1282
        %1704 = vmatprep.subr.bf16.mxu0 %v1287
        %1705 = vmatpush1.bf16.msra.mxu0 %v1286
        %1706 = vmatprep.mubr.bf16.mxu0 %v536
        %1707 = vmatmul.mubr.bf16.gmra.mrb[0].mxu0 %v522
        %v1708 = vpop.f32.mrb[0].mxu0
        %v1709 = vadd.f32 0.0, %v1708
        %v1710 = vpop.f32.mrb[0].mxu0
        %v1711 = vadd.f32 0.0, %v1710
        %v1712 = vpop.f32.mrb[0].mxu0
        %v1713 = vpop.f32.mrb[0].mxu0
        %1714 = vdwg.mxu0
        %1715 = vmatprep.subr.bf16.mxu0 %v1291
        %1716 = vmatpush1.bf16.msra.mxu0 %v1290
        %1717 = vmatprep.subr.bf16.mxu0 %v1295
        %1718 = vmatpush1.bf16.msra.mxu0 %v1294
        %1719 = vmatprep.subr.bf16.mxu0 %v1299
        %1720 = vmatpush1.bf16.msra.mxu0 %v1298
        %1721 = vmatprep.subr.bf16.mxu0 %v1303
        %1722 = vmatpush1.bf16.msra.mxu0 %v1302
        %1723 = vmatprep.subr.bf16.mxu0 %v1307
        %1724 = vmatpush1.bf16.msra.mxu0 %v1306
        %1725 = vmatprep.subr.bf16.mxu0 %v1311
        %1726 = vmatpush1.bf16.msra.mxu0 %v1310
        %1727 = vmatprep.subr.bf16.mxu0 %v1315
        %1728 = vmatpush1.bf16.msra.mxu0 %v1314
        %1729 = vmatprep.subr.bf16.mxu0 %v1319
        %1730 = vmatpush1.bf16.msra.mxu0 %v1318
        %1731 = vmatprep.subr.bf16.mxu0 %v1323
        %1732 = vmatpush1.bf16.msra.mxu0 %v1322
        %1733 = vmatprep.subr.bf16.mxu0 %v1327
        %1734 = vmatpush1.bf16.msra.mxu0 %v1326
        %1735 = vmatprep.subr.bf16.mxu0 %v1331
        %1736 = vmatpush1.bf16.msra.mxu0 %v1330
        %1737 = vmatprep.subr.bf16.mxu0 %v1335
        %1738 = vmatpush1.bf16.msra.mxu0 %v1334
        %1739 = vmatprep.subr.bf16.mxu0 %v1339
        %1740 = vmatpush1.bf16.msra.mxu0 %v1338
        %1741 = vmatprep.subr.bf16.mxu0 %v1343
        %1742 = vmatpush1.bf16.msra.mxu0 %v1342
        %1743 = vmatprep.subr.bf16.mxu0 %v1347
        %1744 = vmatpush1.bf16.msra.mxu0 %v1346
        %1745 = vmatprep.subr.bf16.mxu0 %v1351
        %1746 = vmatpush1.bf16.msra.mxu0 %v1350
        %1747 = vmatprep.mubr.bf16.mxu0 %v546
        %1748 = vmatmul.mubr.bf16.gmra.mrb[0].mxu0 %v544
        %v1749 = vpop.f32.mrb[0].mxu0
        %v1750 = vadd.f32 %v1709, %v1749
        %v1751 = vpop.f32.mrb[0].mxu0
        %v1752 = vadd.f32 %v1711, %v1751
        %v1753 = vpop.f32.mrb[0].mxu0
        %v1754 = vpop.f32.mrb[0].mxu0
        %1755 = vdwg.mxu0
        %1756 = vmatprep.subr.bf16.mxu0 %v1355
        %1757 = vmatpush1.bf16.msra.mxu0 %v1354
        %1758 = vmatprep.subr.bf16.mxu0 %v1359
        %1759 = vmatpush1.bf16.msra.mxu0 %v1358
        %1760 = vmatprep.subr.bf16.mxu0 %v1363
        %1761 = vmatpush1.bf16.msra.mxu0 %v1362
        %1762 = vmatprep.subr.bf16.mxu0 %v1367
        %1763 = vmatpush1.bf16.msra.mxu0 %v1366
        %1764 = vmatprep.subr.bf16.mxu0 %v1371
        %1765 = vmatpush1.bf16.msra.mxu0 %v1370
        %1766 = vmatprep.subr.bf16.mxu0 %v1375
        %1767 = vmatpush1.bf16.msra.mxu0 %v1374
        %1768 = vmatprep.subr.bf16.mxu0 %v1379
        %1769 = vmatpush1.bf16.msra.mxu0 %v1378
        %1770 = vmatprep.subr.bf16.mxu0 %v1383
        %1771 = vmatpush1.bf16.msra.mxu0 %v1382
        %1772 = vmatprep.subr.bf16.mxu0 %v1387
        %1773 = vmatpush1.bf16.msra.mxu0 %v1386
        %1774 = vmatprep.subr.bf16.mxu0 %v1391
        %1775 = vmatpush1.bf16.msra.mxu0 %v1390
        %1776 = vmatprep.subr.bf16.mxu0 %v1395
        %1777 = vmatpush1.bf16.msra.mxu0 %v1394
        %1778 = vmatprep.subr.bf16.mxu0 %v1399
        %1779 = vmatpush1.bf16.msra.mxu0 %v1398
        %1780 = vmatprep.subr.bf16.mxu0 %v1403
        %1781 = vmatpush1.bf16.msra.mxu0 %v1402
        %1782 = vmatprep.subr.bf16.mxu0 %v1407
        %1783 = vmatpush1.bf16.msra.mxu0 %v1406
        %1784 = vmatprep.subr.bf16.mxu0 %v1411
        %1785 = vmatpush1.bf16.msra.mxu0 %v1410
        %1786 = vmatprep.subr.bf16.mxu0 %v1415
        %1787 = vmatpush1.bf16.msra.mxu0 %v1414
        %1788 = vmatprep.mubr.bf16.mxu0 %v543
        %1789 = vmatmul.mubr.bf16.gmra.mrb[0].mxu0 %v529
        %v1790 = vpop.f32.mrb[0].mxu0
        %v1791 = vadd.f32 %v1750, %v1790
        %v1792 = vpop.f32.mrb[0].mxu0
        %v1793 = vadd.f32 %v1752, %v1792
        %v1794 = vpop.f32.mrb[0].mxu0
        %v1795 = vpop.f32.mrb[0].mxu0
        %1796 = vdwg.mxu0
        %1797 = vmatprep.subr.bf16.mxu0 %v1419
        %1798 = vmatpush1.bf16.msra.mxu0 %v1418
        %1799 = vmatprep.subr.bf16.mxu0 %v1423
        %1800 = vmatpush1.bf16.msra.mxu0 %v1422
        %1801 = vmatprep.subr.bf16.mxu0 %v1427
        %1802 = vmatpush1.bf16.msra.mxu0 %v1426
        %1803 = vmatprep.subr.bf16.mxu0 %v1431
        %1804 = vmatpush1.bf16.msra.mxu0 %v1430
        %1805 = vmatprep.subr.bf16.mxu0 %v1435
        %1806 = vmatpush1.bf16.msra.mxu0 %v1434
        %1807 = vmatprep.subr.bf16.mxu0 %v1439
        %1808 = vmatpush1.bf16.msra.mxu0 %v1438
        %1809 = vmatprep.subr.bf16.mxu0 %v1443
        %1810 = vmatpush1.bf16.msra.mxu0 %v1442
        %1811 = vmatprep.subr.bf16.mxu0 %v1447
        %1812 = vmatpush1.bf16.msra.mxu0 %v1446
        %1813 = vmatprep.subr.bf16.mxu0 0
        %1814 = vmatpush1.bf16.msra.mxu0 0
        %1815 = vmatprep.subr.bf16.mxu0 0
        %1816 = vmatpush1.bf16.msra.mxu0 0
        %1817 = vmatprep.subr.bf16.mxu0 0
        %1818 = vmatpush1.bf16.msra.mxu0 0
        %1819 = vmatprep.subr.bf16.mxu0 0
        %1820 = vmatpush1.bf16.msra.mxu0 0
        %1821 = vmatprep.subr.bf16.mxu0 0
        %1822 = vmatpush1.bf16.msra.mxu0 0
        %1823 = vmatprep.subr.bf16.mxu0 0
        %1824 = vmatpush1.bf16.msra.mxu0 0
        %1825 = vmatprep.subr.bf16.mxu0 0
        %1826 = vmatpush1.bf16.msra.mxu0 0
        %1827 = vmatprep.subr.bf16.mxu0 0
        %1828 = vmatpush1.bf16.msra.mxu0 0
        %1829 = vmatprep.mubr.bf16.mxu0 0
        %1830 = vmatmul.mubr.bf16.gmra.mrb[0].mxu0 %v545
        %v1831 = vpop.f32.mrb[0].mxu0
        %v1832 = vadd.f32 %v1791, %v1831
        %v1833 = vpop.f32.mrb[0].mxu0
        %v1834 = vadd.f32 %v1793, %v1833
        %v1835 = vpop.f32.mrb[0].mxu0
        %v1836 = vpop.f32.mrb[0].mxu0
        %1837 = vdwg.mxu0
        %1838 = vmatprep.subr.bf16.mxu0 %v1229
        %1839 = vmatpush1.bf16.msra.mxu0 %v1228
        %1840 = vmatprep.subr.bf16.mxu0 %v1233
        %1841 = vmatpush1.bf16.msra.mxu0 %v1232
        %1842 = vmatprep.subr.bf16.mxu0 %v1237
        %1843 = vmatpush1.bf16.msra.mxu0 %v1236
        %1844 = vmatprep.subr.bf16.mxu0 %v1241
        %1845 = vmatpush1.bf16.msra.mxu0 %v1240
        %1846 = vmatprep.subr.bf16.mxu0 %v1245
        %1847 = vmatpush1.bf16.msra.mxu0 %v1244
        %1848 = vmatprep.subr.bf16.mxu0 %v1249
        %1849 = vmatpush1.bf16.msra.mxu0 %v1248
        %1850 = vmatprep.subr.bf16.mxu0 %v1253
        %1851 = vmatpush1.bf16.msra.mxu0 %v1252
        %1852 = vmatprep.subr.bf16.mxu0 %v1257
        %1853 = vmatpush1.bf16.msra.mxu0 %v1256
        %1854 = vmatprep.subr.bf16.mxu0 %v1261
        %1855 = vmatpush1.bf16.msra.mxu0 %v1260
        %1856 = vmatprep.subr.bf16.mxu0 %v1265
        %1857 = vmatpush1.bf16.msra.mxu0 %v1264
        %1858 = vmatprep.subr.bf16.mxu0 %v1269
        %1859 = vmatpush1.bf16.msra.mxu0 %v1268
        %1860 = vmatprep.subr.bf16.mxu0 %v1273
        %1861 = vmatpush1.bf16.msra.mxu0 %v1272
        %1862 = vmatprep.subr.bf16.mxu0 %v1277
        %1863 = vmatpush1.bf16.msra.mxu0 %v1276
        %1864 = vmatprep.subr.bf16.mxu0 %v1281
        %1865 = vmatpush1.bf16.msra.mxu0 %v1280
        %1866 = vmatprep.subr.bf16.mxu0 %v1285
        %1867 = vmatpush1.bf16.msra.mxu0 %v1284
        %1868 = vmatprep.subr.bf16.mxu0 %v1289
        %1869 = vmatpush1.bf16.msra.mxu0 %v1288
        %1870 = vmatprep.mubr.bf16.mxu0 %v536
        %1871 = vmatmul.mubr.bf16.gmra.mrb[0].mxu0 %v522
        %v1872 = vpop.f32.mrb[0].mxu0
        %v1873 = vadd.f32 0.0, %v1872
        %v1874 = vpop.f32.mrb[0].mxu0
        %v1875 = vadd.f32 0.0, %v1874
        %v1876 = vpop.f32.mrb[0].mxu0
        %v1877 = vpop.f32.mrb[0].mxu0
        %1878 = vdwg.mxu0
        %1879 = vmatprep.subr.bf16.mxu0 %v1293
        %1880 = vmatpush1.bf16.msra.mxu0 %v1292
        %1881 = vmatprep.subr.bf16.mxu0 %v1297
        %1882 = vmatpush1.bf16.msra.mxu0 %v1296
        %1883 = vmatprep.subr.bf16.mxu0 %v1301
        %1884 = vmatpush1.bf16.msra.mxu0 %v1300
        %1885 = vmatprep.subr.bf16.mxu0 %v1305
        %1886 = vmatpush1.bf16.msra.mxu0 %v1304
        %1887 = vmatprep.subr.bf16.mxu0 %v1309
        %1888 = vmatpush1.bf16.msra.mxu0 %v1308
        %1889 = vmatprep.subr.bf16.mxu0 %v1313
        %1890 = vmatpush1.bf16.msra.mxu0 %v1312
        %1891 = vmatprep.subr.bf16.mxu0 %v1317
        %1892 = vmatpush1.bf16.msra.mxu0 %v1316
        %1893 = vmatprep.subr.bf16.mxu0 %v1321
        %1894 = vmatpush1.bf16.msra.mxu0 %v1320
        %1895 = vmatprep.subr.bf16.mxu0 %v1325
        %1896 = vmatpush1.bf16.msra.mxu0 %v1324
        %1897 = vmatprep.subr.bf16.mxu0 %v1329
        %1898 = vmatpush1.bf16.msra.mxu0 %v1328
        %1899 = vmatprep.subr.bf16.mxu0 %v1333
        %1900 = vmatpush1.bf16.msra.mxu0 %v1332
        %1901 = vmatprep.subr.bf16.mxu0 %v1337
        %1902 = vmatpush1.bf16.msra.mxu0 %v1336
        %1903 = vmatprep.subr.bf16.mxu0 %v1341
        %1904 = vmatpush1.bf16.msra.mxu0 %v1340
        %1905 = vmatprep.subr.bf16.mxu0 %v1345
        %1906 = vmatpush1.bf16.msra.mxu0 %v1344
        %1907 = vmatprep.subr.bf16.mxu0 %v1349
        %1908 = vmatpush1.bf16.msra.mxu0 %v1348
        %1909 = vmatprep.subr.bf16.mxu0 %v1353
        %1910 = vmatpush1.bf16.msra.mxu0 %v1352
        %1911 = vmatprep.mubr.bf16.mxu0 %v546
        %1912 = vmatmul.mubr.bf16.gmra.mrb[0].mxu0 %v544
        %v1913 = vpop.f32.mrb[0].mxu0
        %v1914 = vadd.f32 %v1873, %v1913
        %v1915 = vpop.f32.mrb[0].mxu0
        %v1916 = vadd.f32 %v1875, %v1915
        %v1917 = vpop.f32.mrb[0].mxu0
        %v1918 = vpop.f32.mrb[0].mxu0
        %1919 = vdwg.mxu0
        %1920 = vmatprep.subr.bf16.mxu0 %v1357
        %1921 = vmatpush1.bf16.msra.mxu0 %v1356
        %1922 = vmatprep.subr.bf16.mxu0 %v1361
        %1923 = vmatpush1.bf16.msra.mxu0 %v1360
        %1924 = vmatprep.subr.bf16.mxu0 %v1365
        %1925 = vmatpush1.bf16.msra.mxu0 %v1364
        %1926 = vmatprep.subr.bf16.mxu0 %v1369
        %1927 = vmatpush1.bf16.msra.mxu0 %v1368
        %1928 = vmatprep.subr.bf16.mxu0 %v1373
        %1929 = vmatpush1.bf16.msra.mxu0 %v1372
        %1930 = vmatprep.subr.bf16.mxu0 %v1377
        %1931 = vmatpush1.bf16.msra.mxu0 %v1376
        %1932 = vmatprep.subr.bf16.mxu0 %v1381
        %1933 = vmatpush1.bf16.msra.mxu0 %v1380
        %1934 = vmatprep.subr.bf16.mxu0 %v1385
        %1935 = vmatpush1.bf16.msra.mxu0 %v1384
        %1936 = vmatprep.subr.bf16.mxu0 %v1389
        %1937 = vmatpush1.bf16.msra.mxu0 %v1388
        %1938 = vmatprep.subr.bf16.mxu0 %v1393
        %1939 = vmatpush1.bf16.msra.mxu0 %v1392
        %1940 = vmatprep.subr.bf16.mxu0 %v1397
        %1941 = vmatpush1.bf16.msra.mxu0 %v1396
        %1942 = vmatprep.subr.bf16.mxu0 %v1401
        %1943 = vmatpush1.bf16.msra.mxu0 %v1400
        %1944 = vmatprep.subr.bf16.mxu0 %v1405
        %1945 = vmatpush1.bf16.msra.mxu0 %v1404
        %1946 = vmatprep.subr.bf16.mxu0 %v1409
        %1947 = vmatpush1.bf16.msra.mxu0 %v1408
        %1948 = vmatprep.subr.bf16.mxu0 %v1413
        %1949 = vmatpush1.bf16.msra.mxu0 %v1412
        %1950 = vmatprep.subr.bf16.mxu0 %v1417
        %1951 = vmatpush1.bf16.msra.mxu0 %v1416
        %1952 = vmatprep.mubr.bf16.mxu0 %v543
        %1953 = vmatmul.mubr.bf16.gmra.mrb[0].mxu0 %v529
        %v1954 = vpop.f32.mrb[0].mxu0
        %v1955 = vadd.f32 %v1914, %v1954
        %v1956 = vpop.f32.mrb[0].mxu0
        %v1957 = vadd.f32 %v1916, %v1956
        %v1958 = vpop.f32.mrb[0].mxu0
        %v1959 = vpop.f32.mrb[0].mxu0
        %1960 = vdwg.mxu0
        %1961 = vmatprep.subr.bf16.mxu0 %v1421
        %1962 = vmatpush1.bf16.msra.mxu0 %v1420
        %1963 = vmatprep.subr.bf16.mxu0 %v1425
        %1964 = vmatpush1.bf16.msra.mxu0 %v1424
        %1965 = vmatprep.subr.bf16.mxu0 %v1429
        %1966 = vmatpush1.bf16.msra.mxu0 %v1428
        %1967 = vmatprep.subr.bf16.mxu0 %v1433
        %1968 = vmatpush1.bf16.msra.mxu0 %v1432
        %1969 = vmatprep.subr.bf16.mxu0 %v1437
        %1970 = vmatpush1.bf16.msra.mxu0 %v1436
        %1971 = vmatprep.subr.bf16.mxu0 %v1441
        %1972 = vmatpush1.bf16.msra.mxu0 %v1440
        %1973 = vmatprep.subr.bf16.mxu0 %v1445
        %1974 = vmatpush1.bf16.msra.mxu0 %v1444
        %1975 = vmatprep.subr.bf16.mxu0 %v1449
        %1976 = vmatpush1.bf16.msra.mxu0 %v1448
        %1977 = vmatprep.subr.bf16.mxu0 0
        %1978 = vmatpush1.bf16.msra.mxu0 0
        %1979 = vmatprep.subr.bf16.mxu0 0
        %1980 = vmatpush1.bf16.msra.mxu0 0
        %1981 = vmatprep.subr.bf16.mxu0 0
        %1982 = vmatpush1.bf16.msra.mxu0 0
        %1983 = vmatprep.subr.bf16.mxu0 0
        %1984 = vmatpush1.bf16.msra.mxu0 0
        %1985 = vmatprep.subr.bf16.mxu0 0
        %1986 = vmatpush1.bf16.msra.mxu0 0
        %1987 = vmatprep.subr.bf16.mxu0 0
        %1988 = vmatpush1.bf16.msra.mxu0 0
        %1989 = vmatprep.subr.bf16.mxu0 0
        %1990 = vmatpush1.bf16.msra.mxu0 0
        %1991 = vmatprep.subr.bf16.mxu0 0
        %1992 = vmatpush1.bf16.msra.mxu0 0
        %1993 = vmatprep.mubr.bf16.mxu0 0
        %1994 = vmatmul.mubr.bf16.gmra.mrb[0].mxu0 %v545
        %v1995 = vpop.f32.mrb[0].mxu0
        %v1996 = vadd.f32 %v1955, %v1995
        %v1997 = vpop.f32.mrb[0].mxu0
        %v1998 = vadd.f32 %v1957, %v1997
        %v1999 = vpop.f32.mrb[0].mxu0
        %v2000 = vpop.f32.mrb[0].mxu0
        %2001 = vdwg.mxu0
        %v2006 = vcombine.low %v1832, %v1834
        %v2007 = vcombine.low %v1996, %v1998
        %v2009 = vunpack.c.l.s4 1983009808
        %v2010 = vunpack.c.0.s8 %v2009
        %v2011 = vlaneseq
        %v2012 = vshrl.u32 %v2011, 7
        %v2013 = vsub.s32 %v2010, %v2012
        %v2014 = vrot.slane %v2006, %v2013
        %v2016 = vunpack.c.l.s4 1983009808
        %v2017 = vunpack.c.0.s8 %v2016
        %v2018 = vlaneseq
        %v2019 = vshrl.u32 %v2018, 7
        %v2020 = vsub.s32 %v2017, %v2019
        %v2021 = vrot.slane %v2007, %v2020
        %v2022 = vcombine.low %v2014, %v2021
        %v2024 = vadd.f32 %v272, %v2022
        %2025 = vst [vmem:[#allocation2] sm:$0xff] %v2024
        %p2026 = scmp.eq.s32.totalorder %s22, 3
        // Predicated region
        $region45: #{flappy_bird_forward.3} parent=39 // pred_check
          %p2027 = pneg %p2026
        $region46: #{flappy_bird_forward.3} parent=39 // pred_check_branch
          %2029 = sbr.rel (%p2027) target = $region48
        $region47: #{flappy_bird_forward.3} parent=39 // pred_region
          %v2030 = vld [vmem:[#allocation2] sm:$0xff]
          %v2031 = vld [vmem:[%s2] sm:$0xf]
          %v2033 = vlaneseq
          %v2034 = vshrl.u32 %v2033, 7
          %v2035 = vsub.s32 0, %v2034
          %v2036 = vrot.slane %v2031, %v2035
          %v2037 = vlaneseq
          %v2038 = vshrl.u32 %v2037, 7
          %v2039 = vsub.s32 1, %v2038
          %v2040 = vrot.slane %v2031, %v2039
          %v2041 = vlaneseq
          %v2042 = vshrl.u32 %v2041, 7
          %v2043 = vsub.s32 2, %v2042
          %v2044 = vrot.slane %v2031, %v2043
          %v2045 = vlaneseq
          %v2046 = vshrl.u32 %v2045, 7
          %v2047 = vsub.s32 3, %v2046
          %v2048 = vrot.slane %v2031, %v2047
          %v2049 = vcombine.low %v2036, %v2040
          %v2050 = vcombine.low %v2044, %v2048
          %v2052 = vunpack.c.l.s4 1983009808
          %v2053 = vunpack.c.0.s8 %v2052
          %v2054 = vlaneseq
          %v2055 = vshrl.u32 %v2054, 7
          %v2056 = vsub.s32 %v2053, %v2055
          %v2057 = vrot.slane %v2049, %v2056
          %v2059 = vunpack.c.l.s4 1983009808
          %v2060 = vunpack.c.0.s8 %v2059
          %v2061 = vlaneseq
          %v2062 = vshrl.u32 %v2061, 7
          %v2063 = vsub.s32 %v2060, %v2062
          %v2064 = vrot.slane %v2050, %v2063
          %v2065 = vcombine.low %v2057, %v2064
          %v2067 = vadd.f32 %v2030, %v2065
          %v2068 = vmax.f32 %v2067, 0.0
          %v2070 = vcombine.high %v2068, %v2068
          %v2072 = vunpack.c.l.s4 1983009808
          %v2073 = vunpack.c.0.s8 %v2072
          %v2074 = vlaneseq
          %v2075 = vshrl.u32 %v2074, 7
          %v2076 = vsub.s32 %v2073, %v2075
          %v2077 = vrot.slane %v2068, %v2076
          %v2079 = vunpack.c.l.s4 1983009808
          %v2080 = vunpack.c.0.s8 %v2079
          %v2081 = vlaneseq
          %v2082 = vshrl.u32 %v2081, 7
          %v2083 = vsub.s32 %v2080, %v2082
          %v2084 = vrot.slane %v2070, %v2083
          %v2085 = vcombine.high %v2077, %v2077
          %v2086 = vcombine.high %v2084, %v2084
          %v2091 = vpack.c.bf16 %v2077, %v2077
          %v2092 = vpack.c.bf16 %v2085, %v2085
          %v2093 = vpack.c.bf16 %v2084, %v2084
          %v2094 = vpack.c.bf16 %v2086, %v2086
          %v2095 = vld [vmem:[%s3] sm:$0xf]
          %v2096 = vld [vmem:[%s3 + $0x4] sm:$0xf]
          %v2097 = vld [vmem:[%s3 + $0x8] sm:$0xf]
          %v2098 = vld [vmem:[%s3 + $0xc] sm:$0xf]
          %v2099 = vld [vmem:[%s3 + $0x10] sm:$0xf]
          %v2100 = vld [vmem:[%s3 + $0x14] sm:$0xf]
          %v2101 = vld [vmem:[%s3 + $0x18] sm:$0xf]
          %v2102 = vld [vmem:[%s3 + $0x1c] sm:$0xf]
          %v2103 = vld [vmem:[%s3 + $0x20] sm:$0xf]
          %v2104 = vld [vmem:[%s3 + $0x24] sm:$0xf]
          %v2105 = vld [vmem:[%s3 + $0x28] sm:$0xf]
          %v2106 = vld [vmem:[%s3 + $0x2c] sm:$0xf]
          %v2107 = vld [vmem:[%s3 + $0x30] sm:$0xf]
          %v2108 = vld [vmem:[%s3 + $0x34] sm:$0xf]
          %v2109 = vld [vmem:[%s3 + $0x38] sm:$0xf]
          %v2110 = vld [vmem:[%s3 + $0x3c] sm:$0xf]
          %v2111 = vld [vmem:[%s3 + $0x40] sm:$0xf]
          %v2112 = vld [vmem:[%s3 + $0x44] sm:$0xf]
          %v2113 = vld [vmem:[%s3 + $0x48] sm:$0xf]
          %v2114 = vld [vmem:[%s3 + $0x4c] sm:$0xf]
          %v2115 = vld [vmem:[%s3 + $0x50] sm:$0xf]
          %v2116 = vld [vmem:[%s3 + $0x54] sm:$0xf]
          %v2117 = vld [vmem:[%s3 + $0x58] sm:$0xf]
          %v2118 = vld [vmem:[%s3 + $0x5c] sm:$0xf]
          %v2119 = vld [vmem:[%s3 + $0x60] sm:$0xf]
          %v2120 = vld [vmem:[%s3 + $0x64] sm:$0xf]
          %v2121 = vld [vmem:[%s3 + $0x68] sm:$0xf]
          %v2122 = vld [vmem:[%s3 + $0x6c] sm:$0xf]
          %v2123 = vld [vmem:[%s3 + $0x70] sm:$0xf]
          %v2124 = vld [vmem:[%s3 + $0x74] sm:$0xf]
          %v2125 = vld [vmem:[%s3 + $0x78] sm:$0xf]
          %v2126 = vld [vmem:[%s3 + $0x7c] sm:$0xf]
          %v2127 = vld [vmem:[%s3 + $0x80] sm:$0xf]
          %v2128 = vld [vmem:[%s3 + $0x84] sm:$0xf]
          %v2129 = vld [vmem:[%s3 + $0x88] sm:$0xf]
          %v2130 = vld [vmem:[%s3 + $0x8c] sm:$0xf]
          %v2131 = vld [vmem:[%s3 + $0x90] sm:$0xf]
          %v2132 = vld [vmem:[%s3 + $0x94] sm:$0xf]
          %v2133 = vld [vmem:[%s3 + $0x98] sm:$0xf]
          %v2134 = vld [vmem:[%s3 + $0x9c] sm:$0xf]
          %v2135 = vld [vmem:[%s3 + $0xa0] sm:$0xf]
          %v2136 = vld [vmem:[%s3 + $0xa4] sm:$0xf]
          %v2137 = vld [vmem:[%s3 + $0xa8] sm:$0xf]
          %v2138 = vld [vmem:[%s3 + $0xac] sm:$0xf]
          %v2139 = vld [vmem:[%s3 + $0xb0] sm:$0xf]
          %v2140 = vld [vmem:[%s3 + $0xb4] sm:$0xf]
          %v2141 = vld [vmem:[%s3 + $0xb8] sm:$0xf]
          %v2142 = vld [vmem:[%s3 + $0xbc] sm:$0xf]
          %v2143 = vld [vmem:[%s3 + $0xc0] sm:$0xf]
          %v2144 = vld [vmem:[%s3 + $0xc4] sm:$0xf]
          %v2145 = vld [vmem:[%s3 + $0xc8] sm:$0xf]
          %v2146 = vld [vmem:[%s3 + $0xcc] sm:$0xf]
          %v2147 = vld [vmem:[%s3 + $0xd0] sm:$0xf]
          %v2148 = vld [vmem:[%s3 + $0xd4] sm:$0xf]
          %v2149 = vld [vmem:[%s3 + $0xd8] sm:$0xf]
          %v2150 = vld [vmem:[%s3 + $0xdc] sm:$0xf]
          %v2151 = vld [vmem:[%s3 + $0xe0] sm:$0xf]
          %v2152 = vld [vmem:[%s3 + $0xe4] sm:$0xf]
          %v2153 = vld [vmem:[%s3 + $0xe8] sm:$0xf]
          %v2154 = vld [vmem:[%s3 + $0xec] sm:$0xf]
          %v2155 = vld [vmem:[%s3 + $0xf0] sm:$0xf]
          %v2156 = vld [vmem:[%s3 + $0xf4] sm:$0xf]
          %v2157 = vld [vmem:[%s3 + $0xf8] sm:$0xf]
          %v2158 = vld [vmem:[%s3 + $0xfc] sm:$0xf]
          %v2159 = vld [vmem:[%s4] sm:$0x1]
          %v2161 = vlaneseq
          %v2162 = vshrl.u32 %v2161, 7
          %v2163 = vsub.s32 0, %v2162
          %v2164 = vrot.slane %v2159, %v2163
          %v2230 = vunpack.c.l.b16 %v2095
          %v2231 = vunpack.c.l.b16 %v2096
          %v2232 = vunpack.c.l.b16 %v2097
          %v2233 = vunpack.c.l.b16 %v2098
          %v2234 = vunpack.c.l.b16 %v2099
          %v2235 = vunpack.c.l.b16 %v2100
          %v2236 = vunpack.c.l.b16 %v2101
          %v2237 = vunpack.c.l.b16 %v2102
          %v2238 = vunpack.c.l.b16 %v2103
          %v2239 = vunpack.c.l.b16 %v2104
          %v2240 = vunpack.c.l.b16 %v2105
          %v2241 = vunpack.c.l.b16 %v2106
          %v2242 = vunpack.c.l.b16 %v2107
          %v2243 = vunpack.c.l.b16 %v2108
          %v2244 = vunpack.c.l.b16 %v2109
          %v2245 = vunpack.c.l.b16 %v2110
          %v2246 = vunpack.c.l.b16 %v2111
          %v2247 = vunpack.c.l.b16 %v2112
          %v2248 = vunpack.c.l.b16 %v2113
          %v2249 = vunpack.c.l.b16 %v2114
          %v2250 = vunpack.c.l.b16 %v2115
          %v2251 = vunpack.c.l.b16 %v2116
          %v2252 = vunpack.c.l.b16 %v2117
          %v2253 = vunpack.c.l.b16 %v2118
          %v2254 = vunpack.c.l.b16 %v2119
          %v2255 = vunpack.c.l.b16 %v2120
          %v2256 = vunpack.c.l.b16 %v2121
          %v2257 = vunpack.c.l.b16 %v2122
          %v2258 = vunpack.c.l.b16 %v2123
          %v2259 = vunpack.c.l.b16 %v2124
          %v2260 = vunpack.c.l.b16 %v2125
          %v2261 = vunpack.c.l.b16 %v2126
          %v2262 = vunpack.c.l.b16 %v2127
          %v2263 = vunpack.c.l.b16 %v2128
          %v2264 = vunpack.c.l.b16 %v2129
          %v2265 = vunpack.c.l.b16 %v2130
          %v2266 = vunpack.c.l.b16 %v2131
          %v2267 = vunpack.c.l.b16 %v2132
          %v2268 = vunpack.c.l.b16 %v2133
          %v2269 = vunpack.c.l.b16 %v2134
          %v2270 = vunpack.c.l.b16 %v2135
          %v2271 = vunpack.c.l.b16 %v2136
          %v2272 = vunpack.c.l.b16 %v2137
          %v2273 = vunpack.c.l.b16 %v2138
          %v2274 = vunpack.c.l.b16 %v2139
          %v2275 = vunpack.c.l.b16 %v2140
          %v2276 = vunpack.c.l.b16 %v2141
          %v2277 = vunpack.c.l.b16 %v2142
          %v2278 = vunpack.c.l.b16 %v2143
          %v2279 = vunpack.c.l.b16 %v2144
          %v2280 = vunpack.c.l.b16 %v2145
          %v2281 = vunpack.c.l.b16 %v2146
          %v2282 = vunpack.c.l.b16 %v2147
          %v2283 = vunpack.c.l.b16 %v2148
          %v2284 = vunpack.c.l.b16 %v2149
          %v2285 = vunpack.c.l.b16 %v2150
          %v2286 = vunpack.c.l.b16 %v2151
          %v2287 = vunpack.c.l.b16 %v2152
          %v2288 = vunpack.c.l.b16 %v2153
          %v2289 = vunpack.c.l.b16 %v2154
          %v2290 = vunpack.c.l.b16 %v2155
          %v2291 = vunpack.c.l.b16 %v2156
          %v2292 = vunpack.c.l.b16 %v2157
          %v2293 = vunpack.c.l.b16 %v2158
          %v2294 = vpack.c.b16 %v2231, %v2230
          %v2295 = vpack.c.b16 %v2233, %v2232
          %v2296 = vpack.c.b16 %v2235, %v2234
          %v2297 = vpack.c.b16 %v2237, %v2236
          %v2298 = vpack.c.b16 %v2239, %v2238
          %v2299 = vpack.c.b16 %v2241, %v2240
          %v2300 = vpack.c.b16 %v2243, %v2242
          %v2301 = vpack.c.b16 %v2245, %v2244
          %v2302 = vpack.c.b16 %v2247, %v2246
          %v2303 = vpack.c.b16 %v2249, %v2248
          %v2304 = vpack.c.b16 %v2251, %v2250
          %v2305 = vpack.c.b16 %v2253, %v2252
          %v2306 = vpack.c.b16 %v2255, %v2254
          %v2307 = vpack.c.b16 %v2257, %v2256
          %v2308 = vpack.c.b16 %v2259, %v2258
          %v2309 = vpack.c.b16 %v2261, %v2260
          %v2310 = vpack.c.b16 %v2263, %v2262
          %v2311 = vpack.c.b16 %v2265, %v2264
          %v2312 = vpack.c.b16 %v2267, %v2266
          %v2313 = vpack.c.b16 %v2269, %v2268
          %v2314 = vpack.c.b16 %v2271, %v2270
          %v2315 = vpack.c.b16 %v2273, %v2272
          %v2316 = vpack.c.b16 %v2275, %v2274
          %v2317 = vpack.c.b16 %v2277, %v2276
          %v2318 = vpack.c.b16 %v2279, %v2278
          %v2319 = vpack.c.b16 %v2281, %v2280
          %v2320 = vpack.c.b16 %v2283, %v2282
          %v2321 = vpack.c.b16 %v2285, %v2284
          %v2322 = vpack.c.b16 %v2287, %v2286
          %v2323 = vpack.c.b16 %v2289, %v2288
          %v2324 = vpack.c.b16 %v2291, %v2290
          %v2325 = vpack.c.b16 %v2293, %v2292
          %2358 = vmatprep.subr.bf16.mxu0 0
          %2359 = vmatpush1.bf16.msra.mxu0 %v2294
          %2360 = vmatprep.subr.bf16.mxu0 0
          %2361 = vmatpush1.bf16.msra.mxu0 %v2295
          %2362 = vmatprep.subr.bf16.mxu0 0
          %2363 = vmatpush1.bf16.msra.mxu0 %v2296
          %2364 = vmatprep.subr.bf16.mxu0 0
          %2365 = vmatpush1.bf16.msra.mxu0 %v2297
          %2366 = vmatprep.subr.bf16.mxu0 0
          %2367 = vmatpush1.bf16.msra.mxu0 %v2298
          %2368 = vmatprep.subr.bf16.mxu0 0
          %2369 = vmatpush1.bf16.msra.mxu0 %v2299
          %2370 = vmatprep.subr.bf16.mxu0 0
          %2371 = vmatpush1.bf16.msra.mxu0 %v2300
          %2372 = vmatprep.subr.bf16.mxu0 0
          %2373 = vmatpush1.bf16.msra.mxu0 %v2301
          %2374 = vmatprep.subr.bf16.mxu0 0
          %2375 = vmatpush1.bf16.msra.mxu0 %v2302
          %2376 = vmatprep.subr.bf16.mxu0 0
          %2377 = vmatpush1.bf16.msra.mxu0 %v2303
          %2378 = vmatprep.subr.bf16.mxu0 0
          %2379 = vmatpush1.bf16.msra.mxu0 %v2304
          %2380 = vmatprep.subr.bf16.mxu0 0
          %2381 = vmatpush1.bf16.msra.mxu0 %v2305
          %2382 = vmatprep.subr.bf16.mxu0 0
          %2383 = vmatpush1.bf16.msra.mxu0 %v2306
          %2384 = vmatprep.subr.bf16.mxu0 0
          %2385 = vmatpush1.bf16.msra.mxu0 %v2307
          %2386 = vmatprep.subr.bf16.mxu0 0
          %2387 = vmatpush1.bf16.msra.mxu0 %v2308
          %2388 = vmatprep.subr.bf16.mxu0 0
          %2389 = vmatpush1.bf16.msra.mxu0 %v2309
          %2390 = vmatprep.mubr.bf16.mxu0 %v2092
          %2391 = vmatmul.mubr.bf16.gmra.mrb[0].mxu0 %v2091
          %v2392 = vpop.f32.mrb[0].mxu0
          %v2393 = vadd.f32 %v2164, %v2392
          %v2394 = vpop.f32.mrb[0].mxu0
          %v2395 = vpop.f32.mrb[0].mxu0
          %v2396 = vpop.f32.mrb[0].mxu0
          %2397 = vdwg.mxu0
          %2398 = vmatprep.subr.bf16.mxu0 0
          %2399 = vmatpush1.bf16.msra.mxu0 %v2310
          %2400 = vmatprep.subr.bf16.mxu0 0
          %2401 = vmatpush1.bf16.msra.mxu0 %v2311
          %2402 = vmatprep.subr.bf16.mxu0 0
          %2403 = vmatpush1.bf16.msra.mxu0 %v2312
          %2404 = vmatprep.subr.bf16.mxu0 0
          %2405 = vmatpush1.bf16.msra.mxu0 %v2313
          %2406 = vmatprep.subr.bf16.mxu0 0
          %2407 = vmatpush1.bf16.msra.mxu0 %v2314
          %2408 = vmatprep.subr.bf16.mxu0 0
          %2409 = vmatpush1.bf16.msra.mxu0 %v2315
          %2410 = vmatprep.subr.bf16.mxu0 0
          %2411 = vmatpush1.bf16.msra.mxu0 %v2316
          %2412 = vmatprep.subr.bf16.mxu0 0
          %2413 = vmatpush1.bf16.msra.mxu0 %v2317
          %2414 = vmatprep.subr.bf16.mxu0 0
          %2415 = vmatpush1.bf16.msra.mxu0 %v2318
          %2416 = vmatprep.subr.bf16.mxu0 0
          %2417 = vmatpush1.bf16.msra.mxu0 %v2319
          %2418 = vmatprep.subr.bf16.mxu0 0
          %2419 = vmatpush1.bf16.msra.mxu0 %v2320
          %2420 = vmatprep.subr.bf16.mxu0 0
          %2421 = vmatpush1.bf16.msra.mxu0 %v2321
          %2422 = vmatprep.subr.bf16.mxu0 0
          %2423 = vmatpush1.bf16.msra.mxu0 %v2322
          %2424 = vmatprep.subr.bf16.mxu0 0
          %2425 = vmatpush1.bf16.msra.mxu0 %v2323
          %2426 = vmatprep.subr.bf16.mxu0 0
          %2427 = vmatpush1.bf16.msra.mxu0 %v2324
          %2428 = vmatprep.subr.bf16.mxu0 0
          %2429 = vmatpush1.bf16.msra.mxu0 %v2325
          %2430 = vmatprep.mubr.bf16.mxu0 %v2094
          %2431 = vmatmul.mubr.bf16.gmra.mrb[0].mxu0 %v2093
          %v2432 = vpop.f32.mrb[0].mxu0
          %v2433 = vadd.f32 %v2393, %v2432
          %v2434 = vpop.f32.mrb[0].mxu0
          %v2435 = vpop.f32.mrb[0].mxu0
          %v2436 = vpop.f32.mrb[0].mxu0
          %2437 = vdwg.mxu0
          %2438 = vst [vmem:[#allocation3] sm:$0x3] %v2433
        $region48: #{flappy_bird_forward.3} parent=39 // pred_fallthru
          _
        // Predicated region
        $region49: #{flappy_bird_forward.3} parent=39 // pred_check
          %p2439 = pneg %p164
        $region50: #{flappy_bird_forward.3} parent=39 // pred_check_branch
          %2441 = sbr.rel (%p2439) target = $region52
        $region51: #{flappy_bird_forward.3} parent=39 // pred_region
          %s2443 = ssub.s32 32, 32
          %2444 = vsyncadd [#allocation4], %s2443
          %s2445 = smul.addr %s21, 32
          %s2446 = scalar_lea.hbm %s5, %s2445
          %s2448 = sshll.u32 [#allocation3], 4
          %s2449 = int_to_ptr.vmem [resolvable:$true] %s2448
          %2451 = dma.vmem_to_hbm [thread:$0]  %s2449, 32, %s2446, [#allocation4]
        $region52: #{flappy_bird_forward.3} parent=39 // pred_fallthru
          _
        // Predicated region
        $region53: #{flappy_bird_forward.3} parent=39 // pred_check
          %p2452 = pneg %p164
        $region54: #{flappy_bird_forward.3} parent=39 // pred_check_branch
          %2454 = sbr.rel (%p2452) target = $region56
        $region55: #{flappy_bird_forward.3} parent=39 // pred_region
          %2455 = dma.done [#allocation4], 32
        $region56: #{flappy_bird_forward.3} parent=39 // pred_fallthru
          _
      $region40: #{flappy_bird_forward.3} parent=5 // pred_fallthru
        _
      %p2456 = scmp.le.s32.totalorder 2, %s12
      // Predicated region
      $region57: #{flappy_bird_forward.3} parent=5 // pred_check
        %p2457 = pneg %p2456
      $region58: #{flappy_bird_forward.3} parent=5 // pred_check_branch
        %2459 = sbr.rel (%p2457) target = $region60
      $region59: #{flappy_bird_forward.3} parent=5 // pred_region
        %s2460 = ssub.s32 %s12, 2
      $region60: #{flappy_bird_forward.3} parent=5 // pred_fallthru
        _
    $region6: #{flappy_bird_forward.3} parent=1 // loop_footer
      %s16 = sadd.s32 1, %s12
    $region7: #{flappy_bird_forward.3} parent=1 // loop_footer_branch
      %11 = sbr.rel target = $region3
    $region8: #{flappy_bird_forward.3} parent=1 // loop_exit
      _
    %2461 = vsyncpa [#allocation4], 1
    %s2462 = scalar_lea.sflag [#allocation4], 1
    %2463 = vsyncpa %s2462, 1

// kernel: flappy_bird_forward.2
$region0: #{flappy_bird_forward.2}
  #allocation0 [shape = 'u32[]', space=smem, size = 0x4, offset = 0x4, fixed_abs, tag = 'smem constant byte address 0x4 - core index']
  #allocation1 [shape = 'u32[144,128]{1,0:T(1,128)}', space=vmem, size = 0x12000, scoped, tag = 'internal scratch']
  #allocation2 [shape = 'bf16[400,32]{1,0:T(16,128)(2,1)}', space=vmem, size = 0x19000, scoped, tag = 'scratch operand']
  #allocation3 [shape = 'f32[89,64]{1,0:T(8,128)}', space=vmem, size = 0xc000, scoped, tag = 'scratch operand']
  #allocation4 [shape = 'bf16[89,64]{1,0:T(8,128)(2,1)}', space=vmem, size = 0x6000, scoped, tag = 'scratch operand']
  #allocation5 [shape = 'f32[67,64]{1,0:T(8,128)}', space=vmem, size = 0x9000, scoped, tag = 'scratch operand']
  %s0 = inlined_call_operand.vmem [shape: bf16[800,256], index: 0, kind: input, shape index: {}]
  %s1 = inlined_call_operand.vmem [shape: bf16[256,32], index: 1, kind: input, shape index: {}]
  %s2 = inlined_call_operand.vmem [shape: f32[1,32], index: 2, kind: input, shape index: {}]
  %s3 = inlined_call_operand.vmem [shape: bf16[512,64], index: 3, kind: input, shape index: {}]
  %s4 = inlined_call_operand.vmem [shape: f32[1,64], index: 4, kind: input, shape index: {}]
  %s5 = inlined_call_operand.vmem [shape: bf16[576,64], index: 5, kind: input, shape index: {}]
  %s6 = inlined_call_operand.vmem [shape: f32[1,64], index: 6, kind: input, shape index: {}]
  %s7 = inlined_call_operand.vmem [shape: bf16[112,64], index: 7, kind: output, shape index: {}]
  %s8 = sld [smem:[#allocation0]]
  $region61: #{flappy_bird_forward.2} parent=0
    _
  %s10 = ssub.s32 1, %s8
  %s11 = scalar_select 0, %s10, %s8
  loop: start=0, step=1, limit=4
  $region2: #{flappy_bird_forward.2} parent=0 // loop_pre_header
    _
  $region3: #{flappy_bird_forward.2} parent=0 // loop_header
    %s13 = sphi 0, %s17
    %p14 = scmp.ge.s32.totalorder %s13, 4
    %s23 = sphi 0, %s25
    %s26 = sphi 0, %s23
    %s27 = sphi 0, %s26
    %s43 = sphi 0, %s27
    %s47 = sphi 0, %s47
    %s49 = sphi 0, %s47
    %s50 = sphi 0, %s49
    %s64 = sphi 0, %s50
    %s68 = sphi 0, %s68
    %s70 = sphi 0, %s68
    %s71 = sphi 0, %s70
    %s85 = sphi 0, %s71
    %s89 = sphi 0, %s89
    %s91 = sphi 0, %s89
    %s92 = sphi 0, %s91
    %s106 = sphi 0, %s92
    %s110 = sphi 0, %s110
    %s112 = sphi 0, %s110
    %s113 = sphi 0, %s112
    %s127 = sphi 0, %s113
    %s131 = sphi 0, %s131
    %s133 = sphi 0, %s131
    %s134 = sphi 0, %s133
    %s148 = sphi 0, %s134
    %s152 = sphi 0, %s152
    %s154 = sphi 0, %s152
    %s155 = sphi 0, %s154
    %s169 = sphi 0, %s155
    %s175 = sphi 0, %s177
    %s178 = sphi 0, %s175
    %s179 = sphi 0, %s178
    %s195 = sphi 0, %s179
  $region4: #{flappy_bird_forward.2} parent=0 // loop_header_branch
    %16 = sbr.rel (%p14) target = $region8
  $region5: #{flappy_bird_forward.2} parent=0 // loop_body
    %s18 = ssub.s32 %s13, 1
    %s19 = ssub.s32 %s13, 2
    %s20 = sadd.s32 %s13, 1
    %s21 = ssub.s32 %s13, %s20
    %p22 = scmp.eq.s32.totalorder %s21, 0
    %s24 = sadd.s32 %s23, 1
    %s25 = scalar_select %p22, %s23, %s24
    %p28 = pneg %p22
    %p29 = scmp.eq.s32.totalorder %s13, 1
    %p30 = por %p28, %p29
    %p31 = scmp.ne.s32.totalorder %s23, %s26
    %p32 = scmp.eq.s32.totalorder %s13, 0
    %p33 = por %p31, %p32
    %p34 = scmp.ne.s32.totalorder %s23, %s26
    %p35 = scmp.eq.s32.totalorder %s18, 1
    %p36 = por %p34, %p35
    %p37 = scmp.ne.s32.totalorder %s26, %s27
    %p38 = scmp.eq.s32.totalorder %s18, 0
    %p39 = por %p37, %p38
    %p40 = scmp.ne.s32.totalorder %s26, %s27
    %p41 = scmp.eq.s32.totalorder %s19, 1
    %p42 = por %p40, %p41
    %p44 = scmp.ne.s32.totalorder %s27, %s43
    %p45 = scmp.eq.s32.totalorder %s19, 0
    %p46 = por %p44, %p45
    %s48 = sadd.s32 %s47, 1
    %p51 = scmp.eq.s32.totalorder %s13, 1
    %p52 = scmp.ne.s32.totalorder %s47, %s49
    %p53 = scmp.eq.s32.totalorder %s13, 0
    %p54 = por %p52, %p53
    %p55 = scmp.ne.s32.totalorder %s47, %s49
    %p56 = scmp.eq.s32.totalorder %s18, 1
    %p57 = por %p55, %p56
    %p58 = scmp.ne.s32.totalorder %s49, %s50
    %p59 = scmp.eq.s32.totalorder %s18, 0
    %p60 = por %p58, %p59
    %p61 = scmp.ne.s32.totalorder %s49, %s50
    %p62 = scmp.eq.s32.totalorder %s19, 1
    %p63 = por %p61, %p62
    %p65 = scmp.ne.s32.totalorder %s50, %s64
    %p66 = scmp.eq.s32.totalorder %s19, 0
    %p67 = por %p65, %p66
    %s69 = sadd.s32 %s68, 1
    %p72 = scmp.eq.s32.totalorder %s13, 1
    %p73 = scmp.ne.s32.totalorder %s68, %s70
    %p74 = scmp.eq.s32.totalorder %s13, 0
    %p75 = por %p73, %p74
    %p76 = scmp.ne.s32.totalorder %s68, %s70
    %p77 = scmp.eq.s32.totalorder %s18, 1
    %p78 = por %p76, %p77
    %p79 = scmp.ne.s32.totalorder %s70, %s71
    %p80 = scmp.eq.s32.totalorder %s18, 0
    %p81 = por %p79, %p80
    %p82 = scmp.ne.s32.totalorder %s70, %s71
    %p83 = scmp.eq.s32.totalorder %s19, 1
    %p84 = por %p82, %p83
    %p86 = scmp.ne.s32.totalorder %s71, %s85
    %p87 = scmp.eq.s32.totalorder %s19, 0
    %p88 = por %p86, %p87
    %s90 = sadd.s32 %s89, 1
    %p93 = scmp.eq.s32.totalorder %s13, 1
    %p94 = scmp.ne.s32.totalorder %s89, %s91
    %p95 = scmp.eq.s32.totalorder %s13, 0
    %p96 = por %p94, %p95
    %p97 = scmp.ne.s32.totalorder %s89, %s91
    %p98 = scmp.eq.s32.totalorder %s18, 1
    %p99 = por %p97, %p98
    %p100 = scmp.ne.s32.totalorder %s91, %s92
    %p101 = scmp.eq.s32.totalorder %s18, 0
    %p102 = por %p100, %p101
    %p103 = scmp.ne.s32.totalorder %s91, %s92
    %p104 = scmp.eq.s32.totalorder %s19, 1
    %p105 = por %p103, %p104
    %p107 = scmp.ne.s32.totalorder %s92, %s106
    %p108 = scmp.eq.s32.totalorder %s19, 0
    %p109 = por %p107, %p108
    %s111 = sadd.s32 %s110, 1
    %p114 = scmp.eq.s32.totalorder %s13, 1
    %p115 = scmp.ne.s32.totalorder %s110, %s112
    %p116 = scmp.eq.s32.totalorder %s13, 0
    %p117 = por %p115, %p116
    %p118 = scmp.ne.s32.totalorder %s110, %s112
    %p119 = scmp.eq.s32.totalorder %s18, 1
    %p120 = por %p118, %p119
    %p121 = scmp.ne.s32.totalorder %s112, %s113
    %p122 = scmp.eq.s32.totalorder %s18, 0
    %p123 = por %p121, %p122
    %p124 = scmp.ne.s32.totalorder %s112, %s113
    %p125 = scmp.eq.s32.totalorder %s19, 1
    %p126 = por %p124, %p125
    %p128 = scmp.ne.s32.totalorder %s113, %s127
    %p129 = scmp.eq.s32.totalorder %s19, 0
    %p130 = por %p128, %p129
    %s132 = sadd.s32 %s131, 1
    %p135 = scmp.eq.s32.totalorder %s13, 1
    %p136 = scmp.ne.s32.totalorder %s131, %s133
    %p137 = scmp.eq.s32.totalorder %s13, 0
    %p138 = por %p136, %p137
    %p139 = scmp.ne.s32.totalorder %s131, %s133
    %p140 = scmp.eq.s32.totalorder %s18, 1
    %p141 = por %p139, %p140
    %p142 = scmp.ne.s32.totalorder %s133, %s134
    %p143 = scmp.eq.s32.totalorder %s18, 0
    %p144 = por %p142, %p143
    %p145 = scmp.ne.s32.totalorder %s133, %s134
    %p146 = scmp.eq.s32.totalorder %s19, 1
    %p147 = por %p145, %p146
    %p149 = scmp.ne.s32.totalorder %s134, %s148
    %p150 = scmp.eq.s32.totalorder %s19, 0
    %p151 = por %p149, %p150
    %s153 = sadd.s32 %s152, 1
    %p156 = scmp.eq.s32.totalorder %s13, 1
    %p157 = scmp.ne.s32.totalorder %s152, %s154
    %p158 = scmp.eq.s32.totalorder %s13, 0
    %p159 = por %p157, %p158
    %p160 = scmp.ne.s32.totalorder %s152, %s154
    %p161 = scmp.eq.s32.totalorder %s18, 1
    %p162 = por %p160, %p161
    %p163 = scmp.ne.s32.totalorder %s154, %s155
    %p164 = scmp.eq.s32.totalorder %s18, 0
    %p165 = por %p163, %p164
    %p166 = scmp.ne.s32.totalorder %s154, %s155
    %p167 = scmp.eq.s32.totalorder %s19, 1
    %p168 = por %p166, %p167
    %p170 = scmp.ne.s32.totalorder %s155, %s169
    %p171 = scmp.eq.s32.totalorder %s19, 0
    %p172 = por %p170, %p171
    %s173 = ssub.s32 %s13, %s20
    %p174 = scmp.eq.s32.totalorder %s173, 0
    %s176 = sadd.s32 %s175, 1
    %s177 = scalar_select %p174, %s175, %s176
    %p180 = pneg %p174
    %p181 = scmp.eq.s32.totalorder %s13, 1
    %p182 = por %p180, %p181
    %p183 = scmp.ne.s32.totalorder %s175, %s178
    %p184 = scmp.eq.s32.totalorder %s13, 0
    %p185 = por %p183, %p184
    %p186 = scmp.ne.s32.totalorder %s175, %s178
    %p187 = scmp.eq.s32.totalorder %s18, 1
    %p188 = por %p186, %p187
    %p189 = scmp.ne.s32.totalorder %s178, %s179
    %p190 = scmp.eq.s32.totalorder %s18, 0
    %p191 = por %p189, %p190
    %p192 = scmp.ne.s32.totalorder %s178, %s179
    %p193 = scmp.eq.s32.totalorder %s19, 1
    %p194 = por %p192, %p193
    %p196 = scmp.ne.s32.totalorder %s179, %s195
    %p197 = scmp.eq.s32.totalorder %s19, 0
    %p198 = por %p196, %p197
    %p199 = scmp.le.s32.totalorder 1, %s13
    %p200 = scmp.lt.s32.totalorder %s13, 3
    %p201 = pnand %p199, %p200
    %p202 = pneg %p201
    // Predicated region
    $region9: #{flappy_bird_forward.2} parent=5 // pred_check
      _
    $region10: #{flappy_bird_forward.2} parent=5 // pred_check_branch
      %204 = sbr.rel (%p201) target = $region12
    $region11: #{flappy_bird_forward.2} parent=5 // pred_region
      %s205 = ssub.s32 %s13, 1
      // Predicated region
      $region13: #{flappy_bird_forward.2} parent=11 // pred_check
        %p206 = pneg %p60
      $region14: #{flappy_bird_forward.2} parent=11 // pred_check_branch
        %208 = sbr.rel (%p206) target = $region16
      $region15: #{flappy_bird_forward.2} parent=11 // pred_region
        _
      $region16: #{flappy_bird_forward.2} parent=11 // pred_fallthru
        _
      // Predicated region
      $region17: #{flappy_bird_forward.2} parent=11 // pred_check
        %p209 = pneg %p81
      $region18: #{flappy_bird_forward.2} parent=11 // pred_check_branch
        %211 = sbr.rel (%p209) target = $region20
      $region19: #{flappy_bird_forward.2} parent=11 // pred_region
        _
      $region20: #{flappy_bird_forward.2} parent=11 // pred_fallthru
        _
      // Predicated region
      $region21: #{flappy_bird_forward.2} parent=11 // pred_check
        %p212 = pneg %p102
      $region22: #{flappy_bird_forward.2} parent=11 // pred_check_branch
        %214 = sbr.rel (%p212) target = $region24
      $region23: #{flappy_bird_forward.2} parent=11 // pred_region
        _
      $region24: #{flappy_bird_forward.2} parent=11 // pred_fallthru
        _
      // Predicated region
      $region25: #{flappy_bird_forward.2} parent=11 // pred_check
        %p215 = pneg %p123
      $region26: #{flappy_bird_forward.2} parent=11 // pred_check_branch
        %217 = sbr.rel (%p215) target = $region28
      $region27: #{flappy_bird_forward.2} parent=11 // pred_region
        _
      $region28: #{flappy_bird_forward.2} parent=11 // pred_fallthru
        _
      // Predicated region
      $region29: #{flappy_bird_forward.2} parent=11 // pred_check
        %p218 = pneg %p144
      $region30: #{flappy_bird_forward.2} parent=11 // pred_check_branch
        %220 = sbr.rel (%p218) target = $region32
      $region31: #{flappy_bird_forward.2} parent=11 // pred_region
        _
      $region32: #{flappy_bird_forward.2} parent=11 // pred_fallthru
        _
      // Predicated region
      $region33: #{flappy_bird_forward.2} parent=11 // pred_check
        %p221 = pneg %p165
      $region34: #{flappy_bird_forward.2} parent=11 // pred_check_branch
        %223 = sbr.rel (%p221) target = $region36
      $region35: #{flappy_bird_forward.2} parent=11 // pred_region
        _
      $region36: #{flappy_bird_forward.2} parent=11 // pred_fallthru
        _
    $region12: #{flappy_bird_forward.2} parent=5 // pred_fallthru
      _
    %p224 = scmp.lt.s32.totalorder %s13, 2
    // Predicated region
    $region37: #{flappy_bird_forward.2} parent=5 // pred_check
      %p225 = pneg %p224
    $region38: #{flappy_bird_forward.2} parent=5 // pred_check_branch
      %227 = sbr.rel (%p225) target = $region40
    $region39: #{flappy_bird_forward.2} parent=5 // pred_region
      // Predicated region
      $region41: #{flappy_bird_forward.2} parent=39 // pred_check
        %p228 = pneg %p33
      $region42: #{flappy_bird_forward.2} parent=39 // pred_check_branch
        %230 = sbr.rel (%p228) target = $region44
      $region43: #{flappy_bird_forward.2} parent=39 // pred_region
        %s231 = smul.u32 50, %s13
        %p232 = scmp.lt.s32.totalorder %s231, 99
        %s233 = scalar_select %p232, %s231, 99
        %s234 = smul.addr %s233, 2
        %s235 = smul.addr %s234, 4
        %s236 = scalar_lea.vmem %s0, %s235
        %s237 = smul.u32 50, %s13
      $region44: #{flappy_bird_forward.2} parent=39 // pred_fallthru
        _
    $region40: #{flappy_bird_forward.2} parent=5 // pred_fallthru
      _
    %p238 = scmp.le.s32.totalorder 1, %s13
    %p239 = scmp.lt.s32.totalorder %s13, 3
    %p240 = pnand %p238, %p239
    %p241 = pneg %p240
    // Predicated region
    $region45: #{flappy_bird_forward.2} parent=5 // pred_check
      _
    $region46: #{flappy_bird_forward.2} parent=5 // pred_check_branch
      %243 = sbr.rel (%p240) target = $region48
    $region47: #{flappy_bird_forward.2} parent=5 // pred_region
      %s244 = ssub.s32 %s13, 1
      %s245 = smul.u32 50, %s18
      %p246 = scmp.lt.s32.totalorder %s245, 99
      %s247 = scalar_select %p246, %s245, 99
      %s248 = smul.addr %s247, 2
      %s249 = smul.addr %s248, 4
      %s250 = scalar_lea.vmem %s0, %s249
      %p251 = pneg %p39
      %p252 = pneg %p36
      %p253 = pneg %p60
      %p254 = pneg %p57
      %p255 = pneg %p81
      %p256 = pneg %p78
      %p257 = pneg %p102
      %p258 = pneg %p99
      %p259 = pneg %p123
      %p260 = pneg %p120
      %p261 = pneg %p144
      %p262 = pneg %p141
      %p263 = pneg %p165
      %p264 = pneg %p162
      %p265 = pneg %p191
      %p266 = pneg %p188
      %s267 = smul.u32 7, %s18
      %p268 = scmp.lt.s32.totalorder %s267, 13
      %s269 = scalar_select %p268, %s267, 13
      %s270 = smul.addr %s269, 4
      %s271 = scalar_lea.vmem %s7, %s270
      %s272 = smul.u32 50, %s18
      %p273 = scmp.lt.s32.totalorder %s272, 99
      %s274 = scalar_select %p273, %s272, 99
      %s275 = smul.addr %s274, 2
      %s276 = smul.addr %s275, 4
      %s277 = scalar_lea.vmem %s0, %s276
      %s278 = smul.u32 50, %s18
      %s279 = smul.u32 7, %s18
      %p280 = scmp.lt.s32.totalorder %s279, 13
      %s281 = scalar_select %p280, %s279, 13
      %s282 = smul.addr %s281, 4
      %s283 = scalar_lea.vmem %s7, %s282
      %s284 = smul.u32 7, %s18
      %v286 = vld [vmem:[%s277] sm:$0xff]
      %v287 = vld [vmem:[%s277 + $0x8] sm:$0xff]
      %v288 = vld [vmem:[%s277 + $0x10] sm:$0xff]
      %v289 = vld [vmem:[%s277 + $0x18] sm:$0xff]
      %v290 = vld [vmem:[%s277 + $0x20] sm:$0xff]
      %v291 = vld [vmem:[%s277 + $0x28] sm:$0xff]
      %v292 = vld [vmem:[%s277 + $0x30] sm:$0xff]
      %v293 = vld [vmem:[%s277 + $0x38] sm:$0xff]
      %v294 = vld [vmem:[%s277 + $0x40] sm:$0xff]
      %v295 = vld [vmem:[%s277 + $0x48] sm:$0xff]
      %v296 = vld [vmem:[%s277 + $0x50] sm:$0xff]
      %v297 = vld [vmem:[%s277 + $0x58] sm:$0xff]
      %v298 = vld [vmem:[%s277 + $0x60] sm:$0xff]
      %v299 = vld [vmem:[%s277 + $0x68] sm:$0xff]
      %v300 = vld [vmem:[%s277 + $0x70] sm:$0xff]
      %v301 = vld [vmem:[%s277 + $0x78] sm:$0xff]
      %v302 = vld [vmem:[%s277 + $0x80] sm:$0xff]
      %v303 = vld [vmem:[%s277 + $0x88] sm:$0xff]
      %v304 = vld [vmem:[%s277 + $0x90] sm:$0xff]
      %v305 = vld [vmem:[%s277 + $0x98] sm:$0xff]
      %v306 = vld [vmem:[%s277 + $0xa0] sm:$0xff]
      %v307 = vld [vmem:[%s277 + $0xa8] sm:$0xff]
      %v308 = vld [vmem:[%s277 + $0xb0] sm:$0xff]
      %v309 = vld [vmem:[%s277 + $0xb8] sm:$0xff]
      %v310 = vld [vmem:[%s277 + $0xc0] sm:$0xff]
      %v311 = vld [vmem:[%s277 + $0xc8] sm:$0xff]
      %v312 = vld [vmem:[%s277 + $0xd0] sm:$0xff]
      %v313 = vld [vmem:[%s277 + $0xd8] sm:$0xff]
      %v314 = vld [vmem:[%s277 + $0xe0] sm:$0xff]
      %v315 = vld [vmem:[%s277 + $0xe8] sm:$0xff]
      %v316 = vld [vmem:[%s277 + $0xf0] sm:$0xff]
      %v317 = vld [vmem:[%s277 + $0xf8] sm:$0xff]
      %v318 = vld [vmem:[%s277 + $0x100] sm:$0xff]
      %v319 = vld [vmem:[%s277 + $0x108] sm:$0xff]
      %v320 = vld [vmem:[%s277 + $0x110] sm:$0xff]
      %v321 = vld [vmem:[%s277 + $0x118] sm:$0xff]
      %v322 = vld [vmem:[%s277 + $0x120] sm:$0xff]
      %v323 = vld [vmem:[%s277 + $0x128] sm:$0xff]
      %v324 = vld [vmem:[%s277 + $0x130] sm:$0xff]
      %v325 = vld [vmem:[%s277 + $0x138] sm:$0xff]
      %v326 = vld [vmem:[%s277 + $0x140] sm:$0xff]
      %v327 = vld [vmem:[%s277 + $0x148] sm:$0xff]
      %v328 = vld [vmem:[%s277 + $0x150] sm:$0xff]
      %v329 = vld [vmem:[%s277 + $0x158] sm:$0xff]
      %v330 = vld [vmem:[%s277 + $0x160] sm:$0xff]
      %v331 = vld [vmem:[%s277 + $0x168] sm:$0xff]
      %v332 = vld [vmem:[%s277 + $0x170] sm:$0xff]
      %v333 = vld [vmem:[%s277 + $0x178] sm:$0xff]
      %v334 = vld [vmem:[%s277 + $0x180] sm:$0xff]
      %v335 = vld [vmem:[%s277 + $0x188] sm:$0xff]
      %v336 = vld [vmem:[%s1] sm:$0xf]
      %v337 = vld [vmem:[%s1 + $0x4] sm:$0xf]
      %v338 = vld [vmem:[%s1 + $0x8] sm:$0xf]
      %v339 = vld [vmem:[%s1 + $0xc] sm:$0xf]
      %v340 = vld [vmem:[%s1 + $0x10] sm:$0xf]
      %v341 = vld [vmem:[%s1 + $0x14] sm:$0xf]
      %v342 = vld [vmem:[%s1 + $0x18] sm:$0xf]
      %v343 = vld [vmem:[%s1 + $0x1c] sm:$0xf]
      %v344 = vld [vmem:[%s1 + $0x20] sm:$0xf]
      %v345 = vld [vmem:[%s1 + $0x24] sm:$0xf]
      %v346 = vld [vmem:[%s1 + $0x28] sm:$0xf]
      %v347 = vld [vmem:[%s1 + $0x2c] sm:$0xf]
      %v348 = vld [vmem:[%s1 + $0x30] sm:$0xf]
      %v349 = vld [vmem:[%s1 + $0x34] sm:$0xf]
      %v350 = vld [vmem:[%s1 + $0x38] sm:$0xf]
      %v351 = vld [vmem:[%s1 + $0x3c] sm:$0xf]
      %v352 = vld [vmem:[%s1 + $0x40] sm:$0xf]
      %v353 = vld [vmem:[%s1 + $0x44] sm:$0xf]
      %v354 = vld [vmem:[%s1 + $0x48] sm:$0xf]
      %v355 = vld [vmem:[%s1 + $0x4c] sm:$0xf]
      %v356 = vld [vmem:[%s1 + $0x50] sm:$0xf]
      %v357 = vld [vmem:[%s1 + $0x54] sm:$0xf]
      %v358 = vld [vmem:[%s1 + $0x58] sm:$0xf]
      %v359 = vld [vmem:[%s1 + $0x5c] sm:$0xf]
      %v360 = vld [vmem:[%s1 + $0x60] sm:$0xf]
      %v361 = vld [vmem:[%s1 + $0x64] sm:$0xf]
      %v362 = vld [vmem:[%s1 + $0x68] sm:$0xf]
      %v363 = vld [vmem:[%s1 + $0x6c] sm:$0xf]
      %v364 = vld [vmem:[%s1 + $0x70] sm:$0xf]
      %v365 = vld [vmem:[%s1 + $0x74] sm:$0xf]
      %v366 = vld [vmem:[%s1 + $0x78] sm:$0xf]
      %v367 = vld [vmem:[%s1 + $0x7c] sm:$0xf]
      %v368 = vld [vmem:[%s2] sm:$0x1]
      %v370 = vlaneseq
      %v371 = vshrl.u32 %v370, 7
      %v372 = vsub.s32 0, %v371
      %v373 = vrot.slane %v368, %v372
      %v425 = vunpack.c.l.b16 %v286
      %v426 = vunpack.c.h.b16 %v286
      %v427 = vunpack.c.l.b16 %v287
      %v428 = vunpack.c.h.b16 %v287
      %v429 = vunpack.c.l.b16 %v288
      %v430 = vunpack.c.h.b16 %v288
      %v431 = vunpack.c.l.b16 %v289
      %v432 = vunpack.c.h.b16 %v289
      %v433 = vunpack.c.l.b16 %v290
      %v434 = vunpack.c.h.b16 %v290
      %v435 = vunpack.c.l.b16 %v291
      %v436 = vunpack.c.h.b16 %v291
      %v437 = vunpack.c.l.b16 %v292
      %v438 = vunpack.c.h.b16 %v292
      %v439 = vunpack.c.l.b16 %v293
      %v440 = vunpack.c.h.b16 %v293
      %v441 = vunpack.c.l.b16 %v294
      %v442 = vunpack.c.h.b16 %v294
      %v443 = vunpack.c.l.b16 %v295
      %v444 = vunpack.c.h.b16 %v295
      %v445 = vunpack.c.l.b16 %v296
      %v446 = vunpack.c.h.b16 %v296
      %v447 = vunpack.c.l.b16 %v297
      %v448 = vunpack.c.h.b16 %v297
      %v449 = vunpack.c.l.b16 %v298
      %v450 = vunpack.c.h.b16 %v298
      %v451 = vunpack.c.l.b16 %v299
      %v452 = vunpack.c.h.b16 %v299
      %v453 = vunpack.c.l.b16 %v300
      %v454 = vunpack.c.h.b16 %v300
      %v455 = vunpack.c.l.b16 %v301
      %v456 = vunpack.c.h.b16 %v301
      %v457 = vunpack.c.l.b16 %v302
      %v458 = vunpack.c.h.b16 %v302
      %v459 = vunpack.c.l.b16 %v303
      %v460 = vunpack.c.h.b16 %v303
      %v461 = vunpack.c.l.b16 %v304
      %v462 = vunpack.c.h.b16 %v304
      %v463 = vunpack.c.l.b16 %v305
      %v464 = vunpack.c.h.b16 %v305
      %v465 = vunpack.c.l.b16 %v306
      %v466 = vunpack.c.h.b16 %v306
      %v467 = vunpack.c.l.b16 %v307
      %v468 = vunpack.c.h.b16 %v307
      %v469 = vunpack.c.l.b16 %v308
      %v470 = vunpack.c.h.b16 %v308
      %v471 = vunpack.c.l.b16 %v309
      %v472 = vunpack.c.h.b16 %v309
      %v473 = vunpack.c.l.b16 %v310
      %v474 = vunpack.c.h.b16 %v310
      %v475 = vunpack.c.l.b16 %v311
      %v476 = vunpack.c.h.b16 %v311
      %v477 = vunpack.c.l.b16 %v312
      %v478 = vunpack.c.h.b16 %v312
      %v479 = vunpack.c.l.b16 %v313
      %v480 = vunpack.c.h.b16 %v313
      %v481 = vunpack.c.l.b16 %v314
      %v482 = vunpack.c.h.b16 %v314
      %v483 = vunpack.c.l.b16 %v315
      %v484 = vunpack.c.h.b16 %v315
      %v485 = vunpack.c.l.b16 %v316
      %v486 = vunpack.c.h.b16 %v316
      %v487 = vunpack.c.l.b16 %v317
      %v488 = vunpack.c.h.b16 %v317
      %v489 = vunpack.c.l.b16 %v318
      %v490 = vunpack.c.h.b16 %v318
      %v491 = vunpack.c.l.b16 %v319
      %v492 = vunpack.c.h.b16 %v319
      %v493 = vunpack.c.l.b16 %v320
      %v494 = vunpack.c.h.b16 %v320
      %v495 = vunpack.c.l.b16 %v321
      %v496 = vunpack.c.h.b16 %v321
      %v497 = vunpack.c.l.b16 %v322
      %v498 = vunpack.c.h.b16 %v322
      %v499 = vunpack.c.l.b16 %v323
      %v500 = vunpack.c.h.b16 %v323
      %v501 = vunpack.c.l.b16 %v324
      %v502 = vunpack.c.h.b16 %v324
      %v503 = vunpack.c.l.b16 %v325
      %v504 = vunpack.c.h.b16 %v325
      %v505 = vunpack.c.l.b16 %v326
      %v506 = vunpack.c.h.b16 %v326
      %v507 = vunpack.c.l.b16 %v327
      %v508 = vunpack.c.h.b16 %v327
      %v509 = vunpack.c.l.b16 %v328
      %v510 = vunpack.c.h.b16 %v328
      %v511 = vunpack.c.l.b16 %v329
      %v512 = vunpack.c.h.b16 %v329
      %v513 = vunpack.c.l.b16 %v330
      %v514 = vunpack.c.h.b16 %v330
      %v515 = vunpack.c.l.b16 %v331
      %v516 = vunpack.c.h.b16 %v331
      %v517 = vunpack.c.l.b16 %v332
      %v518 = vunpack.c.h.b16 %v332
      %v519 = vunpack.c.l.b16 %v333
      %v520 = vunpack.c.h.b16 %v333
      %v521 = vunpack.c.l.b16 %v334
      %v522 = vunpack.c.h.b16 %v334
      %v523 = vunpack.c.l.b16 %v335
      %v524 = vunpack.c.h.b16 %v335
      %v525 = vpack.c.b16 %v427, %v425
      %v526 = vpack.c.b16 %v428, %v426
      %v527 = vpack.c.b16 %v431, %v429
      %v528 = vpack.c.b16 %v432, %v430
      %v529 = vpack.c.b16 %v435, %v433
      %v530 = vpack.c.b16 %v436, %v434
      %v531 = vpack.c.b16 %v439, %v437
      %v532 = vpack.c.b16 %v440, %v438
      %v533 = vpack.c.b16 %v443, %v441
      %v534 = vpack.c.b16 %v444, %v442
      %v535 = vpack.c.b16 %v447, %v445
      %v536 = vpack.c.b16 %v448, %v446
      %v537 = vpack.c.b16 %v451, %v449
      %v538 = vpack.c.b16 %v452, %v450
      %v539 = vpack.c.b16 %v455, %v453
      %v540 = vpack.c.b16 %v456, %v454
      %v541 = vpack.c.b16 %v459, %v457
      %v542 = vpack.c.b16 %v460, %v458
      %v543 = vpack.c.b16 %v463, %v461
      %v544 = vpack.c.b16 %v464, %v462
      %v545 = vpack.c.b16 %v467, %v465
      %v546 = vpack.c.b16 %v468, %v466
      %v547 = vpack.c.b16 %v471, %v469
      %v548 = vpack.c.b16 %v472, %v470
      %v549 = vpack.c.b16 %v475, %v473
      %v550 = vpack.c.b16 %v476, %v474
      %v551 = vpack.c.b16 %v479, %v477
      %v552 = vpack.c.b16 %v480, %v478
      %v553 = vpack.c.b16 %v483, %v481
      %v554 = vpack.c.b16 %v484, %v482
      %v555 = vpack.c.b16 %v487, %v485
      %v556 = vpack.c.b16 %v488, %v486
      %v557 = vpack.c.b16 %v491, %v489
      %v558 = vpack.c.b16 %v492, %v490
      %v559 = vpack.c.b16 %v495, %v493
      %v560 = vpack.c.b16 %v496, %v494
      %v561 = vpack.c.b16 %v499, %v497
      %v562 = vpack.c.b16 %v500, %v498
      %v563 = vpack.c.b16 %v503, %v501
      %v564 = vpack.c.b16 %v504, %v502
      %v565 = vpack.c.b16 %v507, %v505
      %v566 = vpack.c.b16 %v508, %v506
      %v567 = vpack.c.b16 %v511, %v509
      %v568 = vpack.c.b16 %v512, %v510
      %v569 = vpack.c.b16 %v515, %v513
      %v570 = vpack.c.b16 %v516, %v514
      %v571 = vpack.c.b16 %v519, %v517
      %v572 = vpack.c.b16 %v520, %v518
      %v573 = vpack.c.b16 %v523, %v521
      %v574 = vpack.c.b16 %v524, %v522
      %v657 = vunpack.c.l.b16 %v336
      %v658 = vunpack.c.l.b16 %v337
      %v659 = vunpack.c.l.b16 %v338
      %v660 = vunpack.c.l.b16 %v339
      %v661 = vunpack.c.l.b16 %v340
      %v662 = vunpack.c.l.b16 %v341
      %v663 = vunpack.c.l.b16 %v342
      %v664 = vunpack.c.l.b16 %v343
      %v665 = vunpack.c.l.b16 %v344
      %v666 = vunpack.c.l.b16 %v345
      %v667 = vunpack.c.l.b16 %v346
      %v668 = vunpack.c.l.b16 %v347
      %v669 = vunpack.c.l.b16 %v348
      %v670 = vunpack.c.l.b16 %v349
      %v671 = vunpack.c.l.b16 %v350
      %v672 = vunpack.c.l.b16 %v351
      %v673 = vunpack.c.l.b16 %v352
      %v674 = vunpack.c.l.b16 %v353
      %v675 = vunpack.c.l.b16 %v354
      %v676 = vunpack.c.l.b16 %v355
      %v677 = vunpack.c.l.b16 %v356
      %v678 = vunpack.c.l.b16 %v357
      %v679 = vunpack.c.l.b16 %v358
      %v680 = vunpack.c.l.b16 %v359
      %v681 = vunpack.c.l.b16 %v360
      %v682 = vunpack.c.l.b16 %v361
      %v683 = vunpack.c.l.b16 %v362
      %v684 = vunpack.c.l.b16 %v363
      %v685 = vunpack.c.l.b16 %v364
      %v686 = vunpack.c.l.b16 %v365
      %v687 = vunpack.c.l.b16 %v366
      %v688 = vunpack.c.l.b16 %v367
      %v689 = vpack.c.b16 %v658, %v657
      %v690 = vpack.c.b16 %v660, %v659
      %v691 = vpack.c.b16 %v662, %v661
      %v692 = vpack.c.b16 %v664, %v663
      %v693 = vpack.c.b16 %v666, %v665
      %v694 = vpack.c.b16 %v668, %v667
      %v695 = vpack.c.b16 %v670, %v669
      %v696 = vpack.c.b16 %v672, %v671
      %v697 = vpack.c.b16 %v674, %v673
      %v698 = vpack.c.b16 %v676, %v675
      %v699 = vpack.c.b16 %v678, %v677
      %v700 = vpack.c.b16 %v680, %v679
      %v701 = vpack.c.b16 %v682, %v681
      %v702 = vpack.c.b16 %v684, %v683
      %v703 = vpack.c.b16 %v686, %v685
      %v704 = vpack.c.b16 %v688, %v687
      %721 = vmatprep.subr.bf16.mxu0 0
      %722 = vmatpush1.bf16.msra.mxu0 %v689
      %723 = vmatprep.subr.bf16.mxu0 0
      %724 = vmatpush1.bf16.msra.mxu0 %v690
      %725 = vmatprep.subr.bf16.mxu0 0
      %726 = vmatpush1.bf16.msra.mxu0 %v691
      %727 = vmatprep.subr.bf16.mxu0 0
      %728 = vmatpush1.bf16.msra.mxu0 %v692
      %729 = vmatprep.subr.bf16.mxu0 0
      %730 = vmatpush1.bf16.msra.mxu0 %v693
      %731 = vmatprep.subr.bf16.mxu0 0
      %732 = vmatpush1.bf16.msra.mxu0 %v694
      %733 = vmatprep.subr.bf16.mxu0 0
      %734 = vmatpush1.bf16.msra.mxu0 %v695
      %735 = vmatprep.subr.bf16.mxu0 0
      %736 = vmatpush1.bf16.msra.mxu0 %v696
      %737 = vmatprep.subr.bf16.mxu0 0
      %738 = vmatpush1.bf16.msra.mxu0 %v697
      %739 = vmatprep.subr.bf16.mxu0 0
      %740 = vmatpush1.bf16.msra.mxu0 %v698
      %741 = vmatprep.subr.bf16.mxu0 0
      %742 = vmatpush1.bf16.msra.mxu0 %v699
      %743 = vmatprep.subr.bf16.mxu0 0
      %744 = vmatpush1.bf16.msra.mxu0 %v700
      %745 = vmatprep.subr.bf16.mxu0 0
      %746 = vmatpush1.bf16.msra.mxu0 %v701
      %747 = vmatprep.subr.bf16.mxu0 0
      %748 = vmatpush1.bf16.msra.mxu0 %v702
      %749 = vmatprep.subr.bf16.mxu0 0
      %750 = vmatpush1.bf16.msra.mxu0 %v703
      %751 = vmatprep.subr.bf16.mxu0 0
      %752 = vmatpush1.bf16.msra.mxu0 %v704
      %753 = vmatprep.mubr.bf16.mxu0 %v526
      %754 = vmatmul.mubr.bf16.gmra.mrb[0].mxu0 %v525
      %v755 = vpop.f32.mrb[0].mxu0
      %v756 = vadd.f32 %v373, %v755
      %v757 = vpop.f32.mrb[0].mxu0
      %v758 = vpop.f32.mrb[0].mxu0
      %v759 = vadd.f32 %v373, %v758
      %v760 = vpop.f32.mrb[0].mxu0
      %761 = vmatprep.mubr.bf16.mxu0 %v528
      %762 = vmatmul.mubr.bf16.gmra.mrb[0].mxu0 %v527
      %v763 = vpop.f32.mrb[0].mxu0
      %v764 = vadd.f32 %v373, %v763
      %v765 = vpop.f32.mrb[0].mxu0
      %v766 = vpop.f32.mrb[0].mxu0
      %v767 = vadd.f32 %v373, %v766
      %v768 = vpop.f32.mrb[0].mxu0
      %769 = vmatprep.mubr.bf16.mxu0 %v530
      %770 = vmatmul.mubr.bf16.gmra.mrb[0].mxu0 %v529
      %v771 = vpop.f32.mrb[0].mxu0
      %v772 = vadd.f32 %v373, %v771
      %v773 = vpop.f32.mrb[0].mxu0
      %v774 = vpop.f32.mrb[0].mxu0
      %v775 = vadd.f32 %v373, %v774
      %v776 = vpop.f32.mrb[0].mxu0
      %777 = vmatprep.mubr.bf16.mxu0 %v532
      %778 = vmatmul.mubr.bf16.gmra.mrb[0].mxu0 %v531
      %v779 = vpop.f32.mrb[0].mxu0
      %v780 = vadd.f32 %v373, %v779
      %v781 = vpop.f32.mrb[0].mxu0
      %v782 = vpop.f32.mrb[0].mxu0
      %v783 = vadd.f32 %v373, %v782
      %v784 = vpop.f32.mrb[0].mxu0
      %785 = vmatprep.mubr.bf16.mxu0 %v534
      %786 = vmatmul.mubr.bf16.gmra.mrb[0].mxu0 %v533
      %v787 = vpop.f32.mrb[0].mxu0
      %v788 = vadd.f32 %v373, %v787
      %v789 = vpop.f32.mrb[0].mxu0
      %v790 = vpop.f32.mrb[0].mxu0
      %v791 = vadd.f32 %v373, %v790
      %v792 = vpop.f32.mrb[0].mxu0
      %793 = vmatprep.mubr.bf16.mxu0 %v536
      %794 = vmatmul.mubr.bf16.gmra.mrb[0].mxu0 %v535
      %v795 = vpop.f32.mrb[0].mxu0
      %v796 = vadd.f32 %v373, %v795
      %v797 = vpop.f32.mrb[0].mxu0
      %v798 = vpop.f32.mrb[0].mxu0
      %v799 = vadd.f32 %v373, %v798
      %v800 = vpop.f32.mrb[0].mxu0
      %801 = vmatprep.mubr.bf16.mxu0 %v538
      %802 = vmatmul.mubr.bf16.gmra.mrb[0].mxu0 %v537
      %v803 = vpop.f32.mrb[0].mxu0
      %v804 = vadd.f32 %v373, %v803
      %v805 = vpop.f32.mrb[0].mxu0
      %v806 = vpop.f32.mrb[0].mxu0
      %v807 = vadd.f32 %v373, %v806
      %v808 = vpop.f32.mrb[0].mxu0
      %809 = vmatprep.mubr.bf16.mxu0 %v540
      %810 = vmatmul.mubr.bf16.gmra.mrb[0].mxu0 %v539
      %v811 = vpop.f32.mrb[0].mxu0
      %v812 = vadd.f32 %v373, %v811
      %v813 = vpop.f32.mrb[0].mxu0
      %v814 = vpop.f32.mrb[0].mxu0
      %v815 = vadd.f32 %v373, %v814
      %v816 = vpop.f32.mrb[0].mxu0
      %817 = vmatprep.mubr.bf16.mxu0 %v542
      %818 = vmatmul.mubr.bf16.gmra.mrb[0].mxu0 %v541
      %v819 = vpop.f32.mrb[0].mxu0
      %v820 = vadd.f32 %v373, %v819
      %v821 = vpop.f32.mrb[0].mxu0
      %v822 = vpop.f32.mrb[0].mxu0
      %v823 = vadd.f32 %v373, %v822
      %v824 = vpop.f32.mrb[0].mxu0
      %825 = vmatprep.mubr.bf16.mxu0 %v544
      %826 = vmatmul.mubr.bf16.gmra.mrb[0].mxu0 %v543
      %v827 = vpop.f32.mrb[0].mxu0
      %v828 = vadd.f32 %v373, %v827
      %v829 = vpop.f32.mrb[0].mxu0
      %v830 = vpop.f32.mrb[0].mxu0
      %v831 = vadd.f32 %v373, %v830
      %v832 = vpop.f32.mrb[0].mxu0
      %833 = vmatprep.mubr.bf16.mxu0 %v546
      %834 = vmatmul.mubr.bf16.gmra.mrb[0].mxu0 %v545
      %v835 = vpop.f32.mrb[0].mxu0
      %v836 = vadd.f32 %v373, %v835
      %v837 = vpop.f32.mrb[0].mxu0
      %v838 = vpop.f32.mrb[0].mxu0
      %v839 = vadd.f32 %v373, %v838
      %v840 = vpop.f32.mrb[0].mxu0
      %841 = vmatprep.mubr.bf16.mxu0 %v548
      %842 = vmatmul.mubr.bf16.gmra.mrb[0].mxu0 %v547
      %v843 = vpop.f32.mrb[0].mxu0
      %v844 = vadd.f32 %v373, %v843
      %v845 = vpop.f32.mrb[0].mxu0
      %v846 = vpop.f32.mrb[0].mxu0
      %v847 = vadd.f32 %v373, %v846
      %v848 = vpop.f32.mrb[0].mxu0
      %849 = vmatprep.mubr.bf16.mxu0 %v550
      %850 = vmatmul.mubr.bf16.gmra.mrb[0].mxu0 %v549
      %v851 = vpop.f32.mrb[0].mxu0
      %v852 = vadd.f32 %v373, %v851
      %v853 = vpop.f32.mrb[0].mxu0
      %v854 = vpop.f32.mrb[0].mxu0
      %v855 = vadd.f32 %v373, %v854
      %v856 = vpop.f32.mrb[0].mxu0
      %857 = vmatprep.mubr.bf16.mxu0 %v552
      %858 = vmatmul.mubr.bf16.gmra.mrb[0].mxu0 %v551
      %v859 = vpop.f32.mrb[0].mxu0
      %v860 = vadd.f32 %v373, %v859
      %v861 = vpop.f32.mrb[0].mxu0
      %v862 = vpop.f32.mrb[0].mxu0
      %v863 = vadd.f32 %v373, %v862
      %v864 = vpop.f32.mrb[0].mxu0
      %865 = vmatprep.mubr.bf16.mxu0 %v554
      %866 = vmatmul.mubr.bf16.gmra.mrb[0].mxu0 %v553
      %v867 = vpop.f32.mrb[0].mxu0
      %v868 = vadd.f32 %v373, %v867
      %v869 = vpop.f32.mrb[0].mxu0
      %v870 = vpop.f32.mrb[0].mxu0
      %v871 = vadd.f32 %v373, %v870
      %v872 = vpop.f32.mrb[0].mxu0
      %873 = vmatprep.mubr.bf16.mxu0 %v556
      %874 = vmatmul.mubr.bf16.gmra.mrb[0].mxu0 %v555
      %v875 = vpop.f32.mrb[0].mxu0
      %v876 = vadd.f32 %v373, %v875
      %v877 = vpop.f32.mrb[0].mxu0
      %v878 = vpop.f32.mrb[0].mxu0
      %v879 = vadd.f32 %v373, %v878
      %v880 = vpop.f32.mrb[0].mxu0
      %881 = vmatprep.mubr.bf16.mxu0 %v558
      %882 = vmatmul.mubr.bf16.gmra.mrb[0].mxu0 %v557
      %v883 = vpop.f32.mrb[0].mxu0
      %v884 = vadd.f32 %v373, %v883
      %v885 = vpop.f32.mrb[0].mxu0
      %v886 = vpop.f32.mrb[0].mxu0
      %v887 = vadd.f32 %v373, %v886
      %v888 = vpop.f32.mrb[0].mxu0
      %889 = vmatprep.mubr.bf16.mxu0 %v560
      %890 = vmatmul.mubr.bf16.gmra.mrb[0].mxu0 %v559
      %v891 = vpop.f32.mrb[0].mxu0
      %v892 = vadd.f32 %v373, %v891
      %v893 = vpop.f32.mrb[0].mxu0
      %v894 = vpop.f32.mrb[0].mxu0
      %v895 = vadd.f32 %v373, %v894
      %v896 = vpop.f32.mrb[0].mxu0
      %897 = vmatprep.mubr.bf16.mxu0 %v562
      %898 = vmatmul.mubr.bf16.gmra.mrb[0].mxu0 %v561
      %v899 = vpop.f32.mrb[0].mxu0
      %v900 = vadd.f32 %v373, %v899
      %v901 = vpop.f32.mrb[0].mxu0
      %v902 = vpop.f32.mrb[0].mxu0
      %v903 = vadd.f32 %v373, %v902
      %v904 = vpop.f32.mrb[0].mxu0
      %905 = vmatprep.mubr.bf16.mxu0 %v564
      %906 = vmatmul.mubr.bf16.gmra.mrb[0].mxu0 %v563
      %v907 = vpop.f32.mrb[0].mxu0
      %v908 = vadd.f32 %v373, %v907
      %v909 = vpop.f32.mrb[0].mxu0
      %v910 = vpop.f32.mrb[0].mxu0
      %v911 = vadd.f32 %v373, %v910
      %v912 = vpop.f32.mrb[0].mxu0
      %913 = vmatprep.mubr.bf16.mxu0 %v566
      %914 = vmatmul.mubr.bf16.gmra.mrb[0].mxu0 %v565
      %v915 = vpop.f32.mrb[0].mxu0
      %v916 = vadd.f32 %v373, %v915
      %v917 = vpop.f32.mrb[0].mxu0
      %v918 = vpop.f32.mrb[0].mxu0
      %v919 = vadd.f32 %v373, %v918
      %v920 = vpop.f32.mrb[0].mxu0
      %921 = vmatprep.mubr.bf16.mxu0 %v568
      %922 = vmatmul.mubr.bf16.gmra.mrb[0].mxu0 %v567
      %v923 = vpop.f32.mrb[0].mxu0
      %v924 = vadd.f32 %v373, %v923
      %v925 = vpop.f32.mrb[0].mxu0
      %v926 = vpop.f32.mrb[0].mxu0
      %v927 = vadd.f32 %v373, %v926
      %v928 = vpop.f32.mrb[0].mxu0
      %929 = vmatprep.mubr.bf16.mxu0 %v570
      %930 = vmatmul.mubr.bf16.gmra.mrb[0].mxu0 %v569
      %v931 = vpop.f32.mrb[0].mxu0
      %v932 = vadd.f32 %v373, %v931
      %v933 = vpop.f32.mrb[0].mxu0
      %v934 = vpop.f32.mrb[0].mxu0
      %v935 = vadd.f32 %v373, %v934
      %v936 = vpop.f32.mrb[0].mxu0
      %937 = vmatprep.mubr.bf16.mxu0 %v572
      %938 = vmatmul.mubr.bf16.gmra.mrb[0].mxu0 %v571
      %v939 = vpop.f32.mrb[0].mxu0
      %v940 = vadd.f32 %v373, %v939
      %v941 = vpop.f32.mrb[0].mxu0
      %v942 = vpop.f32.mrb[0].mxu0
      %v943 = vadd.f32 %v373, %v942
      %v944 = vpop.f32.mrb[0].mxu0
      %945 = vmatprep.mubr.bf16.mxu0 %v574
      %946 = vmatmul.mubr.bf16.gmra.mrb[0].mxu0 %v573
      %v947 = vpop.f32.mrb[0].mxu0
      %v948 = vadd.f32 %v373, %v947
      %v949 = vpop.f32.mrb[0].mxu0
      %v950 = vpop.f32.mrb[0].mxu0
      %v951 = vadd.f32 %v373, %v950
      %v952 = vpop.f32.mrb[0].mxu0
      %953 = vdwg.mxu0
      %v954 = vmax.f32 %v756, 0.0
      %v955 = vmax.f32 %v759, 0.0
      %v956 = vmax.f32 %v764, 0.0
      %v957 = vmax.f32 %v767, 0.0
      %v958 = vmax.f32 %v772, 0.0
      %v959 = vmax.f32 %v775, 0.0
      %v960 = vmax.f32 %v780, 0.0
      %v961 = vmax.f32 %v783, 0.0
      %v962 = vmax.f32 %v788, 0.0
      %v963 = vmax.f32 %v791, 0.0
      %v964 = vmax.f32 %v796, 0.0
      %v965 = vmax.f32 %v799, 0.0
      %v966 = vmax.f32 %v804, 0.0
      %v967 = vmax.f32 %v807, 0.0
      %v968 = vmax.f32 %v812, 0.0
      %v969 = vmax.f32 %v815, 0.0
      %v970 = vmax.f32 %v820, 0.0
      %v971 = vmax.f32 %v823, 0.0
      %v972 = vmax.f32 %v828, 0.0
      %v973 = vmax.f32 %v831, 0.0
      %v974 = vmax.f32 %v836, 0.0
      %v975 = vmax.f32 %v839, 0.0
      %v976 = vmax.f32 %v844, 0.0
      %v977 = vmax.f32 %v847, 0.0
      %v978 = vmax.f32 %v852, 0.0
      %v979 = vmax.f32 %v855, 0.0
      %v980 = vmax.f32 %v860, 0.0
      %v981 = vmax.f32 %v863, 0.0
      %v982 = vmax.f32 %v868, 0.0
      %v983 = vmax.f32 %v871, 0.0
      %v984 = vmax.f32 %v876, 0.0
      %v985 = vmax.f32 %v879, 0.0
      %v986 = vmax.f32 %v884, 0.0
      %v987 = vmax.f32 %v887, 0.0
      %v988 = vmax.f32 %v892, 0.0
      %v989 = vmax.f32 %v895, 0.0
      %v990 = vmax.f32 %v900, 0.0
      %v991 = vmax.f32 %v903, 0.0
      %v992 = vmax.f32 %v908, 0.0
      %v993 = vmax.f32 %v911, 0.0
      %v994 = vmax.f32 %v916, 0.0
      %v995 = vmax.f32 %v919, 0.0
      %v996 = vmax.f32 %v924, 0.0
      %v997 = vmax.f32 %v927, 0.0
      %v998 = vmax.f32 %v932, 0.0
      %v999 = vmax.f32 %v935, 0.0
      %v1000 = vmax.f32 %v940, 0.0
      %v1001 = vmax.f32 %v943, 0.0
      %v1002 = vmax.f32 %v948, 0.0
      %v1003 = vmax.f32 %v951, 0.0
      %v1004 = vpack.c.bf16 %v955, %v954
      %v1005 = vpack.c.bf16 %v957, %v956
      %v1006 = vpack.c.bf16 %v959, %v958
      %v1007 = vpack.c.bf16 %v961, %v960
      %v1008 = vpack.c.bf16 %v963, %v962
      %v1009 = vpack.c.bf16 %v965, %v964
      %v1010 = vpack.c.bf16 %v967, %v966
      %v1011 = vpack.c.bf16 %v969, %v968
      %v1012 = vpack.c.bf16 %v971, %v970
      %v1013 = vpack.c.bf16 %v973, %v972
      %v1014 = vpack.c.bf16 %v975, %v974
      %v1015 = vpack.c.bf16 %v977, %v976
      %v1016 = vpack.c.bf16 %v979, %v978
      %v1017 = vpack.c.bf16 %v981, %v980
      %v1018 = vpack.c.bf16 %v983, %v982
      %v1019 = vpack.c.bf16 %v985, %v984
      %v1020 = vpack.c.bf16 %v987, %v986
      %v1021 = vpack.c.bf16 %v989, %v988
      %v1022 = vpack.c.bf16 %v991, %v990
      %v1023 = vpack.c.bf16 %v993, %v992
      %v1024 = vpack.c.bf16 %v995, %v994
      %v1025 = vpack.c.bf16 %v997, %v996
      %v1026 = vpack.c.bf16 %v999, %v998
      %v1027 = vpack.c.bf16 %v1001, %v1000
      %v1028 = vpack.c.bf16 %v1003, %v1002
      %vm1029 = vcmask 261120
      %1030 = vst.msk [vmem:[#allocation2] sm:$0xff] %vm1029, %v1004
      %1031 = vst.msk [vmem:[#allocation2 + $0x8] sm:$0xff] %vm1029, %v1005
      %1032 = vst.msk [vmem:[#allocation2 + $0x10] sm:$0xff] %vm1029, %v1006
      %1033 = vst.msk [vmem:[#allocation2 + $0x18] sm:$0xff] %vm1029, %v1007
      %1034 = vst.msk [vmem:[#allocation2 + $0x20] sm:$0xff] %vm1029, %v1008
      %1035 = vst.msk [vmem:[#allocation2 + $0x28] sm:$0xff] %vm1029, %v1009
      %1036 = vst.msk [vmem:[#allocation2 + $0x30] sm:$0xff] %vm1029, %v1010
      %1037 = vst.msk [vmem:[#allocation2 + $0x38] sm:$0xff] %vm1029, %v1011
      %1038 = vst.msk [vmem:[#allocation2 + $0x40] sm:$0xff] %vm1029, %v1012
      %1039 = vst.msk [vmem:[#allocation2 + $0x48] sm:$0xff] %vm1029, %v1013
      %1040 = vst.msk [vmem:[#allocation2 + $0x50] sm:$0xff] %vm1029, %v1014
      %1041 = vst.msk [vmem:[#allocation2 + $0x58] sm:$0xff] %vm1029, %v1015
      %1042 = vst.msk [vmem:[#allocation2 + $0x60] sm:$0xff] %vm1029, %v1016
      %1043 = vst.msk [vmem:[#allocation2 + $0x68] sm:$0xff] %vm1029, %v1017
      %1044 = vst.msk [vmem:[#allocation2 + $0x70] sm:$0xff] %vm1029, %v1018
      %1045 = vst.msk [vmem:[#allocation2 + $0x78] sm:$0xff] %vm1029, %v1019
      %1046 = vst.msk [vmem:[#allocation2 + $0x80] sm:$0xff] %vm1029, %v1020
      %1047 = vst.msk [vmem:[#allocation2 + $0x88] sm:$0xff] %vm1029, %v1021
      %1048 = vst.msk [vmem:[#allocation2 + $0x90] sm:$0xff] %vm1029, %v1022
      %1049 = vst.msk [vmem:[#allocation2 + $0x98] sm:$0xff] %vm1029, %v1023
      %1050 = vst.msk [vmem:[#allocation2 + $0xa0] sm:$0xff] %vm1029, %v1024
      %1051 = vst.msk [vmem:[#allocation2 + $0xa8] sm:$0xff] %vm1029, %v1025
      %1052 = vst.msk [vmem:[#allocation2 + $0xb0] sm:$0xff] %vm1029, %v1026
      %1053 = vst.msk [vmem:[#allocation2 + $0xb8] sm:$0xff] %vm1029, %v1027
      %1054 = vst.msk [vmem:[#allocation2 + $0xc0] sm:$0xff] %vm1029, %v1028
      %v1055 = vld [vmem:[#allocation2] sm:$0xff]
      %v1056 = vld [vmem:[#allocation2 + $0x8] sm:$0xff]
      %v1057 = vld [vmem:[#allocation2 + $0x10] sm:$0xff]
      %v1058 = vld [vmem:[#allocation2 + $0x18] sm:$0xff]
      %v1059 = vld [vmem:[#allocation2 + $0x20] sm:$0xff]
      %v1060 = vld [vmem:[#allocation2 + $0x28] sm:$0x1f]
      %v1061 = vld [vmem:[%s3] sm:$0xf]
      %v1062 = vld [vmem:[%s3 + $0x4] sm:$0xf]
      %v1063 = vld [vmem:[%s3 + $0x8] sm:$0xf]
      %v1064 = vld [vmem:[%s3 + $0xc] sm:$0xf]
      %v1069 = vunpack.c.l.b16 %v1061
      %v1070 = vunpack.c.l.b16 %v1062
      %v1071 = vunpack.c.l.b16 %v1063
      %v1072 = vunpack.c.l.b16 %v1064
      %v1073 = vpack.c.b16 %v1070, %v1069
      %v1074 = vpack.c.b16 %v1072, %v1071
      %v1078 = vsel %vm1029, %v1055, 0
      %v1081 = vsel %vm1029, %v1056, 0
      %v1084 = vsel %vm1029, %v1057, 0
      %v1087 = vsel %vm1029, %v1058, 0
      %v1090 = vsel %vm1029, %v1059, 0
      %v1093 = vsel %vm1029, %v1060, 0
      %1095 = vmatprep.subr.bf16.mxu0 0
      %1096 = vmatpush1.bf16.msra.mxu0 %v1073
      %1097 = vmatprep.subr.bf16.mxu0 0
      %1098 = vmatpush1.bf16.msra.mxu0 %v1074
      %1099 = vmatprep.subr.bf16.mxu0 0
      %1100 = vmatpush1.bf16.msra.mxu0 0
      %1101 = vmatprep.subr.bf16.mxu0 0
      %1102 = vmatpush1.bf16.msra.mxu0 0
      %1103 = vmatprep.subr.bf16.mxu0 0
      %1104 = vmatpush1.bf16.msra.mxu0 0
      %1105 = vmatprep.subr.bf16.mxu0 0
      %1106 = vmatpush1.bf16.msra.mxu0 0
      %1107 = vmatprep.subr.bf16.mxu0 0
      %1108 = vmatpush1.bf16.msra.mxu0 0
      %1109 = vmatprep.subr.bf16.mxu0 0
      %1110 = vmatpush1.bf16.msra.mxu0 0
      %1111 = vmatprep.subr.bf16.mxu0 0
      %1112 = vmatpush1.bf16.msra.mxu0 0
      %1113 = vmatprep.subr.bf16.mxu0 0
      %1114 = vmatpush1.bf16.msra.mxu0 0
      %1115 = vmatprep.subr.bf16.mxu0 0
      %1116 = vmatpush1.bf16.msra.mxu0 0
      %1117 = vmatprep.subr.bf16.mxu0 0
      %1118 = vmatpush1.bf16.msra.mxu0 0
      %1119 = vmatprep.subr.bf16.mxu0 0
      %1120 = vmatpush1.bf16.msra.mxu0 0
      %1121 = vmatprep.subr.bf16.mxu0 0
      %1122 = vmatpush1.bf16.msra.mxu0 0
      %1123 = vmatprep.subr.bf16.mxu0 0
      %1124 = vmatpush1.bf16.msra.mxu0 0
      %1125 = vmatprep.subr.bf16.mxu0 0
      %1126 = vmatpush1.bf16.msra.mxu0 0
      %1127 = vmatprep.mubr.bf16.mxu0 0
      %1128 = vmatmul.mubr.bf16.gmra.mrb[0].mxu0 %v1078
      %v1129 = vpop.f32.mrb[0].mxu0
      %v1130 = vadd.f32 0.0, %v1129
      %v1131 = vpop.f32.mrb[0].mxu0
      %v1132 = vpop.f32.mrb[0].mxu0
      %v1133 = vadd.f32 0.0, %v1132
      %v1134 = vpop.f32.mrb[0].mxu0
      %1135 = vmatprep.mubr.bf16.mxu0 0
      %1136 = vmatmul.mubr.bf16.gmra.mrb[0].mxu0 %v1081
      %v1137 = vpop.f32.mrb[0].mxu0
      %v1138 = vadd.f32 0.0, %v1137
      %v1139 = vpop.f32.mrb[0].mxu0
      %v1140 = vpop.f32.mrb[0].mxu0
      %v1141 = vadd.f32 0.0, %v1140
      %v1142 = vpop.f32.mrb[0].mxu0
      %1143 = vmatprep.mubr.bf16.mxu0 0
      %1144 = vmatmul.mubr.bf16.gmra.mrb[0].mxu0 %v1084
      %v1145 = vpop.f32.mrb[0].mxu0
      %v1146 = vadd.f32 0.0, %v1145
      %v1147 = vpop.f32.mrb[0].mxu0
      %v1148 = vpop.f32.mrb[0].mxu0
      %v1149 = vadd.f32 0.0, %v1148
      %v1150 = vpop.f32.mrb[0].mxu0
      %1151 = vmatprep.mubr.bf16.mxu0 0
      %1152 = vmatmul.mubr.bf16.gmra.mrb[0].mxu0 %v1087
      %v1153 = vpop.f32.mrb[0].mxu0
      %v1154 = vadd.f32 0.0, %v1153
      %v1155 = vpop.f32.mrb[0].mxu0
      %v1156 = vpop.f32.mrb[0].mxu0
      %v1157 = vadd.f32 0.0, %v1156
      %v1158 = vpop.f32.mrb[0].mxu0
      %1159 = vmatprep.mubr.bf16.mxu0 0
      %1160 = vmatmul.mubr.bf16.gmra.mrb[0].mxu0 %v1090
      %v1161 = vpop.f32.mrb[0].mxu0
      %v1162 = vadd.f32 0.0, %v1161
      %v1163 = vpop.f32.mrb[0].mxu0
      %v1164 = vpop.f32.mrb[0].mxu0
      %v1165 = vadd.f32 0.0, %v1164
      %v1166 = vpop.f32.mrb[0].mxu0
      %1167 = vmatprep.mubr.bf16.mxu0 0
      %1168 = vmatmul.mubr.bf16.gmra.mrb[0].mxu0 %v1093
      %v1169 = vpop.f32.mrb[0].mxu0
      %v1170 = vadd.f32 0.0, %v1169
      %v1171 = vpop.f32.mrb[0].mxu0
      %v1172 = vpop.f32.mrb[0].mxu0
      %v1173 = vadd.f32 0.0, %v1172
      %v1174 = vpop.f32.mrb[0].mxu0
      %1175 = vdwg.mxu0
      %vm1176 = vcmask 523264
      %1177 = vst.msk [vmem:[#allocation3] sm:$0xff] %vm1176, %v1130
      %1178 = vst.msk [vmem:[#allocation3 + $0x8] sm:$0xff] %vm1176, %v1133
      %1179 = vst.msk [vmem:[#allocation3 + $0x10] sm:$0xff] %vm1176, %v1138
      %1180 = vst.msk [vmem:[#allocation3 + $0x18] sm:$0xff] %vm1176, %v1141
      %1181 = vst.msk [vmem:[#allocation3 + $0x20] sm:$0xff] %vm1176, %v1146
      %1182 = vst.msk [vmem:[#allocation3 + $0x28] sm:$0xff] %vm1176, %v1149
      %1183 = vst.msk [vmem:[#allocation3 + $0x30] sm:$0xff] %vm1176, %v1154
      %1184 = vst.msk [vmem:[#allocation3 + $0x38] sm:$0xff] %vm1176, %v1157
      %1185 = vst.msk [vmem:[#allocation3 + $0x40] sm:$0xff] %vm1176, %v1162
      %1186 = vst.msk [vmem:[#allocation3 + $0x48] sm:$0xff] %vm1176, %v1165
      %1187 = vst.msk [vmem:[#allocation3 + $0x50] sm:$0xff] %vm1176, %v1170
      %vm1188 = vcmask 516096
      %1189 = vst.msk [vmem:[#allocation3 + $0x58] sm:$0x1] %vm1188, %v1173
      %v1190 = vld [vmem:[#allocation2 + $0x30] sm:$0xfc]
      %v1191 = vld [vmem:[#allocation2 + $0x38] sm:$0xff]
      %v1192 = vld [vmem:[#allocation2 + $0x40] sm:$0xff]
      %v1193 = vld [vmem:[#allocation2 + $0x48] sm:$0xff]
      %v1194 = vld [vmem:[#allocation2 + $0x50] sm:$0xff]
      %v1195 = vld [vmem:[#allocation2 + $0x58] sm:$0x7f]
      %v1196 = vld [vmem:[%s3 + $0x10] sm:$0xf]
      %v1197 = vld [vmem:[%s3 + $0x14] sm:$0xf]
      %v1198 = vld [vmem:[%s3 + $0x18] sm:$0xf]
      %v1199 = vld [vmem:[%s3 + $0x1c] sm:$0xf]
      %vm1206 = vcmask 1045504
      %v1207 = vrot.slane %v1190, 2
      %v1208 = vrot.slane %v1191, 2
      %v1209 = vsel %vm1206, %v1207, %v1208
      %v1210 = vrot.slane %v1192, 2
      %v1211 = vsel %vm1206, %v1208, %v1210
      %v1212 = vrot.slane %v1193, 2
      %v1213 = vsel %vm1206, %v1210, %v1212
      %v1214 = vrot.slane %v1194, 2
      %v1215 = vsel %vm1206, %v1212, %v1214
      %v1216 = vrot.slane %v1195, 2
      %v1217 = vsel %vm1206, %v1214, %v1216
      %v1222 = vunpack.c.l.b16 %v1196
      %v1223 = vunpack.c.l.b16 %v1197
      %v1224 = vunpack.c.l.b16 %v1198
      %v1225 = vunpack.c.l.b16 %v1199
      %v1226 = vpack.c.b16 %v1223, %v1222
      %v1227 = vpack.c.b16 %v1225, %v1224
      %v1231 = vsel %vm1029, %v1209, 0
      %v1234 = vsel %vm1029, %v1211, 0
      %v1237 = vsel %vm1029, %v1213, 0
      %v1240 = vsel %vm1029, %v1215, 0
      %v1243 = vsel %vm1029, %v1217, 0
      %v1246 = vsel %vm1029, %v1216, 0
      %1248 = vmatprep.subr.bf16.mxu0 0
      %1249 = vmatpush1.bf16.msra.mxu0 %v1226
      %1250 = vmatprep.subr.bf16.mxu0 0
      %1251 = vmatpush1.bf16.msra.mxu0 %v1227
      %1252 = vmatprep.subr.bf16.mxu0 0
      %1253 = vmatpush1.bf16.msra.mxu0 0
      %1254 = vmatprep.subr.bf16.mxu0 0
      %1255 = vmatpush1.bf16.msra.mxu0 0
      %1256 = vmatprep.subr.bf16.mxu0 0
      %1257 = vmatpush1.bf16.msra.mxu0 0
      %1258 = vmatprep.subr.bf16.mxu0 0
      %1259 = vmatpush1.bf16.msra.mxu0 0
      %1260 = vmatprep.subr.bf16.mxu0 0
      %1261 = vmatpush1.bf16.msra.mxu0 0
      %1262 = vmatprep.subr.bf16.mxu0 0
      %1263 = vmatpush1.bf16.msra.mxu0 0
      %1264 = vmatprep.subr.bf16.mxu0 0
      %1265 = vmatpush1.bf16.msra.mxu0 0
      %1266 = vmatprep.subr.bf16.mxu0 0
      %1267 = vmatpush1.bf16.msra.mxu0 0
      %1268 = vmatprep.subr.bf16.mxu0 0
      %1269 = vmatpush1.bf16.msra.mxu0 0
      %1270 = vmatprep.subr.bf16.mxu0 0
      %1271 = vmatpush1.bf16.msra.mxu0 0
      %1272 = vmatprep.subr.bf16.mxu0 0
      %1273 = vmatpush1.bf16.msra.mxu0 0
      %1274 = vmatprep.subr.bf16.mxu0 0
      %1275 = vmatpush1.bf16.msra.mxu0 0
      %1276 = vmatprep.subr.bf16.mxu0 0
      %1277 = vmatpush1.bf16.msra.mxu0 0
      %1278 = vmatprep.subr.bf16.mxu0 0
      %1279 = vmatpush1.bf16.msra.mxu0 0
      %1280 = vmatprep.mubr.bf16.mxu0 0
      %1281 = vmatmul.mubr.bf16.gmra.mrb[0].mxu0 %v1231
      %v1282 = vpop.f32.mrb[0].mxu0
      %v1283 = vadd.f32 0.0, %v1282
      %v1284 = vpop.f32.mrb[0].mxu0
      %v1285 = vpop.f32.mrb[0].mxu0
      %v1286 = vadd.f32 0.0, %v1285
      %v1287 = vpop.f32.mrb[0].mxu0
      %1288 = vmatprep.mubr.bf16.mxu0 0
      %1289 = vmatmul.mubr.bf16.gmra.mrb[0].mxu0 %v1234
      %v1290 = vpop.f32.mrb[0].mxu0
      %v1291 = vadd.f32 0.0, %v1290
      %v1292 = vpop.f32.mrb[0].mxu0
      %v1293 = vpop.f32.mrb[0].mxu0
      %v1294 = vadd.f32 0.0, %v1293
      %v1295 = vpop.f32.mrb[0].mxu0
      %1296 = vmatprep.mubr.bf16.mxu0 0
      %1297 = vmatmul.mubr.bf16.gmra.mrb[0].mxu0 %v1237
      %v1298 = vpop.f32.mrb[0].mxu0
      %v1299 = vadd.f32 0.0, %v1298
      %v1300 = vpop.f32.mrb[0].mxu0
      %v1301 = vpop.f32.mrb[0].mxu0
      %v1302 = vadd.f32 0.0, %v1301
      %v1303 = vpop.f32.mrb[0].mxu0
      %1304 = vmatprep.mubr.bf16.mxu0 0
      %1305 = vmatmul.mubr.bf16.gmra.mrb[0].mxu0 %v1240
      %v1306 = vpop.f32.mrb[0].mxu0
      %v1307 = vadd.f32 0.0, %v1306
      %v1308 = vpop.f32.mrb[0].mxu0
      %v1309 = vpop.f32.mrb[0].mxu0
      %v1310 = vadd.f32 0.0, %v1309
      %v1311 = vpop.f32.mrb[0].mxu0
      %1312 = vmatprep.mubr.bf16.mxu0 0
      %1313 = vmatmul.mubr.bf16.gmra.mrb[0].mxu0 %v1243
      %v1314 = vpop.f32.mrb[0].mxu0
      %v1315 = vadd.f32 0.0, %v1314
      %v1316 = vpop.f32.mrb[0].mxu0
      %v1317 = vpop.f32.mrb[0].mxu0
      %v1318 = vadd.f32 0.0, %v1317
      %v1319 = vpop.f32.mrb[0].mxu0
      %1320 = vmatprep.mubr.bf16.mxu0 0
      %1321 = vmatmul.mubr.bf16.gmra.mrb[0].mxu0 %v1246
      %v1322 = vpop.f32.mrb[0].mxu0
      %v1323 = vadd.f32 0.0, %v1322
      %v1324 = vpop.f32.mrb[0].mxu0
      %v1325 = vpop.f32.mrb[0].mxu0
      %v1326 = vadd.f32 0.0, %v1325
      %v1327 = vpop.f32.mrb[0].mxu0
      %1328 = vdwg.mxu0
      %v1329 = vld [vmem:[#allocation3] sm:$0xff]
      %v1330 = vld [vmem:[#allocation3 + $0x8] sm:$0xff]
      %v1331 = vld [vmem:[#allocation3 + $0x10] sm:$0xff]
      %v1332 = vld [vmem:[#allocation3 + $0x18] sm:$0xff]
      %v1333 = vld [vmem:[#allocation3 + $0x20] sm:$0xff]
      %v1334 = vld [vmem:[#allocation3 + $0x28] sm:$0xff]
      %v1335 = vld [vmem:[#allocation3 + $0x30] sm:$0xff]
      %v1336 = vld [vmem:[#allocation3 + $0x38] sm:$0xff]
      %v1337 = vld [vmem:[#allocation3 + $0x40] sm:$0xff]
      %v1338 = vld [vmem:[#allocation3 + $0x48] sm:$0xff]
      %v1339 = vld [vmem:[#allocation3 + $0x50] sm:$0xff]
      %v1340 = vld [vmem:[#allocation3 + $0x58] sm:$0x1]
      %v1341 = vadd.f32 %v1329, %v1283
      %v1342 = vadd.f32 %v1330, %v1286
      %v1343 = vadd.f32 %v1331, %v1291
      %v1344 = vadd.f32 %v1332, %v1294
      %v1345 = vadd.f32 %v1333, %v1299
      %v1346 = vadd.f32 %v1334, %v1302
      %v1347 = vadd.f32 %v1335, %v1307
      %v1348 = vadd.f32 %v1336, %v1310
      %v1349 = vadd.f32 %v1337, %v1315
      %v1350 = vadd.f32 %v1338, %v1318
      %v1351 = vadd.f32 %v1339, %v1323
      %v1352 = vadd.f32 %v1340, %v1326
      %1353 = vst.msk [vmem:[#allocation3] sm:$0xff] %vm1176, %v1341
      %1354 = vst.msk [vmem:[#allocation3 + $0x8] sm:$0xff] %vm1176, %v1342
      %1355 = vst.msk [vmem:[#allocation3 + $0x10] sm:$0xff] %vm1176, %v1343
      %1356 = vst.msk [vmem:[#allocation3 + $0x18] sm:$0xff] %vm1176, %v1344
      %1357 = vst.msk [vmem:[#allocation3 + $0x20] sm:$0xff] %vm1176, %v1345
      %1358 = vst.msk [vmem:[#allocation3 + $0x28] sm:$0xff] %vm1176, %v1346
      %1359 = vst.msk [vmem:[#allocation3 + $0x30] sm:$0xff] %vm1176, %v1347
      %1360 = vst.msk [vmem:[#allocation3 + $0x38] sm:$0xff] %vm1176, %v1348
      %1361 = vst.msk [vmem:[#allocation3 + $0x40] sm:$0xff] %vm1176, %v1349
      %1362 = vst.msk [vmem:[#allocation3 + $0x48] sm:$0xff] %vm1176, %v1350
      %1363 = vst.msk [vmem:[#allocation3 + $0x50] sm:$0xff] %vm1176, %v1351
      %1364 = vst.msk [vmem:[#allocation3 + $0x58] sm:$0x1] %vm1188, %v1352
      %v1365 = vld [vmem:[#allocation2] sm:$0xff]
      %v1366 = vld [vmem:[#allocation2 + $0x8] sm:$0xff]
      %v1367 = vld [vmem:[#allocation2 + $0x10] sm:$0xff]
      %v1368 = vld [vmem:[#allocation2 + $0x18] sm:$0xff]
      %v1369 = vld [vmem:[#allocation2 + $0x20] sm:$0xff]
      %v1370 = vld [vmem:[#allocation2 + $0x28] sm:$0x1f]
      %v1371 = vld [vmem:[%s3 + $0x20] sm:$0xf]
      %v1372 = vld [vmem:[%s3 + $0x24] sm:$0xf]
      %v1373 = vld [vmem:[%s3 + $0x28] sm:$0xf]
      %v1374 = vld [vmem:[%s3 + $0x2c] sm:$0xf]
      %vm1375 = vsmask.f32 7424
      %v1377 = vshrl.u32 %v1365, 16
      %v1379 = vshll.u32 %v1365, 16
      %v1381 = vrot.slane %v1379, 1
      %v1382 = vor.u32 %v1377, %v1381
      %v1384 = vshll.u32 %v1366, 16
      %v1386 = vrot.slane %v1384, 1
      %v1387 = vsel %vm1375, %v1382, %v1386
      %v1388 = vshrl.u32 %v1366, 16
      %v1390 = vor.u32 %v1388, %v1386
      %v1392 = vshll.u32 %v1367, 16
      %v1394 = vrot.slane %v1392, 1
      %v1395 = vsel %vm1375, %v1390, %v1394
      %v1396 = vshrl.u32 %v1367, 16
      %v1398 = vor.u32 %v1396, %v1394
      %v1400 = vshll.u32 %v1368, 16
      %v1402 = vrot.slane %v1400, 1
      %v1403 = vsel %vm1375, %v1398, %v1402
      %v1404 = vshrl.u32 %v1368, 16
      %v1406 = vor.u32 %v1404, %v1402
      %v1408 = vshll.u32 %v1369, 16
      %v1410 = vrot.slane %v1408, 1
      %v1411 = vsel %vm1375, %v1406, %v1410
      %v1412 = vshrl.u32 %v1369, 16
      %v1414 = vor.u32 %v1412, %v1410
      %v1416 = vshll.u32 %v1370, 16
      %v1418 = vrot.slane %v1416, 1
      %v1419 = vsel %vm1375, %v1414, %v1418
      %v1420 = vshrl.u32 %v1370, 16
      %v1422 = vor.u32 %v1420, %v1418
      %v1427 = vunpack.c.l.b16 %v1371
      %v1428 = vunpack.c.l.b16 %v1372
      %v1429 = vunpack.c.l.b16 %v1373
      %v1430 = vunpack.c.l.b16 %v1374
      %v1431 = vpack.c.b16 %v1428, %v1427
      %v1432 = vpack.c.b16 %v1430, %v1429
      %v1436 = vsel %vm1029, %v1387, 0
      %v1439 = vsel %vm1029, %v1395, 0
      %v1442 = vsel %vm1029, %v1403, 0
      %v1445 = vsel %vm1029, %v1411, 0
      %v1448 = vsel %vm1029, %v1419, 0
      %v1451 = vsel %vm1029, %v1422, 0
      %1453 = vmatprep.subr.bf16.mxu0 0
      %1454 = vmatpush1.bf16.msra.mxu0 %v1431
      %1455 = vmatprep.subr.bf16.mxu0 0
      %1456 = vmatpush1.bf16.msra.mxu0 %v1432
      %1457 = vmatprep.subr.bf16.mxu0 0
      %1458 = vmatpush1.bf16.msra.mxu0 0
      %1459 = vmatprep.subr.bf16.mxu0 0
      %1460 = vmatpush1.bf16.msra.mxu0 0
      %1461 = vmatprep.subr.bf16.mxu0 0
      %1462 = vmatpush1.bf16.msra.mxu0 0
      %1463 = vmatprep.subr.bf16.mxu0 0
      %1464 = vmatpush1.bf16.msra.mxu0 0
      %1465 = vmatprep.subr.bf16.mxu0 0
      %1466 = vmatpush1.bf16.msra.mxu0 0
      %1467 = vmatprep.subr.bf16.mxu0 0
      %1468 = vmatpush1.bf16.msra.mxu0 0
      %1469 = vmatprep.subr.bf16.mxu0 0
      %1470 = vmatpush1.bf16.msra.mxu0 0
      %1471 = vmatprep.subr.bf16.mxu0 0
      %1472 = vmatpush1.bf16.msra.mxu0 0
      %1473 = vmatprep.subr.bf16.mxu0 0
      %1474 = vmatpush1.bf16.msra.mxu0 0
      %1475 = vmatprep.subr.bf16.mxu0 0
      %1476 = vmatpush1.bf16.msra.mxu0 0
      %1477 = vmatprep.subr.bf16.mxu0 0
      %1478 = vmatpush1.bf16.msra.mxu0 0
      %1479 = vmatprep.subr.bf16.mxu0 0
      %1480 = vmatpush1.bf16.msra.mxu0 0
      %1481 = vmatprep.subr.bf16.mxu0 0
      %1482 = vmatpush1.bf16.msra.mxu0 0
      %1483 = vmatprep.subr.bf16.mxu0 0
      %1484 = vmatpush1.bf16.msra.mxu0 0
      %1485 = vmatprep.mubr.bf16.mxu0 0
      %1486 = vmatmul.mubr.bf16.gmra.mrb[0].mxu0 %v1436
      %v1487 = vpop.f32.mrb[0].mxu0
      %v1488 = vadd.f32 0.0, %v1487
      %v1489 = vpop.f32.mrb[0].mxu0
      %v1490 = vpop.f32.mrb[0].mxu0
      %v1491 = vadd.f32 0.0, %v1490
      %v1492 = vpop.f32.mrb[0].mxu0
      %1493 = vmatprep.mubr.bf16.mxu0 0
      %1494 = vmatmul.mubr.bf16.gmra.mrb[0].mxu0 %v1439
      %v1495 = vpop.f32.mrb[0].mxu0
      %v1496 = vadd.f32 0.0, %v1495
      %v1497 = vpop.f32.mrb[0].mxu0
      %v1498 = vpop.f32.mrb[0].mxu0
      %v1499 = vadd.f32 0.0, %v1498
      %v1500 = vpop.f32.mrb[0].mxu0
      %1501 = vmatprep.mubr.bf16.mxu0 0
      %1502 = vmatmul.mubr.bf16.gmra.mrb[0].mxu0 %v1442
      %v1503 = vpop.f32.mrb[0].mxu0
      %v1504 = vadd.f32 0.0, %v1503
      %v1505 = vpop.f32.mrb[0].mxu0
      %v1506 = vpop.f32.mrb[0].mxu0
      %v1507 = vadd.f32 0.0, %v1506
      %v1508 = vpop.f32.mrb[0].mxu0
      %1509 = vmatprep.mubr.bf16.mxu0 0
      %1510 = vmatmul.mubr.bf16.gmra.mrb[0].mxu0 %v1445
      %v1511 = vpop.f32.mrb[0].mxu0
      %v1512 = vadd.f32 0.0, %v1511
      %v1513 = vpop.f32.mrb[0].mxu0
      %v1514 = vpop.f32.mrb[0].mxu0
      %v1515 = vadd.f32 0.0, %v1514
      %v1516 = vpop.f32.mrb[0].mxu0
      %1517 = vmatprep.mubr.bf16.mxu0 0
      %1518 = vmatmul.mubr.bf16.gmra.mrb[0].mxu0 %v1448
      %v1519 = vpop.f32.mrb[0].mxu0
      %v1520 = vadd.f32 0.0, %v1519
      %v1521 = vpop.f32.mrb[0].mxu0
      %v1522 = vpop.f32.mrb[0].mxu0
      %v1523 = vadd.f32 0.0, %v1522
      %v1524 = vpop.f32.mrb[0].mxu0
      %1525 = vmatprep.mubr.bf16.mxu0 0
      %1526 = vmatmul.mubr.bf16.gmra.mrb[0].mxu0 %v1451
      %v1527 = vpop.f32.mrb[0].mxu0
      %v1528 = vadd.f32 0.0, %v1527
      %v1529 = vpop.f32.mrb[0].mxu0
      %v1530 = vpop.f32.mrb[0].mxu0
      %v1531 = vadd.f32 0.0, %v1530
      %v1532 = vpop.f32.mrb[0].mxu0
      %1533 = vdwg.mxu0
      %v1534 = vld [vmem:[#allocation3] sm:$0xff]
      %v1535 = vld [vmem:[#allocation3 + $0x8] sm:$0xff]
      %v1536 = vld [vmem:[#allocation3 + $0x10] sm:$0xff]
      %v1537 = vld [vmem:[#allocation3 + $0x18] sm:$0xff]
      %v1538 = vld [vmem:[#allocation3 + $0x20] sm:$0xff]
      %v1539 = vld [vmem:[#allocation3 + $0x28] sm:$0xff]
      %v1540 = vld [vmem:[#allocation3 + $0x30] sm:$0xff]
      %v1541 = vld [vmem:[#allocation3 + $0x38] sm:$0xff]
      %v1542 = vld [vmem:[#allocation3 + $0x40] sm:$0xff]
      %v1543 = vld [vmem:[#allocation3 + $0x48] sm:$0xff]
      %v1544 = vld [vmem:[#allocation3 + $0x50] sm:$0xff]
      %v1545 = vld [vmem:[#allocation3 + $0x58] sm:$0x1]
      %v1546 = vadd.f32 %v1534, %v1488
      %v1547 = vadd.f32 %v1535, %v1491
      %v1548 = vadd.f32 %v1536, %v1496
      %v1549 = vadd.f32 %v1537, %v1499
      %v1550 = vadd.f32 %v1538, %v1504
      %v1551 = vadd.f32 %v1539, %v1507
      %v1552 = vadd.f32 %v1540, %v1512
      %v1553 = vadd.f32 %v1541, %v1515
      %v1554 = vadd.f32 %v1542, %v1520
      %v1555 = vadd.f32 %v1543, %v1523
      %v1556 = vadd.f32 %v1544, %v1528
      %v1557 = vadd.f32 %v1545, %v1531
      %1558 = vst.msk [vmem:[#allocation3] sm:$0xff] %vm1176, %v1546
      %1559 = vst.msk [vmem:[#allocation3 + $0x8] sm:$0xff] %vm1176, %v1547
      %1560 = vst.msk [vmem:[#allocation3 + $0x10] sm:$0xff] %vm1176, %v1548
      %1561 = vst.msk [vmem:[#allocation3 + $0x18] sm:$0xff] %vm1176, %v1549
      %1562 = vst.msk [vmem:[#allocation3 + $0x20] sm:$0xff] %vm1176, %v1550
      %1563 = vst.msk [vmem:[#allocation3 + $0x28] sm:$0xff] %vm1176, %v1551
      %1564 = vst.msk [vmem:[#allocation3 + $0x30] sm:$0xff] %vm1176, %v1552
      %1565 = vst.msk [vmem:[#allocation3 + $0x38] sm:$0xff] %vm1176, %v1553
      %1566 = vst.msk [vmem:[#allocation3 + $0x40] sm:$0xff] %vm1176, %v1554
      %1567 = vst.msk [vmem:[#allocation3 + $0x48] sm:$0xff] %vm1176, %v1555
      %1568 = vst.msk [vmem:[#allocation3 + $0x50] sm:$0xff] %vm1176, %v1556
      %1569 = vst.msk [vmem:[#allocation3 + $0x58] sm:$0x1] %vm1188, %v1557
      %v1570 = vld [vmem:[#allocation2 + $0x30] sm:$0xfc]
      %v1571 = vld [vmem:[#allocation2 + $0x38] sm:$0xff]
      %v1572 = vld [vmem:[#allocation2 + $0x40] sm:$0xff]
      %v1573 = vld [vmem:[#allocation2 + $0x48] sm:$0xff]
      %v1574 = vld [vmem:[#allocation2 + $0x50] sm:$0xff]
      %v1575 = vld [vmem:[#allocation2 + $0x58] sm:$0x7f]
      %v1576 = vld [vmem:[%s3 + $0x30] sm:$0xf]
      %v1577 = vld [vmem:[%s3 + $0x34] sm:$0xf]
      %v1578 = vld [vmem:[%s3 + $0x38] sm:$0xf]
      %v1579 = vld [vmem:[%s3 + $0x3c] sm:$0xf]
      %vm1580 = vsmask.f32 5376
      %v1582 = vshrl.u32 %v1570, 16
      %v1584 = vrot.slane %v1582, 2
      %v1585 = vshll.u32 %v1570, 16
      %v1587 = vrot.slane %v1585, 3
      %v1588 = vor.u32 %v1584, %v1587
      %v1590 = vshrl.u32 %v1571, 16
      %v1592 = vrot.slane %v1590, 2
      %v1593 = vshll.u32 %v1571, 16
      %v1595 = vrot.slane %v1593, 3
      %v1596 = vor.u32 %v1592, %v1595
      %v1597 = vsel %vm1580, %v1588, %v1596
      %v1599 = vshrl.u32 %v1572, 16
      %v1601 = vrot.slane %v1599, 2
      %v1602 = vshll.u32 %v1572, 16
      %v1604 = vrot.slane %v1602, 3
      %v1605 = vor.u32 %v1601, %v1604
      %v1606 = vsel %vm1580, %v1596, %v1605
      %v1608 = vshrl.u32 %v1573, 16
      %v1610 = vrot.slane %v1608, 2
      %v1611 = vshll.u32 %v1573, 16
      %v1613 = vrot.slane %v1611, 3
      %v1614 = vor.u32 %v1610, %v1613
      %v1615 = vsel %vm1580, %v1605, %v1614
      %v1617 = vshrl.u32 %v1574, 16
      %v1619 = vrot.slane %v1617, 2
      %v1620 = vshll.u32 %v1574, 16
      %v1622 = vrot.slane %v1620, 3
      %v1623 = vor.u32 %v1619, %v1622
      %v1624 = vsel %vm1580, %v1614, %v1623
      %v1626 = vshrl.u32 %v1575, 16
      %v1628 = vrot.slane %v1626, 2
      %v1629 = vshll.u32 %v1575, 16
      %v1631 = vrot.slane %v1629, 3
      %v1632 = vor.u32 %v1628, %v1631
      %v1633 = vsel %vm1580, %v1623, %v1632
      %v1638 = vunpack.c.l.b16 %v1576
      %v1639 = vunpack.c.l.b16 %v1577
      %v1640 = vunpack.c.l.b16 %v1578
      %v1641 = vunpack.c.l.b16 %v1579
      %v1642 = vpack.c.b16 %v1639, %v1638
      %v1643 = vpack.c.b16 %v1641, %v1640
      %v1647 = vsel %vm1029, %v1597, 0
      %v1650 = vsel %vm1029, %v1606, 0
      %v1653 = vsel %vm1029, %v1615, 0
      %v1656 = vsel %vm1029, %v1624, 0
      %v1659 = vsel %vm1029, %v1633, 0
      %v1662 = vsel %vm1029, %v1632, 0
      %1664 = vmatprep.subr.bf16.mxu0 0
      %1665 = vmatpush1.bf16.msra.mxu0 %v1642
      %1666 = vmatprep.subr.bf16.mxu0 0
      %1667 = vmatpush1.bf16.msra.mxu0 %v1643
      %1668 = vmatprep.subr.bf16.mxu0 0
      %1669 = vmatpush1.bf16.msra.mxu0 0
      %1670 = vmatprep.subr.bf16.mxu0 0
      %1671 = vmatpush1.bf16.msra.mxu0 0
      %1672 = vmatprep.subr.bf16.mxu0 0
      %1673 = vmatpush1.bf16.msra.mxu0 0
      %1674 = vmatprep.subr.bf16.mxu0 0
      %1675 = vmatpush1.bf16.msra.mxu0 0
      %1676 = vmatprep.subr.bf16.mxu0 0
      %1677 = vmatpush1.bf16.msra.mxu0 0
      %1678 = vmatprep.subr.bf16.mxu0 0
      %1679 = vmatpush1.bf16.msra.mxu0 0
      %1680 = vmatprep.subr.bf16.mxu0 0
      %1681 = vmatpush1.bf16.msra.mxu0 0
      %1682 = vmatprep.subr.bf16.mxu0 0
      %1683 = vmatpush1.bf16.msra.mxu0 0
      %1684 = vmatprep.subr.bf16.mxu0 0
      %1685 = vmatpush1.bf16.msra.mxu0 0
      %1686 = vmatprep.subr.bf16.mxu0 0
      %1687 = vmatpush1.bf16.msra.mxu0 0
      %1688 = vmatprep.subr.bf16.mxu0 0
      %1689 = vmatpush1.bf16.msra.mxu0 0
      %1690 = vmatprep.subr.bf16.mxu0 0
      %1691 = vmatpush1.bf16.msra.mxu0 0
      %1692 = vmatprep.subr.bf16.mxu0 0
      %1693 = vmatpush1.bf16.msra.mxu0 0
      %1694 = vmatprep.subr.bf16.mxu0 0
      %1695 = vmatpush1.bf16.msra.mxu0 0
      %1696 = vmatprep.mubr.bf16.mxu0 0
      %1697 = vmatmul.mubr.bf16.gmra.mrb[0].mxu0 %v1647
      %v1698 = vpop.f32.mrb[0].mxu0
      %v1699 = vadd.f32 0.0, %v1698
      %v1700 = vpop.f32.mrb[0].mxu0
      %v1701 = vpop.f32.mrb[0].mxu0
      %v1702 = vadd.f32 0.0, %v1701
      %v1703 = vpop.f32.mrb[0].mxu0
      %1704 = vmatprep.mubr.bf16.mxu0 0
      %1705 = vmatmul.mubr.bf16.gmra.mrb[0].mxu0 %v1650
      %v1706 = vpop.f32.mrb[0].mxu0
      %v1707 = vadd.f32 0.0, %v1706
      %v1708 = vpop.f32.mrb[0].mxu0
      %v1709 = vpop.f32.mrb[0].mxu0
      %v1710 = vadd.f32 0.0, %v1709
      %v1711 = vpop.f32.mrb[0].mxu0
      %1712 = vmatprep.mubr.bf16.mxu0 0
      %1713 = vmatmul.mubr.bf16.gmra.mrb[0].mxu0 %v1653
      %v1714 = vpop.f32.mrb[0].mxu0
      %v1715 = vadd.f32 0.0, %v1714
      %v1716 = vpop.f32.mrb[0].mxu0
      %v1717 = vpop.f32.mrb[0].mxu0
      %v1718 = vadd.f32 0.0, %v1717
      %v1719 = vpop.f32.mrb[0].mxu0
      %1720 = vmatprep.mubr.bf16.mxu0 0
      %1721 = vmatmul.mubr.bf16.gmra.mrb[0].mxu0 %v1656
      %v1722 = vpop.f32.mrb[0].mxu0
      %v1723 = vadd.f32 0.0, %v1722
      %v1724 = vpop.f32.mrb[0].mxu0
      %v1725 = vpop.f32.mrb[0].mxu0
      %v1726 = vadd.f32 0.0, %v1725
      %v1727 = vpop.f32.mrb[0].mxu0
      %1728 = vmatprep.mubr.bf16.mxu0 0
      %1729 = vmatmul.mubr.bf16.gmra.mrb[0].mxu0 %v1659
      %v1730 = vpop.f32.mrb[0].mxu0
      %v1731 = vadd.f32 0.0, %v1730
      %v1732 = vpop.f32.mrb[0].mxu0
      %v1733 = vpop.f32.mrb[0].mxu0
      %v1734 = vadd.f32 0.0, %v1733
      %v1735 = vpop.f32.mrb[0].mxu0
      %1736 = vmatprep.mubr.bf16.mxu0 0
      %1737 = vmatmul.mubr.bf16.gmra.mrb[0].mxu0 %v1662
      %v1738 = vpop.f32.mrb[0].mxu0
      %v1739 = vadd.f32 0.0, %v1738
      %v1740 = vpop.f32.mrb[0].mxu0
      %v1741 = vpop.f32.mrb[0].mxu0
      %v1742 = vadd.f32 0.0, %v1741
      %v1743 = vpop.f32.mrb[0].mxu0
      %1744 = vdwg.mxu0
      %v1745 = vld [vmem:[#allocation3] sm:$0xff]
      %v1746 = vld [vmem:[#allocation3 + $0x8] sm:$0xff]
      %v1747 = vld [vmem:[#allocation3 + $0x10] sm:$0xff]
      %v1748 = vld [vmem:[#allocation3 + $0x18] sm:$0xff]
      %v1749 = vld [vmem:[#allocation3 + $0x20] sm:$0xff]
      %v1750 = vld [vmem:[#allocation3 + $0x28] sm:$0xff]
      %v1751 = vld [vmem:[#allocation3 + $0x30] sm:$0xff]
      %v1752 = vld [vmem:[#allocation3 + $0x38] sm:$0xff]
      %v1753 = vld [vmem:[#allocation3 + $0x40] sm:$0xff]
      %v1754 = vld [vmem:[#allocation3 + $0x48] sm:$0xff]
      %v1755 = vld [vmem:[#allocation3 + $0x50] sm:$0xff]
      %v1756 = vld [vmem:[#allocation3 + $0x58] sm:$0x1]
      %v1757 = vadd.f32 %v1745, %v1699
      %v1758 = vadd.f32 %v1746, %v1702
      %v1759 = vadd.f32 %v1747, %v1707
      %v1760 = vadd.f32 %v1748, %v1710
      %v1761 = vadd.f32 %v1749, %v1715
      %v1762 = vadd.f32 %v1750, %v1718
      %v1763 = vadd.f32 %v1751, %v1723
      %v1764 = vadd.f32 %v1752, %v1726
      %v1765 = vadd.f32 %v1753, %v1731
      %v1766 = vadd.f32 %v1754, %v1734
      %v1767 = vadd.f32 %v1755, %v1739
      %v1768 = vadd.f32 %v1756, %v1742
      %1769 = vst.msk [vmem:[#allocation3] sm:$0xff] %vm1176, %v1757
      %1770 = vst.msk [vmem:[#allocation3 + $0x8] sm:$0xff] %vm1176, %v1758
      %1771 = vst.msk [vmem:[#allocation3 + $0x10] sm:$0xff] %vm1176, %v1759
      %1772 = vst.msk [vmem:[#allocation3 + $0x18] sm:$0xff] %vm1176, %v1760
      %1773 = vst.msk [vmem:[#allocation3 + $0x20] sm:$0xff] %vm1176, %v1761
      %1774 = vst.msk [vmem:[#allocation3 + $0x28] sm:$0xff] %vm1176, %v1762
      %1775 = vst.msk [vmem:[#allocation3 + $0x30] sm:$0xff] %vm1176, %v1763
      %1776 = vst.msk [vmem:[#allocation3 + $0x38] sm:$0xff] %vm1176, %v1764
      %1777 = vst.msk [vmem:[#allocation3 + $0x40] sm:$0xff] %vm1176, %v1765
      %1778 = vst.msk [vmem:[#allocation3 + $0x48] sm:$0xff] %vm1176, %v1766
      %1779 = vst.msk [vmem:[#allocation3 + $0x50] sm:$0xff] %vm1176, %v1767
      %1780 = vst.msk [vmem:[#allocation3 + $0x58] sm:$0x1] %vm1188, %v1768
      %v1781 = vld [vmem:[#allocation2 + $0x60] sm:$0xf0]
      %v1782 = vld [vmem:[#allocation2 + $0x68] sm:$0xff]
      %v1783 = vld [vmem:[#allocation2 + $0x70] sm:$0xff]
      %v1784 = vld [vmem:[#allocation2 + $0x78] sm:$0xff]
      %v1785 = vld [vmem:[#allocation2 + $0x80] sm:$0xff]
      %v1786 = vld [vmem:[#allocation2 + $0x88] sm:$0xff]
      %v1787 = vld [vmem:[#allocation2 + $0x90] sm:$0x1]
      %v1788 = vld [vmem:[%s3 + $0x40] sm:$0xf]
      %v1789 = vld [vmem:[%s3 + $0x44] sm:$0xf]
      %v1790 = vld [vmem:[%s3 + $0x48] sm:$0xf]
      %v1791 = vld [vmem:[%s3 + $0x4c] sm:$0xf]
      %vm1799 = vcmask 1043456
      %v1800 = vrot.slane %v1781, 4
      %v1801 = vrot.slane %v1782, 4
      %v1802 = vsel %vm1799, %v1800, %v1801
      %v1803 = vrot.slane %v1783, 4
      %v1804 = vsel %vm1799, %v1801, %v1803
      %v1805 = vrot.slane %v1784, 4
      %v1806 = vsel %vm1799, %v1803, %v1805
      %v1807 = vrot.slane %v1785, 4
      %v1808 = vsel %vm1799, %v1805, %v1807
      %v1809 = vrot.slane %v1786, 4
      %v1810 = vsel %vm1799, %v1807, %v1809
      %v1811 = vrot.slane %v1787, 4
      %v1812 = vsel %vm1799, %v1809, %v1811
      %v1817 = vunpack.c.l.b16 %v1788
      %v1818 = vunpack.c.l.b16 %v1789
      %v1819 = vunpack.c.l.b16 %v1790
      %v1820 = vunpack.c.l.b16 %v1791
      %v1821 = vpack.c.b16 %v1818, %v1817
      %v1822 = vpack.c.b16 %v1820, %v1819
      %v1826 = vsel %vm1029, %v1802, 0
      %v1829 = vsel %vm1029, %v1804, 0
      %v1832 = vsel %vm1029, %v1806, 0
      %v1835 = vsel %vm1029, %v1808, 0
      %v1838 = vsel %vm1029, %v1810, 0
      %v1841 = vsel %vm1029, %v1812, 0
      %1843 = vmatprep.subr.bf16.mxu0 0
      %1844 = vmatpush1.bf16.msra.mxu0 %v1821
      %1845 = vmatprep.subr.bf16.mxu0 0
      %1846 = vmatpush1.bf16.msra.mxu0 %v1822
      %1847 = vmatprep.subr.bf16.mxu0 0
      %1848 = vmatpush1.bf16.msra.mxu0 0
      %1849 = vmatprep.subr.bf16.mxu0 0
      %1850 = vmatpush1.bf16.msra.mxu0 0
      %1851 = vmatprep.subr.bf16.mxu0 0
      %1852 = vmatpush1.bf16.msra.mxu0 0
      %1853 = vmatprep.subr.bf16.mxu0 0
      %1854 = vmatpush1.bf16.msra.mxu0 0
      %1855 = vmatprep.subr.bf16.mxu0 0
      %1856 = vmatpush1.bf16.msra.mxu0 0
      %1857 = vmatprep.subr.bf16.mxu0 0
      %1858 = vmatpush1.bf16.msra.mxu0 0
      %1859 = vmatprep.subr.bf16.mxu0 0
      %1860 = vmatpush1.bf16.msra.mxu0 0
      %1861 = vmatprep.subr.bf16.mxu0 0
      %1862 = vmatpush1.bf16.msra.mxu0 0
      %1863 = vmatprep.subr.bf16.mxu0 0
      %1864 = vmatpush1.bf16.msra.mxu0 0
      %1865 = vmatprep.subr.bf16.mxu0 0
      %1866 = vmatpush1.bf16.msra.mxu0 0
      %1867 = vmatprep.subr.bf16.mxu0 0
      %1868 = vmatpush1.bf16.msra.mxu0 0
      %1869 = vmatprep.subr.bf16.mxu0 0
      %1870 = vmatpush1.bf16.msra.mxu0 0
      %1871 = vmatprep.subr.bf16.mxu0 0
      %1872 = vmatpush1.bf16.msra.mxu0 0
      %1873 = vmatprep.subr.bf16.mxu0 0
      %1874 = vmatpush1.bf16.msra.mxu0 0
      %1875 = vmatprep.mubr.bf16.mxu0 0
      %1876 = vmatmul.mubr.bf16.gmra.mrb[0].mxu0 %v1826
      %v1877 = vpop.f32.mrb[0].mxu0
      %v1878 = vadd.f32 0.0, %v1877
      %v1879 = vpop.f32.mrb[0].mxu0
      %v1880 = vpop.f32.mrb[0].mxu0
      %v1881 = vadd.f32 0.0, %v1880
      %v1882 = vpop.f32.mrb[0].mxu0
      %1883 = vmatprep.mubr.bf16.mxu0 0
      %1884 = vmatmul.mubr.bf16.gmra.mrb[0].mxu0 %v1829
      %v1885 = vpop.f32.mrb[0].mxu0
      %v1886 = vadd.f32 0.0, %v1885
      %v1887 = vpop.f32.mrb[0].mxu0
      %v1888 = vpop.f32.mrb[0].mxu0
      %v1889 = vadd.f32 0.0, %v1888
      %v1890 = vpop.f32.mrb[0].mxu0
      %1891 = vmatprep.mubr.bf16.mxu0 0
      %1892 = vmatmul.mubr.bf16.gmra.mrb[0].mxu0 %v1832
      %v1893 = vpop.f32.mrb[0].mxu0
      %v1894 = vadd.f32 0.0, %v1893
      %v1895 = vpop.f32.mrb[0].mxu0
      %v1896 = vpop.f32.mrb[0].mxu0
      %v1897 = vadd.f32 0.0, %v1896
      %v1898 = vpop.f32.mrb[0].mxu0
      %1899 = vmatprep.mubr.bf16.mxu0 0
      %1900 = vmatmul.mubr.bf16.gmra.mrb[0].mxu0 %v1835
      %v1901 = vpop.f32.mrb[0].mxu0
      %v1902 = vadd.f32 0.0, %v1901
      %v1903 = vpop.f32.mrb[0].mxu0
      %v1904 = vpop.f32.mrb[0].mxu0
      %v1905 = vadd.f32 0.0, %v1904
      %v1906 = vpop.f32.mrb[0].mxu0
      %1907 = vmatprep.mubr.bf16.mxu0 0
      %1908 = vmatmul.mubr.bf16.gmra.mrb[0].mxu0 %v1838
      %v1909 = vpop.f32.mrb[0].mxu0
      %v1910 = vadd.f32 0.0, %v1909
      %v1911 = vpop.f32.mrb[0].mxu0
      %v1912 = vpop.f32.mrb[0].mxu0
      %v1913 = vadd.f32 0.0, %v1912
      %v1914 = vpop.f32.mrb[0].mxu0
      %1915 = vmatprep.mubr.bf16.mxu0 0
      %1916 = vmatmul.mubr.bf16.gmra.mrb[0].mxu0 %v1841
      %v1917 = vpop.f32.mrb[0].mxu0
      %v1918 = vadd.f32 0.0, %v1917
      %v1919 = vpop.f32.mrb[0].mxu0
      %v1920 = vpop.f32.mrb[0].mxu0
      %v1921 = vadd.f32 0.0, %v1920
      %v1922 = vpop.f32.mrb[0].mxu0
      %1923 = vdwg.mxu0
      %v1924 = vld [vmem:[#allocation3] sm:$0xff]
      %v1925 = vld [vmem:[#allocation3 + $0x8] sm:$0xff]
      %v1926 = vld [vmem:[#allocation3 + $0x10] sm:$0xff]
      %v1927 = vld [vmem:[#allocation3 + $0x18] sm:$0xff]
      %v1928 = vld [vmem:[#allocation3 + $0x20] sm:$0xff]
      %v1929 = vld [vmem:[#allocation3 + $0x28] sm:$0xff]
      %v1930 = vld [vmem:[#allocation3 + $0x30] sm:$0xff]
      %v1931 = vld [vmem:[#allocation3 + $0x38] sm:$0xff]
      %v1932 = vld [vmem:[#allocation3 + $0x40] sm:$0xff]
      %v1933 = vld [vmem:[#allocation3 + $0x48] sm:$0xff]
      %v1934 = vld [vmem:[#allocation3 + $0x50] sm:$0xff]
      %v1935 = vld [vmem:[#allocation3 + $0x58] sm:$0x1]
      %v1936 = vadd.f32 %v1924, %v1878
      %v1937 = vadd.f32 %v1925, %v1881
      %v1938 = vadd.f32 %v1926, %v1886
      %v1939 = vadd.f32 %v1927, %v1889
      %v1940 = vadd.f32 %v1928, %v1894
      %v1941 = vadd.f32 %v1929, %v1897
      %v1942 = vadd.f32 %v1930, %v1902
      %v1943 = vadd.f32 %v1931, %v1905
      %v1944 = vadd.f32 %v1932, %v1910
      %v1945 = vadd.f32 %v1933, %v1913
      %v1946 = vadd.f32 %v1934, %v1918
      %v1947 = vadd.f32 %v1935, %v1921
      %1948 = vst.msk [vmem:[#allocation3] sm:$0xff] %vm1176, %v1936
      %1949 = vst.msk [vmem:[#allocation3 + $0x8] sm:$0xff] %vm1176, %v1937
      %1950 = vst.msk [vmem:[#allocation3 + $0x10] sm:$0xff] %vm1176, %v1938
      %1951 = vst.msk [vmem:[#allocation3 + $0x18] sm:$0xff] %vm1176, %v1939
      %1952 = vst.msk [vmem:[#allocation3 + $0x20] sm:$0xff] %vm1176, %v1940
      %1953 = vst.msk [vmem:[#allocation3 + $0x28] sm:$0xff] %vm1176, %v1941
      %1954 = vst.msk [vmem:[#allocation3 + $0x30] sm:$0xff] %vm1176, %v1942
      %1955 = vst.msk [vmem:[#allocation3 + $0x38] sm:$0xff] %vm1176, %v1943
      %1956 = vst.msk [vmem:[#allocation3 + $0x40] sm:$0xff] %vm1176, %v1944
      %1957 = vst.msk [vmem:[#allocation3 + $0x48] sm:$0xff] %vm1176, %v1945
      %1958 = vst.msk [vmem:[#allocation3 + $0x50] sm:$0xff] %vm1176, %v1946
      %1959 = vst.msk [vmem:[#allocation3 + $0x58] sm:$0x1] %vm1188, %v1947
      %v1960 = vld [vmem:[#allocation2 + $0x90] sm:$0xc0]
      %v1961 = vld [vmem:[#allocation2 + $0x98] sm:$0xff]
      %v1962 = vld [vmem:[#allocation2 + $0xa0] sm:$0xff]
      %v1963 = vld [vmem:[#allocation2 + $0xa8] sm:$0xff]
      %v1964 = vld [vmem:[#allocation2 + $0xb0] sm:$0xff]
      %v1965 = vld [vmem:[#allocation2 + $0xb8] sm:$0xff]
      %v1966 = vld [vmem:[#allocation2 + $0xc0] sm:$0x7]
      %v1967 = vld [vmem:[%s3 + $0x50] sm:$0xf]
      %v1968 = vld [vmem:[%s3 + $0x54] sm:$0xf]
      %v1969 = vld [vmem:[%s3 + $0x58] sm:$0xf]
      %v1970 = vld [vmem:[%s3 + $0x5c] sm:$0xf]
      %vm1978 = vcmask 1041408
      %v1979 = vrot.slane %v1960, 6
      %v1980 = vrot.slane %v1961, 6
      %v1981 = vsel %vm1978, %v1979, %v1980
      %v1982 = vrot.slane %v1962, 6
      %v1983 = vsel %vm1978, %v1980, %v1982
      %v1984 = vrot.slane %v1963, 6
      %v1985 = vsel %vm1978, %v1982, %v1984
      %v1986 = vrot.slane %v1964, 6
      %v1987 = vsel %vm1978, %v1984, %v1986
      %v1988 = vrot.slane %v1965, 6
      %v1989 = vsel %vm1978, %v1986, %v1988
      %v1990 = vrot.slane %v1966, 6
      %v1991 = vsel %vm1978, %v1988, %v1990
      %v1996 = vunpack.c.l.b16 %v1967
      %v1997 = vunpack.c.l.b16 %v1968
      %v1998 = vunpack.c.l.b16 %v1969
      %v1999 = vunpack.c.l.b16 %v1970
      %v2000 = vpack.c.b16 %v1997, %v1996
      %v2001 = vpack.c.b16 %v1999, %v1998
      %v2005 = vsel %vm1029, %v1981, 0
      %v2008 = vsel %vm1029, %v1983, 0
      %v2011 = vsel %vm1029, %v1985, 0
      %v2014 = vsel %vm1029, %v1987, 0
      %v2017 = vsel %vm1029, %v1989, 0
      %v2020 = vsel %vm1029, %v1991, 0
      %2022 = vmatprep.subr.bf16.mxu0 0
      %2023 = vmatpush1.bf16.msra.mxu0 %v2000
      %2024 = vmatprep.subr.bf16.mxu0 0
      %2025 = vmatpush1.bf16.msra.mxu0 %v2001
      %2026 = vmatprep.subr.bf16.mxu0 0
      %2027 = vmatpush1.bf16.msra.mxu0 0
      %2028 = vmatprep.subr.bf16.mxu0 0
      %2029 = vmatpush1.bf16.msra.mxu0 0
      %2030 = vmatprep.subr.bf16.mxu0 0
      %2031 = vmatpush1.bf16.msra.mxu0 0
      %2032 = vmatprep.subr.bf16.mxu0 0
      %2033 = vmatpush1.bf16.msra.mxu0 0
      %2034 = vmatprep.subr.bf16.mxu0 0
      %2035 = vmatpush1.bf16.msra.mxu0 0
      %2036 = vmatprep.subr.bf16.mxu0 0
      %2037 = vmatpush1.bf16.msra.mxu0 0
      %2038 = vmatprep.subr.bf16.mxu0 0
      %2039 = vmatpush1.bf16.msra.mxu0 0
      %2040 = vmatprep.subr.bf16.mxu0 0
      %2041 = vmatpush1.bf16.msra.mxu0 0
      %2042 = vmatprep.subr.bf16.mxu0 0
      %2043 = vmatpush1.bf16.msra.mxu0 0
      %2044 = vmatprep.subr.bf16.mxu0 0
      %2045 = vmatpush1.bf16.msra.mxu0 0
      %2046 = vmatprep.subr.bf16.mxu0 0
      %2047 = vmatpush1.bf16.msra.mxu0 0
      %2048 = vmatprep.subr.bf16.mxu0 0
      %2049 = vmatpush1.bf16.msra.mxu0 0
      %2050 = vmatprep.subr.bf16.mxu0 0
      %2051 = vmatpush1.bf16.msra.mxu0 0
      %2052 = vmatprep.subr.bf16.mxu0 0
      %2053 = vmatpush1.bf16.msra.mxu0 0
      %2054 = vmatprep.mubr.bf16.mxu0 0
      %2055 = vmatmul.mubr.bf16.gmra.mrb[0].mxu0 %v2005
      %v2056 = vpop.f32.mrb[0].mxu0
      %v2057 = vadd.f32 0.0, %v2056
      %v2058 = vpop.f32.mrb[0].mxu0
      %v2059 = vpop.f32.mrb[0].mxu0
      %v2060 = vadd.f32 0.0, %v2059
      %v2061 = vpop.f32.mrb[0].mxu0
      %2062 = vmatprep.mubr.bf16.mxu0 0
      %2063 = vmatmul.mubr.bf16.gmra.mrb[0].mxu0 %v2008
      %v2064 = vpop.f32.mrb[0].mxu0
      %v2065 = vadd.f32 0.0, %v2064
      %v2066 = vpop.f32.mrb[0].mxu0
      %v2067 = vpop.f32.mrb[0].mxu0
      %v2068 = vadd.f32 0.0, %v2067
      %v2069 = vpop.f32.mrb[0].mxu0
      %2070 = vmatprep.mubr.bf16.mxu0 0
      %2071 = vmatmul.mubr.bf16.gmra.mrb[0].mxu0 %v2011
      %v2072 = vpop.f32.mrb[0].mxu0
      %v2073 = vadd.f32 0.0, %v2072
      %v2074 = vpop.f32.mrb[0].mxu0
      %v2075 = vpop.f32.mrb[0].mxu0
      %v2076 = vadd.f32 0.0, %v2075
      %v2077 = vpop.f32.mrb[0].mxu0
      %2078 = vmatprep.mubr.bf16.mxu0 0
      %2079 = vmatmul.mubr.bf16.gmra.mrb[0].mxu0 %v2014
      %v2080 = vpop.f32.mrb[0].mxu0
      %v2081 = vadd.f32 0.0, %v2080
      %v2082 = vpop.f32.mrb[0].mxu0
      %v2083 = vpop.f32.mrb[0].mxu0
      %v2084 = vadd.f32 0.0, %v2083
      %v2085 = vpop.f32.mrb[0].mxu0
      %2086 = vmatprep.mubr.bf16.mxu0 0
      %2087 = vmatmul.mubr.bf16.gmra.mrb[0].mxu0 %v2017
      %v2088 = vpop.f32.mrb[0].mxu0
      %v2089 = vadd.f32 0.0, %v2088
      %v2090 = vpop.f32.mrb[0].mxu0
      %v2091 = vpop.f32.mrb[0].mxu0
      %v2092 = vadd.f32 0.0, %v2091
      %v2093 = vpop.f32.mrb[0].mxu0
      %2094 = vmatprep.mubr.bf16.mxu0 0
      %2095 = vmatmul.mubr.bf16.gmra.mrb[0].mxu0 %v2020
      %v2096 = vpop.f32.mrb[0].mxu0
      %v2097 = vadd.f32 0.0, %v2096
      %v2098 = vpop.f32.mrb[0].mxu0
      %v2099 = vpop.f32.mrb[0].mxu0
      %v2100 = vadd.f32 0.0, %v2099
      %v2101 = vpop.f32.mrb[0].mxu0
      %2102 = vdwg.mxu0
      %v2103 = vld [vmem:[#allocation3] sm:$0xff]
      %v2104 = vld [vmem:[#allocation3 + $0x8] sm:$0xff]
      %v2105 = vld [vmem:[#allocation3 + $0x10] sm:$0xff]
      %v2106 = vld [vmem:[#allocation3 + $0x18] sm:$0xff]
      %v2107 = vld [vmem:[#allocation3 + $0x20] sm:$0xff]
      %v2108 = vld [vmem:[#allocation3 + $0x28] sm:$0xff]
      %v2109 = vld [vmem:[#allocation3 + $0x30] sm:$0xff]
      %v2110 = vld [vmem:[#allocation3 + $0x38] sm:$0xff]
      %v2111 = vld [vmem:[#allocation3 + $0x40] sm:$0xff]
      %v2112 = vld [vmem:[#allocation3 + $0x48] sm:$0xff]
      %v2113 = vld [vmem:[#allocation3 + $0x50] sm:$0xff]
      %v2114 = vld [vmem:[#allocation3 + $0x58] sm:$0x1]
      %v2115 = vadd.f32 %v2103, %v2057
      %v2116 = vadd.f32 %v2104, %v2060
      %v2117 = vadd.f32 %v2105, %v2065
      %v2118 = vadd.f32 %v2106, %v2068
      %v2119 = vadd.f32 %v2107, %v2073
      %v2120 = vadd.f32 %v2108, %v2076
      %v2121 = vadd.f32 %v2109, %v2081
      %v2122 = vadd.f32 %v2110, %v2084
      %v2123 = vadd.f32 %v2111, %v2089
      %v2124 = vadd.f32 %v2112, %v2092
      %v2125 = vadd.f32 %v2113, %v2097
      %v2126 = vadd.f32 %v2114, %v2100
      %2127 = vst.msk [vmem:[#allocation3] sm:$0xff] %vm1176, %v2115
      %2128 = vst.msk [vmem:[#allocation3 + $0x8] sm:$0xff] %vm1176, %v2116
      %2129 = vst.msk [vmem:[#allocation3 + $0x10] sm:$0xff] %vm1176, %v2117
      %2130 = vst.msk [vmem:[#allocation3 + $0x18] sm:$0xff] %vm1176, %v2118
      %2131 = vst.msk [vmem:[#allocation3 + $0x20] sm:$0xff] %vm1176, %v2119
      %2132 = vst.msk [vmem:[#allocation3 + $0x28] sm:$0xff] %vm1176, %v2120
      %2133 = vst.msk [vmem:[#allocation3 + $0x30] sm:$0xff] %vm1176, %v2121
      %2134 = vst.msk [vmem:[#allocation3 + $0x38] sm:$0xff] %vm1176, %v2122
      %2135 = vst.msk [vmem:[#allocation3 + $0x40] sm:$0xff] %vm1176, %v2123
      %2136 = vst.msk [vmem:[#allocation3 + $0x48] sm:$0xff] %vm1176, %v2124
      %2137 = vst.msk [vmem:[#allocation3 + $0x50] sm:$0xff] %vm1176, %v2125
      %2138 = vst.msk [vmem:[#allocation3 + $0x58] sm:$0x1] %vm1188, %v2126
      %v2139 = vld [vmem:[#allocation2 + $0x60] sm:$0xf0]
      %v2140 = vld [vmem:[#allocation2 + $0x68] sm:$0xff]
      %v2141 = vld [vmem:[#allocation2 + $0x70] sm:$0xff]
      %v2142 = vld [vmem:[#allocation2 + $0x78] sm:$0xff]
      %v2143 = vld [vmem:[#allocation2 + $0x80] sm:$0xff]
      %v2144 = vld [vmem:[#allocation2 + $0x88] sm:$0xff]
      %v2145 = vld [vmem:[#allocation2 + $0x90] sm:$0x1]
      %v2146 = vld [vmem:[%s3 + $0x60] sm:$0xf]
      %v2147 = vld [vmem:[%s3 + $0x64] sm:$0xf]
      %v2148 = vld [vmem:[%s3 + $0x68] sm:$0xf]
      %v2149 = vld [vmem:[%s3 + $0x6c] sm:$0xf]
      %vm2150 = vsmask.f32 3328
      %v2152 = vshrl.u32 %v2139, 16
      %v2154 = vrot.slane %v2152, 4
      %v2155 = vshll.u32 %v2139, 16
      %v2157 = vrot.slane %v2155, 5
      %v2158 = vor.u32 %v2154, %v2157
      %v2160 = vshrl.u32 %v2140, 16
      %v2162 = vrot.slane %v2160, 4
      %v2163 = vshll.u32 %v2140, 16
      %v2165 = vrot.slane %v2163, 5
      %v2166 = vor.u32 %v2162, %v2165
      %v2167 = vsel %vm2150, %v2158, %v2166
      %v2169 = vshrl.u32 %v2141, 16
      %v2171 = vrot.slane %v2169, 4
      %v2172 = vshll.u32 %v2141, 16
      %v2174 = vrot.slane %v2172, 5
      %v2175 = vor.u32 %v2171, %v2174
      %v2176 = vsel %vm2150, %v2166, %v2175
      %v2178 = vshrl.u32 %v2142, 16
      %v2180 = vrot.slane %v2178, 4
      %v2181 = vshll.u32 %v2142, 16
      %v2183 = vrot.slane %v2181, 5
      %v2184 = vor.u32 %v2180, %v2183
      %v2185 = vsel %vm2150, %v2175, %v2184
      %v2187 = vshrl.u32 %v2143, 16
      %v2189 = vrot.slane %v2187, 4
      %v2190 = vshll.u32 %v2143, 16
      %v2192 = vrot.slane %v2190, 5
      %v2193 = vor.u32 %v2189, %v2192
      %v2194 = vsel %vm2150, %v2184, %v2193
      %v2196 = vshrl.u32 %v2144, 16
      %v2198 = vrot.slane %v2196, 4
      %v2199 = vshll.u32 %v2144, 16
      %v2201 = vrot.slane %v2199, 5
      %v2202 = vor.u32 %v2198, %v2201
      %v2203 = vsel %vm2150, %v2193, %v2202
      %v2205 = vshrl.u32 %v2145, 16
      %v2207 = vrot.slane %v2205, 4
      %v2208 = vshll.u32 %v2145, 16
      %v2210 = vrot.slane %v2208, 5
      %v2211 = vor.u32 %v2207, %v2210
      %v2212 = vsel %vm2150, %v2202, %v2211
      %v2217 = vunpack.c.l.b16 %v2146
      %v2218 = vunpack.c.l.b16 %v2147
      %v2219 = vunpack.c.l.b16 %v2148
      %v2220 = vunpack.c.l.b16 %v2149
      %v2221 = vpack.c.b16 %v2218, %v2217
      %v2222 = vpack.c.b16 %v2220, %v2219
      %v2226 = vsel %vm1029, %v2167, 0
      %v2229 = vsel %vm1029, %v2176, 0
      %v2232 = vsel %vm1029, %v2185, 0
      %v2235 = vsel %vm1029, %v2194, 0
      %v2238 = vsel %vm1029, %v2203, 0
      %v2241 = vsel %vm1029, %v2212, 0
      %2243 = vmatprep.subr.bf16.mxu0 0
      %2244 = vmatpush1.bf16.msra.mxu0 %v2221
      %2245 = vmatprep.subr.bf16.mxu0 0
      %2246 = vmatpush1.bf16.msra.mxu0 %v2222
      %2247 = vmatprep.subr.bf16.mxu0 0
      %2248 = vmatpush1.bf16.msra.mxu0 0
      %2249 = vmatprep.subr.bf16.mxu0 0
      %2250 = vmatpush1.bf16.msra.mxu0 0
      %2251 = vmatprep.subr.bf16.mxu0 0
      %2252 = vmatpush1.bf16.msra.mxu0 0
      %2253 = vmatprep.subr.bf16.mxu0 0
      %2254 = vmatpush1.bf16.msra.mxu0 0
      %2255 = vmatprep.subr.bf16.mxu0 0
      %2256 = vmatpush1.bf16.msra.mxu0 0
      %2257 = vmatprep.subr.bf16.mxu0 0
      %2258 = vmatpush1.bf16.msra.mxu0 0
      %2259 = vmatprep.subr.bf16.mxu0 0
      %2260 = vmatpush1.bf16.msra.mxu0 0
      %2261 = vmatprep.subr.bf16.mxu0 0
      %2262 = vmatpush1.bf16.msra.mxu0 0
      %2263 = vmatprep.subr.bf16.mxu0 0
      %2264 = vmatpush1.bf16.msra.mxu0 0
      %2265 = vmatprep.subr.bf16.mxu0 0
      %2266 = vmatpush1.bf16.msra.mxu0 0
      %2267 = vmatprep.subr.bf16.mxu0 0
      %2268 = vmatpush1.bf16.msra.mxu0 0
      %2269 = vmatprep.subr.bf16.mxu0 0
      %2270 = vmatpush1.bf16.msra.mxu0 0
      %2271 = vmatprep.subr.bf16.mxu0 0
      %2272 = vmatpush1.bf16.msra.mxu0 0
      %2273 = vmatprep.subr.bf16.mxu0 0
      %2274 = vmatpush1.bf16.msra.mxu0 0
      %2275 = vmatprep.mubr.bf16.mxu0 0
      %2276 = vmatmul.mubr.bf16.gmra.mrb[0].mxu0 %v2226
      %v2277 = vpop.f32.mrb[0].mxu0
      %v2278 = vadd.f32 0.0, %v2277
      %v2279 = vpop.f32.mrb[0].mxu0
      %v2280 = vpop.f32.mrb[0].mxu0
      %v2281 = vadd.f32 0.0, %v2280
      %v2282 = vpop.f32.mrb[0].mxu0
      %2283 = vmatprep.mubr.bf16.mxu0 0
      %2284 = vmatmul.mubr.bf16.gmra.mrb[0].mxu0 %v2229
      %v2285 = vpop.f32.mrb[0].mxu0
      %v2286 = vadd.f32 0.0, %v2285
      %v2287 = vpop.f32.mrb[0].mxu0
      %v2288 = vpop.f32.mrb[0].mxu0
      %v2289 = vadd.f32 0.0, %v2288
      %v2290 = vpop.f32.mrb[0].mxu0
      %2291 = vmatprep.mubr.bf16.mxu0 0
      %2292 = vmatmul.mubr.bf16.gmra.mrb[0].mxu0 %v2232
      %v2293 = vpop.f32.mrb[0].mxu0
      %v2294 = vadd.f32 0.0, %v2293
      %v2295 = vpop.f32.mrb[0].mxu0
      %v2296 = vpop.f32.mrb[0].mxu0
      %v2297 = vadd.f32 0.0, %v2296
      %v2298 = vpop.f32.mrb[0].mxu0
      %2299 = vmatprep.mubr.bf16.mxu0 0
      %2300 = vmatmul.mubr.bf16.gmra.mrb[0].mxu0 %v2235
      %v2301 = vpop.f32.mrb[0].mxu0
      %v2302 = vadd.f32 0.0, %v2301
      %v2303 = vpop.f32.mrb[0].mxu0
      %v2304 = vpop.f32.mrb[0].mxu0
      %v2305 = vadd.f32 0.0, %v2304
      %v2306 = vpop.f32.mrb[0].mxu0
      %2307 = vmatprep.mubr.bf16.mxu0 0
      %2308 = vmatmul.mubr.bf16.gmra.mrb[0].mxu0 %v2238
      %v2309 = vpop.f32.mrb[0].mxu0
      %v2310 = vadd.f32 0.0, %v2309
      %v2311 = vpop.f32.mrb[0].mxu0
      %v2312 = vpop.f32.mrb[0].mxu0
      %v2313 = vadd.f32 0.0, %v2312
      %v2314 = vpop.f32.mrb[0].mxu0
      %2315 = vmatprep.mubr.bf16.mxu0 0
      %2316 = vmatmul.mubr.bf16.gmra.mrb[0].mxu0 %v2241
      %v2317 = vpop.f32.mrb[0].mxu0
      %v2318 = vadd.f32 0.0, %v2317
      %v2319 = vpop.f32.mrb[0].mxu0
      %v2320 = vpop.f32.mrb[0].mxu0
      %v2321 = vadd.f32 0.0, %v2320
      %v2322 = vpop.f32.mrb[0].mxu0
      %2323 = vdwg.mxu0
      %v2324 = vld [vmem:[#allocation3] sm:$0xff]
      %v2325 = vld [vmem:[#allocation3 + $0x8] sm:$0xff]
      %v2326 = vld [vmem:[#allocation3 + $0x10] sm:$0xff]
      %v2327 = vld [vmem:[#allocation3 + $0x18] sm:$0xff]
      %v2328 = vld [vmem:[#allocation3 + $0x20] sm:$0xff]
      %v2329 = vld [vmem:[#allocation3 + $0x28] sm:$0xff]
      %v2330 = vld [vmem:[#allocation3 + $0x30] sm:$0xff]
      %v2331 = vld [vmem:[#allocation3 + $0x38] sm:$0xff]
      %v2332 = vld [vmem:[#allocation3 + $0x40] sm:$0xff]
      %v2333 = vld [vmem:[#allocation3 + $0x48] sm:$0xff]
      %v2334 = vld [vmem:[#allocation3 + $0x50] sm:$0xff]
      %v2335 = vld [vmem:[#allocation3 + $0x58] sm:$0x1]
      %v2336 = vadd.f32 %v2324, %v2278
      %v2337 = vadd.f32 %v2325, %v2281
      %v2338 = vadd.f32 %v2326, %v2286
      %v2339 = vadd.f32 %v2327, %v2289
      %v2340 = vadd.f32 %v2328, %v2294
      %v2341 = vadd.f32 %v2329, %v2297
      %v2342 = vadd.f32 %v2330, %v2302
      %v2343 = vadd.f32 %v2331, %v2305
      %v2344 = vadd.f32 %v2332, %v2310
      %v2345 = vadd.f32 %v2333, %v2313
      %v2346 = vadd.f32 %v2334, %v2318
      %v2347 = vadd.f32 %v2335, %v2321
      %2348 = vst.msk [vmem:[#allocation3] sm:$0xff] %vm1176, %v2336
      %2349 = vst.msk [vmem:[#allocation3 + $0x8] sm:$0xff] %vm1176, %v2337
      %2350 = vst.msk [vmem:[#allocation3 + $0x10] sm:$0xff] %vm1176, %v2338
      %2351 = vst.msk [vmem:[#allocation3 + $0x18] sm:$0xff] %vm1176, %v2339
      %2352 = vst.msk [vmem:[#allocation3 + $0x20] sm:$0xff] %vm1176, %v2340
      %2353 = vst.msk [vmem:[#allocation3 + $0x28] sm:$0xff] %vm1176, %v2341
      %2354 = vst.msk [vmem:[#allocation3 + $0x30] sm:$0xff] %vm1176, %v2342
      %2355 = vst.msk [vmem:[#allocation3 + $0x38] sm:$0xff] %vm1176, %v2343
      %2356 = vst.msk [vmem:[#allocation3 + $0x40] sm:$0xff] %vm1176, %v2344
      %2357 = vst.msk [vmem:[#allocation3 + $0x48] sm:$0xff] %vm1176, %v2345
      %2358 = vst.msk [vmem:[#allocation3 + $0x50] sm:$0xff] %vm1176, %v2346
      %2359 = vst.msk [vmem:[#allocation3 + $0x58] sm:$0x1] %vm1188, %v2347
      %v2360 = vld [vmem:[#allocation2 + $0x90] sm:$0xc0]
      %v2361 = vld [vmem:[#allocation2 + $0x98] sm:$0xff]
      %v2362 = vld [vmem:[#allocation2 + $0xa0] sm:$0xff]
      %v2363 = vld [vmem:[#allocation2 + $0xa8] sm:$0xff]
      %v2364 = vld [vmem:[#allocation2 + $0xb0] sm:$0xff]
      %v2365 = vld [vmem:[#allocation2 + $0xb8] sm:$0xff]
      %v2366 = vld [vmem:[#allocation2 + $0xc0] sm:$0x7]
      %v2367 = vld [vmem:[%s3 + $0x70] sm:$0xf]
      %v2368 = vld [vmem:[%s3 + $0x74] sm:$0xf]
      %v2369 = vld [vmem:[%s3 + $0x78] sm:$0xf]
      %v2370 = vld [vmem:[%s3 + $0x7c] sm:$0xf]
      %vm2371 = vsmask.f32 1280
      %v2373 = vshrl.u32 %v2360, 16
      %v2375 = vrot.slane %v2373, 6
      %v2376 = vshll.u32 %v2360, 16
      %v2378 = vrot.slane %v2376, 7
      %v2379 = vor.u32 %v2375, %v2378
      %v2381 = vshrl.u32 %v2361, 16
      %v2383 = vrot.slane %v2381, 6
      %v2384 = vshll.u32 %v2361, 16
      %v2386 = vrot.slane %v2384, 7
      %v2387 = vor.u32 %v2383, %v2386
      %v2388 = vsel %vm2371, %v2379, %v2387
      %v2390 = vshrl.u32 %v2362, 16
      %v2392 = vrot.slane %v2390, 6
      %v2393 = vshll.u32 %v2362, 16
      %v2395 = vrot.slane %v2393, 7
      %v2396 = vor.u32 %v2392, %v2395
      %v2397 = vsel %vm2371, %v2387, %v2396
      %v2399 = vshrl.u32 %v2363, 16
      %v2401 = vrot.slane %v2399, 6
      %v2402 = vshll.u32 %v2363, 16
      %v2404 = vrot.slane %v2402, 7
      %v2405 = vor.u32 %v2401, %v2404
      %v2406 = vsel %vm2371, %v2396, %v2405
      %v2408 = vshrl.u32 %v2364, 16
      %v2410 = vrot.slane %v2408, 6
      %v2411 = vshll.u32 %v2364, 16
      %v2413 = vrot.slane %v2411, 7
      %v2414 = vor.u32 %v2410, %v2413
      %v2415 = vsel %vm2371, %v2405, %v2414
      %v2417 = vshrl.u32 %v2365, 16
      %v2419 = vrot.slane %v2417, 6
      %v2420 = vshll.u32 %v2365, 16
      %v2422 = vrot.slane %v2420, 7
      %v2423 = vor.u32 %v2419, %v2422
      %v2424 = vsel %vm2371, %v2414, %v2423
      %v2426 = vshrl.u32 %v2366, 16
      %v2428 = vrot.slane %v2426, 6
      %v2429 = vshll.u32 %v2366, 16
      %v2431 = vrot.slane %v2429, 7
      %v2432 = vor.u32 %v2428, %v2431
      %v2433 = vsel %vm2371, %v2423, %v2432
      %v2438 = vunpack.c.l.b16 %v2367
      %v2439 = vunpack.c.l.b16 %v2368
      %v2440 = vunpack.c.l.b16 %v2369
      %v2441 = vunpack.c.l.b16 %v2370
      %v2442 = vpack.c.b16 %v2439, %v2438
      %v2443 = vpack.c.b16 %v2441, %v2440
      %v2447 = vsel %vm1029, %v2388, 0
      %v2450 = vsel %vm1029, %v2397, 0
      %v2453 = vsel %vm1029, %v2406, 0
      %v2456 = vsel %vm1029, %v2415, 0
      %v2459 = vsel %vm1029, %v2424, 0
      %v2462 = vsel %vm1029, %v2433, 0
      %2464 = vmatprep.subr.bf16.mxu0 0
      %2465 = vmatpush1.bf16.msra.mxu0 %v2442
      %2466 = vmatprep.subr.bf16.mxu0 0
      %2467 = vmatpush1.bf16.msra.mxu0 %v2443
      %2468 = vmatprep.subr.bf16.mxu0 0
      %2469 = vmatpush1.bf16.msra.mxu0 0
      %2470 = vmatprep.subr.bf16.mxu0 0
      %2471 = vmatpush1.bf16.msra.mxu0 0
      %2472 = vmatprep.subr.bf16.mxu0 0
      %2473 = vmatpush1.bf16.msra.mxu0 0
      %2474 = vmatprep.subr.bf16.mxu0 0
      %2475 = vmatpush1.bf16.msra.mxu0 0
      %2476 = vmatprep.subr.bf16.mxu0 0
      %2477 = vmatpush1.bf16.msra.mxu0 0
      %2478 = vmatprep.subr.bf16.mxu0 0
      %2479 = vmatpush1.bf16.msra.mxu0 0
      %2480 = vmatprep.subr.bf16.mxu0 0
      %2481 = vmatpush1.bf16.msra.mxu0 0
      %2482 = vmatprep.subr.bf16.mxu0 0
      %2483 = vmatpush1.bf16.msra.mxu0 0
      %2484 = vmatprep.subr.bf16.mxu0 0
      %2485 = vmatpush1.bf16.msra.mxu0 0
      %2486 = vmatprep.subr.bf16.mxu0 0
      %2487 = vmatpush1.bf16.msra.mxu0 0
      %2488 = vmatprep.subr.bf16.mxu0 0
      %2489 = vmatpush1.bf16.msra.mxu0 0
      %2490 = vmatprep.subr.bf16.mxu0 0
      %2491 = vmatpush1.bf16.msra.mxu0 0
      %2492 = vmatprep.subr.bf16.mxu0 0
      %2493 = vmatpush1.bf16.msra.mxu0 0
      %2494 = vmatprep.subr.bf16.mxu0 0
      %2495 = vmatpush1.bf16.msra.mxu0 0
      %2496 = vmatprep.mubr.bf16.mxu0 0
      %2497 = vmatmul.mubr.bf16.gmra.mrb[0].mxu0 %v2447
      %v2498 = vpop.f32.mrb[0].mxu0
      %v2499 = vadd.f32 0.0, %v2498
      %v2500 = vpop.f32.mrb[0].mxu0
      %v2501 = vpop.f32.mrb[0].mxu0
      %v2502 = vadd.f32 0.0, %v2501
      %v2503 = vpop.f32.mrb[0].mxu0
      %2504 = vmatprep.mubr.bf16.mxu0 0
      %2505 = vmatmul.mubr.bf16.gmra.mrb[0].mxu0 %v2450
      %v2506 = vpop.f32.mrb[0].mxu0
      %v2507 = vadd.f32 0.0, %v2506
      %v2508 = vpop.f32.mrb[0].mxu0
      %v2509 = vpop.f32.mrb[0].mxu0
      %v2510 = vadd.f32 0.0, %v2509
      %v2511 = vpop.f32.mrb[0].mxu0
      %2512 = vmatprep.mubr.bf16.mxu0 0
      %2513 = vmatmul.mubr.bf16.gmra.mrb[0].mxu0 %v2453
      %v2514 = vpop.f32.mrb[0].mxu0
      %v2515 = vadd.f32 0.0, %v2514
      %v2516 = vpop.f32.mrb[0].mxu0
      %v2517 = vpop.f32.mrb[0].mxu0
      %v2518 = vadd.f32 0.0, %v2517
      %v2519 = vpop.f32.mrb[0].mxu0
      %2520 = vmatprep.mubr.bf16.mxu0 0
      %2521 = vmatmul.mubr.bf16.gmra.mrb[0].mxu0 %v2456
      %v2522 = vpop.f32.mrb[0].mxu0
      %v2523 = vadd.f32 0.0, %v2522
      %v2524 = vpop.f32.mrb[0].mxu0
      %v2525 = vpop.f32.mrb[0].mxu0
      %v2526 = vadd.f32 0.0, %v2525
      %v2527 = vpop.f32.mrb[0].mxu0
      %2528 = vmatprep.mubr.bf16.mxu0 0
      %2529 = vmatmul.mubr.bf16.gmra.mrb[0].mxu0 %v2459
      %v2530 = vpop.f32.mrb[0].mxu0
      %v2531 = vadd.f32 0.0, %v2530
      %v2532 = vpop.f32.mrb[0].mxu0
      %v2533 = vpop.f32.mrb[0].mxu0
      %v2534 = vadd.f32 0.0, %v2533
      %v2535 = vpop.f32.mrb[0].mxu0
      %2536 = vmatprep.mubr.bf16.mxu0 0
      %2537 = vmatmul.mubr.bf16.gmra.mrb[0].mxu0 %v2462
      %v2538 = vpop.f32.mrb[0].mxu0
      %v2539 = vadd.f32 0.0, %v2538
      %v2540 = vpop.f32.mrb[0].mxu0
      %v2541 = vpop.f32.mrb[0].mxu0
      %v2542 = vadd.f32 0.0, %v2541
      %v2543 = vpop.f32.mrb[0].mxu0
      %2544 = vdwg.mxu0
      %v2545 = vld [vmem:[#allocation3] sm:$0xff]
      %v2546 = vld [vmem:[#allocation3 + $0x8] sm:$0xff]
      %v2547 = vld [vmem:[#allocation3 + $0x10] sm:$0xff]
      %v2548 = vld [vmem:[#allocation3 + $0x18] sm:$0xff]
      %v2549 = vld [vmem:[#allocation3 + $0x20] sm:$0xff]
      %v2550 = vld [vmem:[#allocation3 + $0x28] sm:$0xff]
      %v2551 = vld [vmem:[#allocation3 + $0x30] sm:$0xff]
      %v2552 = vld [vmem:[#allocation3 + $0x38] sm:$0xff]
      %v2553 = vld [vmem:[#allocation3 + $0x40] sm:$0xff]
      %v2554 = vld [vmem:[#allocation3 + $0x48] sm:$0xff]
      %v2555 = vld [vmem:[#allocation3 + $0x50] sm:$0xff]
      %v2556 = vld [vmem:[#allocation3 + $0x58] sm:$0x1]
      %v2557 = vadd.f32 %v2545, %v2499
      %v2558 = vadd.f32 %v2546, %v2502
      %v2559 = vadd.f32 %v2547, %v2507
      %v2560 = vadd.f32 %v2548, %v2510
      %v2561 = vadd.f32 %v2549, %v2515
      %v2562 = vadd.f32 %v2550, %v2518
      %v2563 = vadd.f32 %v2551, %v2523
      %v2564 = vadd.f32 %v2552, %v2526
      %v2565 = vadd.f32 %v2553, %v2531
      %v2566 = vadd.f32 %v2554, %v2534
      %v2567 = vadd.f32 %v2555, %v2539
      %v2568 = vadd.f32 %v2556, %v2542
      %2569 = vst.msk [vmem:[#allocation3] sm:$0xff] %vm1176, %v2557
      %2570 = vst.msk [vmem:[#allocation3 + $0x8] sm:$0xff] %vm1176, %v2558
      %2571 = vst.msk [vmem:[#allocation3 + $0x10] sm:$0xff] %vm1176, %v2559
      %2572 = vst.msk [vmem:[#allocation3 + $0x18] sm:$0xff] %vm1176, %v2560
      %2573 = vst.msk [vmem:[#allocation3 + $0x20] sm:$0xff] %vm1176, %v2561
      %2574 = vst.msk [vmem:[#allocation3 + $0x28] sm:$0xff] %vm1176, %v2562
      %2575 = vst.msk [vmem:[#allocation3 + $0x30] sm:$0xff] %vm1176, %v2563
      %2576 = vst.msk [vmem:[#allocation3 + $0x38] sm:$0xff] %vm1176, %v2564
      %2577 = vst.msk [vmem:[#allocation3 + $0x40] sm:$0xff] %vm1176, %v2565
      %2578 = vst.msk [vmem:[#allocation3 + $0x48] sm:$0xff] %vm1176, %v2566
      %2579 = vst.msk [vmem:[#allocation3 + $0x50] sm:$0xff] %vm1176, %v2567
      %2580 = vst.msk [vmem:[#allocation3 + $0x58] sm:$0x1] %vm1188, %v2568
      %v2581 = vld [vmem:[#allocation2] sm:$0xe0]
      %v2582 = vld [vmem:[#allocation2 + $0x8] sm:$0xff]
      %v2583 = vld [vmem:[#allocation2 + $0x10] sm:$0xff]
      %v2584 = vld [vmem:[#allocation2 + $0x18] sm:$0xff]
      %v2585 = vld [vmem:[#allocation2 + $0x20] sm:$0xff]
      %v2586 = vld [vmem:[#allocation2 + $0x28] sm:$0xff]
      %v2587 = vld [vmem:[#allocation2 + $0x30] sm:$0x3]
      %v2588 = vld [vmem:[%s3 + $0x80] sm:$0xf]
      %v2589 = vld [vmem:[%s3 + $0x84] sm:$0xf]
      %v2590 = vld [vmem:[%s3 + $0x88] sm:$0xf]
      %v2591 = vld [vmem:[%s3 + $0x8c] sm:$0xf]
      %vm2599 = vcmask 1042432
      %v2600 = vrot.slane %v2581, 5
      %v2601 = vrot.slane %v2582, 5
      %v2602 = vsel %vm2599, %v2600, %v2601
      %v2603 = vrot.slane %v2583, 5
      %v2604 = vsel %vm2599, %v2601, %v2603
      %v2605 = vrot.slane %v2584, 5
      %v2606 = vsel %vm2599, %v2603, %v2605
      %v2607 = vrot.slane %v2585, 5
      %v2608 = vsel %vm2599, %v2605, %v2607
      %v2609 = vrot.slane %v2586, 5
      %v2610 = vsel %vm2599, %v2607, %v2609
      %v2611 = vrot.slane %v2587, 5
      %v2612 = vsel %vm2599, %v2609, %v2611
      %v2617 = vunpack.c.l.b16 %v2588
      %v2618 = vunpack.c.l.b16 %v2589
      %v2619 = vunpack.c.l.b16 %v2590
      %v2620 = vunpack.c.l.b16 %v2591
      %v2621 = vpack.c.b16 %v2618, %v2617
      %v2622 = vpack.c.b16 %v2620, %v2619
      %v2626 = vsel %vm1029, %v2602, 0
      %v2629 = vsel %vm1029, %v2604, 0
      %v2632 = vsel %vm1029, %v2606, 0
      %v2635 = vsel %vm1029, %v2608, 0
      %v2638 = vsel %vm1029, %v2610, 0
      %v2641 = vsel %vm1029, %v2612, 0
      %2643 = vmatprep.subr.bf16.mxu0 0
      %2644 = vmatpush1.bf16.msra.mxu0 %v2621
      %2645 = vmatprep.subr.bf16.mxu0 0
      %2646 = vmatpush1.bf16.msra.mxu0 %v2622
      %2647 = vmatprep.subr.bf16.mxu0 0
      %2648 = vmatpush1.bf16.msra.mxu0 0
      %2649 = vmatprep.subr.bf16.mxu0 0
      %2650 = vmatpush1.bf16.msra.mxu0 0
      %2651 = vmatprep.subr.bf16.mxu0 0
      %2652 = vmatpush1.bf16.msra.mxu0 0
      %2653 = vmatprep.subr.bf16.mxu0 0
      %2654 = vmatpush1.bf16.msra.mxu0 0
      %2655 = vmatprep.subr.bf16.mxu0 0
      %2656 = vmatpush1.bf16.msra.mxu0 0
      %2657 = vmatprep.subr.bf16.mxu0 0
      %2658 = vmatpush1.bf16.msra.mxu0 0
      %2659 = vmatprep.subr.bf16.mxu0 0
      %2660 = vmatpush1.bf16.msra.mxu0 0
      %2661 = vmatprep.subr.bf16.mxu0 0
      %2662 = vmatpush1.bf16.msra.mxu0 0
      %2663 = vmatprep.subr.bf16.mxu0 0
      %2664 = vmatpush1.bf16.msra.mxu0 0
      %2665 = vmatprep.subr.bf16.mxu0 0
      %2666 = vmatpush1.bf16.msra.mxu0 0
      %2667 = vmatprep.subr.bf16.mxu0 0
      %2668 = vmatpush1.bf16.msra.mxu0 0
      %2669 = vmatprep.subr.bf16.mxu0 0
      %2670 = vmatpush1.bf16.msra.mxu0 0
      %2671 = vmatprep.subr.bf16.mxu0 0
      %2672 = vmatpush1.bf16.msra.mxu0 0
      %2673 = vmatprep.subr.bf16.mxu0 0
      %2674 = vmatpush1.bf16.msra.mxu0 0
      %2675 = vmatprep.mubr.bf16.mxu0 0
      %2676 = vmatmul.mubr.bf16.gmra.mrb[0].mxu0 %v2626
      %v2677 = vpop.f32.mrb[0].mxu0
      %v2678 = vadd.f32 0.0, %v2677
      %v2679 = vpop.f32.mrb[0].mxu0
      %v2680 = vpop.f32.mrb[0].mxu0
      %v2681 = vadd.f32 0.0, %v2680
      %v2682 = vpop.f32.mrb[0].mxu0
      %2683 = vmatprep.mubr.bf16.mxu0 0
      %2684 = vmatmul.mubr.bf16.gmra.mrb[0].mxu0 %v2629
      %v2685 = vpop.f32.mrb[0].mxu0
      %v2686 = vadd.f32 0.0, %v2685
      %v2687 = vpop.f32.mrb[0].mxu0
      %v2688 = vpop.f32.mrb[0].mxu0
      %v2689 = vadd.f32 0.0, %v2688
      %v2690 = vpop.f32.mrb[0].mxu0
      %2691 = vmatprep.mubr.bf16.mxu0 0
      %2692 = vmatmul.mubr.bf16.gmra.mrb[0].mxu0 %v2632
      %v2693 = vpop.f32.mrb[0].mxu0
      %v2694 = vadd.f32 0.0, %v2693
      %v2695 = vpop.f32.mrb[0].mxu0
      %v2696 = vpop.f32.mrb[0].mxu0
      %v2697 = vadd.f32 0.0, %v2696
      %v2698 = vpop.f32.mrb[0].mxu0
      %2699 = vmatprep.mubr.bf16.mxu0 0
      %2700 = vmatmul.mubr.bf16.gmra.mrb[0].mxu0 %v2635
      %v2701 = vpop.f32.mrb[0].mxu0
      %v2702 = vadd.f32 0.0, %v2701
      %v2703 = vpop.f32.mrb[0].mxu0
      %v2704 = vpop.f32.mrb[0].mxu0
      %v2705 = vadd.f32 0.0, %v2704
      %v2706 = vpop.f32.mrb[0].mxu0
      %2707 = vmatprep.mubr.bf16.mxu0 0
      %2708 = vmatmul.mubr.bf16.gmra.mrb[0].mxu0 %v2638
      %v2709 = vpop.f32.mrb[0].mxu0
      %v2710 = vadd.f32 0.0, %v2709
      %v2711 = vpop.f32.mrb[0].mxu0
      %v2712 = vpop.f32.mrb[0].mxu0
      %v2713 = vadd.f32 0.0, %v2712
      %v2714 = vpop.f32.mrb[0].mxu0
      %2715 = vmatprep.mubr.bf16.mxu0 0
      %2716 = vmatmul.mubr.bf16.gmra.mrb[0].mxu0 %v2641
      %v2717 = vpop.f32.mrb[0].mxu0
      %v2718 = vadd.f32 0.0, %v2717
      %v2719 = vpop.f32.mrb[0].mxu0
      %v2720 = vpop.f32.mrb[0].mxu0
      %v2721 = vadd.f32 0.0, %v2720
      %v2722 = vpop.f32.mrb[0].mxu0
      %2723 = vdwg.mxu0
      %v2724 = vld [vmem:[#allocation3] sm:$0xff]
      %v2725 = vld [vmem:[#allocation3 + $0x8] sm:$0xff]
      %v2726 = vld [vmem:[#allocation3 + $0x10] sm:$0xff]
      %v2727 = vld [vmem:[#allocation3 + $0x18] sm:$0xff]
      %v2728 = vld [vmem:[#allocation3 + $0x20] sm:$0xff]
      %v2729 = vld [vmem:[#allocation3 + $0x28] sm:$0xff]
      %v2730 = vld [vmem:[#allocation3 + $0x30] sm:$0xff]
      %v2731 = vld [vmem:[#allocation3 + $0x38] sm:$0xff]
      %v2732 = vld [vmem:[#allocation3 + $0x40] sm:$0xff]
      %v2733 = vld [vmem:[#allocation3 + $0x48] sm:$0xff]
      %v2734 = vld [vmem:[#allocation3 + $0x50] sm:$0xff]
      %v2735 = vld [vmem:[#allocation3 + $0x58] sm:$0x1]
      %v2736 = vadd.f32 %v2724, %v2678
      %v2737 = vadd.f32 %v2725, %v2681
      %v2738 = vadd.f32 %v2726, %v2686
      %v2739 = vadd.f32 %v2727, %v2689
      %v2740 = vadd.f32 %v2728, %v2694
      %v2741 = vadd.f32 %v2729, %v2697
      %v2742 = vadd.f32 %v2730, %v2702
      %v2743 = vadd.f32 %v2731, %v2705
      %v2744 = vadd.f32 %v2732, %v2710
      %v2745 = vadd.f32 %v2733, %v2713
      %v2746 = vadd.f32 %v2734, %v2718
      %v2747 = vadd.f32 %v2735, %v2721
      %2748 = vst.msk [vmem:[#allocation3] sm:$0xff] %vm1176, %v2736
      %2749 = vst.msk [vmem:[#allocation3 + $0x8] sm:$0xff] %vm1176, %v2737
      %2750 = vst.msk [vmem:[#allocation3 + $0x10] sm:$0xff] %vm1176, %v2738
      %2751 = vst.msk [vmem:[#allocation3 + $0x18] sm:$0xff] %vm1176, %v2739
      %2752 = vst.msk [vmem:[#allocation3 + $0x20] sm:$0xff] %vm1176, %v2740
      %2753 = vst.msk [vmem:[#allocation3 + $0x28] sm:$0xff] %vm1176, %v2741
      %2754 = vst.msk [vmem:[#allocation3 + $0x30] sm:$0xff] %vm1176, %v2742
      %2755 = vst.msk [vmem:[#allocation3 + $0x38] sm:$0xff] %vm1176, %v2743
      %2756 = vst.msk [vmem:[#allocation3 + $0x40] sm:$0xff] %vm1176, %v2744
      %2757 = vst.msk [vmem:[#allocation3 + $0x48] sm:$0xff] %vm1176, %v2745
      %2758 = vst.msk [vmem:[#allocation3 + $0x50] sm:$0xff] %vm1176, %v2746
      %2759 = vst.msk [vmem:[#allocation3 + $0x58] sm:$0x1] %vm1188, %v2747
      %v2760 = vld [vmem:[#allocation2 + $0x30] sm:$0x80]
      %v2761 = vld [vmem:[#allocation2 + $0x38] sm:$0xff]
      %v2762 = vld [vmem:[#allocation2 + $0x40] sm:$0xff]
      %v2763 = vld [vmem:[#allocation2 + $0x48] sm:$0xff]
      %v2764 = vld [vmem:[#allocation2 + $0x50] sm:$0xff]
      %v2765 = vld [vmem:[#allocation2 + $0x58] sm:$0xff]
      %v2766 = vld [vmem:[#allocation2 + $0x60] sm:$0xf]
      %v2767 = vld [vmem:[%s3 + $0x90] sm:$0xf]
      %v2768 = vld [vmem:[%s3 + $0x94] sm:$0xf]
      %v2769 = vld [vmem:[%s3 + $0x98] sm:$0xf]
      %v2770 = vld [vmem:[%s3 + $0x9c] sm:$0xf]
      %vm2778 = vcmask 1040384
      %v2779 = vrot.slane %v2760, 7
      %v2780 = vrot.slane %v2761, 7
      %v2781 = vsel %vm2778, %v2779, %v2780
      %v2782 = vrot.slane %v2762, 7
      %v2783 = vsel %vm2778, %v2780, %v2782
      %v2784 = vrot.slane %v2763, 7
      %v2785 = vsel %vm2778, %v2782, %v2784
      %v2786 = vrot.slane %v2764, 7
      %v2787 = vsel %vm2778, %v2784, %v2786
      %v2788 = vrot.slane %v2765, 7
      %v2789 = vsel %vm2778, %v2786, %v2788
      %v2790 = vrot.slane %v2766, 7
      %v2791 = vsel %vm2778, %v2788, %v2790
      %v2796 = vunpack.c.l.b16 %v2767
      %v2797 = vunpack.c.l.b16 %v2768
      %v2798 = vunpack.c.l.b16 %v2769
      %v2799 = vunpack.c.l.b16 %v2770
      %v2800 = vpack.c.b16 %v2797, %v2796
      %v2801 = vpack.c.b16 %v2799, %v2798
      %v2805 = vsel %vm1029, %v2781, 0
      %v2808 = vsel %vm1029, %v2783, 0
      %v2811 = vsel %vm1029, %v2785, 0
      %v2814 = vsel %vm1029, %v2787, 0
      %v2817 = vsel %vm1029, %v2789, 0
      %v2820 = vsel %vm1029, %v2791, 0
      %2822 = vmatprep.subr.bf16.mxu0 0
      %2823 = vmatpush1.bf16.msra.mxu0 %v2800
      %2824 = vmatprep.subr.bf16.mxu0 0
      %2825 = vmatpush1.bf16.msra.mxu0 %v2801
      %2826 = vmatprep.subr.bf16.mxu0 0
      %2827 = vmatpush1.bf16.msra.mxu0 0
      %2828 = vmatprep.subr.bf16.mxu0 0
      %2829 = vmatpush1.bf16.msra.mxu0 0
      %2830 = vmatprep.subr.bf16.mxu0 0
      %2831 = vmatpush1.bf16.msra.mxu0 0
      %2832 = vmatprep.subr.bf16.mxu0 0
      %2833 = vmatpush1.bf16.msra.mxu0 0
      %2834 = vmatprep.subr.bf16.mxu0 0
      %2835 = vmatpush1.bf16.msra.mxu0 0
      %2836 = vmatprep.subr.bf16.mxu0 0
      %2837 = vmatpush1.bf16.msra.mxu0 0
      %2838 = vmatprep.subr.bf16.mxu0 0
      %2839 = vmatpush1.bf16.msra.mxu0 0
      %2840 = vmatprep.subr.bf16.mxu0 0
      %2841 = vmatpush1.bf16.msra.mxu0 0
      %2842 = vmatprep.subr.bf16.mxu0 0
      %2843 = vmatpush1.bf16.msra.mxu0 0
      %2844 = vmatprep.subr.bf16.mxu0 0
      %2845 = vmatpush1.bf16.msra.mxu0 0
      %2846 = vmatprep.subr.bf16.mxu0 0
      %2847 = vmatpush1.bf16.msra.mxu0 0
      %2848 = vmatprep.subr.bf16.mxu0 0
      %2849 = vmatpush1.bf16.msra.mxu0 0
      %2850 = vmatprep.subr.bf16.mxu0 0
      %2851 = vmatpush1.bf16.msra.mxu0 0
      %2852 = vmatprep.subr.bf16.mxu0 0
      %2853 = vmatpush1.bf16.msra.mxu0 0
      %2854 = vmatprep.mubr.bf16.mxu0 0
      %2855 = vmatmul.mubr.bf16.gmra.mrb[0].mxu0 %v2805
      %v2856 = vpop.f32.mrb[0].mxu0
      %v2857 = vadd.f32 0.0, %v2856
      %v2858 = vpop.f32.mrb[0].mxu0
      %v2859 = vpop.f32.mrb[0].mxu0
      %v2860 = vadd.f32 0.0, %v2859
      %v2861 = vpop.f32.mrb[0].mxu0
      %2862 = vmatprep.mubr.bf16.mxu0 0
      %2863 = vmatmul.mubr.bf16.gmra.mrb[0].mxu0 %v2808
      %v2864 = vpop.f32.mrb[0].mxu0
      %v2865 = vadd.f32 0.0, %v2864
      %v2866 = vpop.f32.mrb[0].mxu0
      %v2867 = vpop.f32.mrb[0].mxu0
      %v2868 = vadd.f32 0.0, %v2867
      %v2869 = vpop.f32.mrb[0].mxu0
      %2870 = vmatprep.mubr.bf16.mxu0 0
      %2871 = vmatmul.mubr.bf16.gmra.mrb[0].mxu0 %v2811
      %v2872 = vpop.f32.mrb[0].mxu0
      %v2873 = vadd.f32 0.0, %v2872
      %v2874 = vpop.f32.mrb[0].mxu0
      %v2875 = vpop.f32.mrb[0].mxu0
      %v2876 = vadd.f32 0.0, %v2875
      %v2877 = vpop.f32.mrb[0].mxu0
      %2878 = vmatprep.mubr.bf16.mxu0 0
      %2879 = vmatmul.mubr.bf16.gmra.mrb[0].mxu0 %v2814
      %v2880 = vpop.f32.mrb[0].mxu0
      %v2881 = vadd.f32 0.0, %v2880
      %v2882 = vpop.f32.mrb[0].mxu0
      %v2883 = vpop.f32.mrb[0].mxu0
      %v2884 = vadd.f32 0.0, %v2883
      %v2885 = vpop.f32.mrb[0].mxu0
      %2886 = vmatprep.mubr.bf16.mxu0 0
      %2887 = vmatmul.mubr.bf16.gmra.mrb[0].mxu0 %v2817
      %v2888 = vpop.f32.mrb[0].mxu0
      %v2889 = vadd.f32 0.0, %v2888
      %v2890 = vpop.f32.mrb[0].mxu0
      %v2891 = vpop.f32.mrb[0].mxu0
      %v2892 = vadd.f32 0.0, %v2891
      %v2893 = vpop.f32.mrb[0].mxu0
      %2894 = vmatprep.mubr.bf16.mxu0 0
      %2895 = vmatmul.mubr.bf16.gmra.mrb[0].mxu0 %v2820
      %v2896 = vpop.f32.mrb[0].mxu0
      %v2897 = vadd.f32 0.0, %v2896
      %v2898 = vpop.f32.mrb[0].mxu0
      %v2899 = vpop.f32.mrb[0].mxu0
      %v2900 = vadd.f32 0.0, %v2899
      %v2901 = vpop.f32.mrb[0].mxu0
      %2902 = vdwg.mxu0
      %v2903 = vld [vmem:[#allocation3] sm:$0xff]
      %v2904 = vld [vmem:[#allocation3 + $0x8] sm:$0xff]
      %v2905 = vld [vmem:[#allocation3 + $0x10] sm:$0xff]
      %v2906 = vld [vmem:[#allocation3 + $0x18] sm:$0xff]
      %v2907 = vld [vmem:[#allocation3 + $0x20] sm:$0xff]
      %v2908 = vld [vmem:[#allocation3 + $0x28] sm:$0xff]
      %v2909 = vld [vmem:[#allocation3 + $0x30] sm:$0xff]
      %v2910 = vld [vmem:[#allocation3 + $0x38] sm:$0xff]
      %v2911 = vld [vmem:[#allocation3 + $0x40] sm:$0xff]
      %v2912 = vld [vmem:[#allocation3 + $0x48] sm:$0xff]
      %v2913 = vld [vmem:[#allocation3 + $0x50] sm:$0xff]
      %v2914 = vld [vmem:[#allocation3 + $0x58] sm:$0x1]
      %v2915 = vadd.f32 %v2903, %v2857
      %v2916 = vadd.f32 %v2904, %v2860
      %v2917 = vadd.f32 %v2905, %v2865
      %v2918 = vadd.f32 %v2906, %v2868
      %v2919 = vadd.f32 %v2907, %v2873
      %v2920 = vadd.f32 %v2908, %v2876
      %v2921 = vadd.f32 %v2909, %v2881
      %v2922 = vadd.f32 %v2910, %v2884
      %v2923 = vadd.f32 %v2911, %v2889
      %v2924 = vadd.f32 %v2912, %v2892
      %v2925 = vadd.f32 %v2913, %v2897
      %v2926 = vadd.f32 %v2914, %v2900
      %2927 = vst.msk [vmem:[#allocation3] sm:$0xff] %vm1176, %v2915
      %2928 = vst.msk [vmem:[#allocation3 + $0x8] sm:$0xff] %vm1176, %v2916
      %2929 = vst.msk [vmem:[#allocation3 + $0x10] sm:$0xff] %vm1176, %v2917
      %2930 = vst.msk [vmem:[#allocation3 + $0x18] sm:$0xff] %vm1176, %v2918
      %2931 = vst.msk [vmem:[#allocation3 + $0x20] sm:$0xff] %vm1176, %v2919
      %2932 = vst.msk [vmem:[#allocation3 + $0x28] sm:$0xff] %vm1176, %v2920
      %2933 = vst.msk [vmem:[#allocation3 + $0x30] sm:$0xff] %vm1176, %v2921
      %2934 = vst.msk [vmem:[#allocation3 + $0x38] sm:$0xff] %vm1176, %v2922
      %2935 = vst.msk [vmem:[#allocation3 + $0x40] sm:$0xff] %vm1176, %v2923
      %2936 = vst.msk [vmem:[#allocation3 + $0x48] sm:$0xff] %vm1176, %v2924
      %2937 = vst.msk [vmem:[#allocation3 + $0x50] sm:$0xff] %vm1176, %v2925
      %2938 = vst.msk [vmem:[#allocation3 + $0x58] sm:$0x1] %vm1188, %v2926
      %v2939 = vld [vmem:[#allocation2] sm:$0xe0]
      %v2940 = vld [vmem:[#allocation2 + $0x8] sm:$0xff]
      %v2941 = vld [vmem:[#allocation2 + $0x10] sm:$0xff]
      %v2942 = vld [vmem:[#allocation2 + $0x18] sm:$0xff]
      %v2943 = vld [vmem:[#allocation2 + $0x20] sm:$0xff]
      %v2944 = vld [vmem:[#allocation2 + $0x28] sm:$0xff]
      %v2945 = vld [vmem:[#allocation2 + $0x30] sm:$0x3]
      %v2946 = vld [vmem:[%s3 + $0xa0] sm:$0xf]
      %v2947 = vld [vmem:[%s3 + $0xa4] sm:$0xf]
      %v2948 = vld [vmem:[%s3 + $0xa8] sm:$0xf]
      %v2949 = vld [vmem:[%s3 + $0xac] sm:$0xf]
      %vm2950 = vsmask.f32 2304
      %v2952 = vshrl.u32 %v2939, 16
      %v2954 = vrot.slane %v2952, 5
      %v2955 = vshll.u32 %v2939, 16
      %v2957 = vrot.slane %v2955, 6
      %v2958 = vor.u32 %v2954, %v2957
      %v2960 = vshrl.u32 %v2940, 16
      %v2962 = vrot.slane %v2960, 5
      %v2963 = vshll.u32 %v2940, 16
      %v2965 = vrot.slane %v2963, 6
      %v2966 = vor.u32 %v2962, %v2965
      %v2967 = vsel %vm2950, %v2958, %v2966
      %v2969 = vshrl.u32 %v2941, 16
      %v2971 = vrot.slane %v2969, 5
      %v2972 = vshll.u32 %v2941, 16
      %v2974 = vrot.slane %v2972, 6
      %v2975 = vor.u32 %v2971, %v2974
      %v2976 = vsel %vm2950, %v2966, %v2975
      %v2978 = vshrl.u32 %v2942, 16
      %v2980 = vrot.slane %v2978, 5
      %v2981 = vshll.u32 %v2942, 16
      %v2983 = vrot.slane %v2981, 6
      %v2984 = vor.u32 %v2980, %v2983
      %v2985 = vsel %vm2950, %v2975, %v2984
      %v2987 = vshrl.u32 %v2943, 16
      %v2989 = vrot.slane %v2987, 5
      %v2990 = vshll.u32 %v2943, 16
      %v2992 = vrot.slane %v2990, 6
      %v2993 = vor.u32 %v2989, %v2992
      %v2994 = vsel %vm2950, %v2984, %v2993
      %v2996 = vshrl.u32 %v2944, 16
      %v2998 = vrot.slane %v2996, 5
      %v2999 = vshll.u32 %v2944, 16
      %v3001 = vrot.slane %v2999, 6
      %v3002 = vor.u32 %v2998, %v3001
      %v3003 = vsel %vm2950, %v2993, %v3002
      %v3005 = vshrl.u32 %v2945, 16
      %v3007 = vrot.slane %v3005, 5
      %v3008 = vshll.u32 %v2945, 16
      %v3010 = vrot.slane %v3008, 6
      %v3011 = vor.u32 %v3007, %v3010
      %v3012 = vsel %vm2950, %v3002, %v3011
      %v3017 = vunpack.c.l.b16 %v2946
      %v3018 = vunpack.c.l.b16 %v2947
      %v3019 = vunpack.c.l.b16 %v2948
      %v3020 = vunpack.c.l.b16 %v2949
      %v3021 = vpack.c.b16 %v3018, %v3017
      %v3022 = vpack.c.b16 %v3020, %v3019
      %v3026 = vsel %vm1029, %v2967, 0
      %v3029 = vsel %vm1029, %v2976, 0
      %v3032 = vsel %vm1029, %v2985, 0
      %v3035 = vsel %vm1029, %v2994, 0
      %v3038 = vsel %vm1029, %v3003, 0
      %v3041 = vsel %vm1029, %v3012, 0
      %3043 = vmatprep.subr.bf16.mxu0 0
      %3044 = vmatpush1.bf16.msra.mxu0 %v3021
      %3045 = vmatprep.subr.bf16.mxu0 0
      %3046 = vmatpush1.bf16.msra.mxu0 %v3022
      %3047 = vmatprep.subr.bf16.mxu0 0
      %3048 = vmatpush1.bf16.msra.mxu0 0
      %3049 = vmatprep.subr.bf16.mxu0 0
      %3050 = vmatpush1.bf16.msra.mxu0 0
      %3051 = vmatprep.subr.bf16.mxu0 0
      %3052 = vmatpush1.bf16.msra.mxu0 0
      %3053 = vmatprep.subr.bf16.mxu0 0
      %3054 = vmatpush1.bf16.msra.mxu0 0
      %3055 = vmatprep.subr.bf16.mxu0 0
      %3056 = vmatpush1.bf16.msra.mxu0 0
      %3057 = vmatprep.subr.bf16.mxu0 0
      %3058 = vmatpush1.bf16.msra.mxu0 0
      %3059 = vmatprep.subr.bf16.mxu0 0
      %3060 = vmatpush1.bf16.msra.mxu0 0
      %3061 = vmatprep.subr.bf16.mxu0 0
      %3062 = vmatpush1.bf16.msra.mxu0 0
      %3063 = vmatprep.subr.bf16.mxu0 0
      %3064 = vmatpush1.bf16.msra.mxu0 0
      %3065 = vmatprep.subr.bf16.mxu0 0
      %3066 = vmatpush1.bf16.msra.mxu0 0
      %3067 = vmatprep.subr.bf16.mxu0 0
      %3068 = vmatpush1.bf16.msra.mxu0 0
      %3069 = vmatprep.subr.bf16.mxu0 0
      %3070 = vmatpush1.bf16.msra.mxu0 0
      %3071 = vmatprep.subr.bf16.mxu0 0
      %3072 = vmatpush1.bf16.msra.mxu0 0
      %3073 = vmatprep.subr.bf16.mxu0 0
      %3074 = vmatpush1.bf16.msra.mxu0 0
      %3075 = vmatprep.mubr.bf16.mxu0 0
      %3076 = vmatmul.mubr.bf16.gmra.mrb[0].mxu0 %v3026
      %v3077 = vpop.f32.mrb[0].mxu0
      %v3078 = vadd.f32 0.0, %v3077
      %v3079 = vpop.f32.mrb[0].mxu0
      %v3080 = vpop.f32.mrb[0].mxu0
      %v3081 = vadd.f32 0.0, %v3080
      %v3082 = vpop.f32.mrb[0].mxu0
      %3083 = vmatprep.mubr.bf16.mxu0 0
      %3084 = vmatmul.mubr.bf16.gmra.mrb[0].mxu0 %v3029
      %v3085 = vpop.f32.mrb[0].mxu0
      %v3086 = vadd.f32 0.0, %v3085
      %v3087 = vpop.f32.mrb[0].mxu0
      %v3088 = vpop.f32.mrb[0].mxu0
      %v3089 = vadd.f32 0.0, %v3088
      %v3090 = vpop.f32.mrb[0].mxu0
      %3091 = vmatprep.mubr.bf16.mxu0 0
      %3092 = vmatmul.mubr.bf16.gmra.mrb[0].mxu0 %v3032
      %v3093 = vpop.f32.mrb[0].mxu0
      %v3094 = vadd.f32 0.0, %v3093
      %v3095 = vpop.f32.mrb[0].mxu0
      %v3096 = vpop.f32.mrb[0].mxu0
      %v3097 = vadd.f32 0.0, %v3096
      %v3098 = vpop.f32.mrb[0].mxu0
      %3099 = vmatprep.mubr.bf16.mxu0 0
      %3100 = vmatmul.mubr.bf16.gmra.mrb[0].mxu0 %v3035
      %v3101 = vpop.f32.mrb[0].mxu0
      %v3102 = vadd.f32 0.0, %v3101
      %v3103 = vpop.f32.mrb[0].mxu0
      %v3104 = vpop.f32.mrb[0].mxu0
      %v3105 = vadd.f32 0.0, %v3104
      %v3106 = vpop.f32.mrb[0].mxu0
      %3107 = vmatprep.mubr.bf16.mxu0 0
      %3108 = vmatmul.mubr.bf16.gmra.mrb[0].mxu0 %v3038
      %v3109 = vpop.f32.mrb[0].mxu0
      %v3110 = vadd.f32 0.0, %v3109
      %v3111 = vpop.f32.mrb[0].mxu0
      %v3112 = vpop.f32.mrb[0].mxu0
      %v3113 = vadd.f32 0.0, %v3112
      %v3114 = vpop.f32.mrb[0].mxu0
      %3115 = vmatprep.mubr.bf16.mxu0 0
      %3116 = vmatmul.mubr.bf16.gmra.mrb[0].mxu0 %v3041
      %v3117 = vpop.f32.mrb[0].mxu0
      %v3118 = vadd.f32 0.0, %v3117
      %v3119 = vpop.f32.mrb[0].mxu0
      %v3120 = vpop.f32.mrb[0].mxu0
      %v3121 = vadd.f32 0.0, %v3120
      %v3122 = vpop.f32.mrb[0].mxu0
      %3123 = vdwg.mxu0
      %v3124 = vld [vmem:[#allocation3] sm:$0xff]
      %v3125 = vld [vmem:[#allocation3 + $0x8] sm:$0xff]
      %v3126 = vld [vmem:[#allocation3 + $0x10] sm:$0xff]
      %v3127 = vld [vmem:[#allocation3 + $0x18] sm:$0xff]
      %v3128 = vld [vmem:[#allocation3 + $0x20] sm:$0xff]
      %v3129 = vld [vmem:[#allocation3 + $0x28] sm:$0xff]
      %v3130 = vld [vmem:[#allocation3 + $0x30] sm:$0xff]
      %v3131 = vld [vmem:[#allocation3 + $0x38] sm:$0xff]
      %v3132 = vld [vmem:[#allocation3 + $0x40] sm:$0xff]
      %v3133 = vld [vmem:[#allocation3 + $0x48] sm:$0xff]
      %v3134 = vld [vmem:[#allocation3 + $0x50] sm:$0xff]
      %v3135 = vld [vmem:[#allocation3 + $0x58] sm:$0x1]
      %v3136 = vadd.f32 %v3124, %v3078
      %v3137 = vadd.f32 %v3125, %v3081
      %v3138 = vadd.f32 %v3126, %v3086
      %v3139 = vadd.f32 %v3127, %v3089
      %v3140 = vadd.f32 %v3128, %v3094
      %v3141 = vadd.f32 %v3129, %v3097
      %v3142 = vadd.f32 %v3130, %v3102
      %v3143 = vadd.f32 %v3131, %v3105
      %v3144 = vadd.f32 %v3132, %v3110
      %v3145 = vadd.f32 %v3133, %v3113
      %v3146 = vadd.f32 %v3134, %v3118
      %v3147 = vadd.f32 %v3135, %v3121
      %3148 = vst.msk [vmem:[#allocation3] sm:$0xff] %vm1176, %v3136
      %3149 = vst.msk [vmem:[#allocation3 + $0x8] sm:$0xff] %vm1176, %v3137
      %3150 = vst.msk [vmem:[#allocation3 + $0x10] sm:$0xff] %vm1176, %v3138
      %3151 = vst.msk [vmem:[#allocation3 + $0x18] sm:$0xff] %vm1176, %v3139
      %3152 = vst.msk [vmem:[#allocation3 + $0x20] sm:$0xff] %vm1176, %v3140
      %3153 = vst.msk [vmem:[#allocation3 + $0x28] sm:$0xff] %vm1176, %v3141
      %3154 = vst.msk [vmem:[#allocation3 + $0x30] sm:$0xff] %vm1176, %v3142
      %3155 = vst.msk [vmem:[#allocation3 + $0x38] sm:$0xff] %vm1176, %v3143
      %3156 = vst.msk [vmem:[#allocation3 + $0x40] sm:$0xff] %vm1176, %v3144
      %3157 = vst.msk [vmem:[#allocation3 + $0x48] sm:$0xff] %vm1176, %v3145
      %3158 = vst.msk [vmem:[#allocation3 + $0x50] sm:$0xff] %vm1176, %v3146
      %3159 = vst.msk [vmem:[#allocation3 + $0x58] sm:$0x1] %vm1188, %v3147
      %v3160 = vld [vmem:[#allocation2 + $0x30] sm:$0x80]
      %v3161 = vld [vmem:[#allocation2 + $0x38] sm:$0xff]
      %v3162 = vld [vmem:[#allocation2 + $0x40] sm:$0xff]
      %v3163 = vld [vmem:[#allocation2 + $0x48] sm:$0xff]
      %v3164 = vld [vmem:[#allocation2 + $0x50] sm:$0xff]
      %v3165 = vld [vmem:[#allocation2 + $0x58] sm:$0xff]
      %v3166 = vld [vmem:[#allocation2 + $0x60] sm:$0xf]
      %v3167 = vld [vmem:[%s3 + $0xb0] sm:$0xf]
      %v3168 = vld [vmem:[%s3 + $0xb4] sm:$0xf]
      %v3169 = vld [vmem:[%s3 + $0xb8] sm:$0xf]
      %v3170 = vld [vmem:[%s3 + $0xbc] sm:$0xf]
      %vm3171 = vsmask.f32 256
      %v3173 = vshrl.u32 %v3160, 16
      %v3175 = vrot.slane %v3173, 7
      %v3177 = vshrl.u32 %v3161, 16
      %v3179 = vrot.slane %v3177, 7
      %v3180 = vshll.u32 %v3161, 16
      %v3182 = vor.u32 %v3179, %v3180
      %v3183 = vsel %vm3171, %v3175, %v3182
      %v3185 = vshrl.u32 %v3162, 16
      %v3187 = vrot.slane %v3185, 7
      %v3188 = vshll.u32 %v3162, 16
      %v3190 = vor.u32 %v3187, %v3188
      %v3191 = vsel %vm3171, %v3179, %v3190
      %v3193 = vshrl.u32 %v3163, 16
      %v3195 = vrot.slane %v3193, 7
      %v3196 = vshll.u32 %v3163, 16
      %v3198 = vor.u32 %v3195, %v3196
      %v3199 = vsel %vm3171, %v3187, %v3198
      %v3201 = vshrl.u32 %v3164, 16
      %v3203 = vrot.slane %v3201, 7
      %v3204 = vshll.u32 %v3164, 16
      %v3206 = vor.u32 %v3203, %v3204
      %v3207 = vsel %vm3171, %v3195, %v3206
      %v3209 = vshrl.u32 %v3165, 16
      %v3211 = vrot.slane %v3209, 7
      %v3212 = vshll.u32 %v3165, 16
      %v3214 = vor.u32 %v3211, %v3212
      %v3215 = vsel %vm3171, %v3203, %v3214
      %v3217 = vshrl.u32 %v3166, 16
      %v3219 = vrot.slane %v3217, 7
      %v3220 = vshll.u32 %v3166, 16
      %v3222 = vor.u32 %v3219, %v3220
      %v3223 = vsel %vm3171, %v3211, %v3222
      %v3228 = vunpack.c.l.b16 %v3167
      %v3229 = vunpack.c.l.b16 %v3168
      %v3230 = vunpack.c.l.b16 %v3169
      %v3231 = vunpack.c.l.b16 %v3170
      %v3232 = vpack.c.b16 %v3229, %v3228
      %v3233 = vpack.c.b16 %v3231, %v3230
      %v3237 = vsel %vm1029, %v3183, 0
      %v3240 = vsel %vm1029, %v3191, 0
      %v3243 = vsel %vm1029, %v3199, 0
      %v3246 = vsel %vm1029, %v3207, 0
      %v3249 = vsel %vm1029, %v3215, 0
      %v3252 = vsel %vm1029, %v3223, 0
      %3254 = vmatprep.subr.bf16.mxu0 0
      %3255 = vmatpush1.bf16.msra.mxu0 %v3232
      %3256 = vmatprep.subr.bf16.mxu0 0
      %3257 = vmatpush1.bf16.msra.mxu0 %v3233
      %3258 = vmatprep.subr.bf16.mxu0 0
      %3259 = vmatpush1.bf16.msra.mxu0 0
      %3260 = vmatprep.subr.bf16.mxu0 0
      %3261 = vmatpush1.bf16.msra.mxu0 0
      %3262 = vmatprep.subr.bf16.mxu0 0
      %3263 = vmatpush1.bf16.msra.mxu0 0
      %3264 = vmatprep.subr.bf16.mxu0 0
      %3265 = vmatpush1.bf16.msra.mxu0 0
      %3266 = vmatprep.subr.bf16.mxu0 0
      %3267 = vmatpush1.bf16.msra.mxu0 0
      %3268 = vmatprep.subr.bf16.mxu0 0
      %3269 = vmatpush1.bf16.msra.mxu0 0
      %3270 = vmatprep.subr.bf16.mxu0 0
      %3271 = vmatpush1.bf16.msra.mxu0 0
      %3272 = vmatprep.subr.bf16.mxu0 0
      %3273 = vmatpush1.bf16.msra.mxu0 0
      %3274 = vmatprep.subr.bf16.mxu0 0
      %3275 = vmatpush1.bf16.msra.mxu0 0
      %3276 = vmatprep.subr.bf16.mxu0 0
      %3277 = vmatpush1.bf16.msra.mxu0 0
      %3278 = vmatprep.subr.bf16.mxu0 0
      %3279 = vmatpush1.bf16.msra.mxu0 0
      %3280 = vmatprep.subr.bf16.mxu0 0
      %3281 = vmatpush1.bf16.msra.mxu0 0
      %3282 = vmatprep.subr.bf16.mxu0 0
      %3283 = vmatpush1.bf16.msra.mxu0 0
      %3284 = vmatprep.subr.bf16.mxu0 0
      %3285 = vmatpush1.bf16.msra.mxu0 0
      %3286 = vmatprep.mubr.bf16.mxu0 0
      %3287 = vmatmul.mubr.bf16.gmra.mrb[0].mxu0 %v3237
      %v3288 = vpop.f32.mrb[0].mxu0
      %v3289 = vadd.f32 0.0, %v3288
      %v3290 = vpop.f32.mrb[0].mxu0
      %v3291 = vpop.f32.mrb[0].mxu0
      %v3292 = vadd.f32 0.0, %v3291
      %v3293 = vpop.f32.mrb[0].mxu0
      %3294 = vmatprep.mubr.bf16.mxu0 0
      %3295 = vmatmul.mubr.bf16.gmra.mrb[0].mxu0 %v3240
      %v3296 = vpop.f32.mrb[0].mxu0
      %v3297 = vadd.f32 0.0, %v3296
      %v3298 = vpop.f32.mrb[0].mxu0
      %v3299 = vpop.f32.mrb[0].mxu0
      %v3300 = vadd.f32 0.0, %v3299
      %v3301 = vpop.f32.mrb[0].mxu0
      %3302 = vmatprep.mubr.bf16.mxu0 0
      %3303 = vmatmul.mubr.bf16.gmra.mrb[0].mxu0 %v3243
      %v3304 = vpop.f32.mrb[0].mxu0
      %v3305 = vadd.f32 0.0, %v3304
      %v3306 = vpop.f32.mrb[0].mxu0
      %v3307 = vpop.f32.mrb[0].mxu0
      %v3308 = vadd.f32 0.0, %v3307
      %v3309 = vpop.f32.mrb[0].mxu0
      %3310 = vmatprep.mubr.bf16.mxu0 0
      %3311 = vmatmul.mubr.bf16.gmra.mrb[0].mxu0 %v3246
      %v3312 = vpop.f32.mrb[0].mxu0
      %v3313 = vadd.f32 0.0, %v3312
      %v3314 = vpop.f32.mrb[0].mxu0
      %v3315 = vpop.f32.mrb[0].mxu0
      %v3316 = vadd.f32 0.0, %v3315
      %v3317 = vpop.f32.mrb[0].mxu0
      %3318 = vmatprep.mubr.bf16.mxu0 0
      %3319 = vmatmul.mubr.bf16.gmra.mrb[0].mxu0 %v3249
      %v3320 = vpop.f32.mrb[0].mxu0
      %v3321 = vadd.f32 0.0, %v3320
      %v3322 = vpop.f32.mrb[0].mxu0
      %v3323 = vpop.f32.mrb[0].mxu0
      %v3324 = vadd.f32 0.0, %v3323
      %v3325 = vpop.f32.mrb[0].mxu0
      %3326 = vmatprep.mubr.bf16.mxu0 0
      %3327 = vmatmul.mubr.bf16.gmra.mrb[0].mxu0 %v3252
      %v3328 = vpop.f32.mrb[0].mxu0
      %v3329 = vadd.f32 0.0, %v3328
      %v3330 = vpop.f32.mrb[0].mxu0
      %v3331 = vpop.f32.mrb[0].mxu0
      %v3332 = vadd.f32 0.0, %v3331
      %v3333 = vpop.f32.mrb[0].mxu0
      %3334 = vdwg.mxu0
      %v3335 = vld [vmem:[#allocation3] sm:$0xff]
      %v3336 = vld [vmem:[#allocation3 + $0x8] sm:$0xff]
      %v3337 = vld [vmem:[#allocation3 + $0x10] sm:$0xff]
      %v3338 = vld [vmem:[#allocation3 + $0x18] sm:$0xff]
      %v3339 = vld [vmem:[#allocation3 + $0x20] sm:$0xff]
      %v3340 = vld [vmem:[#allocation3 + $0x28] sm:$0xff]
      %v3341 = vld [vmem:[#allocation3 + $0x30] sm:$0xff]
      %v3342 = vld [vmem:[#allocation3 + $0x38] sm:$0xff]
      %v3343 = vld [vmem:[#allocation3 + $0x40] sm:$0xff]
      %v3344 = vld [vmem:[#allocation3 + $0x48] sm:$0xff]
      %v3345 = vld [vmem:[#allocation3 + $0x50] sm:$0xff]
      %v3346 = vld [vmem:[#allocation3 + $0x58] sm:$0x1]
      %v3347 = vadd.f32 %v3335, %v3289
      %v3348 = vadd.f32 %v3336, %v3292
      %v3349 = vadd.f32 %v3337, %v3297
      %v3350 = vadd.f32 %v3338, %v3300
      %v3351 = vadd.f32 %v3339, %v3305
      %v3352 = vadd.f32 %v3340, %v3308
      %v3353 = vadd.f32 %v3341, %v3313
      %v3354 = vadd.f32 %v3342, %v3316
      %v3355 = vadd.f32 %v3343, %v3321
      %v3356 = vadd.f32 %v3344, %v3324
      %v3357 = vadd.f32 %v3345, %v3329
      %v3358 = vadd.f32 %v3346, %v3332
      %3359 = vst.msk [vmem:[#allocation3] sm:$0xff] %vm1176, %v3347
      %3360 = vst.msk [vmem:[#allocation3 + $0x8] sm:$0xff] %vm1176, %v3348
      %3361 = vst.msk [vmem:[#allocation3 + $0x10] sm:$0xff] %vm1176, %v3349
      %3362 = vst.msk [vmem:[#allocation3 + $0x18] sm:$0xff] %vm1176, %v3350
      %3363 = vst.msk [vmem:[#allocation3 + $0x20] sm:$0xff] %vm1176, %v3351
      %3364 = vst.msk [vmem:[#allocation3 + $0x28] sm:$0xff] %vm1176, %v3352
      %3365 = vst.msk [vmem:[#allocation3 + $0x30] sm:$0xff] %vm1176, %v3353
      %3366 = vst.msk [vmem:[#allocation3 + $0x38] sm:$0xff] %vm1176, %v3354
      %3367 = vst.msk [vmem:[#allocation3 + $0x40] sm:$0xff] %vm1176, %v3355
      %3368 = vst.msk [vmem:[#allocation3 + $0x48] sm:$0xff] %vm1176, %v3356
      %3369 = vst.msk [vmem:[#allocation3 + $0x50] sm:$0xff] %vm1176, %v3357
      %3370 = vst.msk [vmem:[#allocation3 + $0x58] sm:$0x1] %vm1188, %v3358
      %v3371 = vld [vmem:[#allocation2 + $0x68] sm:$0xfe]
      %v3372 = vld [vmem:[#allocation2 + $0x70] sm:$0xff]
      %v3373 = vld [vmem:[#allocation2 + $0x78] sm:$0xff]
      %v3374 = vld [vmem:[#allocation2 + $0x80] sm:$0xff]
      %v3375 = vld [vmem:[#allocation2 + $0x88] sm:$0xff]
      %v3376 = vld [vmem:[#allocation2 + $0x90] sm:$0x3f]
      %v3377 = vld [vmem:[%s3 + $0xc0] sm:$0xf]
      %v3378 = vld [vmem:[%s3 + $0xc4] sm:$0xf]
      %v3379 = vld [vmem:[%s3 + $0xc8] sm:$0xf]
      %v3380 = vld [vmem:[%s3 + $0xcc] sm:$0xf]
      %vm3387 = vcmask 1046528
      %v3388 = vrot.slane %v3371, 1
      %v3389 = vrot.slane %v3372, 1
      %v3390 = vsel %vm3387, %v3388, %v3389
      %v3391 = vrot.slane %v3373, 1
      %v3392 = vsel %vm3387, %v3389, %v3391
      %v3393 = vrot.slane %v3374, 1
      %v3394 = vsel %vm3387, %v3391, %v3393
      %v3395 = vrot.slane %v3375, 1
      %v3396 = vsel %vm3387, %v3393, %v3395
      %v3397 = vrot.slane %v3376, 1
      %v3398 = vsel %vm3387, %v3395, %v3397
      %v3403 = vunpack.c.l.b16 %v3377
      %v3404 = vunpack.c.l.b16 %v3378
      %v3405 = vunpack.c.l.b16 %v3379
      %v3406 = vunpack.c.l.b16 %v3380
      %v3407 = vpack.c.b16 %v3404, %v3403
      %v3408 = vpack.c.b16 %v3406, %v3405
      %v3412 = vsel %vm1029, %v3390, 0
      %v3415 = vsel %vm1029, %v3392, 0
      %v3418 = vsel %vm1029, %v3394, 0
      %v3421 = vsel %vm1029, %v3396, 0
      %v3424 = vsel %vm1029, %v3398, 0
      %v3427 = vsel %vm1029, %v3397, 0
      %3429 = vmatprep.subr.bf16.mxu0 0
      %3430 = vmatpush1.bf16.msra.mxu0 %v3407
      %3431 = vmatprep.subr.bf16.mxu0 0
      %3432 = vmatpush1.bf16.msra.mxu0 %v3408
      %3433 = vmatprep.subr.bf16.mxu0 0
      %3434 = vmatpush1.bf16.msra.mxu0 0
      %3435 = vmatprep.subr.bf16.mxu0 0
      %3436 = vmatpush1.bf16.msra.mxu0 0
      %3437 = vmatprep.subr.bf16.mxu0 0
      %3438 = vmatpush1.bf16.msra.mxu0 0
      %3439 = vmatprep.subr.bf16.mxu0 0
      %3440 = vmatpush1.bf16.msra.mxu0 0
      %3441 = vmatprep.subr.bf16.mxu0 0
      %3442 = vmatpush1.bf16.msra.mxu0 0
      %3443 = vmatprep.subr.bf16.mxu0 0
      %3444 = vmatpush1.bf16.msra.mxu0 0
      %3445 = vmatprep.subr.bf16.mxu0 0
      %3446 = vmatpush1.bf16.msra.mxu0 0
      %3447 = vmatprep.subr.bf16.mxu0 0
      %3448 = vmatpush1.bf16.msra.mxu0 0
      %3449 = vmatprep.subr.bf16.mxu0 0
      %3450 = vmatpush1.bf16.msra.mxu0 0
      %3451 = vmatprep.subr.bf16.mxu0 0
      %3452 = vmatpush1.bf16.msra.mxu0 0
      %3453 = vmatprep.subr.bf16.mxu0 0
      %3454 = vmatpush1.bf16.msra.mxu0 0
      %3455 = vmatprep.subr.bf16.mxu0 0
      %3456 = vmatpush1.bf16.msra.mxu0 0
      %3457 = vmatprep.subr.bf16.mxu0 0
      %3458 = vmatpush1.bf16.msra.mxu0 0
      %3459 = vmatprep.subr.bf16.mxu0 0
      %3460 = vmatpush1.bf16.msra.mxu0 0
      %3461 = vmatprep.mubr.bf16.mxu0 0
      %3462 = vmatmul.mubr.bf16.gmra.mrb[0].mxu0 %v3412
      %v3463 = vpop.f32.mrb[0].mxu0
      %v3464 = vadd.f32 0.0, %v3463
      %v3465 = vpop.f32.mrb[0].mxu0
      %v3466 = vpop.f32.mrb[0].mxu0
      %v3467 = vadd.f32 0.0, %v3466
      %v3468 = vpop.f32.mrb[0].mxu0
      %3469 = vmatprep.mubr.bf16.mxu0 0
      %3470 = vmatmul.mubr.bf16.gmra.mrb[0].mxu0 %v3415
      %v3471 = vpop.f32.mrb[0].mxu0
      %v3472 = vadd.f32 0.0, %v3471
      %v3473 = vpop.f32.mrb[0].mxu0
      %v3474 = vpop.f32.mrb[0].mxu0
      %v3475 = vadd.f32 0.0, %v3474
      %v3476 = vpop.f32.mrb[0].mxu0
      %3477 = vmatprep.mubr.bf16.mxu0 0
      %3478 = vmatmul.mubr.bf16.gmra.mrb[0].mxu0 %v3418
      %v3479 = vpop.f32.mrb[0].mxu0
      %v3480 = vadd.f32 0.0, %v3479
      %v3481 = vpop.f32.mrb[0].mxu0
      %v3482 = vpop.f32.mrb[0].mxu0
      %v3483 = vadd.f32 0.0, %v3482
      %v3484 = vpop.f32.mrb[0].mxu0
      %3485 = vmatprep.mubr.bf16.mxu0 0
      %3486 = vmatmul.mubr.bf16.gmra.mrb[0].mxu0 %v3421
      %v3487 = vpop.f32.mrb[0].mxu0
      %v3488 = vadd.f32 0.0, %v3487
      %v3489 = vpop.f32.mrb[0].mxu0
      %v3490 = vpop.f32.mrb[0].mxu0
      %v3491 = vadd.f32 0.0, %v3490
      %v3492 = vpop.f32.mrb[0].mxu0
      %3493 = vmatprep.mubr.bf16.mxu0 0
      %3494 = vmatmul.mubr.bf16.gmra.mrb[0].mxu0 %v3424
      %v3495 = vpop.f32.mrb[0].mxu0
      %v3496 = vadd.f32 0.0, %v3495
      %v3497 = vpop.f32.mrb[0].mxu0
      %v3498 = vpop.f32.mrb[0].mxu0
      %v3499 = vadd.f32 0.0, %v3498
      %v3500 = vpop.f32.mrb[0].mxu0
      %3501 = vmatprep.mubr.bf16.mxu0 0
      %3502 = vmatmul.mubr.bf16.gmra.mrb[0].mxu0 %v3427
      %v3503 = vpop.f32.mrb[0].mxu0
      %v3504 = vadd.f32 0.0, %v3503
      %v3505 = vpop.f32.mrb[0].mxu0
      %v3506 = vpop.f32.mrb[0].mxu0
      %v3507 = vadd.f32 0.0, %v3506
      %v3508 = vpop.f32.mrb[0].mxu0
      %3509 = vdwg.mxu0
      %v3510 = vld [vmem:[#allocation3] sm:$0xff]
      %v3511 = vld [vmem:[#allocation3 + $0x8] sm:$0xff]
      %v3512 = vld [vmem:[#allocation3 + $0x10] sm:$0xff]
      %v3513 = vld [vmem:[#allocation3 + $0x18] sm:$0xff]
      %v3514 = vld [vmem:[#allocation3 + $0x20] sm:$0xff]
      %v3515 = vld [vmem:[#allocation3 + $0x28] sm:$0xff]
      %v3516 = vld [vmem:[#allocation3 + $0x30] sm:$0xff]
      %v3517 = vld [vmem:[#allocation3 + $0x38] sm:$0xff]
      %v3518 = vld [vmem:[#allocation3 + $0x40] sm:$0xff]
      %v3519 = vld [vmem:[#allocation3 + $0x48] sm:$0xff]
      %v3520 = vld [vmem:[#allocation3 + $0x50] sm:$0xff]
      %v3521 = vld [vmem:[#allocation3 + $0x58] sm:$0x1]
      %v3522 = vadd.f32 %v3510, %v3464
      %v3523 = vadd.f32 %v3511, %v3467
      %v3524 = vadd.f32 %v3512, %v3472
      %v3525 = vadd.f32 %v3513, %v3475
      %v3526 = vadd.f32 %v3514, %v3480
      %v3527 = vadd.f32 %v3515, %v3483
      %v3528 = vadd.f32 %v3516, %v3488
      %v3529 = vadd.f32 %v3517, %v3491
      %v3530 = vadd.f32 %v3518, %v3496
      %v3531 = vadd.f32 %v3519, %v3499
      %v3532 = vadd.f32 %v3520, %v3504
      %v3533 = vadd.f32 %v3521, %v3507
      %3534 = vst.msk [vmem:[#allocation3] sm:$0xff] %vm1176, %v3522
      %3535 = vst.msk [vmem:[#allocation3 + $0x8] sm:$0xff] %vm1176, %v3523
      %3536 = vst.msk [vmem:[#allocation3 + $0x10] sm:$0xff] %vm1176, %v3524
      %3537 = vst.msk [vmem:[#allocation3 + $0x18] sm:$0xff] %vm1176, %v3525
      %3538 = vst.msk [vmem:[#allocation3 + $0x20] sm:$0xff] %vm1176, %v3526
      %3539 = vst.msk [vmem:[#allocation3 + $0x28] sm:$0xff] %vm1176, %v3527
      %3540 = vst.msk [vmem:[#allocation3 + $0x30] sm:$0xff] %vm1176, %v3528
      %3541 = vst.msk [vmem:[#allocation3 + $0x38] sm:$0xff] %vm1176, %v3529
      %3542 = vst.msk [vmem:[#allocation3 + $0x40] sm:$0xff] %vm1176, %v3530
      %3543 = vst.msk [vmem:[#allocation3 + $0x48] sm:$0xff] %vm1176, %v3531
      %3544 = vst.msk [vmem:[#allocation3 + $0x50] sm:$0xff] %vm1176, %v3532
      %3545 = vst.msk [vmem:[#allocation3 + $0x58] sm:$0x1] %vm1188, %v3533
      %v3546 = vld [vmem:[#allocation2 + $0x98] sm:$0xf8]
      %v3547 = vld [vmem:[#allocation2 + $0xa0] sm:$0xff]
      %v3548 = vld [vmem:[#allocation2 + $0xa8] sm:$0xff]
      %v3549 = vld [vmem:[#allocation2 + $0xb0] sm:$0xff]
      %v3550 = vld [vmem:[#allocation2 + $0xb8] sm:$0xff]
      %v3551 = vld [vmem:[#allocation2 + $0xc0] sm:$0xff]
      %v3552 = vld [vmem:[%s3 + $0xd0] sm:$0xf]
      %v3553 = vld [vmem:[%s3 + $0xd4] sm:$0xf]
      %v3554 = vld [vmem:[%s3 + $0xd8] sm:$0xf]
      %v3555 = vld [vmem:[%s3 + $0xdc] sm:$0xf]
      %vm3562 = vcmask 1044480
      %v3563 = vrot.slane %v3546, 3
      %v3564 = vrot.slane %v3547, 3
      %v3565 = vsel %vm3562, %v3563, %v3564
      %v3566 = vrot.slane %v3548, 3
      %v3567 = vsel %vm3562, %v3564, %v3566
      %v3568 = vrot.slane %v3549, 3
      %v3569 = vsel %vm3562, %v3566, %v3568
      %v3570 = vrot.slane %v3550, 3
      %v3571 = vsel %vm3562, %v3568, %v3570
      %v3572 = vrot.slane %v3551, 3
      %v3573 = vsel %vm3562, %v3570, %v3572
      %v3578 = vunpack.c.l.b16 %v3552
      %v3579 = vunpack.c.l.b16 %v3553
      %v3580 = vunpack.c.l.b16 %v3554
      %v3581 = vunpack.c.l.b16 %v3555
      %v3582 = vpack.c.b16 %v3579, %v3578
      %v3583 = vpack.c.b16 %v3581, %v3580
      %v3587 = vsel %vm1029, %v3565, 0
      %v3590 = vsel %vm1029, %v3567, 0
      %v3593 = vsel %vm1029, %v3569, 0
      %v3596 = vsel %vm1029, %v3571, 0
      %v3599 = vsel %vm1029, %v3573, 0
      %v3602 = vsel %vm1029, %v3572, 0
      %3604 = vmatprep.subr.bf16.mxu0 0
      %3605 = vmatpush1.bf16.msra.mxu0 %v3582
      %3606 = vmatprep.subr.bf16.mxu0 0
      %3607 = vmatpush1.bf16.msra.mxu0 %v3583
      %3608 = vmatprep.subr.bf16.mxu0 0
      %3609 = vmatpush1.bf16.msra.mxu0 0
      %3610 = vmatprep.subr.bf16.mxu0 0
      %3611 = vmatpush1.bf16.msra.mxu0 0
      %3612 = vmatprep.subr.bf16.mxu0 0
      %3613 = vmatpush1.bf16.msra.mxu0 0
      %3614 = vmatprep.subr.bf16.mxu0 0
      %3615 = vmatpush1.bf16.msra.mxu0 0
      %3616 = vmatprep.subr.bf16.mxu0 0
      %3617 = vmatpush1.bf16.msra.mxu0 0
      %3618 = vmatprep.subr.bf16.mxu0 0
      %3619 = vmatpush1.bf16.msra.mxu0 0
      %3620 = vmatprep.subr.bf16.mxu0 0
      %3621 = vmatpush1.bf16.msra.mxu0 0
      %3622 = vmatprep.subr.bf16.mxu0 0
      %3623 = vmatpush1.bf16.msra.mxu0 0
      %3624 = vmatprep.subr.bf16.mxu0 0
      %3625 = vmatpush1.bf16.msra.mxu0 0
      %3626 = vmatprep.subr.bf16.mxu0 0
      %3627 = vmatpush1.bf16.msra.mxu0 0
      %3628 = vmatprep.subr.bf16.mxu0 0
      %3629 = vmatpush1.bf16.msra.mxu0 0
      %3630 = vmatprep.subr.bf16.mxu0 0
      %3631 = vmatpush1.bf16.msra.mxu0 0
      %3632 = vmatprep.subr.bf16.mxu0 0
      %3633 = vmatpush1.bf16.msra.mxu0 0
      %3634 = vmatprep.subr.bf16.mxu0 0
      %3635 = vmatpush1.bf16.msra.mxu0 0
      %3636 = vmatprep.mubr.bf16.mxu0 0
      %3637 = vmatmul.mubr.bf16.gmra.mrb[0].mxu0 %v3587
      %v3638 = vpop.f32.mrb[0].mxu0
      %v3639 = vadd.f32 0.0, %v3638
      %v3640 = vpop.f32.mrb[0].mxu0
      %v3641 = vpop.f32.mrb[0].mxu0
      %v3642 = vadd.f32 0.0, %v3641
      %v3643 = vpop.f32.mrb[0].mxu0
      %3644 = vmatprep.mubr.bf16.mxu0 0
      %3645 = vmatmul.mubr.bf16.gmra.mrb[0].mxu0 %v3590
      %v3646 = vpop.f32.mrb[0].mxu0
      %v3647 = vadd.f32 0.0, %v3646
      %v3648 = vpop.f32.mrb[0].mxu0
      %v3649 = vpop.f32.mrb[0].mxu0
      %v3650 = vadd.f32 0.0, %v3649
      %v3651 = vpop.f32.mrb[0].mxu0
      %3652 = vmatprep.mubr.bf16.mxu0 0
      %3653 = vmatmul.mubr.bf16.gmra.mrb[0].mxu0 %v3593
      %v3654 = vpop.f32.mrb[0].mxu0
      %v3655 = vadd.f32 0.0, %v3654
      %v3656 = vpop.f32.mrb[0].mxu0
      %v3657 = vpop.f32.mrb[0].mxu0
      %v3658 = vadd.f32 0.0, %v3657
      %v3659 = vpop.f32.mrb[0].mxu0
      %3660 = vmatprep.mubr.bf16.mxu0 0
      %3661 = vmatmul.mubr.bf16.gmra.mrb[0].mxu0 %v3596
      %v3662 = vpop.f32.mrb[0].mxu0
      %v3663 = vadd.f32 0.0, %v3662
      %v3664 = vpop.f32.mrb[0].mxu0
      %v3665 = vpop.f32.mrb[0].mxu0
      %v3666 = vadd.f32 0.0, %v3665
      %v3667 = vpop.f32.mrb[0].mxu0
      %3668 = vmatprep.mubr.bf16.mxu0 0
      %3669 = vmatmul.mubr.bf16.gmra.mrb[0].mxu0 %v3599
      %v3670 = vpop.f32.mrb[0].mxu0
      %v3671 = vadd.f32 0.0, %v3670
      %v3672 = vpop.f32.mrb[0].mxu0
      %v3673 = vpop.f32.mrb[0].mxu0
      %v3674 = vadd.f32 0.0, %v3673
      %v3675 = vpop.f32.mrb[0].mxu0
      %3676 = vmatprep.mubr.bf16.mxu0 0
      %3677 = vmatmul.mubr.bf16.gmra.mrb[0].mxu0 %v3602
      %v3678 = vpop.f32.mrb[0].mxu0
      %v3679 = vadd.f32 0.0, %v3678
      %v3680 = vpop.f32.mrb[0].mxu0
      %v3681 = vpop.f32.mrb[0].mxu0
      %v3682 = vadd.f32 0.0, %v3681
      %v3683 = vpop.f32.mrb[0].mxu0
      %3684 = vdwg.mxu0
      %v3685 = vld [vmem:[#allocation3] sm:$0xff]
      %v3686 = vld [vmem:[#allocation3 + $0x8] sm:$0xff]
      %v3687 = vld [vmem:[#allocation3 + $0x10] sm:$0xff]
      %v3688 = vld [vmem:[#allocation3 + $0x18] sm:$0xff]
      %v3689 = vld [vmem:[#allocation3 + $0x20] sm:$0xff]
      %v3690 = vld [vmem:[#allocation3 + $0x28] sm:$0xff]
      %v3691 = vld [vmem:[#allocation3 + $0x30] sm:$0xff]
      %v3692 = vld [vmem:[#allocation3 + $0x38] sm:$0xff]
      %v3693 = vld [vmem:[#allocation3 + $0x40] sm:$0xff]
      %v3694 = vld [vmem:[#allocation3 + $0x48] sm:$0xff]
      %v3695 = vld [vmem:[#allocation3 + $0x50] sm:$0xff]
      %v3696 = vld [vmem:[#allocation3 + $0x58] sm:$0x1]
      %v3697 = vadd.f32 %v3685, %v3639
      %v3698 = vadd.f32 %v3686, %v3642
      %v3699 = vadd.f32 %v3687, %v3647
      %v3700 = vadd.f32 %v3688, %v3650
      %v3701 = vadd.f32 %v3689, %v3655
      %v3702 = vadd.f32 %v3690, %v3658
      %v3703 = vadd.f32 %v3691, %v3663
      %v3704 = vadd.f32 %v3692, %v3666
      %v3705 = vadd.f32 %v3693, %v3671
      %v3706 = vadd.f32 %v3694, %v3674
      %v3707 = vadd.f32 %v3695, %v3679
      %v3708 = vadd.f32 %v3696, %v3682
      %3709 = vst.msk [vmem:[#allocation3] sm:$0xff] %vm1176, %v3697
      %3710 = vst.msk [vmem:[#allocation3 + $0x8] sm:$0xff] %vm1176, %v3698
      %3711 = vst.msk [vmem:[#allocation3 + $0x10] sm:$0xff] %vm1176, %v3699
      %3712 = vst.msk [vmem:[#allocation3 + $0x18] sm:$0xff] %vm1176, %v3700
      %3713 = vst.msk [vmem:[#allocation3 + $0x20] sm:$0xff] %vm1176, %v3701
      %3714 = vst.msk [vmem:[#allocation3 + $0x28] sm:$0xff] %vm1176, %v3702
      %3715 = vst.msk [vmem:[#allocation3 + $0x30] sm:$0xff] %vm1176, %v3703
      %3716 = vst.msk [vmem:[#allocation3 + $0x38] sm:$0xff] %vm1176, %v3704
      %3717 = vst.msk [vmem:[#allocation3 + $0x40] sm:$0xff] %vm1176, %v3705
      %3718 = vst.msk [vmem:[#allocation3 + $0x48] sm:$0xff] %vm1176, %v3706
      %3719 = vst.msk [vmem:[#allocation3 + $0x50] sm:$0xff] %vm1176, %v3707
      %3720 = vst.msk [vmem:[#allocation3 + $0x58] sm:$0x1] %vm1188, %v3708
      %v3721 = vld [vmem:[#allocation2 + $0x68] sm:$0xfe]
      %v3722 = vld [vmem:[#allocation2 + $0x70] sm:$0xff]
      %v3723 = vld [vmem:[#allocation2 + $0x78] sm:$0xff]
      %v3724 = vld [vmem:[#allocation2 + $0x80] sm:$0xff]
      %v3725 = vld [vmem:[#allocation2 + $0x88] sm:$0xff]
      %v3726 = vld [vmem:[#allocation2 + $0x90] sm:$0x3f]
      %v3727 = vld [vmem:[%s3 + $0xe0] sm:$0xf]
      %v3728 = vld [vmem:[%s3 + $0xe4] sm:$0xf]
      %v3729 = vld [vmem:[%s3 + $0xe8] sm:$0xf]
      %v3730 = vld [vmem:[%s3 + $0xec] sm:$0xf]
      %vm3731 = vsmask.f32 6400
      %v3733 = vshrl.u32 %v3721, 16
      %v3735 = vrot.slane %v3733, 1
      %v3736 = vshll.u32 %v3721, 16
      %v3738 = vrot.slane %v3736, 2
      %v3739 = vor.u32 %v3735, %v3738
      %v3741 = vshrl.u32 %v3722, 16
      %v3743 = vrot.slane %v3741, 1
      %v3744 = vshll.u32 %v3722, 16
      %v3746 = vrot.slane %v3744, 2
      %v3747 = vor.u32 %v3743, %v3746
      %v3748 = vsel %vm3731, %v3739, %v3747
      %v3750 = vshrl.u32 %v3723, 16
      %v3752 = vrot.slane %v3750, 1
      %v3753 = vshll.u32 %v3723, 16
      %v3755 = vrot.slane %v3753, 2
      %v3756 = vor.u32 %v3752, %v3755
      %v3757 = vsel %vm3731, %v3747, %v3756
      %v3759 = vshrl.u32 %v3724, 16
      %v3761 = vrot.slane %v3759, 1
      %v3762 = vshll.u32 %v3724, 16
      %v3764 = vrot.slane %v3762, 2
      %v3765 = vor.u32 %v3761, %v3764
      %v3766 = vsel %vm3731, %v3756, %v3765
      %v3768 = vshrl.u32 %v3725, 16
      %v3770 = vrot.slane %v3768, 1
      %v3771 = vshll.u32 %v3725, 16
      %v3773 = vrot.slane %v3771, 2
      %v3774 = vor.u32 %v3770, %v3773
      %v3775 = vsel %vm3731, %v3765, %v3774
      %v3777 = vshrl.u32 %v3726, 16
      %v3779 = vrot.slane %v3777, 1
      %v3780 = vshll.u32 %v3726, 16
      %v3782 = vrot.slane %v3780, 2
      %v3783 = vor.u32 %v3779, %v3782
      %v3784 = vsel %vm3731, %v3774, %v3783
      %v3789 = vunpack.c.l.b16 %v3727
      %v3790 = vunpack.c.l.b16 %v3728
      %v3791 = vunpack.c.l.b16 %v3729
      %v3792 = vunpack.c.l.b16 %v3730
      %v3793 = vpack.c.b16 %v3790, %v3789
      %v3794 = vpack.c.b16 %v3792, %v3791
      %v3798 = vsel %vm1029, %v3748, 0
      %v3801 = vsel %vm1029, %v3757, 0
      %v3804 = vsel %vm1029, %v3766, 0
      %v3807 = vsel %vm1029, %v3775, 0
      %v3810 = vsel %vm1029, %v3784, 0
      %v3813 = vsel %vm1029, %v3783, 0
      %3815 = vmatprep.subr.bf16.mxu0 0
      %3816 = vmatpush1.bf16.msra.mxu0 %v3793
      %3817 = vmatprep.subr.bf16.mxu0 0
      %3818 = vmatpush1.bf16.msra.mxu0 %v3794
      %3819 = vmatprep.subr.bf16.mxu0 0
      %3820 = vmatpush1.bf16.msra.mxu0 0
      %3821 = vmatprep.subr.bf16.mxu0 0
      %3822 = vmatpush1.bf16.msra.mxu0 0
      %3823 = vmatprep.subr.bf16.mxu0 0
      %3824 = vmatpush1.bf16.msra.mxu0 0
      %3825 = vmatprep.subr.bf16.mxu0 0
      %3826 = vmatpush1.bf16.msra.mxu0 0
      %3827 = vmatprep.subr.bf16.mxu0 0
      %3828 = vmatpush1.bf16.msra.mxu0 0
      %3829 = vmatprep.subr.bf16.mxu0 0
      %3830 = vmatpush1.bf16.msra.mxu0 0
      %3831 = vmatprep.subr.bf16.mxu0 0
      %3832 = vmatpush1.bf16.msra.mxu0 0
      %3833 = vmatprep.subr.bf16.mxu0 0
      %3834 = vmatpush1.bf16.msra.mxu0 0
      %3835 = vmatprep.subr.bf16.mxu0 0
      %3836 = vmatpush1.bf16.msra.mxu0 0
      %3837 = vmatprep.subr.bf16.mxu0 0
      %3838 = vmatpush1.bf16.msra.mxu0 0
      %3839 = vmatprep.subr.bf16.mxu0 0
      %3840 = vmatpush1.bf16.msra.mxu0 0
      %3841 = vmatprep.subr.bf16.mxu0 0
      %3842 = vmatpush1.bf16.msra.mxu0 0
      %3843 = vmatprep.subr.bf16.mxu0 0
      %3844 = vmatpush1.bf16.msra.mxu0 0
      %3845 = vmatprep.subr.bf16.mxu0 0
      %3846 = vmatpush1.bf16.msra.mxu0 0
      %3847 = vmatprep.mubr.bf16.mxu0 0
      %3848 = vmatmul.mubr.bf16.gmra.mrb[0].mxu0 %v3798
      %v3849 = vpop.f32.mrb[0].mxu0
      %v3850 = vadd.f32 0.0, %v3849
      %v3851 = vpop.f32.mrb[0].mxu0
      %v3852 = vpop.f32.mrb[0].mxu0
      %v3853 = vadd.f32 0.0, %v3852
      %v3854 = vpop.f32.mrb[0].mxu0
      %3855 = vmatprep.mubr.bf16.mxu0 0
      %3856 = vmatmul.mubr.bf16.gmra.mrb[0].mxu0 %v3801
      %v3857 = vpop.f32.mrb[0].mxu0
      %v3858 = vadd.f32 0.0, %v3857
      %v3859 = vpop.f32.mrb[0].mxu0
      %v3860 = vpop.f32.mrb[0].mxu0
      %v3861 = vadd.f32 0.0, %v3860
      %v3862 = vpop.f32.mrb[0].mxu0
      %3863 = vmatprep.mubr.bf16.mxu0 0
      %3864 = vmatmul.mubr.bf16.gmra.mrb[0].mxu0 %v3804
      %v3865 = vpop.f32.mrb[0].mxu0
      %v3866 = vadd.f32 0.0, %v3865
      %v3867 = vpop.f32.mrb[0].mxu0
      %v3868 = vpop.f32.mrb[0].mxu0
      %v3869 = vadd.f32 0.0, %v3868
      %v3870 = vpop.f32.mrb[0].mxu0
      %3871 = vmatprep.mubr.bf16.mxu0 0
      %3872 = vmatmul.mubr.bf16.gmra.mrb[0].mxu0 %v3807
      %v3873 = vpop.f32.mrb[0].mxu0
      %v3874 = vadd.f32 0.0, %v3873
      %v3875 = vpop.f32.mrb[0].mxu0
      %v3876 = vpop.f32.mrb[0].mxu0
      %v3877 = vadd.f32 0.0, %v3876
      %v3878 = vpop.f32.mrb[0].mxu0
      %3879 = vmatprep.mubr.bf16.mxu0 0
      %3880 = vmatmul.mubr.bf16.gmra.mrb[0].mxu0 %v3810
      %v3881 = vpop.f32.mrb[0].mxu0
      %v3882 = vadd.f32 0.0, %v3881
      %v3883 = vpop.f32.mrb[0].mxu0
      %v3884 = vpop.f32.mrb[0].mxu0
      %v3885 = vadd.f32 0.0, %v3884
      %v3886 = vpop.f32.mrb[0].mxu0
      %3887 = vmatprep.mubr.bf16.mxu0 0
      %3888 = vmatmul.mubr.bf16.gmra.mrb[0].mxu0 %v3813
      %v3889 = vpop.f32.mrb[0].mxu0
      %v3890 = vadd.f32 0.0, %v3889
      %v3891 = vpop.f32.mrb[0].mxu0
      %v3892 = vpop.f32.mrb[0].mxu0
      %v3893 = vadd.f32 0.0, %v3892
      %v3894 = vpop.f32.mrb[0].mxu0
      %3895 = vdwg.mxu0
      %v3896 = vld [vmem:[#allocation3] sm:$0xff]
      %v3897 = vld [vmem:[#allocation3 + $0x8] sm:$0xff]
      %v3898 = vld [vmem:[#allocation3 + $0x10] sm:$0xff]
      %v3899 = vld [vmem:[#allocation3 + $0x18] sm:$0xff]
      %v3900 = vld [vmem:[#allocation3 + $0x20] sm:$0xff]
      %v3901 = vld [vmem:[#allocation3 + $0x28] sm:$0xff]
      %v3902 = vld [vmem:[#allocation3 + $0x30] sm:$0xff]
      %v3903 = vld [vmem:[#allocation3 + $0x38] sm:$0xff]
      %v3904 = vld [vmem:[#allocation3 + $0x40] sm:$0xff]
      %v3905 = vld [vmem:[#allocation3 + $0x48] sm:$0xff]
      %v3906 = vld [vmem:[#allocation3 + $0x50] sm:$0xff]
      %v3907 = vld [vmem:[#allocation3 + $0x58] sm:$0x1]
      %v3908 = vadd.f32 %v3896, %v3850
      %v3909 = vadd.f32 %v3897, %v3853
      %v3910 = vadd.f32 %v3898, %v3858
      %v3911 = vadd.f32 %v3899, %v3861
      %v3912 = vadd.f32 %v3900, %v3866
      %v3913 = vadd.f32 %v3901, %v3869
      %v3914 = vadd.f32 %v3902, %v3874
      %v3915 = vadd.f32 %v3903, %v3877
      %v3916 = vadd.f32 %v3904, %v3882
      %v3917 = vadd.f32 %v3905, %v3885
      %v3918 = vadd.f32 %v3906, %v3890
      %v3919 = vadd.f32 %v3907, %v3893
      %3920 = vst.msk [vmem:[#allocation3] sm:$0xff] %vm1176, %v3908
      %3921 = vst.msk [vmem:[#allocation3 + $0x8] sm:$0xff] %vm1176, %v3909
      %3922 = vst.msk [vmem:[#allocation3 + $0x10] sm:$0xff] %vm1176, %v3910
      %3923 = vst.msk [vmem:[#allocation3 + $0x18] sm:$0xff] %vm1176, %v3911
      %3924 = vst.msk [vmem:[#allocation3 + $0x20] sm:$0xff] %vm1176, %v3912
      %3925 = vst.msk [vmem:[#allocation3 + $0x28] sm:$0xff] %vm1176, %v3913
      %3926 = vst.msk [vmem:[#allocation3 + $0x30] sm:$0xff] %vm1176, %v3914
      %3927 = vst.msk [vmem:[#allocation3 + $0x38] sm:$0xff] %vm1176, %v3915
      %3928 = vst.msk [vmem:[#allocation3 + $0x40] sm:$0xff] %vm1176, %v3916
      %3929 = vst.msk [vmem:[#allocation3 + $0x48] sm:$0xff] %vm1176, %v3917
      %3930 = vst.msk [vmem:[#allocation3 + $0x50] sm:$0xff] %vm1176, %v3918
      %3931 = vst.msk [vmem:[#allocation3 + $0x58] sm:$0x1] %vm1188, %v3919
      %v3932 = vld [vmem:[#allocation2 + $0x98] sm:$0xf8]
      %v3933 = vld [vmem:[#allocation2 + $0xa0] sm:$0xff]
      %v3934 = vld [vmem:[#allocation2 + $0xa8] sm:$0xff]
      %v3935 = vld [vmem:[#allocation2 + $0xb0] sm:$0xff]
      %v3936 = vld [vmem:[#allocation2 + $0xb8] sm:$0xff]
      %v3937 = vld [vmem:[#allocation2 + $0xc0] sm:$0xff]
      %v3938 = vld [vmem:[%s3 + $0xf0] sm:$0xf]
      %v3939 = vld [vmem:[%s3 + $0xf4] sm:$0xf]
      %v3940 = vld [vmem:[%s3 + $0xf8] sm:$0xf]
      %v3941 = vld [vmem:[%s3 + $0xfc] sm:$0xf]
      %vm3942 = vsmask.f32 4352
      %v3944 = vshrl.u32 %v3932, 16
      %v3946 = vrot.slane %v3944, 3
      %v3947 = vshll.u32 %v3932, 16
      %v3949 = vrot.slane %v3947, 4
      %v3950 = vor.u32 %v3946, %v3949
      %v3952 = vshrl.u32 %v3933, 16
      %v3954 = vrot.slane %v3952, 3
      %v3955 = vshll.u32 %v3933, 16
      %v3957 = vrot.slane %v3955, 4
      %v3958 = vor.u32 %v3954, %v3957
      %v3959 = vsel %vm3942, %v3950, %v3958
      %v3961 = vshrl.u32 %v3934, 16
      %v3963 = vrot.slane %v3961, 3
      %v3964 = vshll.u32 %v3934, 16
      %v3966 = vrot.slane %v3964, 4
      %v3967 = vor.u32 %v3963, %v3966
      %v3968 = vsel %vm3942, %v3958, %v3967
      %v3970 = vshrl.u32 %v3935, 16
      %v3972 = vrot.slane %v3970, 3
      %v3973 = vshll.u32 %v3935, 16
      %v3975 = vrot.slane %v3973, 4
      %v3976 = vor.u32 %v3972, %v3975
      %v3977 = vsel %vm3942, %v3967, %v3976
      %v3979 = vshrl.u32 %v3936, 16
      %v3981 = vrot.slane %v3979, 3
      %v3982 = vshll.u32 %v3936, 16
      %v3984 = vrot.slane %v3982, 4
      %v3985 = vor.u32 %v3981, %v3984
      %v3986 = vsel %vm3942, %v3976, %v3985
      %v3988 = vshrl.u32 %v3937, 16
      %v3990 = vrot.slane %v3988, 3
      %v3991 = vshll.u32 %v3937, 16
      %v3993 = vrot.slane %v3991, 4
      %v3994 = vor.u32 %v3990, %v3993
      %v3995 = vsel %vm3942, %v3985, %v3994
      %v4000 = vunpack.c.l.b16 %v3938
      %v4001 = vunpack.c.l.b16 %v3939
      %v4002 = vunpack.c.l.b16 %v3940
      %v4003 = vunpack.c.l.b16 %v3941
      %v4004 = vpack.c.b16 %v4001, %v4000
      %v4005 = vpack.c.b16 %v4003, %v4002
      %v4009 = vsel %vm1029, %v3959, 0
      %v4012 = vsel %vm1029, %v3968, 0
      %v4015 = vsel %vm1029, %v3977, 0
      %v4018 = vsel %vm1029, %v3986, 0
      %v4021 = vsel %vm1029, %v3995, 0
      %v4024 = vsel %vm1029, %v3994, 0
      %4026 = vmatprep.subr.bf16.mxu0 0
      %4027 = vmatpush1.bf16.msra.mxu0 %v4004
      %4028 = vmatprep.subr.bf16.mxu0 0
      %4029 = vmatpush1.bf16.msra.mxu0 %v4005
      %4030 = vmatprep.subr.bf16.mxu0 0
      %4031 = vmatpush1.bf16.msra.mxu0 0
      %4032 = vmatprep.subr.bf16.mxu0 0
      %4033 = vmatpush1.bf16.msra.mxu0 0
      %4034 = vmatprep.subr.bf16.mxu0 0
      %4035 = vmatpush1.bf16.msra.mxu0 0
      %4036 = vmatprep.subr.bf16.mxu0 0
      %4037 = vmatpush1.bf16.msra.mxu0 0
      %4038 = vmatprep.subr.bf16.mxu0 0
      %4039 = vmatpush1.bf16.msra.mxu0 0
      %4040 = vmatprep.subr.bf16.mxu0 0
      %4041 = vmatpush1.bf16.msra.mxu0 0
      %4042 = vmatprep.subr.bf16.mxu0 0
      %4043 = vmatpush1.bf16.msra.mxu0 0
      %4044 = vmatprep.subr.bf16.mxu0 0
      %4045 = vmatpush1.bf16.msra.mxu0 0
      %4046 = vmatprep.subr.bf16.mxu0 0
      %4047 = vmatpush1.bf16.msra.mxu0 0
      %4048 = vmatprep.subr.bf16.mxu0 0
      %4049 = vmatpush1.bf16.msra.mxu0 0
      %4050 = vmatprep.subr.bf16.mxu0 0
      %4051 = vmatpush1.bf16.msra.mxu0 0
      %4052 = vmatprep.subr.bf16.mxu0 0
      %4053 = vmatpush1.bf16.msra.mxu0 0
      %4054 = vmatprep.subr.bf16.mxu0 0
      %4055 = vmatpush1.bf16.msra.mxu0 0
      %4056 = vmatprep.subr.bf16.mxu0 0
      %4057 = vmatpush1.bf16.msra.mxu0 0
      %4058 = vmatprep.mubr.bf16.mxu0 0
      %4059 = vmatmul.mubr.bf16.gmra.mrb[0].mxu0 %v4009
      %v4060 = vpop.f32.mrb[0].mxu0
      %v4061 = vadd.f32 0.0, %v4060
      %v4062 = vpop.f32.mrb[0].mxu0
      %v4063 = vpop.f32.mrb[0].mxu0
      %v4064 = vadd.f32 0.0, %v4063
      %v4065 = vpop.f32.mrb[0].mxu0
      %4066 = vmatprep.mubr.bf16.mxu0 0
      %4067 = vmatmul.mubr.bf16.gmra.mrb[0].mxu0 %v4012
      %v4068 = vpop.f32.mrb[0].mxu0
      %v4069 = vadd.f32 0.0, %v4068
      %v4070 = vpop.f32.mrb[0].mxu0
      %v4071 = vpop.f32.mrb[0].mxu0
      %v4072 = vadd.f32 0.0, %v4071
      %v4073 = vpop.f32.mrb[0].mxu0
      %4074 = vmatprep.mubr.bf16.mxu0 0
      %4075 = vmatmul.mubr.bf16.gmra.mrb[0].mxu0 %v4015
      %v4076 = vpop.f32.mrb[0].mxu0
      %v4077 = vadd.f32 0.0, %v4076
      %v4078 = vpop.f32.mrb[0].mxu0
      %v4079 = vpop.f32.mrb[0].mxu0
      %v4080 = vadd.f32 0.0, %v4079
      %v4081 = vpop.f32.mrb[0].mxu0
      %4082 = vmatprep.mubr.bf16.mxu0 0
      %4083 = vmatmul.mubr.bf16.gmra.mrb[0].mxu0 %v4018
      %v4084 = vpop.f32.mrb[0].mxu0
      %v4085 = vadd.f32 0.0, %v4084
      %v4086 = vpop.f32.mrb[0].mxu0
      %v4087 = vpop.f32.mrb[0].mxu0
      %v4088 = vadd.f32 0.0, %v4087
      %v4089 = vpop.f32.mrb[0].mxu0
      %4090 = vmatprep.mubr.bf16.mxu0 0
      %4091 = vmatmul.mubr.bf16.gmra.mrb[0].mxu0 %v4021
      %v4092 = vpop.f32.mrb[0].mxu0
      %v4093 = vadd.f32 0.0, %v4092
      %v4094 = vpop.f32.mrb[0].mxu0
      %v4095 = vpop.f32.mrb[0].mxu0
      %v4096 = vadd.f32 0.0, %v4095
      %v4097 = vpop.f32.mrb[0].mxu0
      %4098 = vmatprep.mubr.bf16.mxu0 0
      %4099 = vmatmul.mubr.bf16.gmra.mrb[0].mxu0 %v4024
      %v4100 = vpop.f32.mrb[0].mxu0
      %v4101 = vadd.f32 0.0, %v4100
      %v4102 = vpop.f32.mrb[0].mxu0
      %v4103 = vpop.f32.mrb[0].mxu0
      %v4104 = vadd.f32 0.0, %v4103
      %v4105 = vpop.f32.mrb[0].mxu0
      %4106 = vdwg.mxu0
      %v4107 = vld [vmem:[#allocation3] sm:$0xff]
      %v4108 = vld [vmem:[#allocation3 + $0x8] sm:$0xff]
      %v4109 = vld [vmem:[#allocation3 + $0x10] sm:$0xff]
      %v4110 = vld [vmem:[#allocation3 + $0x18] sm:$0xff]
      %v4111 = vld [vmem:[#allocation3 + $0x20] sm:$0xff]
      %v4112 = vld [vmem:[#allocation3 + $0x28] sm:$0xff]
      %v4113 = vld [vmem:[#allocation3 + $0x30] sm:$0xff]
      %v4114 = vld [vmem:[#allocation3 + $0x38] sm:$0xff]
      %v4115 = vld [vmem:[#allocation3 + $0x40] sm:$0xff]
      %v4116 = vld [vmem:[#allocation3 + $0x48] sm:$0xff]
      %v4117 = vld [vmem:[#allocation3 + $0x50] sm:$0xff]
      %v4118 = vld [vmem:[#allocation3 + $0x58] sm:$0x1]
      %v4119 = vadd.f32 %v4107, %v4061
      %v4120 = vadd.f32 %v4108, %v4064
      %v4121 = vadd.f32 %v4109, %v4069
      %v4122 = vadd.f32 %v4110, %v4072
      %v4123 = vadd.f32 %v4111, %v4077
      %v4124 = vadd.f32 %v4112, %v4080
      %v4125 = vadd.f32 %v4113, %v4085
      %v4126 = vadd.f32 %v4114, %v4088
      %v4127 = vadd.f32 %v4115, %v4093
      %v4128 = vadd.f32 %v4116, %v4096
      %v4129 = vadd.f32 %v4117, %v4101
      %v4130 = vadd.f32 %v4118, %v4104
      %4131 = vst.msk [vmem:[#allocation3] sm:$0xff] %vm1176, %v4119
      %4132 = vst.msk [vmem:[#allocation3 + $0x8] sm:$0xff] %vm1176, %v4120
      %4133 = vst.msk [vmem:[#allocation3 + $0x10] sm:$0xff] %vm1176, %v4121
      %4134 = vst.msk [vmem:[#allocation3 + $0x18] sm:$0xff] %vm1176, %v4122
      %4135 = vst.msk [vmem:[#allocation3 + $0x20] sm:$0xff] %vm1176, %v4123
      %4136 = vst.msk [vmem:[#allocation3 + $0x28] sm:$0xff] %vm1176, %v4124
      %4137 = vst.msk [vmem:[#allocation3 + $0x30] sm:$0xff] %vm1176, %v4125
      %4138 = vst.msk [vmem:[#allocation3 + $0x38] sm:$0xff] %vm1176, %v4126
      %4139 = vst.msk [vmem:[#allocation3 + $0x40] sm:$0xff] %vm1176, %v4127
      %4140 = vst.msk [vmem:[#allocation3 + $0x48] sm:$0xff] %vm1176, %v4128
      %4141 = vst.msk [vmem:[#allocation3 + $0x50] sm:$0xff] %vm1176, %v4129
      %4142 = vst.msk [vmem:[#allocation3 + $0x58] sm:$0x1] %vm1188, %v4130
      %v4143 = vld [vmem:[#allocation3] sm:$0xff]
      %v4144 = vld [vmem:[#allocation3 + $0x8] sm:$0xff]
      %v4145 = vld [vmem:[#allocation3 + $0x10] sm:$0xff]
      %v4146 = vld [vmem:[#allocation3 + $0x18] sm:$0xff]
      %v4147 = vld [vmem:[#allocation3 + $0x20] sm:$0xff]
      %v4148 = vld [vmem:[#allocation3 + $0x28] sm:$0xff]
      %v4149 = vld [vmem:[#allocation3 + $0x30] sm:$0xff]
      %v4150 = vld [vmem:[#allocation3 + $0x38] sm:$0xff]
      %v4151 = vld [vmem:[#allocation3 + $0x40] sm:$0xff]
      %v4152 = vld [vmem:[#allocation3 + $0x48] sm:$0xff]
      %v4153 = vld [vmem:[#allocation3 + $0x50] sm:$0xff]
      %v4154 = vld [vmem:[#allocation3 + $0x58] sm:$0x1]
      %v4155 = vld [vmem:[%s4] sm:$0x1]
      %v4157 = vlaneseq
      %v4158 = vshrl.u32 %v4157, 7
      %v4159 = vsub.s32 0, %v4158
      %v4160 = vrot.slane %v4155, %v4159
      %v4162 = vadd.f32 %v4143, %v4160
      %v4163 = vadd.f32 %v4144, %v4160
      %v4164 = vadd.f32 %v4145, %v4160
      %v4165 = vadd.f32 %v4146, %v4160
      %v4166 = vadd.f32 %v4147, %v4160
      %v4167 = vadd.f32 %v4148, %v4160
      %v4168 = vadd.f32 %v4149, %v4160
      %v4169 = vadd.f32 %v4150, %v4160
      %v4170 = vadd.f32 %v4151, %v4160
      %v4171 = vadd.f32 %v4152, %v4160
      %v4172 = vadd.f32 %v4153, %v4160
      %v4173 = vadd.f32 %v4154, %v4160
      %v4174 = vmax.f32 %v4162, 0.0
      %v4175 = vmax.f32 %v4163, 0.0
      %v4176 = vmax.f32 %v4164, 0.0
      %v4177 = vmax.f32 %v4165, 0.0
      %v4178 = vmax.f32 %v4166, 0.0
      %v4179 = vmax.f32 %v4167, 0.0
      %v4180 = vmax.f32 %v4168, 0.0
      %v4181 = vmax.f32 %v4169, 0.0
      %v4182 = vmax.f32 %v4170, 0.0
      %v4183 = vmax.f32 %v4171, 0.0
      %v4184 = vmax.f32 %v4172, 0.0
      %v4185 = vmax.f32 %v4173, 0.0
      %v4186 = vpack.c.bf16 %v4175, %v4174
      %v4187 = vpack.c.bf16 %v4177, %v4176
      %v4188 = vpack.c.bf16 %v4179, %v4178
      %v4189 = vpack.c.bf16 %v4181, %v4180
      %v4190 = vpack.c.bf16 %v4183, %v4182
      %v4191 = vpack.c.bf16 %v4185, %v4184
      %v4198 = vunpack.c.l.b16 %v4186
      %v4199 = vunpack.c.h.b16 %v4186
      %v4200 = vunpack.c.l.b16 %v4187
      %v4201 = vunpack.c.h.b16 %v4187
      %v4202 = vunpack.c.l.b16 %v4188
      %v4203 = vunpack.c.h.b16 %v4188
      %v4204 = vunpack.c.l.b16 %v4189
      %v4205 = vunpack.c.h.b16 %v4189
      %v4206 = vunpack.c.l.b16 %v4190
      %v4207 = vunpack.c.h.b16 %v4190
      %v4208 = vunpack.c.l.b16 %v4191
      %v4209 = vunpack.c.h.b16 %v4191
      %v4210 = vpack.c.b16 %v4198, %v4198
      %v4211 = vpack.c.b16 %v4199, %v4199
      %v4212 = vpack.c.b16 %v4200, %v4200
      %v4213 = vpack.c.b16 %v4201, %v4201
      %v4214 = vpack.c.b16 %v4202, %v4202
      %v4215 = vpack.c.b16 %v4203, %v4203
      %v4216 = vpack.c.b16 %v4204, %v4204
      %v4217 = vpack.c.b16 %v4205, %v4205
      %v4218 = vpack.c.b16 %v4206, %v4206
      %v4219 = vpack.c.b16 %v4207, %v4207
      %v4220 = vpack.c.b16 %v4208, %v4208
      %v4221 = vpack.c.b16 %v4209, %v4209
      %vm4234 = vcmask 519168
      %4235 = vst.msk [vmem:[#allocation4] sm:$0xf] %vm4234, %v4210
      %4236 = vst.msk [vmem:[#allocation4 + $0x4] sm:$0xf] %vm4234, %v4211
      %4237 = vst.msk [vmem:[#allocation4 + $0x8] sm:$0xf] %vm4234, %v4212
      %4238 = vst.msk [vmem:[#allocation4 + $0xc] sm:$0xf] %vm4234, %v4213
      %4239 = vst.msk [vmem:[#allocation4 + $0x10] sm:$0xf] %vm4234, %v4214
      %4240 = vst.msk [vmem:[#allocation4 + $0x14] sm:$0xf] %vm4234, %v4215
      %4241 = vst.msk [vmem:[#allocation4 + $0x18] sm:$0xf] %vm4234, %v4216
      %4242 = vst.msk [vmem:[#allocation4 + $0x1c] sm:$0xf] %vm4234, %v4217
      %4243 = vst.msk [vmem:[#allocation4 + $0x20] sm:$0xf] %vm4234, %v4218
      %4244 = vst.msk [vmem:[#allocation4 + $0x24] sm:$0xf] %vm4234, %v4219
      %4245 = vst.msk [vmem:[#allocation4 + $0x28] sm:$0xf] %vm4234, %v4220
      %vm4246 = vcmask 516096
      %vm4247 = vmand %vm4246, %vm3171
      %v4248 = vld [vmem:[#allocation4 + $0x2c] sm:$0x1]
      %v4249 = vsel %vm4247, %v4221, %v4248
      %4250 = vst [vmem:[#allocation4 + $0x2c] sm:$0x1] %v4249
      %v4251 = vld [vmem:[#allocation4] sm:$0xf]
      %v4252 = vld [vmem:[#allocation4 + $0x4] sm:$0xf]
      %v4253 = vld [vmem:[#allocation4 + $0x8] sm:$0xf]
      %v4254 = vld [vmem:[#allocation4 + $0xc] sm:$0xf]
      %v4255 = vld [vmem:[#allocation4 + $0x10] sm:$0xf]
      %v4256 = vld [vmem:[#allocation4 + $0x14] sm:$0xf]
      %v4257 = vld [vmem:[#allocation4 + $0x18] sm:$0xf]
      %v4258 = vld [vmem:[#allocation4 + $0x1c] sm:$0xf]
      %v4259 = vld [vmem:[#allocation4 + $0x20] sm:$0x3]
      %v4260 = vld [vmem:[%s5] sm:$0xf]
      %v4261 = vld [vmem:[%s5 + $0x4] sm:$0xf]
      %v4262 = vld [vmem:[%s5 + $0x8] sm:$0xf]
      %v4263 = vld [vmem:[%s5 + $0xc] sm:$0xf]
      %v4264 = vld [vmem:[%s5 + $0x10] sm:$0xf]
      %v4265 = vld [vmem:[%s5 + $0x14] sm:$0xf]
      %v4266 = vld [vmem:[%s5 + $0x18] sm:$0xf]
      %v4267 = vld [vmem:[%s5 + $0x1c] sm:$0xf]
      %v4277 = vunpack.c.l.b16 %v4251
      %v4278 = vunpack.c.l.b16 %v4252
      %v4279 = vunpack.c.l.b16 %v4253
      %v4280 = vunpack.c.l.b16 %v4254
      %v4281 = vunpack.c.l.b16 %v4255
      %v4282 = vunpack.c.l.b16 %v4256
      %v4283 = vunpack.c.l.b16 %v4257
      %v4284 = vunpack.c.l.b16 %v4258
      %v4285 = vunpack.c.l.b16 %v4259
      %v4286 = vpack.c.b16 %v4278, %v4277
      %v4287 = vpack.c.b16 %v4280, %v4279
      %v4288 = vpack.c.b16 %v4282, %v4281
      %v4289 = vpack.c.b16 %v4284, %v4283
      %v4290 = vpack.c.b16 %v4285, %v4285
      %v4299 = vunpack.c.l.b16 %v4260
      %v4300 = vunpack.c.l.b16 %v4261
      %v4301 = vunpack.c.l.b16 %v4262
      %v4302 = vunpack.c.l.b16 %v4263
      %v4303 = vunpack.c.l.b16 %v4264
      %v4304 = vunpack.c.l.b16 %v4265
      %v4305 = vunpack.c.l.b16 %v4266
      %v4306 = vunpack.c.l.b16 %v4267
      %v4307 = vpack.c.b16 %v4300, %v4299
      %v4308 = vpack.c.b16 %v4302, %v4301
      %v4309 = vpack.c.b16 %v4304, %v4303
      %v4310 = vpack.c.b16 %v4306, %v4305
      %v4316 = vsel %vm1176, %v4286, 0
      %v4319 = vsel %vm1176, %v4287, 0
      %v4322 = vsel %vm1176, %v4288, 0
      %v4325 = vsel %vm1176, %v4289, 0
      %v4328 = vsel %vm1176, %v4290, 0
      %4330 = vmatprep.subr.bf16.mxu0 0
      %4331 = vmatpush1.bf16.msra.mxu0 %v4307
      %4332 = vmatprep.subr.bf16.mxu0 0
      %4333 = vmatpush1.bf16.msra.mxu0 %v4308
      %4334 = vmatprep.subr.bf16.mxu0 0
      %4335 = vmatpush1.bf16.msra.mxu0 %v4309
      %4336 = vmatprep.subr.bf16.mxu0 0
      %4337 = vmatpush1.bf16.msra.mxu0 %v4310
      %4338 = vmatprep.subr.bf16.mxu0 0
      %4339 = vmatpush1.bf16.msra.mxu0 0
      %4340 = vmatprep.subr.bf16.mxu0 0
      %4341 = vmatpush1.bf16.msra.mxu0 0
      %4342 = vmatprep.subr.bf16.mxu0 0
      %4343 = vmatpush1.bf16.msra.mxu0 0
      %4344 = vmatprep.subr.bf16.mxu0 0
      %4345 = vmatpush1.bf16.msra.mxu0 0
      %4346 = vmatprep.subr.bf16.mxu0 0
      %4347 = vmatpush1.bf16.msra.mxu0 0
      %4348 = vmatprep.subr.bf16.mxu0 0
      %4349 = vmatpush1.bf16.msra.mxu0 0
      %4350 = vmatprep.subr.bf16.mxu0 0
      %4351 = vmatpush1.bf16.msra.mxu0 0
      %4352 = vmatprep.subr.bf16.mxu0 0
      %4353 = vmatpush1.bf16.msra.mxu0 0
      %4354 = vmatprep.subr.bf16.mxu0 0
      %4355 = vmatpush1.bf16.msra.mxu0 0
      %4356 = vmatprep.subr.bf16.mxu0 0
      %4357 = vmatpush1.bf16.msra.mxu0 0
      %4358 = vmatprep.subr.bf16.mxu0 0
      %4359 = vmatpush1.bf16.msra.mxu0 0
      %4360 = vmatprep.subr.bf16.mxu0 0
      %4361 = vmatpush1.bf16.msra.mxu0 0
      %4362 = vmatprep.mubr.bf16.mxu0 0
      %4363 = vmatmul.mubr.bf16.gmra.mrb[0].mxu0 %v4316
      %v4364 = vpop.f32.mrb[0].mxu0
      %v4365 = vadd.f32 0.0, %v4364
      %v4366 = vpop.f32.mrb[0].mxu0
      %v4367 = vpop.f32.mrb[0].mxu0
      %v4368 = vadd.f32 0.0, %v4367
      %v4369 = vpop.f32.mrb[0].mxu0
      %4370 = vmatprep.mubr.bf16.mxu0 0
      %4371 = vmatmul.mubr.bf16.gmra.mrb[0].mxu0 %v4319
      %v4372 = vpop.f32.mrb[0].mxu0
      %v4373 = vadd.f32 0.0, %v4372
      %v4374 = vpop.f32.mrb[0].mxu0
      %v4375 = vpop.f32.mrb[0].mxu0
      %v4376 = vadd.f32 0.0, %v4375
      %v4377 = vpop.f32.mrb[0].mxu0
      %4378 = vmatprep.mubr.bf16.mxu0 0
      %4379 = vmatmul.mubr.bf16.gmra.mrb[0].mxu0 %v4322
      %v4380 = vpop.f32.mrb[0].mxu0
      %v4381 = vadd.f32 0.0, %v4380
      %v4382 = vpop.f32.mrb[0].mxu0
      %v4383 = vpop.f32.mrb[0].mxu0
      %v4384 = vadd.f32 0.0, %v4383
      %v4385 = vpop.f32.mrb[0].mxu0
      %4386 = vmatprep.mubr.bf16.mxu0 0
      %4387 = vmatmul.mubr.bf16.gmra.mrb[0].mxu0 %v4325
      %v4388 = vpop.f32.mrb[0].mxu0
      %v4389 = vadd.f32 0.0, %v4388
      %v4390 = vpop.f32.mrb[0].mxu0
      %v4391 = vpop.f32.mrb[0].mxu0
      %v4392 = vadd.f32 0.0, %v4391
      %v4393 = vpop.f32.mrb[0].mxu0
      %4394 = vmatprep.mubr.bf16.mxu0 0
      %4395 = vmatmul.mubr.bf16.gmra.mrb[0].mxu0 %v4328
      %v4396 = vpop.f32.mrb[0].mxu0
      %v4397 = vadd.f32 0.0, %v4396
      %v4398 = vpop.f32.mrb[0].mxu0
      %v4399 = vpop.f32.mrb[0].mxu0
      %v4400 = vpop.f32.mrb[0].mxu0
      %4401 = vdwg.mxu0
      %4402 = vst.msk [vmem:[#allocation5] sm:$0xff] %vm1176, %v4365
      %4403 = vst.msk [vmem:[#allocation5 + $0x8] sm:$0xff] %vm1176, %v4368
      %4404 = vst.msk [vmem:[#allocation5 + $0x10] sm:$0xff] %vm1176, %v4373
      %4405 = vst.msk [vmem:[#allocation5 + $0x18] sm:$0xff] %vm1176, %v4376
      %4406 = vst.msk [vmem:[#allocation5 + $0x20] sm:$0xff] %vm1176, %v4381
      %4407 = vst.msk [vmem:[#allocation5 + $0x28] sm:$0xff] %vm1176, %v4384
      %4408 = vst.msk [vmem:[#allocation5 + $0x30] sm:$0xff] %vm1176, %v4389
      %4409 = vst.msk [vmem:[#allocation5 + $0x38] sm:$0xff] %vm1176, %v4392
      %vm4410 = vcmask 518144
      %4411 = vst.msk [vmem:[#allocation5 + $0x40] sm:$0x7] %vm4410, %v4397
      %v4412 = vld [vmem:[#allocation4] sm:$0xf]
      %v4413 = vld [vmem:[#allocation4 + $0x4] sm:$0xf]
      %v4414 = vld [vmem:[#allocation4 + $0x8] sm:$0xf]
      %v4415 = vld [vmem:[#allocation4 + $0xc] sm:$0xf]
      %v4416 = vld [vmem:[#allocation4 + $0x10] sm:$0xf]
      %v4417 = vld [vmem:[#allocation4 + $0x14] sm:$0xf]
      %v4418 = vld [vmem:[#allocation4 + $0x18] sm:$0xf]
      %v4419 = vld [vmem:[#allocation4 + $0x1c] sm:$0xf]
      %v4420 = vld [vmem:[#allocation4 + $0x20] sm:$0x3]
      %v4421 = vld [vmem:[%s5 + $0x20] sm:$0xf]
      %v4422 = vld [vmem:[%s5 + $0x24] sm:$0xf]
      %v4423 = vld [vmem:[%s5 + $0x28] sm:$0xf]
      %v4424 = vld [vmem:[%s5 + $0x2c] sm:$0xf]
      %v4425 = vld [vmem:[%s5 + $0x30] sm:$0xf]
      %v4426 = vld [vmem:[%s5 + $0x34] sm:$0xf]
      %v4427 = vld [vmem:[%s5 + $0x38] sm:$0xf]
      %v4428 = vld [vmem:[%s5 + $0x3c] sm:$0xf]
      %v4438 = vunpack.c.l.b16 %v4412
      %v4439 = vunpack.c.l.b16 %v4413
      %v4440 = vunpack.c.l.b16 %v4414
      %v4441 = vunpack.c.l.b16 %v4415
      %v4442 = vunpack.c.l.b16 %v4416
      %v4443 = vunpack.c.l.b16 %v4417
      %v4444 = vunpack.c.l.b16 %v4418
      %v4445 = vunpack.c.l.b16 %v4419
      %v4446 = vunpack.c.l.b16 %v4420
      %v4447 = vpack.c.b16 %v4439, %v4438
      %v4448 = vpack.c.b16 %v4441, %v4440
      %v4449 = vpack.c.b16 %v4443, %v4442
      %v4450 = vpack.c.b16 %v4445, %v4444
      %v4451 = vpack.c.b16 %v4446, %v4446
      %v4453 = vshrl.u32 %v4447, 16
      %v4455 = vshll.u32 %v4447, 16
      %v4457 = vrot.slane %v4455, 1
      %v4458 = vor.u32 %v4453, %v4457
      %v4460 = vshll.u32 %v4448, 16
      %v4462 = vrot.slane %v4460, 1
      %v4463 = vsel %vm1375, %v4458, %v4462
      %v4464 = vshrl.u32 %v4448, 16
      %v4466 = vor.u32 %v4464, %v4462
      %v4468 = vshll.u32 %v4449, 16
      %v4470 = vrot.slane %v4468, 1
      %v4471 = vsel %vm1375, %v4466, %v4470
      %v4472 = vshrl.u32 %v4449, 16
      %v4474 = vor.u32 %v4472, %v4470
      %v4476 = vshll.u32 %v4450, 16
      %v4478 = vrot.slane %v4476, 1
      %v4479 = vsel %vm1375, %v4474, %v4478
      %v4480 = vshrl.u32 %v4450, 16
      %v4482 = vor.u32 %v4480, %v4478
      %v4484 = vshll.u32 %v4451, 16
      %v4486 = vrot.slane %v4484, 1
      %v4487 = vsel %vm1375, %v4482, %v4486
      %v4488 = vshrl.u32 %v4451, 16
      %v4490 = vor.u32 %v4488, %v4486
      %v4499 = vunpack.c.l.b16 %v4421
      %v4500 = vunpack.c.l.b16 %v4422
      %v4501 = vunpack.c.l.b16 %v4423
      %v4502 = vunpack.c.l.b16 %v4424
      %v4503 = vunpack.c.l.b16 %v4425
      %v4504 = vunpack.c.l.b16 %v4426
      %v4505 = vunpack.c.l.b16 %v4427
      %v4506 = vunpack.c.l.b16 %v4428
      %v4507 = vpack.c.b16 %v4500, %v4499
      %v4508 = vpack.c.b16 %v4502, %v4501
      %v4509 = vpack.c.b16 %v4504, %v4503
      %v4510 = vpack.c.b16 %v4506, %v4505
      %v4516 = vsel %vm1176, %v4463, 0
      %v4519 = vsel %vm1176, %v4471, 0
      %v4522 = vsel %vm1176, %v4479, 0
      %v4525 = vsel %vm1176, %v4487, 0
      %v4528 = vsel %vm1176, %v4490, 0
      %4530 = vmatprep.subr.bf16.mxu0 0
      %4531 = vmatpush1.bf16.msra.mxu0 %v4507
      %4532 = vmatprep.subr.bf16.mxu0 0
      %4533 = vmatpush1.bf16.msra.mxu0 %v4508
      %4534 = vmatprep.subr.bf16.mxu0 0
      %4535 = vmatpush1.bf16.msra.mxu0 %v4509
      %4536 = vmatprep.subr.bf16.mxu0 0
      %4537 = vmatpush1.bf16.msra.mxu0 %v4510
      %4538 = vmatprep.subr.bf16.mxu0 0
      %4539 = vmatpush1.bf16.msra.mxu0 0
      %4540 = vmatprep.subr.bf16.mxu0 0
      %4541 = vmatpush1.bf16.msra.mxu0 0
      %4542 = vmatprep.subr.bf16.mxu0 0
      %4543 = vmatpush1.bf16.msra.mxu0 0
      %4544 = vmatprep.subr.bf16.mxu0 0
      %4545 = vmatpush1.bf16.msra.mxu0 0
      %4546 = vmatprep.subr.bf16.mxu0 0
      %4547 = vmatpush1.bf16.msra.mxu0 0
      %4548 = vmatprep.subr.bf16.mxu0 0
      %4549 = vmatpush1.bf16.msra.mxu0 0
      %4550 = vmatprep.subr.bf16.mxu0 0
      %4551 = vmatpush1.bf16.msra.mxu0 0
      %4552 = vmatprep.subr.bf16.mxu0 0
      %4553 = vmatpush1.bf16.msra.mxu0 0
      %4554 = vmatprep.subr.bf16.mxu0 0
      %4555 = vmatpush1.bf16.msra.mxu0 0
      %4556 = vmatprep.subr.bf16.mxu0 0
      %4557 = vmatpush1.bf16.msra.mxu0 0
      %4558 = vmatprep.subr.bf16.mxu0 0
      %4559 = vmatpush1.bf16.msra.mxu0 0
      %4560 = vmatprep.subr.bf16.mxu0 0
      %4561 = vmatpush1.bf16.msra.mxu0 0
      %4562 = vmatprep.mubr.bf16.mxu0 0
      %4563 = vmatmul.mubr.bf16.gmra.mrb[0].mxu0 %v4516
      %v4564 = vpop.f32.mrb[0].mxu0
      %v4565 = vadd.f32 0.0, %v4564
      %v4566 = vpop.f32.mrb[0].mxu0
      %v4567 = vpop.f32.mrb[0].mxu0
      %v4568 = vadd.f32 0.0, %v4567
      %v4569 = vpop.f32.mrb[0].mxu0
      %4570 = vmatprep.mubr.bf16.mxu0 0
      %4571 = vmatmul.mubr.bf16.gmra.mrb[0].mxu0 %v4519
      %v4572 = vpop.f32.mrb[0].mxu0
      %v4573 = vadd.f32 0.0, %v4572
      %v4574 = vpop.f32.mrb[0].mxu0
      %v4575 = vpop.f32.mrb[0].mxu0
      %v4576 = vadd.f32 0.0, %v4575
      %v4577 = vpop.f32.mrb[0].mxu0
      %4578 = vmatprep.mubr.bf16.mxu0 0
      %4579 = vmatmul.mubr.bf16.gmra.mrb[0].mxu0 %v4522
      %v4580 = vpop.f32.mrb[0].mxu0
      %v4581 = vadd.f32 0.0, %v4580
      %v4582 = vpop.f32.mrb[0].mxu0
      %v4583 = vpop.f32.mrb[0].mxu0
      %v4584 = vadd.f32 0.0, %v4583
      %v4585 = vpop.f32.mrb[0].mxu0
      %4586 = vmatprep.mubr.bf16.mxu0 0
      %4587 = vmatmul.mubr.bf16.gmra.mrb[0].mxu0 %v4525
      %v4588 = vpop.f32.mrb[0].mxu0
      %v4589 = vadd.f32 0.0, %v4588
      %v4590 = vpop.f32.mrb[0].mxu0
      %v4591 = vpop.f32.mrb[0].mxu0
      %v4592 = vadd.f32 0.0, %v4591
      %v4593 = vpop.f32.mrb[0].mxu0
      %4594 = vmatprep.mubr.bf16.mxu0 0
      %4595 = vmatmul.mubr.bf16.gmra.mrb[0].mxu0 %v4528
      %v4596 = vpop.f32.mrb[0].mxu0
      %v4597 = vadd.f32 0.0, %v4596
      %v4598 = vpop.f32.mrb[0].mxu0
      %v4599 = vpop.f32.mrb[0].mxu0
      %v4600 = vpop.f32.mrb[0].mxu0
      %4601 = vdwg.mxu0
      %v4602 = vld [vmem:[#allocation5] sm:$0xff]
      %v4603 = vld [vmem:[#allocation5 + $0x8] sm:$0xff]
      %v4604 = vld [vmem:[#allocation5 + $0x10] sm:$0xff]
      %v4605 = vld [vmem:[#allocation5 + $0x18] sm:$0xff]
      %v4606 = vld [vmem:[#allocation5 + $0x20] sm:$0xff]
      %v4607 = vld [vmem:[#allocation5 + $0x28] sm:$0xff]
      %v4608 = vld [vmem:[#allocation5 + $0x30] sm:$0xff]
      %v4609 = vld [vmem:[#allocation5 + $0x38] sm:$0xff]
      %v4610 = vld [vmem:[#allocation5 + $0x40] sm:$0x7]
      %v4611 = vadd.f32 %v4602, %v4565
      %v4612 = vadd.f32 %v4603, %v4568
      %v4613 = vadd.f32 %v4604, %v4573
      %v4614 = vadd.f32 %v4605, %v4576
      %v4615 = vadd.f32 %v4606, %v4581
      %v4616 = vadd.f32 %v4607, %v4584
      %v4617 = vadd.f32 %v4608, %v4589
      %v4618 = vadd.f32 %v4609, %v4592
      %v4619 = vadd.f32 %v4610, %v4597
      %4620 = vst.msk [vmem:[#allocation5] sm:$0xff] %vm1176, %v4611
      %4621 = vst.msk [vmem:[#allocation5 + $0x8] sm:$0xff] %vm1176, %v4612
      %4622 = vst.msk [vmem:[#allocation5 + $0x10] sm:$0xff] %vm1176, %v4613
      %4623 = vst.msk [vmem:[#allocation5 + $0x18] sm:$0xff] %vm1176, %v4614
      %4624 = vst.msk [vmem:[#allocation5 + $0x20] sm:$0xff] %vm1176, %v4615
      %4625 = vst.msk [vmem:[#allocation5 + $0x28] sm:$0xff] %vm1176, %v4616
      %4626 = vst.msk [vmem:[#allocation5 + $0x30] sm:$0xff] %vm1176, %v4617
      %4627 = vst.msk [vmem:[#allocation5 + $0x38] sm:$0xff] %vm1176, %v4618
      %4628 = vst.msk [vmem:[#allocation5 + $0x40] sm:$0x7] %vm4410, %v4619
      %v4629 = vld [vmem:[#allocation4] sm:$0xe]
      %v4630 = vld [vmem:[#allocation4 + $0x4] sm:$0xf]
      %v4631 = vld [vmem:[#allocation4 + $0x8] sm:$0xf]
      %v4632 = vld [vmem:[#allocation4 + $0xc] sm:$0xf]
      %v4633 = vld [vmem:[#allocation4 + $0x10] sm:$0xf]
      %v4634 = vld [vmem:[#allocation4 + $0x14] sm:$0xf]
      %v4635 = vld [vmem:[#allocation4 + $0x18] sm:$0xf]
      %v4636 = vld [vmem:[#allocation4 + $0x1c] sm:$0xf]
      %v4637 = vld [vmem:[#allocation4 + $0x20] sm:$0x7]
      %v4638 = vld [vmem:[%s5 + $0x40] sm:$0xf]
      %v4639 = vld [vmem:[%s5 + $0x44] sm:$0xf]
      %v4640 = vld [vmem:[%s5 + $0x48] sm:$0xf]
      %v4641 = vld [vmem:[%s5 + $0x4c] sm:$0xf]
      %v4642 = vld [vmem:[%s5 + $0x50] sm:$0xf]
      %v4643 = vld [vmem:[%s5 + $0x54] sm:$0xf]
      %v4644 = vld [vmem:[%s5 + $0x58] sm:$0xf]
      %v4645 = vld [vmem:[%s5 + $0x5c] sm:$0xf]
      %v4655 = vunpack.c.l.b16 %v4629
      %v4656 = vunpack.c.l.b16 %v4630
      %v4657 = vunpack.c.l.b16 %v4631
      %v4658 = vunpack.c.l.b16 %v4632
      %v4659 = vunpack.c.l.b16 %v4633
      %v4660 = vunpack.c.l.b16 %v4634
      %v4661 = vunpack.c.l.b16 %v4635
      %v4662 = vunpack.c.l.b16 %v4636
      %v4663 = vunpack.c.l.b16 %v4637
      %v4664 = vpack.c.b16 %v4656, %v4655
      %v4665 = vpack.c.b16 %v4658, %v4657
      %v4666 = vpack.c.b16 %v4660, %v4659
      %v4667 = vpack.c.b16 %v4662, %v4661
      %v4668 = vpack.c.b16 %v4663, %v4663
      %v4669 = vrot.slane %v4664, 1
      %v4670 = vrot.slane %v4665, 1
      %v4671 = vsel %vm3387, %v4669, %v4670
      %v4672 = vrot.slane %v4666, 1
      %v4673 = vsel %vm3387, %v4670, %v4672
      %v4674 = vrot.slane %v4667, 1
      %v4675 = vsel %vm3387, %v4672, %v4674
      %v4676 = vrot.slane %v4668, 1
      %v4677 = vsel %vm3387, %v4674, %v4676
      %v4686 = vunpack.c.l.b16 %v4638
      %v4687 = vunpack.c.l.b16 %v4639
      %v4688 = vunpack.c.l.b16 %v4640
      %v4689 = vunpack.c.l.b16 %v4641
      %v4690 = vunpack.c.l.b16 %v4642
      %v4691 = vunpack.c.l.b16 %v4643
      %v4692 = vunpack.c.l.b16 %v4644
      %v4693 = vunpack.c.l.b16 %v4645
      %v4694 = vpack.c.b16 %v4687, %v4686
      %v4695 = vpack.c.b16 %v4689, %v4688
      %v4696 = vpack.c.b16 %v4691, %v4690
      %v4697 = vpack.c.b16 %v4693, %v4692
      %v4703 = vsel %vm1176, %v4671, 0
      %v4706 = vsel %vm1176, %v4673, 0
      %v4709 = vsel %vm1176, %v4675, 0
      %v4712 = vsel %vm1176, %v4677, 0
      %v4715 = vsel %vm1176, %v4676, 0
      %4717 = vmatprep.subr.bf16.mxu0 0
      %4718 = vmatpush1.bf16.msra.mxu0 %v4694
      %4719 = vmatprep.subr.bf16.mxu0 0
      %4720 = vmatpush1.bf16.msra.mxu0 %v4695
      %4721 = vmatprep.subr.bf16.mxu0 0
      %4722 = vmatpush1.bf16.msra.mxu0 %v4696
      %4723 = vmatprep.subr.bf16.mxu0 0
      %4724 = vmatpush1.bf16.msra.mxu0 %v4697
      %4725 = vmatprep.subr.bf16.mxu0 0
      %4726 = vmatpush1.bf16.msra.mxu0 0
      %4727 = vmatprep.subr.bf16.mxu0 0
      %4728 = vmatpush1.bf16.msra.mxu0 0
      %4729 = vmatprep.subr.bf16.mxu0 0
      %4730 = vmatpush1.bf16.msra.mxu0 0
      %4731 = vmatprep.subr.bf16.mxu0 0
      %4732 = vmatpush1.bf16.msra.mxu0 0
      %4733 = vmatprep.subr.bf16.mxu0 0
      %4734 = vmatpush1.bf16.msra.mxu0 0
      %4735 = vmatprep.subr.bf16.mxu0 0
      %4736 = vmatpush1.bf16.msra.mxu0 0
      %4737 = vmatprep.subr.bf16.mxu0 0
      %4738 = vmatpush1.bf16.msra.mxu0 0
      %4739 = vmatprep.subr.bf16.mxu0 0
      %4740 = vmatpush1.bf16.msra.mxu0 0
      %4741 = vmatprep.subr.bf16.mxu0 0
      %4742 = vmatpush1.bf16.msra.mxu0 0
      %4743 = vmatprep.subr.bf16.mxu0 0
      %4744 = vmatpush1.bf16.msra.mxu0 0
      %4745 = vmatprep.subr.bf16.mxu0 0
      %4746 = vmatpush1.bf16.msra.mxu0 0
      %4747 = vmatprep.subr.bf16.mxu0 0
      %4748 = vmatpush1.bf16.msra.mxu0 0
      %4749 = vmatprep.mubr.bf16.mxu0 0
      %4750 = vmatmul.mubr.bf16.gmra.mrb[0].mxu0 %v4703
      %v4751 = vpop.f32.mrb[0].mxu0
      %v4752 = vadd.f32 0.0, %v4751
      %v4753 = vpop.f32.mrb[0].mxu0
      %v4754 = vpop.f32.mrb[0].mxu0
      %v4755 = vadd.f32 0.0, %v4754
      %v4756 = vpop.f32.mrb[0].mxu0
      %4757 = vmatprep.mubr.bf16.mxu0 0
      %4758 = vmatmul.mubr.bf16.gmra.mrb[0].mxu0 %v4706
      %v4759 = vpop.f32.mrb[0].mxu0
      %v4760 = vadd.f32 0.0, %v4759
      %v4761 = vpop.f32.mrb[0].mxu0
      %v4762 = vpop.f32.mrb[0].mxu0
      %v4763 = vadd.f32 0.0, %v4762
      %v4764 = vpop.f32.mrb[0].mxu0
      %4765 = vmatprep.mubr.bf16.mxu0 0
      %4766 = vmatmul.mubr.bf16.gmra.mrb[0].mxu0 %v4709
      %v4767 = vpop.f32.mrb[0].mxu0
      %v4768 = vadd.f32 0.0, %v4767
      %v4769 = vpop.f32.mrb[0].mxu0
      %v4770 = vpop.f32.mrb[0].mxu0
      %v4771 = vadd.f32 0.0, %v4770
      %v4772 = vpop.f32.mrb[0].mxu0
      %4773 = vmatprep.mubr.bf16.mxu0 0
      %4774 = vmatmul.mubr.bf16.gmra.mrb[0].mxu0 %v4712
      %v4775 = vpop.f32.mrb[0].mxu0
      %v4776 = vadd.f32 0.0, %v4775
      %v4777 = vpop.f32.mrb[0].mxu0
      %v4778 = vpop.f32.mrb[0].mxu0
      %v4779 = vadd.f32 0.0, %v4778
      %v4780 = vpop.f32.mrb[0].mxu0
      %4781 = vmatprep.mubr.bf16.mxu0 0
      %4782 = vmatmul.mubr.bf16.gmra.mrb[0].mxu0 %v4715
      %v4783 = vpop.f32.mrb[0].mxu0
      %v4784 = vadd.f32 0.0, %v4783
      %v4785 = vpop.f32.mrb[0].mxu0
      %v4786 = vpop.f32.mrb[0].mxu0
      %v4787 = vpop.f32.mrb[0].mxu0
      %4788 = vdwg.mxu0
      %v4789 = vld [vmem:[#allocation5] sm:$0xff]
      %v4790 = vld [vmem:[#allocation5 + $0x8] sm:$0xff]
      %v4791 = vld [vmem:[#allocation5 + $0x10] sm:$0xff]
      %v4792 = vld [vmem:[#allocation5 + $0x18] sm:$0xff]
      %v4793 = vld [vmem:[#allocation5 + $0x20] sm:$0xff]
      %v4794 = vld [vmem:[#allocation5 + $0x28] sm:$0xff]
      %v4795 = vld [vmem:[#allocation5 + $0x30] sm:$0xff]
      %v4796 = vld [vmem:[#allocation5 + $0x38] sm:$0xff]
      %v4797 = vld [vmem:[#allocation5 + $0x40] sm:$0x7]
      %v4798 = vadd.f32 %v4789, %v4752
      %v4799 = vadd.f32 %v4790, %v4755
      %v4800 = vadd.f32 %v4791, %v4760
      %v4801 = vadd.f32 %v4792, %v4763
      %v4802 = vadd.f32 %v4793, %v4768
      %v4803 = vadd.f32 %v4794, %v4771
      %v4804 = vadd.f32 %v4795, %v4776
      %v4805 = vadd.f32 %v4796, %v4779
      %v4806 = vadd.f32 %v4797, %v4784
      %4807 = vst.msk [vmem:[#allocation5] sm:$0xff] %vm1176, %v4798
      %4808 = vst.msk [vmem:[#allocation5 + $0x8] sm:$0xff] %vm1176, %v4799
      %4809 = vst.msk [vmem:[#allocation5 + $0x10] sm:$0xff] %vm1176, %v4800
      %4810 = vst.msk [vmem:[#allocation5 + $0x18] sm:$0xff] %vm1176, %v4801
      %4811 = vst.msk [vmem:[#allocation5 + $0x20] sm:$0xff] %vm1176, %v4802
      %4812 = vst.msk [vmem:[#allocation5 + $0x28] sm:$0xff] %vm1176, %v4803
      %4813 = vst.msk [vmem:[#allocation5 + $0x30] sm:$0xff] %vm1176, %v4804
      %4814 = vst.msk [vmem:[#allocation5 + $0x38] sm:$0xff] %vm1176, %v4805
      %4815 = vst.msk [vmem:[#allocation5 + $0x40] sm:$0x7] %vm4410, %v4806
      %v4816 = vld [vmem:[#allocation4 + $0x4] sm:$0xe]
      %v4817 = vld [vmem:[#allocation4 + $0x8] sm:$0xf]
      %v4818 = vld [vmem:[#allocation4 + $0xc] sm:$0xf]
      %v4819 = vld [vmem:[#allocation4 + $0x10] sm:$0xf]
      %v4820 = vld [vmem:[#allocation4 + $0x14] sm:$0xf]
      %v4821 = vld [vmem:[#allocation4 + $0x18] sm:$0xf]
      %v4822 = vld [vmem:[#allocation4 + $0x1c] sm:$0xf]
      %v4823 = vld [vmem:[#allocation4 + $0x20] sm:$0xf]
      %v4824 = vld [vmem:[#allocation4 + $0x24] sm:$0x7]
      %v4825 = vld [vmem:[%s5 + $0x60] sm:$0xf]
      %v4826 = vld [vmem:[%s5 + $0x64] sm:$0xf]
      %v4827 = vld [vmem:[%s5 + $0x68] sm:$0xf]
      %v4828 = vld [vmem:[%s5 + $0x6c] sm:$0xf]
      %v4829 = vld [vmem:[%s5 + $0x70] sm:$0xf]
      %v4830 = vld [vmem:[%s5 + $0x74] sm:$0xf]
      %v4831 = vld [vmem:[%s5 + $0x78] sm:$0xf]
      %v4832 = vld [vmem:[%s5 + $0x7c] sm:$0xf]
      %v4842 = vunpack.c.l.b16 %v4816
      %v4843 = vunpack.c.l.b16 %v4817
      %v4844 = vunpack.c.l.b16 %v4818
      %v4845 = vunpack.c.l.b16 %v4819
      %v4846 = vunpack.c.l.b16 %v4820
      %v4847 = vunpack.c.l.b16 %v4821
      %v4848 = vunpack.c.l.b16 %v4822
      %v4849 = vunpack.c.l.b16 %v4823
      %v4850 = vunpack.c.l.b16 %v4824
      %v4851 = vpack.c.b16 %v4843, %v4842
      %v4852 = vpack.c.b16 %v4845, %v4844
      %v4853 = vpack.c.b16 %v4847, %v4846
      %v4854 = vpack.c.b16 %v4849, %v4848
      %v4855 = vpack.c.b16 %v4850, %v4850
      %v4856 = vrot.slane %v4851, 1
      %v4857 = vrot.slane %v4852, 1
      %v4858 = vsel %vm3387, %v4856, %v4857
      %v4859 = vrot.slane %v4853, 1
      %v4860 = vsel %vm3387, %v4857, %v4859
      %v4861 = vrot.slane %v4854, 1
      %v4862 = vsel %vm3387, %v4859, %v4861
      %v4863 = vrot.slane %v4855, 1
      %v4864 = vsel %vm3387, %v4861, %v4863
      %v4873 = vunpack.c.l.b16 %v4825
      %v4874 = vunpack.c.l.b16 %v4826
      %v4875 = vunpack.c.l.b16 %v4827
      %v4876 = vunpack.c.l.b16 %v4828
      %v4877 = vunpack.c.l.b16 %v4829
      %v4878 = vunpack.c.l.b16 %v4830
      %v4879 = vunpack.c.l.b16 %v4831
      %v4880 = vunpack.c.l.b16 %v4832
      %v4881 = vpack.c.b16 %v4874, %v4873
      %v4882 = vpack.c.b16 %v4876, %v4875
      %v4883 = vpack.c.b16 %v4878, %v4877
      %v4884 = vpack.c.b16 %v4880, %v4879
      %v4890 = vsel %vm1176, %v4858, 0
      %v4893 = vsel %vm1176, %v4860, 0
      %v4896 = vsel %vm1176, %v4862, 0
      %v4899 = vsel %vm1176, %v4864, 0
      %v4902 = vsel %vm1176, %v4863, 0
      %4904 = vmatprep.subr.bf16.mxu0 0
      %4905 = vmatpush1.bf16.msra.mxu0 %v4881
      %4906 = vmatprep.subr.bf16.mxu0 0
      %4907 = vmatpush1.bf16.msra.mxu0 %v4882
      %4908 = vmatprep.subr.bf16.mxu0 0
      %4909 = vmatpush1.bf16.msra.mxu0 %v4883
      %4910 = vmatprep.subr.bf16.mxu0 0
      %4911 = vmatpush1.bf16.msra.mxu0 %v4884
      %4912 = vmatprep.subr.bf16.mxu0 0
      %4913 = vmatpush1.bf16.msra.mxu0 0
      %4914 = vmatprep.subr.bf16.mxu0 0
      %4915 = vmatpush1.bf16.msra.mxu0 0
      %4916 = vmatprep.subr.bf16.mxu0 0
      %4917 = vmatpush1.bf16.msra.mxu0 0
      %4918 = vmatprep.subr.bf16.mxu0 0
      %4919 = vmatpush1.bf16.msra.mxu0 0
      %4920 = vmatprep.subr.bf16.mxu0 0
      %4921 = vmatpush1.bf16.msra.mxu0 0
      %4922 = vmatprep.subr.bf16.mxu0 0
      %4923 = vmatpush1.bf16.msra.mxu0 0
      %4924 = vmatprep.subr.bf16.mxu0 0
      %4925 = vmatpush1.bf16.msra.mxu0 0
      %4926 = vmatprep.subr.bf16.mxu0 0
      %4927 = vmatpush1.bf16.msra.mxu0 0
      %4928 = vmatprep.subr.bf16.mxu0 0
      %4929 = vmatpush1.bf16.msra.mxu0 0
      %4930 = vmatprep.subr.bf16.mxu0 0
      %4931 = vmatpush1.bf16.msra.mxu0 0
      %4932 = vmatprep.subr.bf16.mxu0 0
      %4933 = vmatpush1.bf16.msra.mxu0 0
      %4934 = vmatprep.subr.bf16.mxu0 0
      %4935 = vmatpush1.bf16.msra.mxu0 0
      %4936 = vmatprep.mubr.bf16.mxu0 0
      %4937 = vmatmul.mubr.bf16.gmra.mrb[0].mxu0 %v4890
      %v4938 = vpop.f32.mrb[0].mxu0
      %v4939 = vadd.f32 0.0, %v4938
      %v4940 = vpop.f32.mrb[0].mxu0
      %v4941 = vpop.f32.mrb[0].mxu0
      %v4942 = vadd.f32 0.0, %v4941
      %v4943 = vpop.f32.mrb[0].mxu0
      %4944 = vmatprep.mubr.bf16.mxu0 0
      %4945 = vmatmul.mubr.bf16.gmra.mrb[0].mxu0 %v4893
      %v4946 = vpop.f32.mrb[0].mxu0
      %v4947 = vadd.f32 0.0, %v4946
      %v4948 = vpop.f32.mrb[0].mxu0
      %v4949 = vpop.f32.mrb[0].mxu0
      %v4950 = vadd.f32 0.0, %v4949
      %v4951 = vpop.f32.mrb[0].mxu0
      %4952 = vmatprep.mubr.bf16.mxu0 0
      %4953 = vmatmul.mubr.bf16.gmra.mrb[0].mxu0 %v4896
      %v4954 = vpop.f32.mrb[0].mxu0
      %v4955 = vadd.f32 0.0, %v4954
      %v4956 = vpop.f32.mrb[0].mxu0
      %v4957 = vpop.f32.mrb[0].mxu0
      %v4958 = vadd.f32 0.0, %v4957
      %v4959 = vpop.f32.mrb[0].mxu0
      %4960 = vmatprep.mubr.bf16.mxu0 0
      %4961 = vmatmul.mubr.bf16.gmra.mrb[0].mxu0 %v4899
      %v4962 = vpop.f32.mrb[0].mxu0
      %v4963 = vadd.f32 0.0, %v4962
      %v4964 = vpop.f32.mrb[0].mxu0
      %v4965 = vpop.f32.mrb[0].mxu0
      %v4966 = vadd.f32 0.0, %v4965
      %v4967 = vpop.f32.mrb[0].mxu0
      %4968 = vmatprep.mubr.bf16.mxu0 0
      %4969 = vmatmul.mubr.bf16.gmra.mrb[0].mxu0 %v4902
      %v4970 = vpop.f32.mrb[0].mxu0
      %v4971 = vadd.f32 0.0, %v4970
      %v4972 = vpop.f32.mrb[0].mxu0
      %v4973 = vpop.f32.mrb[0].mxu0
      %v4974 = vpop.f32.mrb[0].mxu0
      %4975 = vdwg.mxu0
      %v4976 = vld [vmem:[#allocation5] sm:$0xff]
      %v4977 = vld [vmem:[#allocation5 + $0x8] sm:$0xff]
      %v4978 = vld [vmem:[#allocation5 + $0x10] sm:$0xff]
      %v4979 = vld [vmem:[#allocation5 + $0x18] sm:$0xff]
      %v4980 = vld [vmem:[#allocation5 + $0x20] sm:$0xff]
      %v4981 = vld [vmem:[#allocation5 + $0x28] sm:$0xff]
      %v4982 = vld [vmem:[#allocation5 + $0x30] sm:$0xff]
      %v4983 = vld [vmem:[#allocation5 + $0x38] sm:$0xff]
      %v4984 = vld [vmem:[#allocation5 + $0x40] sm:$0x7]
      %v4985 = vadd.f32 %v4976, %v4939
      %v4986 = vadd.f32 %v4977, %v4942
      %v4987 = vadd.f32 %v4978, %v4947
      %v4988 = vadd.f32 %v4979, %v4950
      %v4989 = vadd.f32 %v4980, %v4955
      %v4990 = vadd.f32 %v4981, %v4958
      %v4991 = vadd.f32 %v4982, %v4963
      %v4992 = vadd.f32 %v4983, %v4966
      %v4993 = vadd.f32 %v4984, %v4971
      %4994 = vst.msk [vmem:[#allocation5] sm:$0xff] %vm1176, %v4985
      %4995 = vst.msk [vmem:[#allocation5 + $0x8] sm:$0xff] %vm1176, %v4986
      %4996 = vst.msk [vmem:[#allocation5 + $0x10] sm:$0xff] %vm1176, %v4987
      %4997 = vst.msk [vmem:[#allocation5 + $0x18] sm:$0xff] %vm1176, %v4988
      %4998 = vst.msk [vmem:[#allocation5 + $0x20] sm:$0xff] %vm1176, %v4989
      %4999 = vst.msk [vmem:[#allocation5 + $0x28] sm:$0xff] %vm1176, %v4990
      %5000 = vst.msk [vmem:[#allocation5 + $0x30] sm:$0xff] %vm1176, %v4991
      %5001 = vst.msk [vmem:[#allocation5 + $0x38] sm:$0xff] %vm1176, %v4992
      %5002 = vst.msk [vmem:[#allocation5 + $0x40] sm:$0x7] %vm4410, %v4993
      %v5003 = vld [vmem:[#allocation4 + $0x4] sm:$0xe]
      %v5004 = vld [vmem:[#allocation4 + $0x8] sm:$0xf]
      %v5005 = vld [vmem:[#allocation4 + $0xc] sm:$0xf]
      %v5006 = vld [vmem:[#allocation4 + $0x10] sm:$0xf]
      %v5007 = vld [vmem:[#allocation4 + $0x14] sm:$0xf]
      %v5008 = vld [vmem:[#allocation4 + $0x18] sm:$0xf]
      %v5009 = vld [vmem:[#allocation4 + $0x1c] sm:$0xf]
      %v5010 = vld [vmem:[#allocation4 + $0x20] sm:$0xf]
      %v5011 = vld [vmem:[#allocation4 + $0x24] sm:$0x7]
      %v5012 = vld [vmem:[%s5 + $0x80] sm:$0xf]
      %v5013 = vld [vmem:[%s5 + $0x84] sm:$0xf]
      %v5014 = vld [vmem:[%s5 + $0x88] sm:$0xf]
      %v5015 = vld [vmem:[%s5 + $0x8c] sm:$0xf]
      %v5016 = vld [vmem:[%s5 + $0x90] sm:$0xf]
      %v5017 = vld [vmem:[%s5 + $0x94] sm:$0xf]
      %v5018 = vld [vmem:[%s5 + $0x98] sm:$0xf]
      %v5019 = vld [vmem:[%s5 + $0x9c] sm:$0xf]
      %v5029 = vunpack.c.l.b16 %v5003
      %v5030 = vunpack.c.l.b16 %v5004
      %v5031 = vunpack.c.l.b16 %v5005
      %v5032 = vunpack.c.l.b16 %v5006
      %v5033 = vunpack.c.l.b16 %v5007
      %v5034 = vunpack.c.l.b16 %v5008
      %v5035 = vunpack.c.l.b16 %v5009
      %v5036 = vunpack.c.l.b16 %v5010
      %v5037 = vunpack.c.l.b16 %v5011
      %v5038 = vpack.c.b16 %v5030, %v5029
      %v5039 = vpack.c.b16 %v5032, %v5031
      %v5040 = vpack.c.b16 %v5034, %v5033
      %v5041 = vpack.c.b16 %v5036, %v5035
      %v5042 = vpack.c.b16 %v5037, %v5037
      %v5044 = vshrl.u32 %v5038, 16
      %v5046 = vrot.slane %v5044, 1
      %v5047 = vshll.u32 %v5038, 16
      %v5049 = vrot.slane %v5047, 2
      %v5050 = vor.u32 %v5046, %v5049
      %v5052 = vshrl.u32 %v5039, 16
      %v5054 = vrot.slane %v5052, 1
      %v5055 = vshll.u32 %v5039, 16
      %v5057 = vrot.slane %v5055, 2
      %v5058 = vor.u32 %v5054, %v5057
      %v5059 = vsel %vm3731, %v5050, %v5058
      %v5061 = vshrl.u32 %v5040, 16
      %v5063 = vrot.slane %v5061, 1
      %v5064 = vshll.u32 %v5040, 16
      %v5066 = vrot.slane %v5064, 2
      %v5067 = vor.u32 %v5063, %v5066
      %v5068 = vsel %vm3731, %v5058, %v5067
      %v5070 = vshrl.u32 %v5041, 16
      %v5072 = vrot.slane %v5070, 1
      %v5073 = vshll.u32 %v5041, 16
      %v5075 = vrot.slane %v5073, 2
      %v5076 = vor.u32 %v5072, %v5075
      %v5077 = vsel %vm3731, %v5067, %v5076
      %v5079 = vshrl.u32 %v5042, 16
      %v5081 = vrot.slane %v5079, 1
      %v5082 = vshll.u32 %v5042, 16
      %v5084 = vrot.slane %v5082, 2
      %v5085 = vor.u32 %v5081, %v5084
      %v5086 = vsel %vm3731, %v5076, %v5085
      %v5095 = vunpack.c.l.b16 %v5012
      %v5096 = vunpack.c.l.b16 %v5013
      %v5097 = vunpack.c.l.b16 %v5014
      %v5098 = vunpack.c.l.b16 %v5015
      %v5099 = vunpack.c.l.b16 %v5016
      %v5100 = vunpack.c.l.b16 %v5017
      %v5101 = vunpack.c.l.b16 %v5018
      %v5102 = vunpack.c.l.b16 %v5019
      %v5103 = vpack.c.b16 %v5096, %v5095
      %v5104 = vpack.c.b16 %v5098, %v5097
      %v5105 = vpack.c.b16 %v5100, %v5099
      %v5106 = vpack.c.b16 %v5102, %v5101
      %v5112 = vsel %vm1176, %v5059, 0
      %v5115 = vsel %vm1176, %v5068, 0
      %v5118 = vsel %vm1176, %v5077, 0
      %v5121 = vsel %vm1176, %v5086, 0
      %v5124 = vsel %vm1176, %v5085, 0
      %5126 = vmatprep.subr.bf16.mxu0 0
      %5127 = vmatpush1.bf16.msra.mxu0 %v5103
      %5128 = vmatprep.subr.bf16.mxu0 0
      %5129 = vmatpush1.bf16.msra.mxu0 %v5104
      %5130 = vmatprep.subr.bf16.mxu0 0
      %5131 = vmatpush1.bf16.msra.mxu0 %v5105
      %5132 = vmatprep.subr.bf16.mxu0 0
      %5133 = vmatpush1.bf16.msra.mxu0 %v5106
      %5134 = vmatprep.subr.bf16.mxu0 0
      %5135 = vmatpush1.bf16.msra.mxu0 0
      %5136 = vmatprep.subr.bf16.mxu0 0
      %5137 = vmatpush1.bf16.msra.mxu0 0
      %5138 = vmatprep.subr.bf16.mxu0 0
      %5139 = vmatpush1.bf16.msra.mxu0 0
      %5140 = vmatprep.subr.bf16.mxu0 0
      %5141 = vmatpush1.bf16.msra.mxu0 0
      %5142 = vmatprep.subr.bf16.mxu0 0
      %5143 = vmatpush1.bf16.msra.mxu0 0
      %5144 = vmatprep.subr.bf16.mxu0 0
      %5145 = vmatpush1.bf16.msra.mxu0 0
      %5146 = vmatprep.subr.bf16.mxu0 0
      %5147 = vmatpush1.bf16.msra.mxu0 0
      %5148 = vmatprep.subr.bf16.mxu0 0
      %5149 = vmatpush1.bf16.msra.mxu0 0
      %5150 = vmatprep.subr.bf16.mxu0 0
      %5151 = vmatpush1.bf16.msra.mxu0 0
      %5152 = vmatprep.subr.bf16.mxu0 0
      %5153 = vmatpush1.bf16.msra.mxu0 0
      %5154 = vmatprep.subr.bf16.mxu0 0
      %5155 = vmatpush1.bf16.msra.mxu0 0
      %5156 = vmatprep.subr.bf16.mxu0 0
      %5157 = vmatpush1.bf16.msra.mxu0 0
      %5158 = vmatprep.mubr.bf16.mxu0 0
      %5159 = vmatmul.mubr.bf16.gmra.mrb[0].mxu0 %v5112
      %v5160 = vpop.f32.mrb[0].mxu0
      %v5161 = vadd.f32 0.0, %v5160
      %v5162 = vpop.f32.mrb[0].mxu0
      %v5163 = vpop.f32.mrb[0].mxu0
      %v5164 = vadd.f32 0.0, %v5163
      %v5165 = vpop.f32.mrb[0].mxu0
      %5166 = vmatprep.mubr.bf16.mxu0 0
      %5167 = vmatmul.mubr.bf16.gmra.mrb[0].mxu0 %v5115
      %v5168 = vpop.f32.mrb[0].mxu0
      %v5169 = vadd.f32 0.0, %v5168
      %v5170 = vpop.f32.mrb[0].mxu0
      %v5171 = vpop.f32.mrb[0].mxu0
      %v5172 = vadd.f32 0.0, %v5171
      %v5173 = vpop.f32.mrb[0].mxu0
      %5174 = vmatprep.mubr.bf16.mxu0 0
      %5175 = vmatmul.mubr.bf16.gmra.mrb[0].mxu0 %v5118
      %v5176 = vpop.f32.mrb[0].mxu0
      %v5177 = vadd.f32 0.0, %v5176
      %v5178 = vpop.f32.mrb[0].mxu0
      %v5179 = vpop.f32.mrb[0].mxu0
      %v5180 = vadd.f32 0.0, %v5179
      %v5181 = vpop.f32.mrb[0].mxu0
      %5182 = vmatprep.mubr.bf16.mxu0 0
      %5183 = vmatmul.mubr.bf16.gmra.mrb[0].mxu0 %v5121
      %v5184 = vpop.f32.mrb[0].mxu0
      %v5185 = vadd.f32 0.0, %v5184
      %v5186 = vpop.f32.mrb[0].mxu0
      %v5187 = vpop.f32.mrb[0].mxu0
      %v5188 = vadd.f32 0.0, %v5187
      %v5189 = vpop.f32.mrb[0].mxu0
      %5190 = vmatprep.mubr.bf16.mxu0 0
      %5191 = vmatmul.mubr.bf16.gmra.mrb[0].mxu0 %v5124
      %v5192 = vpop.f32.mrb[0].mxu0
      %v5193 = vadd.f32 0.0, %v5192
      %v5194 = vpop.f32.mrb[0].mxu0
      %v5195 = vpop.f32.mrb[0].mxu0
      %v5196 = vpop.f32.mrb[0].mxu0
      %5197 = vdwg.mxu0
      %v5198 = vld [vmem:[#allocation5] sm:$0xff]
      %v5199 = vld [vmem:[#allocation5 + $0x8] sm:$0xff]
      %v5200 = vld [vmem:[#allocation5 + $0x10] sm:$0xff]
      %v5201 = vld [vmem:[#allocation5 + $0x18] sm:$0xff]
      %v5202 = vld [vmem:[#allocation5 + $0x20] sm:$0xff]
      %v5203 = vld [vmem:[#allocation5 + $0x28] sm:$0xff]
      %v5204 = vld [vmem:[#allocation5 + $0x30] sm:$0xff]
      %v5205 = vld [vmem:[#allocation5 + $0x38] sm:$0xff]
      %v5206 = vld [vmem:[#allocation5 + $0x40] sm:$0x7]
      %v5207 = vadd.f32 %v5198, %v5161
      %v5208 = vadd.f32 %v5199, %v5164
      %v5209 = vadd.f32 %v5200, %v5169
      %v5210 = vadd.f32 %v5201, %v5172
      %v5211 = vadd.f32 %v5202, %v5177
      %v5212 = vadd.f32 %v5203, %v5180
      %v5213 = vadd.f32 %v5204, %v5185
      %v5214 = vadd.f32 %v5205, %v5188
      %v5215 = vadd.f32 %v5206, %v5193
      %5216 = vst.msk [vmem:[#allocation5] sm:$0xff] %vm1176, %v5207
      %5217 = vst.msk [vmem:[#allocation5 + $0x8] sm:$0xff] %vm1176, %v5208
      %5218 = vst.msk [vmem:[#allocation5 + $0x10] sm:$0xff] %vm1176, %v5209
      %5219 = vst.msk [vmem:[#allocation5 + $0x18] sm:$0xff] %vm1176, %v5210
      %5220 = vst.msk [vmem:[#allocation5 + $0x20] sm:$0xff] %vm1176, %v5211
      %5221 = vst.msk [vmem:[#allocation5 + $0x28] sm:$0xff] %vm1176, %v5212
      %5222 = vst.msk [vmem:[#allocation5 + $0x30] sm:$0xff] %vm1176, %v5213
      %5223 = vst.msk [vmem:[#allocation5 + $0x38] sm:$0xff] %vm1176, %v5214
      %5224 = vst.msk [vmem:[#allocation5 + $0x40] sm:$0x7] %vm4410, %v5215
      %v5225 = vld [vmem:[#allocation4 + $0x4] sm:$0xc]
      %v5226 = vld [vmem:[#allocation4 + $0x8] sm:$0xf]
      %v5227 = vld [vmem:[#allocation4 + $0xc] sm:$0xf]
      %v5228 = vld [vmem:[#allocation4 + $0x10] sm:$0xf]
      %v5229 = vld [vmem:[#allocation4 + $0x14] sm:$0xf]
      %v5230 = vld [vmem:[#allocation4 + $0x18] sm:$0xf]
      %v5231 = vld [vmem:[#allocation4 + $0x1c] sm:$0xf]
      %v5232 = vld [vmem:[#allocation4 + $0x20] sm:$0xf]
      %v5233 = vld [vmem:[#allocation4 + $0x24] sm:$0xf]
      %v5234 = vld [vmem:[%s5 + $0xa0] sm:$0xf]
      %v5235 = vld [vmem:[%s5 + $0xa4] sm:$0xf]
      %v5236 = vld [vmem:[%s5 + $0xa8] sm:$0xf]
      %v5237 = vld [vmem:[%s5 + $0xac] sm:$0xf]
      %v5238 = vld [vmem:[%s5 + $0xb0] sm:$0xf]
      %v5239 = vld [vmem:[%s5 + $0xb4] sm:$0xf]
      %v5240 = vld [vmem:[%s5 + $0xb8] sm:$0xf]
      %v5241 = vld [vmem:[%s5 + $0xbc] sm:$0xf]
      %v5251 = vunpack.c.l.b16 %v5225
      %v5252 = vunpack.c.l.b16 %v5226
      %v5253 = vunpack.c.l.b16 %v5227
      %v5254 = vunpack.c.l.b16 %v5228
      %v5255 = vunpack.c.l.b16 %v5229
      %v5256 = vunpack.c.l.b16 %v5230
      %v5257 = vunpack.c.l.b16 %v5231
      %v5258 = vunpack.c.l.b16 %v5232
      %v5259 = vunpack.c.l.b16 %v5233
      %v5260 = vpack.c.b16 %v5252, %v5251
      %v5261 = vpack.c.b16 %v5254, %v5253
      %v5262 = vpack.c.b16 %v5256, %v5255
      %v5263 = vpack.c.b16 %v5258, %v5257
      %v5264 = vpack.c.b16 %v5259, %v5259
      %v5265 = vrot.slane %v5260, 2
      %v5266 = vrot.slane %v5261, 2
      %v5267 = vsel %vm1206, %v5265, %v5266
      %v5268 = vrot.slane %v5262, 2
      %v5269 = vsel %vm1206, %v5266, %v5268
      %v5270 = vrot.slane %v5263, 2
      %v5271 = vsel %vm1206, %v5268, %v5270
      %v5272 = vrot.slane %v5264, 2
      %v5273 = vsel %vm1206, %v5270, %v5272
      %v5282 = vunpack.c.l.b16 %v5234
      %v5283 = vunpack.c.l.b16 %v5235
      %v5284 = vunpack.c.l.b16 %v5236
      %v5285 = vunpack.c.l.b16 %v5237
      %v5286 = vunpack.c.l.b16 %v5238
      %v5287 = vunpack.c.l.b16 %v5239
      %v5288 = vunpack.c.l.b16 %v5240
      %v5289 = vunpack.c.l.b16 %v5241
      %v5290 = vpack.c.b16 %v5283, %v5282
      %v5291 = vpack.c.b16 %v5285, %v5284
      %v5292 = vpack.c.b16 %v5287, %v5286
      %v5293 = vpack.c.b16 %v5289, %v5288
      %v5299 = vsel %vm1176, %v5267, 0
      %v5302 = vsel %vm1176, %v5269, 0
      %v5305 = vsel %vm1176, %v5271, 0
      %v5308 = vsel %vm1176, %v5273, 0
      %v5311 = vsel %vm1176, %v5272, 0
      %5313 = vmatprep.subr.bf16.mxu0 0
      %5314 = vmatpush1.bf16.msra.mxu0 %v5290
      %5315 = vmatprep.subr.bf16.mxu0 0
      %5316 = vmatpush1.bf16.msra.mxu0 %v5291
      %5317 = vmatprep.subr.bf16.mxu0 0
      %5318 = vmatpush1.bf16.msra.mxu0 %v5292
      %5319 = vmatprep.subr.bf16.mxu0 0
      %5320 = vmatpush1.bf16.msra.mxu0 %v5293
      %5321 = vmatprep.subr.bf16.mxu0 0
      %5322 = vmatpush1.bf16.msra.mxu0 0
      %5323 = vmatprep.subr.bf16.mxu0 0
      %5324 = vmatpush1.bf16.msra.mxu0 0
      %5325 = vmatprep.subr.bf16.mxu0 0
      %5326 = vmatpush1.bf16.msra.mxu0 0
      %5327 = vmatprep.subr.bf16.mxu0 0
      %5328 = vmatpush1.bf16.msra.mxu0 0
      %5329 = vmatprep.subr.bf16.mxu0 0
      %5330 = vmatpush1.bf16.msra.mxu0 0
      %5331 = vmatprep.subr.bf16.mxu0 0
      %5332 = vmatpush1.bf16.msra.mxu0 0
      %5333 = vmatprep.subr.bf16.mxu0 0
      %5334 = vmatpush1.bf16.msra.mxu0 0
      %5335 = vmatprep.subr.bf16.mxu0 0
      %5336 = vmatpush1.bf16.msra.mxu0 0
      %5337 = vmatprep.subr.bf16.mxu0 0
      %5338 = vmatpush1.bf16.msra.mxu0 0
      %5339 = vmatprep.subr.bf16.mxu0 0
      %5340 = vmatpush1.bf16.msra.mxu0 0
      %5341 = vmatprep.subr.bf16.mxu0 0
      %5342 = vmatpush1.bf16.msra.mxu0 0
      %5343 = vmatprep.subr.bf16.mxu0 0
      %5344 = vmatpush1.bf16.msra.mxu0 0
      %5345 = vmatprep.mubr.bf16.mxu0 0
      %5346 = vmatmul.mubr.bf16.gmra.mrb[0].mxu0 %v5299
      %v5347 = vpop.f32.mrb[0].mxu0
      %v5348 = vadd.f32 0.0, %v5347
      %v5349 = vpop.f32.mrb[0].mxu0
      %v5350 = vpop.f32.mrb[0].mxu0
      %v5351 = vadd.f32 0.0, %v5350
      %v5352 = vpop.f32.mrb[0].mxu0
      %5353 = vmatprep.mubr.bf16.mxu0 0
      %5354 = vmatmul.mubr.bf16.gmra.mrb[0].mxu0 %v5302
      %v5355 = vpop.f32.mrb[0].mxu0
      %v5356 = vadd.f32 0.0, %v5355
      %v5357 = vpop.f32.mrb[0].mxu0
      %v5358 = vpop.f32.mrb[0].mxu0
      %v5359 = vadd.f32 0.0, %v5358
      %v5360 = vpop.f32.mrb[0].mxu0
      %5361 = vmatprep.mubr.bf16.mxu0 0
      %5362 = vmatmul.mubr.bf16.gmra.mrb[0].mxu0 %v5305
      %v5363 = vpop.f32.mrb[0].mxu0
      %v5364 = vadd.f32 0.0, %v5363
      %v5365 = vpop.f32.mrb[0].mxu0
      %v5366 = vpop.f32.mrb[0].mxu0
      %v5367 = vadd.f32 0.0, %v5366
      %v5368 = vpop.f32.mrb[0].mxu0
      %5369 = vmatprep.mubr.bf16.mxu0 0
      %5370 = vmatmul.mubr.bf16.gmra.mrb[0].mxu0 %v5308
      %v5371 = vpop.f32.mrb[0].mxu0
      %v5372 = vadd.f32 0.0, %v5371
      %v5373 = vpop.f32.mrb[0].mxu0
      %v5374 = vpop.f32.mrb[0].mxu0
      %v5375 = vadd.f32 0.0, %v5374
      %v5376 = vpop.f32.mrb[0].mxu0
      %5377 = vmatprep.mubr.bf16.mxu0 0
      %5378 = vmatmul.mubr.bf16.gmra.mrb[0].mxu0 %v5311
      %v5379 = vpop.f32.mrb[0].mxu0
      %v5380 = vadd.f32 0.0, %v5379
      %v5381 = vpop.f32.mrb[0].mxu0
      %v5382 = vpop.f32.mrb[0].mxu0
      %v5383 = vpop.f32.mrb[0].mxu0
      %5384 = vdwg.mxu0
      %v5385 = vld [vmem:[#allocation5] sm:$0xff]
      %v5386 = vld [vmem:[#allocation5 + $0x8] sm:$0xff]
      %v5387 = vld [vmem:[#allocation5 + $0x10] sm:$0xff]
      %v5388 = vld [vmem:[#allocation5 + $0x18] sm:$0xff]
      %v5389 = vld [vmem:[#allocation5 + $0x20] sm:$0xff]
      %v5390 = vld [vmem:[#allocation5 + $0x28] sm:$0xff]
      %v5391 = vld [vmem:[#allocation5 + $0x30] sm:$0xff]
      %v5392 = vld [vmem:[#allocation5 + $0x38] sm:$0xff]
      %v5393 = vld [vmem:[#allocation5 + $0x40] sm:$0x7]
      %v5394 = vadd.f32 %v5385, %v5348
      %v5395 = vadd.f32 %v5386, %v5351
      %v5396 = vadd.f32 %v5387, %v5356
      %v5397 = vadd.f32 %v5388, %v5359
      %v5398 = vadd.f32 %v5389, %v5364
      %v5399 = vadd.f32 %v5390, %v5367
      %v5400 = vadd.f32 %v5391, %v5372
      %v5401 = vadd.f32 %v5392, %v5375
      %v5402 = vadd.f32 %v5393, %v5380
      %5403 = vst.msk [vmem:[#allocation5] sm:$0xff] %vm1176, %v5394
      %5404 = vst.msk [vmem:[#allocation5 + $0x8] sm:$0xff] %vm1176, %v5395
      %5405 = vst.msk [vmem:[#allocation5 + $0x10] sm:$0xff] %vm1176, %v5396
      %5406 = vst.msk [vmem:[#allocation5 + $0x18] sm:$0xff] %vm1176, %v5397
      %5407 = vst.msk [vmem:[#allocation5 + $0x20] sm:$0xff] %vm1176, %v5398
      %5408 = vst.msk [vmem:[#allocation5 + $0x28] sm:$0xff] %vm1176, %v5399
      %5409 = vst.msk [vmem:[#allocation5 + $0x30] sm:$0xff] %vm1176, %v5400
      %5410 = vst.msk [vmem:[#allocation5 + $0x38] sm:$0xff] %vm1176, %v5401
      %5411 = vst.msk [vmem:[#allocation5 + $0x40] sm:$0x7] %vm4410, %v5402
      %v5412 = vld [vmem:[#allocation4 + $0x8] sm:$0xc]
      %v5413 = vld [vmem:[#allocation4 + $0xc] sm:$0xf]
      %v5414 = vld [vmem:[#allocation4 + $0x10] sm:$0xf]
      %v5415 = vld [vmem:[#allocation4 + $0x14] sm:$0xf]
      %v5416 = vld [vmem:[#allocation4 + $0x18] sm:$0xf]
      %v5417 = vld [vmem:[#allocation4 + $0x1c] sm:$0xf]
      %v5418 = vld [vmem:[#allocation4 + $0x20] sm:$0xf]
      %v5419 = vld [vmem:[#allocation4 + $0x24] sm:$0xf]
      %v5420 = vld [vmem:[#allocation4 + $0x28] sm:$0xf]
      %v5421 = vld [vmem:[%s5 + $0xc0] sm:$0xf]
      %v5422 = vld [vmem:[%s5 + $0xc4] sm:$0xf]
      %v5423 = vld [vmem:[%s5 + $0xc8] sm:$0xf]
      %v5424 = vld [vmem:[%s5 + $0xcc] sm:$0xf]
      %v5425 = vld [vmem:[%s5 + $0xd0] sm:$0xf]
      %v5426 = vld [vmem:[%s5 + $0xd4] sm:$0xf]
      %v5427 = vld [vmem:[%s5 + $0xd8] sm:$0xf]
      %v5428 = vld [vmem:[%s5 + $0xdc] sm:$0xf]
      %v5438 = vunpack.c.l.b16 %v5412
      %v5439 = vunpack.c.l.b16 %v5413
      %v5440 = vunpack.c.l.b16 %v5414
      %v5441 = vunpack.c.l.b16 %v5415
      %v5442 = vunpack.c.l.b16 %v5416
      %v5443 = vunpack.c.l.b16 %v5417
      %v5444 = vunpack.c.l.b16 %v5418
      %v5445 = vunpack.c.l.b16 %v5419
      %v5446 = vunpack.c.l.b16 %v5420
      %v5447 = vpack.c.b16 %v5439, %v5438
      %v5448 = vpack.c.b16 %v5441, %v5440
      %v5449 = vpack.c.b16 %v5443, %v5442
      %v5450 = vpack.c.b16 %v5445, %v5444
      %v5451 = vpack.c.b16 %v5446, %v5446
      %v5452 = vrot.slane %v5447, 2
      %v5453 = vrot.slane %v5448, 2
      %v5454 = vsel %vm1206, %v5452, %v5453
      %v5455 = vrot.slane %v5449, 2
      %v5456 = vsel %vm1206, %v5453, %v5455
      %v5457 = vrot.slane %v5450, 2
      %v5458 = vsel %vm1206, %v5455, %v5457
      %v5459 = vrot.slane %v5451, 2
      %v5460 = vsel %vm1206, %v5457, %v5459
      %v5469 = vunpack.c.l.b16 %v5421
      %v5470 = vunpack.c.l.b16 %v5422
      %v5471 = vunpack.c.l.b16 %v5423
      %v5472 = vunpack.c.l.b16 %v5424
      %v5473 = vunpack.c.l.b16 %v5425
      %v5474 = vunpack.c.l.b16 %v5426
      %v5475 = vunpack.c.l.b16 %v5427
      %v5476 = vunpack.c.l.b16 %v5428
      %v5477 = vpack.c.b16 %v5470, %v5469
      %v5478 = vpack.c.b16 %v5472, %v5471
      %v5479 = vpack.c.b16 %v5474, %v5473
      %v5480 = vpack.c.b16 %v5476, %v5475
      %v5486 = vsel %vm1176, %v5454, 0
      %v5489 = vsel %vm1176, %v5456, 0
      %v5492 = vsel %vm1176, %v5458, 0
      %v5495 = vsel %vm1176, %v5460, 0
      %v5498 = vsel %vm1176, %v5459, 0
      %5500 = vmatprep.subr.bf16.mxu0 0
      %5501 = vmatpush1.bf16.msra.mxu0 %v5477
      %5502 = vmatprep.subr.bf16.mxu0 0
      %5503 = vmatpush1.bf16.msra.mxu0 %v5478
      %5504 = vmatprep.subr.bf16.mxu0 0
      %5505 = vmatpush1.bf16.msra.mxu0 %v5479
      %5506 = vmatprep.subr.bf16.mxu0 0
      %5507 = vmatpush1.bf16.msra.mxu0 %v5480
      %5508 = vmatprep.subr.bf16.mxu0 0
      %5509 = vmatpush1.bf16.msra.mxu0 0
      %5510 = vmatprep.subr.bf16.mxu0 0
      %5511 = vmatpush1.bf16.msra.mxu0 0
      %5512 = vmatprep.subr.bf16.mxu0 0
      %5513 = vmatpush1.bf16.msra.mxu0 0
      %5514 = vmatprep.subr.bf16.mxu0 0
      %5515 = vmatpush1.bf16.msra.mxu0 0
      %5516 = vmatprep.subr.bf16.mxu0 0
      %5517 = vmatpush1.bf16.msra.mxu0 0
      %5518 = vmatprep.subr.bf16.mxu0 0
      %5519 = vmatpush1.bf16.msra.mxu0 0
      %5520 = vmatprep.subr.bf16.mxu0 0
      %5521 = vmatpush1.bf16.msra.mxu0 0
      %5522 = vmatprep.subr.bf16.mxu0 0
      %5523 = vmatpush1.bf16.msra.mxu0 0
      %5524 = vmatprep.subr.bf16.mxu0 0
      %5525 = vmatpush1.bf16.msra.mxu0 0
      %5526 = vmatprep.subr.bf16.mxu0 0
      %5527 = vmatpush1.bf16.msra.mxu0 0
      %5528 = vmatprep.subr.bf16.mxu0 0
      %5529 = vmatpush1.bf16.msra.mxu0 0
      %5530 = vmatprep.subr.bf16.mxu0 0
      %5531 = vmatpush1.bf16.msra.mxu0 0
      %5532 = vmatprep.mubr.bf16.mxu0 0
      %5533 = vmatmul.mubr.bf16.gmra.mrb[0].mxu0 %v5486
      %v5534 = vpop.f32.mrb[0].mxu0
      %v5535 = vadd.f32 0.0, %v5534
      %v5536 = vpop.f32.mrb[0].mxu0
      %v5537 = vpop.f32.mrb[0].mxu0
      %v5538 = vadd.f32 0.0, %v5537
      %v5539 = vpop.f32.mrb[0].mxu0
      %5540 = vmatprep.mubr.bf16.mxu0 0
      %5541 = vmatmul.mubr.bf16.gmra.mrb[0].mxu0 %v5489
      %v5542 = vpop.f32.mrb[0].mxu0
      %v5543 = vadd.f32 0.0, %v5542
      %v5544 = vpop.f32.mrb[0].mxu0
      %v5545 = vpop.f32.mrb[0].mxu0
      %v5546 = vadd.f32 0.0, %v5545
      %v5547 = vpop.f32.mrb[0].mxu0
      %5548 = vmatprep.mubr.bf16.mxu0 0
      %5549 = vmatmul.mubr.bf16.gmra.mrb[0].mxu0 %v5492
      %v5550 = vpop.f32.mrb[0].mxu0
      %v5551 = vadd.f32 0.0, %v5550
      %v5552 = vpop.f32.mrb[0].mxu0
      %v5553 = vpop.f32.mrb[0].mxu0
      %v5554 = vadd.f32 0.0, %v5553
      %v5555 = vpop.f32.mrb[0].mxu0
      %5556 = vmatprep.mubr.bf16.mxu0 0
      %5557 = vmatmul.mubr.bf16.gmra.mrb[0].mxu0 %v5495
      %v5558 = vpop.f32.mrb[0].mxu0
      %v5559 = vadd.f32 0.0, %v5558
      %v5560 = vpop.f32.mrb[0].mxu0
      %v5561 = vpop.f32.mrb[0].mxu0
      %v5562 = vadd.f32 0.0, %v5561
      %v5563 = vpop.f32.mrb[0].mxu0
      %5564 = vmatprep.mubr.bf16.mxu0 0
      %5565 = vmatmul.mubr.bf16.gmra.mrb[0].mxu0 %v5498
      %v5566 = vpop.f32.mrb[0].mxu0
      %v5567 = vadd.f32 0.0, %v5566
      %v5568 = vpop.f32.mrb[0].mxu0
      %v5569 = vpop.f32.mrb[0].mxu0
      %v5570 = vpop.f32.mrb[0].mxu0
      %5571 = vdwg.mxu0
      %v5572 = vld [vmem:[#allocation5] sm:$0xff]
      %v5573 = vld [vmem:[#allocation5 + $0x8] sm:$0xff]
      %v5574 = vld [vmem:[#allocation5 + $0x10] sm:$0xff]
      %v5575 = vld [vmem:[#allocation5 + $0x18] sm:$0xff]
      %v5576 = vld [vmem:[#allocation5 + $0x20] sm:$0xff]
      %v5577 = vld [vmem:[#allocation5 + $0x28] sm:$0xff]
      %v5578 = vld [vmem:[#allocation5 + $0x30] sm:$0xff]
      %v5579 = vld [vmem:[#allocation5 + $0x38] sm:$0xff]
      %v5580 = vld [vmem:[#allocation5 + $0x40] sm:$0x7]
      %v5581 = vadd.f32 %v5572, %v5535
      %v5582 = vadd.f32 %v5573, %v5538
      %v5583 = vadd.f32 %v5574, %v5543
      %v5584 = vadd.f32 %v5575, %v5546
      %v5585 = vadd.f32 %v5576, %v5551
      %v5586 = vadd.f32 %v5577, %v5554
      %v5587 = vadd.f32 %v5578, %v5559
      %v5588 = vadd.f32 %v5579, %v5562
      %v5589 = vadd.f32 %v5580, %v5567
      %5590 = vst.msk [vmem:[#allocation5] sm:$0xff] %vm1176, %v5581
      %5591 = vst.msk [vmem:[#allocation5 + $0x8] sm:$0xff] %vm1176, %v5582
      %5592 = vst.msk [vmem:[#allocation5 + $0x10] sm:$0xff] %vm1176, %v5583
      %5593 = vst.msk [vmem:[#allocation5 + $0x18] sm:$0xff] %vm1176, %v5584
      %5594 = vst.msk [vmem:[#allocation5 + $0x20] sm:$0xff] %vm1176, %v5585
      %5595 = vst.msk [vmem:[#allocation5 + $0x28] sm:$0xff] %vm1176, %v5586
      %5596 = vst.msk [vmem:[#allocation5 + $0x30] sm:$0xff] %vm1176, %v5587
      %5597 = vst.msk [vmem:[#allocation5 + $0x38] sm:$0xff] %vm1176, %v5588
      %5598 = vst.msk [vmem:[#allocation5 + $0x40] sm:$0x7] %vm4410, %v5589
      %v5599 = vld [vmem:[#allocation4 + $0x8] sm:$0xc]
      %v5600 = vld [vmem:[#allocation4 + $0xc] sm:$0xf]
      %v5601 = vld [vmem:[#allocation4 + $0x10] sm:$0xf]
      %v5602 = vld [vmem:[#allocation4 + $0x14] sm:$0xf]
      %v5603 = vld [vmem:[#allocation4 + $0x18] sm:$0xf]
      %v5604 = vld [vmem:[#allocation4 + $0x1c] sm:$0xf]
      %v5605 = vld [vmem:[#allocation4 + $0x20] sm:$0xf]
      %v5606 = vld [vmem:[#allocation4 + $0x24] sm:$0xf]
      %v5607 = vld [vmem:[#allocation4 + $0x28] sm:$0xf]
      %v5608 = vld [vmem:[%s5 + $0xe0] sm:$0xf]
      %v5609 = vld [vmem:[%s5 + $0xe4] sm:$0xf]
      %v5610 = vld [vmem:[%s5 + $0xe8] sm:$0xf]
      %v5611 = vld [vmem:[%s5 + $0xec] sm:$0xf]
      %v5612 = vld [vmem:[%s5 + $0xf0] sm:$0xf]
      %v5613 = vld [vmem:[%s5 + $0xf4] sm:$0xf]
      %v5614 = vld [vmem:[%s5 + $0xf8] sm:$0xf]
      %v5615 = vld [vmem:[%s5 + $0xfc] sm:$0xf]
      %v5625 = vunpack.c.l.b16 %v5599
      %v5626 = vunpack.c.l.b16 %v5600
      %v5627 = vunpack.c.l.b16 %v5601
      %v5628 = vunpack.c.l.b16 %v5602
      %v5629 = vunpack.c.l.b16 %v5603
      %v5630 = vunpack.c.l.b16 %v5604
      %v5631 = vunpack.c.l.b16 %v5605
      %v5632 = vunpack.c.l.b16 %v5606
      %v5633 = vunpack.c.l.b16 %v5607
      %v5634 = vpack.c.b16 %v5626, %v5625
      %v5635 = vpack.c.b16 %v5628, %v5627
      %v5636 = vpack.c.b16 %v5630, %v5629
      %v5637 = vpack.c.b16 %v5632, %v5631
      %v5638 = vpack.c.b16 %v5633, %v5633
      %v5640 = vshrl.u32 %v5634, 16
      %v5642 = vrot.slane %v5640, 2
      %v5643 = vshll.u32 %v5634, 16
      %v5645 = vrot.slane %v5643, 3
      %v5646 = vor.u32 %v5642, %v5645
      %v5648 = vshrl.u32 %v5635, 16
      %v5650 = vrot.slane %v5648, 2
      %v5651 = vshll.u32 %v5635, 16
      %v5653 = vrot.slane %v5651, 3
      %v5654 = vor.u32 %v5650, %v5653
      %v5655 = vsel %vm1580, %v5646, %v5654
      %v5657 = vshrl.u32 %v5636, 16
      %v5659 = vrot.slane %v5657, 2
      %v5660 = vshll.u32 %v5636, 16
      %v5662 = vrot.slane %v5660, 3
      %v5663 = vor.u32 %v5659, %v5662
      %v5664 = vsel %vm1580, %v5654, %v5663
      %v5666 = vshrl.u32 %v5637, 16
      %v5668 = vrot.slane %v5666, 2
      %v5669 = vshll.u32 %v5637, 16
      %v5671 = vrot.slane %v5669, 3
      %v5672 = vor.u32 %v5668, %v5671
      %v5673 = vsel %vm1580, %v5663, %v5672
      %v5675 = vshrl.u32 %v5638, 16
      %v5677 = vrot.slane %v5675, 2
      %v5678 = vshll.u32 %v5638, 16
      %v5680 = vrot.slane %v5678, 3
      %v5681 = vor.u32 %v5677, %v5680
      %v5682 = vsel %vm1580, %v5672, %v5681
      %v5691 = vunpack.c.l.b16 %v5608
      %v5692 = vunpack.c.l.b16 %v5609
      %v5693 = vunpack.c.l.b16 %v5610
      %v5694 = vunpack.c.l.b16 %v5611
      %v5695 = vunpack.c.l.b16 %v5612
      %v5696 = vunpack.c.l.b16 %v5613
      %v5697 = vunpack.c.l.b16 %v5614
      %v5698 = vunpack.c.l.b16 %v5615
      %v5699 = vpack.c.b16 %v5692, %v5691
      %v5700 = vpack.c.b16 %v5694, %v5693
      %v5701 = vpack.c.b16 %v5696, %v5695
      %v5702 = vpack.c.b16 %v5698, %v5697
      %v5708 = vsel %vm1176, %v5655, 0
      %v5711 = vsel %vm1176, %v5664, 0
      %v5714 = vsel %vm1176, %v5673, 0
      %v5717 = vsel %vm1176, %v5682, 0
      %v5720 = vsel %vm1176, %v5681, 0
      %5722 = vmatprep.subr.bf16.mxu0 0
      %5723 = vmatpush1.bf16.msra.mxu0 %v5699
      %5724 = vmatprep.subr.bf16.mxu0 0
      %5725 = vmatpush1.bf16.msra.mxu0 %v5700
      %5726 = vmatprep.subr.bf16.mxu0 0
      %5727 = vmatpush1.bf16.msra.mxu0 %v5701
      %5728 = vmatprep.subr.bf16.mxu0 0
      %5729 = vmatpush1.bf16.msra.mxu0 %v5702
      %5730 = vmatprep.subr.bf16.mxu0 0
      %5731 = vmatpush1.bf16.msra.mxu0 0
      %5732 = vmatprep.subr.bf16.mxu0 0
      %5733 = vmatpush1.bf16.msra.mxu0 0
      %5734 = vmatprep.subr.bf16.mxu0 0
      %5735 = vmatpush1.bf16.msra.mxu0 0
      %5736 = vmatprep.subr.bf16.mxu0 0
      %5737 = vmatpush1.bf16.msra.mxu0 0
      %5738 = vmatprep.subr.bf16.mxu0 0
      %5739 = vmatpush1.bf16.msra.mxu0 0
      %5740 = vmatprep.subr.bf16.mxu0 0
      %5741 = vmatpush1.bf16.msra.mxu0 0
      %5742 = vmatprep.subr.bf16.mxu0 0
      %5743 = vmatpush1.bf16.msra.mxu0 0
      %5744 = vmatprep.subr.bf16.mxu0 0
      %5745 = vmatpush1.bf16.msra.mxu0 0
      %5746 = vmatprep.subr.bf16.mxu0 0
      %5747 = vmatpush1.bf16.msra.mxu0 0
      %5748 = vmatprep.subr.bf16.mxu0 0
      %5749 = vmatpush1.bf16.msra.mxu0 0
      %5750 = vmatprep.subr.bf16.mxu0 0
      %5751 = vmatpush1.bf16.msra.mxu0 0
      %5752 = vmatprep.subr.bf16.mxu0 0
      %5753 = vmatpush1.bf16.msra.mxu0 0
      %5754 = vmatprep.mubr.bf16.mxu0 0
      %5755 = vmatmul.mubr.bf16.gmra.mrb[0].mxu0 %v5708
      %v5756 = vpop.f32.mrb[0].mxu0
      %v5757 = vadd.f32 0.0, %v5756
      %v5758 = vpop.f32.mrb[0].mxu0
      %v5759 = vpop.f32.mrb[0].mxu0
      %v5760 = vadd.f32 0.0, %v5759
      %v5761 = vpop.f32.mrb[0].mxu0
      %5762 = vmatprep.mubr.bf16.mxu0 0
      %5763 = vmatmul.mubr.bf16.gmra.mrb[0].mxu0 %v5711
      %v5764 = vpop.f32.mrb[0].mxu0
      %v5765 = vadd.f32 0.0, %v5764
      %v5766 = vpop.f32.mrb[0].mxu0
      %v5767 = vpop.f32.mrb[0].mxu0
      %v5768 = vadd.f32 0.0, %v5767
      %v5769 = vpop.f32.mrb[0].mxu0
      %5770 = vmatprep.mubr.bf16.mxu0 0
      %5771 = vmatmul.mubr.bf16.gmra.mrb[0].mxu0 %v5714
      %v5772 = vpop.f32.mrb[0].mxu0
      %v5773 = vadd.f32 0.0, %v5772
      %v5774 = vpop.f32.mrb[0].mxu0
      %v5775 = vpop.f32.mrb[0].mxu0
      %v5776 = vadd.f32 0.0, %v5775
      %v5777 = vpop.f32.mrb[0].mxu0
      %5778 = vmatprep.mubr.bf16.mxu0 0
      %5779 = vmatmul.mubr.bf16.gmra.mrb[0].mxu0 %v5717
      %v5780 = vpop.f32.mrb[0].mxu0
      %v5781 = vadd.f32 0.0, %v5780
      %v5782 = vpop.f32.mrb[0].mxu0
      %v5783 = vpop.f32.mrb[0].mxu0
      %v5784 = vadd.f32 0.0, %v5783
      %v5785 = vpop.f32.mrb[0].mxu0
      %5786 = vmatprep.mubr.bf16.mxu0 0
      %5787 = vmatmul.mubr.bf16.gmra.mrb[0].mxu0 %v5720
      %v5788 = vpop.f32.mrb[0].mxu0
      %v5789 = vadd.f32 0.0, %v5788
      %v5790 = vpop.f32.mrb[0].mxu0
      %v5791 = vpop.f32.mrb[0].mxu0
      %v5792 = vpop.f32.mrb[0].mxu0
      %5793 = vdwg.mxu0
      %v5794 = vld [vmem:[#allocation5] sm:$0xff]
      %v5795 = vld [vmem:[#allocation5 + $0x8] sm:$0xff]
      %v5796 = vld [vmem:[#allocation5 + $0x10] sm:$0xff]
      %v5797 = vld [vmem:[#allocation5 + $0x18] sm:$0xff]
      %v5798 = vld [vmem:[#allocation5 + $0x20] sm:$0xff]
      %v5799 = vld [vmem:[#allocation5 + $0x28] sm:$0xff]
      %v5800 = vld [vmem:[#allocation5 + $0x30] sm:$0xff]
      %v5801 = vld [vmem:[#allocation5 + $0x38] sm:$0xff]
      %v5802 = vld [vmem:[#allocation5 + $0x40] sm:$0x7]
      %v5803 = vadd.f32 %v5794, %v5757
      %v5804 = vadd.f32 %v5795, %v5760
      %v5805 = vadd.f32 %v5796, %v5765
      %v5806 = vadd.f32 %v5797, %v5768
      %v5807 = vadd.f32 %v5798, %v5773
      %v5808 = vadd.f32 %v5799, %v5776
      %v5809 = vadd.f32 %v5800, %v5781
      %v5810 = vadd.f32 %v5801, %v5784
      %v5811 = vadd.f32 %v5802, %v5789
      %5812 = vst.msk [vmem:[#allocation5] sm:$0xff] %vm1176, %v5803
      %5813 = vst.msk [vmem:[#allocation5 + $0x8] sm:$0xff] %vm1176, %v5804
      %5814 = vst.msk [vmem:[#allocation5 + $0x10] sm:$0xff] %vm1176, %v5805
      %5815 = vst.msk [vmem:[#allocation5 + $0x18] sm:$0xff] %vm1176, %v5806
      %5816 = vst.msk [vmem:[#allocation5 + $0x20] sm:$0xff] %vm1176, %v5807
      %5817 = vst.msk [vmem:[#allocation5 + $0x28] sm:$0xff] %vm1176, %v5808
      %5818 = vst.msk [vmem:[#allocation5 + $0x30] sm:$0xff] %vm1176, %v5809
      %5819 = vst.msk [vmem:[#allocation5 + $0x38] sm:$0xff] %vm1176, %v5810
      %5820 = vst.msk [vmem:[#allocation5 + $0x40] sm:$0x7] %vm4410, %v5811
      %v5821 = vld [vmem:[#allocation4 + $0x8] sm:$0x8]
      %v5822 = vld [vmem:[#allocation4 + $0xc] sm:$0xf]
      %v5823 = vld [vmem:[#allocation4 + $0x10] sm:$0xf]
      %v5824 = vld [vmem:[#allocation4 + $0x14] sm:$0xf]
      %v5825 = vld [vmem:[#allocation4 + $0x18] sm:$0xf]
      %v5826 = vld [vmem:[#allocation4 + $0x1c] sm:$0xf]
      %v5827 = vld [vmem:[#allocation4 + $0x20] sm:$0xf]
      %v5828 = vld [vmem:[#allocation4 + $0x24] sm:$0xf]
      %v5829 = vld [vmem:[#allocation4 + $0x28] sm:$0xf]
      %v5830 = vld [vmem:[#allocation4 + $0x2c] sm:$0x1]
      %v5831 = vld [vmem:[%s5 + $0x100] sm:$0xf]
      %v5832 = vld [vmem:[%s5 + $0x104] sm:$0xf]
      %v5833 = vld [vmem:[%s5 + $0x108] sm:$0xf]
      %v5834 = vld [vmem:[%s5 + $0x10c] sm:$0xf]
      %v5835 = vld [vmem:[%s5 + $0x110] sm:$0xf]
      %v5836 = vld [vmem:[%s5 + $0x114] sm:$0xf]
      %v5837 = vld [vmem:[%s5 + $0x118] sm:$0xf]
      %v5838 = vld [vmem:[%s5 + $0x11c] sm:$0xf]
      %v5849 = vunpack.c.l.b16 %v5821
      %v5850 = vunpack.c.l.b16 %v5822
      %v5851 = vunpack.c.l.b16 %v5823
      %v5852 = vunpack.c.l.b16 %v5824
      %v5853 = vunpack.c.l.b16 %v5825
      %v5854 = vunpack.c.l.b16 %v5826
      %v5855 = vunpack.c.l.b16 %v5827
      %v5856 = vunpack.c.l.b16 %v5828
      %v5857 = vunpack.c.l.b16 %v5829
      %v5858 = vunpack.c.l.b16 %v5830
      %v5859 = vpack.c.b16 %v5850, %v5849
      %v5860 = vpack.c.b16 %v5852, %v5851
      %v5861 = vpack.c.b16 %v5854, %v5853
      %v5862 = vpack.c.b16 %v5856, %v5855
      %v5863 = vpack.c.b16 %v5858, %v5857
      %v5864 = vrot.slane %v5859, 3
      %v5865 = vrot.slane %v5860, 3
      %v5866 = vsel %vm3562, %v5864, %v5865
      %v5867 = vrot.slane %v5861, 3
      %v5868 = vsel %vm3562, %v5865, %v5867
      %v5869 = vrot.slane %v5862, 3
      %v5870 = vsel %vm3562, %v5867, %v5869
      %v5871 = vrot.slane %v5863, 3
      %v5872 = vsel %vm3562, %v5869, %v5871
      %v5881 = vunpack.c.l.b16 %v5831
      %v5882 = vunpack.c.l.b16 %v5832
      %v5883 = vunpack.c.l.b16 %v5833
      %v5884 = vunpack.c.l.b16 %v5834
      %v5885 = vunpack.c.l.b16 %v5835
      %v5886 = vunpack.c.l.b16 %v5836
      %v5887 = vunpack.c.l.b16 %v5837
      %v5888 = vunpack.c.l.b16 %v5838
      %v5889 = vpack.c.b16 %v5882, %v5881
      %v5890 = vpack.c.b16 %v5884, %v5883
      %v5891 = vpack.c.b16 %v5886, %v5885
      %v5892 = vpack.c.b16 %v5888, %v5887
      %v5898 = vsel %vm1176, %v5866, 0
      %v5901 = vsel %vm1176, %v5868, 0
      %v5904 = vsel %vm1176, %v5870, 0
      %v5907 = vsel %vm1176, %v5872, 0
      %v5910 = vsel %vm1176, %v5871, 0
      %5912 = vmatprep.subr.bf16.mxu0 0
      %5913 = vmatpush1.bf16.msra.mxu0 %v5889
      %5914 = vmatprep.subr.bf16.mxu0 0
      %5915 = vmatpush1.bf16.msra.mxu0 %v5890
      %5916 = vmatprep.subr.bf16.mxu0 0
      %5917 = vmatpush1.bf16.msra.mxu0 %v5891
      %5918 = vmatprep.subr.bf16.mxu0 0
      %5919 = vmatpush1.bf16.msra.mxu0 %v5892
      %5920 = vmatprep.subr.bf16.mxu0 0
      %5921 = vmatpush1.bf16.msra.mxu0 0
      %5922 = vmatprep.subr.bf16.mxu0 0
      %5923 = vmatpush1.bf16.msra.mxu0 0
      %5924 = vmatprep.subr.bf16.mxu0 0
      %5925 = vmatpush1.bf16.msra.mxu0 0
      %5926 = vmatprep.subr.bf16.mxu0 0
      %5927 = vmatpush1.bf16.msra.mxu0 0
      %5928 = vmatprep.subr.bf16.mxu0 0
      %5929 = vmatpush1.bf16.msra.mxu0 0
      %5930 = vmatprep.subr.bf16.mxu0 0
      %5931 = vmatpush1.bf16.msra.mxu0 0
      %5932 = vmatprep.subr.bf16.mxu0 0
      %5933 = vmatpush1.bf16.msra.mxu0 0
      %5934 = vmatprep.subr.bf16.mxu0 0
      %5935 = vmatpush1.bf16.msra.mxu0 0
      %5936 = vmatprep.subr.bf16.mxu0 0
      %5937 = vmatpush1.bf16.msra.mxu0 0
      %5938 = vmatprep.subr.bf16.mxu0 0
      %5939 = vmatpush1.bf16.msra.mxu0 0
      %5940 = vmatprep.subr.bf16.mxu0 0
      %5941 = vmatpush1.bf16.msra.mxu0 0
      %5942 = vmatprep.subr.bf16.mxu0 0
      %5943 = vmatpush1.bf16.msra.mxu0 0
      %5944 = vmatprep.mubr.bf16.mxu0 0
      %5945 = vmatmul.mubr.bf16.gmra.mrb[0].mxu0 %v5898
      %v5946 = vpop.f32.mrb[0].mxu0
      %v5947 = vadd.f32 0.0, %v5946
      %v5948 = vpop.f32.mrb[0].mxu0
      %v5949 = vpop.f32.mrb[0].mxu0
      %v5950 = vadd.f32 0.0, %v5949
      %v5951 = vpop.f32.mrb[0].mxu0
      %5952 = vmatprep.mubr.bf16.mxu0 0
      %5953 = vmatmul.mubr.bf16.gmra.mrb[0].mxu0 %v5901
      %v5954 = vpop.f32.mrb[0].mxu0
      %v5955 = vadd.f32 0.0, %v5954
      %v5956 = vpop.f32.mrb[0].mxu0
      %v5957 = vpop.f32.mrb[0].mxu0
      %v5958 = vadd.f32 0.0, %v5957
      %v5959 = vpop.f32.mrb[0].mxu0
      %5960 = vmatprep.mubr.bf16.mxu0 0
      %5961 = vmatmul.mubr.bf16.gmra.mrb[0].mxu0 %v5904
      %v5962 = vpop.f32.mrb[0].mxu0
      %v5963 = vadd.f32 0.0, %v5962
      %v5964 = vpop.f32.mrb[0].mxu0
      %v5965 = vpop.f32.mrb[0].mxu0
      %v5966 = vadd.f32 0.0, %v5965
      %v5967 = vpop.f32.mrb[0].mxu0
      %5968 = vmatprep.mubr.bf16.mxu0 0
      %5969 = vmatmul.mubr.bf16.gmra.mrb[0].mxu0 %v5907
      %v5970 = vpop.f32.mrb[0].mxu0
      %v5971 = vadd.f32 0.0, %v5970
      %v5972 = vpop.f32.mrb[0].mxu0
      %v5973 = vpop.f32.mrb[0].mxu0
      %v5974 = vadd.f32 0.0, %v5973
      %v5975 = vpop.f32.mrb[0].mxu0
      %5976 = vmatprep.mubr.bf16.mxu0 0
      %5977 = vmatmul.mubr.bf16.gmra.mrb[0].mxu0 %v5910
      %v5978 = vpop.f32.mrb[0].mxu0
      %v5979 = vadd.f32 0.0, %v5978
      %v5980 = vpop.f32.mrb[0].mxu0
      %v5981 = vpop.f32.mrb[0].mxu0
      %v5982 = vpop.f32.mrb[0].mxu0
      %5983 = vdwg.mxu0
      %v5984 = vld [vmem:[#allocation5] sm:$0xff]
      %v5985 = vld [vmem:[#allocation5 + $0x8] sm:$0xff]
      %v5986 = vld [vmem:[#allocation5 + $0x10] sm:$0xff]
      %v5987 = vld [vmem:[#allocation5 + $0x18] sm:$0xff]
      %v5988 = vld [vmem:[#allocation5 + $0x20] sm:$0xff]
      %v5989 = vld [vmem:[#allocation5 + $0x28] sm:$0xff]
      %v5990 = vld [vmem:[#allocation5 + $0x30] sm:$0xff]
      %v5991 = vld [vmem:[#allocation5 + $0x38] sm:$0xff]
      %v5992 = vld [vmem:[#allocation5 + $0x40] sm:$0x7]
      %v5993 = vadd.f32 %v5984, %v5947
      %v5994 = vadd.f32 %v5985, %v5950
      %v5995 = vadd.f32 %v5986, %v5955
      %v5996 = vadd.f32 %v5987, %v5958
      %v5997 = vadd.f32 %v5988, %v5963
      %v5998 = vadd.f32 %v5989, %v5966
      %v5999 = vadd.f32 %v5990, %v5971
      %v6000 = vadd.f32 %v5991, %v5974
      %v6001 = vadd.f32 %v5992, %v5979
      %6002 = vst.msk [vmem:[#allocation5] sm:$0xff] %vm1176, %v5993
      %6003 = vst.msk [vmem:[#allocation5 + $0x8] sm:$0xff] %vm1176, %v5994
      %6004 = vst.msk [vmem:[#allocation5 + $0x10] sm:$0xff] %vm1176, %v5995
      %6005 = vst.msk [vmem:[#allocation5 + $0x18] sm:$0xff] %vm1176, %v5996
      %6006 = vst.msk [vmem:[#allocation5 + $0x20] sm:$0xff] %vm1176, %v5997
      %6007 = vst.msk [vmem:[#allocation5 + $0x28] sm:$0xff] %vm1176, %v5998
      %6008 = vst.msk [vmem:[#allocation5 + $0x30] sm:$0xff] %vm1176, %v5999
      %6009 = vst.msk [vmem:[#allocation5 + $0x38] sm:$0xff] %vm1176, %v6000
      %6010 = vst.msk [vmem:[#allocation5 + $0x40] sm:$0x7] %vm4410, %v6001
      %v6011 = vld [vmem:[#allocation5] sm:$0x7f]
      %v6012 = vld [vmem:[%s6] sm:$0x1]
      %v6014 = vlaneseq
      %v6015 = vshrl.u32 %v6014, 7
      %v6016 = vsub.s32 0, %v6015
      %v6017 = vrot.slane %v6012, %v6016
      %v6019 = vadd.f32 %v6011, %v6017
      %v6020 = vmax.f32 %v6019, 0.0
      %v6021 = vpack.c.bf16 %v6020, %v6020
      %vm6022 = vcmask 519168
      %vm6023 = vmand %vm6022, %vm2150
      %v6024 = vld [vmem:[%s283] sm:$0xf]
      %v6025 = vsel %vm6023, %v6021, %v6024
      %6026 = vst [vmem:[%s283] sm:$0xf] %v6025
      %v6027 = vld [vmem:[#allocation5 + $0xa] sm:$0x7f]
      %v6028 = vld [vmem:[%s6] sm:$0x1]
      %v6030 = vlaneseq
      %v6031 = vshrl.u32 %v6030, 7
      %v6032 = vsub.s32 0, %v6031
      %v6033 = vrot.slane %v6028, %v6032
      %v6035 = vadd.f32 %v6027, %v6033
      %v6036 = vmax.f32 %v6035, 0.0
      %v6037 = vpack.c.bf16 %v6036, %v6036
      %v6039 = vunpack.c.l.b16 %v6037
      %v6040 = vpack.c.b16 %v6039, %v6039
      %v6042 = vshll.u32 %v6040, 16
      %v6044 = vrot.slane %v6042, 5
      %v6045 = vshrl.u32 %v6040, 16
      %v6047 = vrot.slane %v6045, 4
      %v6048 = vor.u32 %v6047, %v6044
      %v6049 = vrot.slane %v6048, 4
      %vm6052 = vcmask 519171
      %vm6053 = vsmask.f32 7950
      %vm6054 = vmand %vm6052, %vm6053
      %v6055 = vld [vmem:[%s283] sm:$0x8]
      %v6056 = vsel %vm6054, %v6044, %v6055
      %6057 = vst [vmem:[%s283] sm:$0x8] %v6056
      %6058 = vst.msk [vmem:[%s283 + $0x4] sm:$0x7] %vm4410, %v6049
      %v6059 = vld [vmem:[#allocation5 + $0x14] sm:$0x7f]
      %v6060 = vld [vmem:[%s6] sm:$0x1]
      %v6062 = vlaneseq
      %v6063 = vshrl.u32 %v6062, 7
      %v6064 = vsub.s32 0, %v6063
      %v6065 = vrot.slane %v6060, %v6064
      %v6067 = vadd.f32 %v6059, %v6065
      %v6068 = vmax.f32 %v6067, 0.0
      %v6069 = vpack.c.bf16 %v6068, %v6068
      %v6071 = vunpack.c.l.b16 %v6069
      %v6072 = vpack.c.b16 %v6071, %v6071
      %v6073 = vrot.slane %v6072, 5
      %v6074 = vrot.slane %v6073, 4
      %vm6077 = vcmask 519171
      %6078 = vst.msk [vmem:[%s283 + $0x4] sm:$0x8] %vm6077, %v6073
      %vm6079 = vcmask 518144
      %vm6080 = vmand %vm6079, %vm2950
      %v6081 = vld [vmem:[%s283 + $0x8] sm:$0x7]
      %v6082 = vsel %vm6080, %v6074, %v6081
      %6083 = vst [vmem:[%s283 + $0x8] sm:$0x7] %v6082
      %v6084 = vld [vmem:[#allocation5 + $0x1e] sm:$0x7f]
      %v6085 = vld [vmem:[%s6] sm:$0x1]
      %v6087 = vlaneseq
      %v6088 = vshrl.u32 %v6087, 7
      %v6089 = vsub.s32 0, %v6088
      %v6090 = vrot.slane %v6085, %v6089
      %v6092 = vadd.f32 %v6084, %v6090
      %v6093 = vmax.f32 %v6092, 0.0
      %v6094 = vpack.c.bf16 %v6093, %v6093
      %v6096 = vunpack.c.l.b16 %v6094
      %v6097 = vpack.c.b16 %v6096, %v6096
      %v6099 = vshrl.u32 %v6097, 16
      %v6101 = vrot.slane %v6099, 5
      %v6102 = vshll.u32 %v6097, 16
      %v6104 = vrot.slane %v6102, 6
      %v6105 = vor.u32 %v6101, %v6104
      %v6106 = vrot.slane %v6105, 4
      %vm6109 = vcmask 519170
      %vm6110 = vsmask.f32 7946
      %vm6111 = vmand %vm6109, %vm6110
      %v6112 = vld [vmem:[%s283 + $0x8] sm:$0xc]
      %v6113 = vsel %vm6111, %v6105, %v6112
      %6114 = vst [vmem:[%s283 + $0x8] sm:$0xc] %v6113
      %vm6115 = vcmask 517120
      %6116 = vst.msk [vmem:[%s283 + $0xc] sm:$0x3] %vm6115, %v6106
      %v6117 = vld [vmem:[#allocation5 + $0x28] sm:$0x7f]
      %v6118 = vld [vmem:[%s6] sm:$0x1]
      %v6120 = vlaneseq
      %v6121 = vshrl.u32 %v6120, 7
      %v6122 = vsub.s32 0, %v6121
      %v6123 = vrot.slane %v6118, %v6122
      %v6125 = vadd.f32 %v6117, %v6123
      %v6126 = vmax.f32 %v6125, 0.0
      %v6127 = vpack.c.bf16 %v6126, %v6126
      %v6129 = vunpack.c.l.b16 %v6127
      %v6130 = vpack.c.b16 %v6129, %v6129
      %v6131 = vrot.slane %v6130, 6
      %v6132 = vrot.slane %v6131, 4
      %vm6135 = vcmask 519170
      %6136 = vst.msk [vmem:[%s283 + $0xc] sm:$0xc] %vm6135, %v6131
      %vm6137 = vcmask 517120
      %vm6138 = vmand %vm6137, %vm2371
      %v6139 = vld [vmem:[%s283 + $0x10] sm:$0x3]
      %v6140 = vsel %vm6138, %v6132, %v6139
      %6141 = vst [vmem:[%s283 + $0x10] sm:$0x3] %v6140
      %v6142 = vld [vmem:[#allocation5 + $0x32] sm:$0x7f]
      %v6143 = vld [vmem:[%s6] sm:$0x1]
      %v6145 = vlaneseq
      %v6146 = vshrl.u32 %v6145, 7
      %v6147 = vsub.s32 0, %v6146
      %v6148 = vrot.slane %v6143, %v6147
      %v6150 = vadd.f32 %v6142, %v6148
      %v6151 = vmax.f32 %v6150, 0.0
      %v6152 = vpack.c.bf16 %v6151, %v6151
      %v6154 = vunpack.c.l.b16 %v6152
      %v6155 = vpack.c.b16 %v6154, %v6154
      %v6157 = vshrl.u32 %v6155, 16
      %v6159 = vrot.slane %v6157, 6
      %v6160 = vshll.u32 %v6155, 16
      %v6162 = vrot.slane %v6160, 7
      %v6163 = vor.u32 %v6159, %v6162
      %v6164 = vrot.slane %v6163, 4
      %vm6167 = vcmask 519169
      %vm6168 = vsmask.f32 7942
      %vm6169 = vmand %vm6167, %vm6168
      %v6170 = vld [vmem:[%s283 + $0x10] sm:$0xe]
      %v6171 = vsel %vm6169, %v6163, %v6170
      %6172 = vst [vmem:[%s283 + $0x10] sm:$0xe] %v6171
      %6173 = vst.msk [vmem:[%s283 + $0x14] sm:$0x1] %vm1188, %v6164
      %v6174 = vld [vmem:[#allocation5 + $0x3c] sm:$0x7f]
      %v6175 = vld [vmem:[%s6] sm:$0x1]
      %v6177 = vlaneseq
      %v6178 = vshrl.u32 %v6177, 7
      %v6179 = vsub.s32 0, %v6178
      %v6180 = vrot.slane %v6175, %v6179
      %v6182 = vadd.f32 %v6174, %v6180
      %v6183 = vmax.f32 %v6182, 0.0
      %v6184 = vpack.c.bf16 %v6183, %v6183
      %v6186 = vunpack.c.l.b16 %v6184
      %v6187 = vpack.c.b16 %v6186, %v6186
      %v6188 = vrot.slane %v6187, 7
      %v6189 = vrot.slane %v6188, 4
      %vm6192 = vcmask 519169
      %6193 = vst.msk [vmem:[%s283 + $0x14] sm:$0xe] %vm6192, %v6188
      %v6194 = vld [vmem:[%s283 + $0x18] sm:$0x1]
      %v6195 = vsel %vm4247, %v6189, %v6194
      %6196 = vst [vmem:[%s283 + $0x18] sm:$0x1] %v6195
      %vm6197 = vsmask.f32 7938
      %vm6198 = vmand %vm6022, %vm6197
      %v6199 = vld [vmem:[%s283 + $0x18] sm:$0xf]
      %v6200 = vsel %vm6198, 0, %v6199
      %6201 = vst [vmem:[%s283 + $0x18] sm:$0xf] %v6200
      %s6202 = smul.u32 7, %s18
      %p6203 = scmp.lt.s32.totalorder %s6202, 13
      %s6204 = scalar_select %p6203, %s6202, 13
      %s6205 = smul.addr %s6204, 4
      %s6206 = scalar_lea.vmem %s7, %s6205
      // Predicated region
      $region49: #{flappy_bird_forward.2} parent=47 // pred_check
        %p6207 = pneg %p188
      $region50: #{flappy_bird_forward.2} parent=47 // pred_check_branch
        %6209 = sbr.rel (%p6207) target = $region52
      $region51: #{flappy_bird_forward.2} parent=47 // pred_region
        %s6210 = smul.u32 7, %s18
      $region52: #{flappy_bird_forward.2} parent=47 // pred_fallthru
        _
    $region48: #{flappy_bird_forward.2} parent=5 // pred_fallthru
      _
    %p6211 = scmp.le.s32.totalorder 2, %s13
    // Predicated region
    $region53: #{flappy_bird_forward.2} parent=5 // pred_check
      %p6212 = pneg %p6211
    $region54: #{flappy_bird_forward.2} parent=5 // pred_check_branch
      %6214 = sbr.rel (%p6212) target = $region56
    $region55: #{flappy_bird_forward.2} parent=5 // pred_region
      %s6215 = ssub.s32 %s13, 2
      // Predicated region
      $region57: #{flappy_bird_forward.2} parent=55 // pred_check
        %p6216 = pneg %p194
      $region58: #{flappy_bird_forward.2} parent=55 // pred_check_branch
        %6218 = sbr.rel (%p6216) target = $region60
      $region59: #{flappy_bird_forward.2} parent=55 // pred_region
        %s6219 = smul.u32 7, %s19
        %p6220 = scmp.lt.s32.totalorder %s6219, 13
        %s6221 = scalar_select %p6220, %s6219, 13
        %s6222 = smul.addr %s6221, 4
        %s6223 = scalar_lea.vmem %s7, %s6222
      $region60: #{flappy_bird_forward.2} parent=55 // pred_fallthru
        _
    $region56: #{flappy_bird_forward.2} parent=5 // pred_fallthru
      _
  $region6: #{flappy_bird_forward.2} parent=0 // loop_footer
    %s17 = sadd.s32 1, %s13
  $region7: #{flappy_bird_forward.2} parent=0 // loop_footer_branch
    %12 = sbr.rel target = $region3
  $region8: #{flappy_bird_forward.2} parent=0 // loop_exit
    _

</llo_original>
